<compile_context>
chip_gen: v6e
topology: v6e:2x2x1
jax: 0.10.0
libtpu: 0.0.40
codegen_flags: <defaults>
</compile_context>

<pallas_src>
import functools
import numpy as np
import jax
import jax.numpy as jnp
from jax import lax
from jax.experimental import pallas as pl
from jax.experimental.pallas import tpu as pltpu

BN_EPS = 1e-5
NEG_INF = -1e30


# ---------------------------------------------------------------------------
# Fused kernel: conv1 -> BN -> ReLU -> conv2 -> BN -> ReLU -> maxpool -> FC ->
#               log_softmax, one image per grid step.
# ---------------------------------------------------------------------------
def _fused_cnn_kernel(x_ref, w1_ref, s1_ref, t1_ref,
                      w2_ref, s2_ref, t2_ref,
                      fcw_ref, fcb_ref,
                      o_ref,
                      xpad_ref, y1pad_ref, acc2_ref,
                      *, H, W, KH, KW, C1, C2):
    Ho, Wo = H, W            # 3x3, stride 1, pad 1 -> same spatial size
    HW = Ho * Wo

    # ---------------- conv1 (Cin=1): VPU broadcast-FMA taps -----------------
    # zero-padded input lives in VMEM scratch (halo handled in-kernel).
    xpad_ref[...] = jnp.zeros(xpad_ref.shape, xpad_ref.dtype)
    xpad_ref[1:1 + H, 1:1 + W, :] = x_ref[0]                   # (H, W, 1)

    acc1 = jnp.zeros((Ho, Wo, C1), jnp.float32)
    for kh in range(KH):
        for kw in range(KW):
            tap = xpad_ref[kh:kh + Ho, kw:kw + Wo, :]          # (Ho, Wo, 1)
            wv = w1_ref[kh * KW + kw]                          # (C1,)
            acc1 = acc1 + tap * wv[None, None, :]              # broadcast over lanes
    y1 = jnp.maximum(acc1 * s1_ref[0][None, None, :]
                     + t1_ref[0][None, None, :], 0.0)          # (Ho, Wo, C1) f32

    # ---------------- conv2: 9 accumulating 2D MXU dots ---------------------
    # padded conv1 activation kept in VMEM as bf16 (matmul operand dtype).
    y1pad_ref[...] = jnp.zeros(y1pad_ref.shape, y1pad_ref.dtype)
    y1pad_ref[1:1 + Ho, 1:1 + Wo, :] = y1.astype(y1pad_ref.dtype)

    for t in range(KH * KW):
        kh, kw = t // KW, t % KW
        tap = y1pad_ref[kh:kh + Ho, kw:kw + Wo, :]             # (Ho, Wo, C1) bf16
        tap2 = tap.reshape(HW, C1)                             # M=HW on sublanes
        d = jnp.dot(tap2, w2_ref[t], preferred_element_type=jnp.float32)
        if t == 0:
            acc2_ref[...] = d
        else:
            acc2_ref[...] = acc2_ref[...] + d

    y2 = jnp.maximum(acc2_ref[...] * s2_ref[0][None, :]
                     + t2_ref[0][None, :], 0.0)                # (HW, C2) f32

    # ---------------- global max-pool + FC + log_softmax --------------------
    pooled = jnp.max(y2, axis=0, keepdims=True)                # (1, C2)
    logits = jnp.dot(pooled, fcw_ref[...],
                     preferred_element_type=jnp.float32) + fcb_ref[...]   # (1, CP)
    m = jnp.max(logits, axis=-1, keepdims=True)
    lse = m + jnp.log(jnp.sum(jnp.exp(logits - m), axis=-1, keepdims=True))
    o_ref[0] = (logits - lse).astype(o_ref.dtype)


# ---------------------------------------------------------------------------
# Wrapper: fold BN into scale/shift, reshape weights, single pallas_call.
# ---------------------------------------------------------------------------
@jax.jit
def cnn_forward(x_bfF, conv_params, fc_w, fc_b):
    """x_bfF: (batch, input_frames_number, f_number), like the PyTorch input."""
    assert len(conv_params) == 2, "fused kernel specialized to conv_layers_number=2"
    B, H, W = x_bfF.shape
    p1, p2 = conv_params
    KH, KW, cin1, C1 = p1["w"].shape
    _, _, _, C2 = p2["w"].shape
    assert cin1 == 1 and (KH, KW) == (3, 3)
    classes = fc_w.shape[1]
    CP = ((classes + 127) // 128) * 128                         # lane-dense output slab

    # Fold conv bias + BN running stats into per-channel scale/shift.
    s1 = p1["gamma"] / jnp.sqrt(p1["var"] + BN_EPS)
    t1 = (p1["b"] - p1["mean"]) * s1 + p1["beta"]
    s2 = p2["gamma"] / jnp.sqrt(p2["var"] + BN_EPS)
    t2 = (p2["b"] - p2["mean"]) * s2 + p2["beta"]

    x4 = x_bfF.astype(jnp.float32)[..., None]                   # (B, H, W, 1)
    w1 = p1["w"].reshape(KH * KW, C1).astype(jnp.float32)       # VPU taps stay f32
    w2 = p2["w"].reshape(KH * KW, C1, C2).astype(jnp.bfloat16)  # MXU operands bf16
    fcw = jnp.zeros((C2, CP), jnp.float32).at[:, :classes].set(fc_w.astype(jnp.float32))
    fcb = jnp.full((1, CP), NEG_INF, jnp.float32).at[0, :classes].set(
        fc_b.astype(jnp.float32))

    Hp, Wp = H + 2, W + 2
    HW = H * W

    kernel = functools.partial(_fused_cnn_kernel,
                               H=H, W=W, KH=KH, KW=KW, C1=C1, C2=C2)

    flops = int(B * (2 * HW * KH * KW * C1            # conv1
                     + 2 * HW * KH * KW * C1 * C2     # conv2
                     + 2 * C2 * CP))                  # fc
    bytes_accessed = int(x4.size * 4 + w1.size * 4 + w2.size * 2 + fcw.size * 4
                         + (s1.size + t1.size + s2.size + t2.size) * 4
                         + fcb.size * 4 + B * CP * 4)

    out = pl.pallas_call(
        kernel,
        out_shape=jax.ShapeDtypeStruct((B, 1, CP), jnp.float32),
        grid=(B,),
        in_specs=[
            pl.BlockSpec((1, H, W, 1), lambda n: (n, 0, 0, 0)),
            pl.BlockSpec((KH * KW, C1), lambda n: (0, 0)),
            pl.BlockSpec((1, C1), lambda n: (0, 0)),
            pl.BlockSpec((1, C1), lambda n: (0, 0)),
            pl.BlockSpec((KH * KW, C1, C2), lambda n: (0, 0, 0)),
            pl.BlockSpec((1, C2), lambda n: (0, 0)),
            pl.BlockSpec((1, C2), lambda n: (0, 0)),
            pl.BlockSpec((C2, CP), lambda n: (0, 0)),
            pl.BlockSpec((1, CP), lambda n: (0, 0)),
        ],
        out_specs=pl.BlockSpec((1, 1, CP), lambda n: (n, 0, 0)),
        scratch_shapes=[
            pltpu.VMEM((Hp, Wp, 1), jnp.float32),     # zero-padded input
            pltpu.VMEM((Hp, Wp, C1), jnp.bfloat16),   # zero-padded conv1 output
            pltpu.VMEM((HW, C2), jnp.float32),        # conv2 accumulator
        ],
        compiler_params=pltpu.CompilerParams(dimension_semantics=("parallel",)),
        cost_estimate=pl.CostEstimate(flops=flops,
                                      transcendentals=int(B * (CP + 2)),
                                      bytes_accessed=bytes_accessed),
    )(x4, w1, s1.reshape(1, C1), t1.reshape(1, C1),
      w2, s2.reshape(1, C2), t2.reshape(1, C2), fcw, fcb)

    return out.reshape(B, CP)[:, :classes]


# ---------------------------------------------------------------------------
# Parameter init (deterministic, He-style, matching the module's __init__ shapes)
# ---------------------------------------------------------------------------
def init_params(key, conv_layers_number=2, classes_number=10,
                kernel_size=(3, 3), std_scale_factor=1.0):
    kh, kw = kernel_size
    conv_params = []
    cin = 1
    for k in range(1, conv_layers_number + 1):
        cout = 2 ** (5 + k)                       # 64, 128, ...
        key, k1, k2, k3, k4, k5, k6 = jax.random.split(key, 7)
        fan_in = cin * kh * kw
        std = np.sqrt(2.0 / fan_in) * np.sqrt(std_scale_factor)
        conv_params.append(dict(
            w=jax.random.normal(k1, (kh, kw, cin, cout), jnp.float32) * std,
            b=jax.random.normal(k2, (cout,), jnp.float32) * 0.01,
            gamma=1.0 + 0.1 * jax.random.normal(k3, (cout,), jnp.float32),
            beta=0.1 * jax.random.normal(k4, (cout,), jnp.float32),
            mean=0.1 * jax.random.normal(k5, (cout,), jnp.float32),
            var=jnp.abs(1.0 + 0.1 * jax.random.normal(k6, (cout,), jnp.float32)),
        ))
        cin = cout
    key, kf1, kf2 = jax.random.split(key, 3)
    fc_std = np.sqrt(2.0 / cin) * np.sqrt(std_scale_factor)
    fc_w = jax.random.normal(kf1, (cin, classes_number), jnp.float32) * fc_std
    fc_b = jax.random.normal(kf2, (classes_number,), jnp.float32) * 0.01
    return conv_params, fc_w, fc_b


# Pure-JAX f32 reference (PyTorch forward semantics) for the correctness check.
def cnn_reference(x_bfF, conv_params, fc_w, fc_b):
    x = x_bfF[:, :, :, None].astype(jnp.float32)
    for p in conv_params:
        y = lax.conv_general_dilated(
            x, p["w"], window_strides=(1, 1), padding=((1, 1), (1, 1)),
            dimension_numbers=("NHWC", "HWIO", "NHWC"))
        y = y + p["b"]
        y = (y - p["mean"]) * (p["gamma"] / jnp.sqrt(p["var"] + BN_EPS)) + p["beta"]
        x = jnp.maximum(y, 0.0)
    pooled = jnp.max(x, axis=(1, 2))
    logits = pooled @ fc_w + fc_b
    return jax.nn.log_softmax(logits, axis=-1)


if __name__ == "__main__":
    key = jax.random.PRNGKey(0)
    key, kx = jax.random.split(key)

    batch, frames, freq = 2, 16, 16
    x = jax.random.normal(kx, (batch, frames, freq), jnp.float32)

    conv_params, fc_w, fc_b = init_params(
        key, conv_layers_number=2, classes_number=10,
        kernel_size=(3, 3), std_scale_factor=1.0)

    out = jax.block_until_ready(cnn_forward(x, conv_params, fc_w, fc_b))
    ref = jax.block_until_ready(cnn_reference(x, conv_params, fc_w, fc_b))

    # conv2 runs in bf16 on the MXU (f32 accumulate) -> loosened tolerance vs f32 ref.
    np.testing.assert_allclose(np.asarray(out), np.asarray(ref), rtol=5e-2, atol=1e-1)
    # log_softmax self-consistency: rows must exponentiate-sum to 1.
    np.testing.assert_allclose(np.exp(np.asarray(out)).sum(-1), 1.0, rtol=1e-3, atol=1e-3)

    assert out.shape == (batch, 10)
    print("KERNEL_OK")
</pallas_src>

<mosaic_0001>
module attributes {stable_mosaic.version = 11 : i64} {
  func.func @_fused_cnn_kernel(%arg0: i32, %arg1: memref<1x16x16x1xf32, #tpu.memory_space<vmem>>, %arg2: memref<9x64xf32, #tpu.memory_space<vmem>>, %arg3: memref<1x64xf32, #tpu.memory_space<vmem>>, %arg4: memref<1x64xf32, #tpu.memory_space<vmem>>, %arg5: memref<9x64x128xbf16, #tpu.memory_space<vmem>>, %arg6: memref<1x128xf32, #tpu.memory_space<vmem>>, %arg7: memref<1x128xf32, #tpu.memory_space<vmem>>, %arg8: memref<128x128xf32, #tpu.memory_space<vmem>>, %arg9: memref<1x128xf32, #tpu.memory_space<vmem>>, %arg10: memref<1x1x128xf32, #tpu.memory_space<vmem>>, %arg11: memref<18x18x1xf32, #tpu.memory_space<vmem>>, %arg12: memref<18x18x64xbf16, #tpu.memory_space<vmem>>, %arg13: memref<256x128xf32, #tpu.memory_space<vmem>>) attributes {dimension_semantics = [#tpu.dimension_semantics<parallel>], iteration_bounds = array<i64: 2>, scalar_prefetch = 0 : i64, scratch_operands = 3 : i64, tpu.core_type = #tpu.core_type<tc>, window_params = [{transform_indices = @transform_0, window_bounds = array<i64: 1, 16, 16, 1>}, {pipeline_mode = #tpu.pipeline_mode<synchronous>, transform_indices = @transform_1, window_bounds = array<i64: 9, 64>}, {pipeline_mode = #tpu.pipeline_mode<synchronous>, transform_indices = @transform_2, window_bounds = array<i64: 1, 64>}, {pipeline_mode = #tpu.pipeline_mode<synchronous>, transform_indices = @transform_3, window_bounds = array<i64: 1, 64>}, {pipeline_mode = #tpu.pipeline_mode<synchronous>, transform_indices = @transform_4, window_bounds = array<i64: 9, 64, 128>}, {pipeline_mode = #tpu.pipeline_mode<synchronous>, transform_indices = @transform_5, window_bounds = array<i64: 1, 128>}, {pipeline_mode = #tpu.pipeline_mode<synchronous>, transform_indices = @transform_6, window_bounds = array<i64: 1, 128>}, {pipeline_mode = #tpu.pipeline_mode<synchronous>, transform_indices = @transform_7, window_bounds = array<i64: 128, 128>}, {pipeline_mode = #tpu.pipeline_mode<synchronous>, transform_indices = @transform_8, window_bounds = array<i64: 1, 128>}, {transform_indices = @transform_9, window_bounds = array<i64: 1, 1, 128>}]} {
    %cst = arith.constant 0.000000e+00 : f32
    %0 = vector.broadcast %cst : f32 to vector<18x18x1xf32>
    %c0 = arith.constant 0 : index
    %c0_0 = arith.constant 0 : index
    %c0_1 = arith.constant 0 : index
    %1 = vector.load %arg11[%c0, %c0_0, %c0_1] : memref<18x18x1xf32, #tpu.memory_space<vmem>>, vector<18x18x1xf32>
    tpu.vector_store %arg11[%c0, %c0_0, %c0_1], %0 {strides = array<i32>} : memref<18x18x1xf32, #tpu.memory_space<vmem>>, vector<18x18x1xf32>,
    %c0_2 = arith.constant 0 : index
    %c0_3 = arith.constant 0 : index
    %c0_4 = arith.constant 0 : index
    %c0_5 = arith.constant 0 : index
    %2 = vector.load %arg1[%c0_2, %c0_3, %c0_4, %c0_5] : memref<1x16x16x1xf32, #tpu.memory_space<vmem>>, vector<1x16x16x1xf32>
    %3 = vector.shape_cast %2 : vector<1x16x16x1xf32> to vector<16x16x1xf32>
    %c1 = arith.constant 1 : index
    %c1_6 = arith.constant 1 : index
    %c0_7 = arith.constant 0 : index
    %4 = vector.load %arg11[%c1, %c1_6, %c0_7] : memref<18x18x1xf32, #tpu.memory_space<vmem>>, vector<16x16x1xf32>
    tpu.vector_store %arg11[%c1, %c1_6, %c0_7], %3 {strides = array<i32>} : memref<18x18x1xf32, #tpu.memory_space<vmem>>, vector<16x16x1xf32>,
    %cst_8 = arith.constant 0.000000e+00 : f32
    %5 = vector.broadcast %cst_8 : f32 to vector<16x16x64xf32>
    %c0_9 = arith.constant 0 : index
    %c0_10 = arith.constant 0 : index
    %c0_11 = arith.constant 0 : index
    %6 = vector.load %arg11[%c0_9, %c0_10, %c0_11] : memref<18x18x1xf32, #tpu.memory_space<vmem>>, vector<16x16x1xf32>
    %c0_12 = arith.constant 0 : index
    %c0_13 = arith.constant 0 : index
    %7 = vector.load %arg2[%c0_12, %c0_13] : memref<9x64xf32, #tpu.memory_space<vmem>>, vector<1x64xf32>
    %8 = vector.shape_cast %7 : vector<1x64xf32> to vector<64xf32>
    %9 = vector.shape_cast %8 : vector<64xf32> to vector<1x1x64xf32>
    %10 = vector.broadcast %6 : vector<16x16x1xf32> to vector<16x16x64xf32>
    %11 = vector.broadcast %9 : vector<1x1x64xf32> to vector<16x16x64xf32>
    %12 = arith.mulf %10, %11 : vector<16x16x64xf32>
    %13 = arith.addf %5, %12 : vector<16x16x64xf32>
    %c0_14 = arith.constant 0 : index
    %c1_15 = arith.constant 1 : index
    %c0_16 = arith.constant 0 : index
    %14 = vector.load %arg11[%c0_14, %c1_15, %c0_16] : memref<18x18x1xf32, #tpu.memory_space<vmem>>, vector<16x16x1xf32>
    %c1_17 = arith.constant 1 : index
    %c0_18 = arith.constant 0 : index
    %15 = vector.load %arg2[%c1_17, %c0_18] : memref<9x64xf32, #tpu.memory_space<vmem>>, vector<1x64xf32>
    %16 = vector.shape_cast %15 : vector<1x64xf32> to vector<64xf32>
    %17 = vector.shape_cast %16 : vector<64xf32> to vector<1x1x64xf32>
    %18 = vector.broadcast %14 : vector<16x16x1xf32> to vector<16x16x64xf32>
    %19 = vector.broadcast %17 : vector<1x1x64xf32> to vector<16x16x64xf32>
    %20 = arith.mulf %18, %19 : vector<16x16x64xf32>
    %21 = arith.addf %13, %20 : vector<16x16x64xf32>
    %c0_19 = arith.constant 0 : index
    %c2 = arith.constant 2 : index
    %c0_20 = arith.constant 0 : index
    %22 = vector.load %arg11[%c0_19, %c2, %c0_20] : memref<18x18x1xf32, #tpu.memory_space<vmem>>, vector<16x16x1xf32>
    %c2_21 = arith.constant 2 : index
    %c0_22 = arith.constant 0 : index
    %23 = vector.load %arg2[%c2_21, %c0_22] : memref<9x64xf32, #tpu.memory_space<vmem>>, vector<1x64xf32>
    %24 = vector.shape_cast %23 : vector<1x64xf32> to vector<64xf32>
    %25 = vector.shape_cast %24 : vector<64xf32> to vector<1x1x64xf32>
    %26 = vector.broadcast %22 : vector<16x16x1xf32> to vector<16x16x64xf32>
    %27 = vector.broadcast %25 : vector<1x1x64xf32> to vector<16x16x64xf32>
    %28 = arith.mulf %26, %27 : vector<16x16x64xf32>
    %29 = arith.addf %21, %28 : vector<16x16x64xf32>
    %c1_23 = arith.constant 1 : index
    %c0_24 = arith.constant 0 : index
    %c0_25 = arith.constant 0 : index
    %30 = vector.load %arg11[%c1_23, %c0_24, %c0_25] : memref<18x18x1xf32, #tpu.memory_space<vmem>>, vector<16x16x1xf32>
    %c3 = arith.constant 3 : index
    %c0_26 = arith.constant 0 : index
    %31 = vector.load %arg2[%c3, %c0_26] : memref<9x64xf32, #tpu.memory_space<vmem>>, vector<1x64xf32>
    %32 = vector.shape_cast %31 : vector<1x64xf32> to vector<64xf32>
    %33 = vector.shape_cast %32 : vector<64xf32> to vector<1x1x64xf32>
    %34 = vector.broadcast %30 : vector<16x16x1xf32> to vector<16x16x64xf32>
    %35 = vector.broadcast %33 : vector<1x1x64xf32> to vector<16x16x64xf32>
    %36 = arith.mulf %34, %35 : vector<16x16x64xf32>
    %37 = arith.addf %29, %36 : vector<16x16x64xf32>
    %c1_27 = arith.constant 1 : index
    %c1_28 = arith.constant 1 : index
    %c0_29 = arith.constant 0 : index
    %38 = vector.load %arg11[%c1_27, %c1_28, %c0_29] : memref<18x18x1xf32, #tpu.memory_space<vmem>>, vector<16x16x1xf32>
    %c4 = arith.constant 4 : index
    %c0_30 = arith.constant 0 : index
    %39 = vector.load %arg2[%c4, %c0_30] : memref<9x64xf32, #tpu.memory_space<vmem>>, vector<1x64xf32>
    %40 = vector.shape_cast %39 : vector<1x64xf32> to vector<64xf32>
    %41 = vector.shape_cast %40 : vector<64xf32> to vector<1x1x64xf32>
    %42 = vector.broadcast %38 : vector<16x16x1xf32> to vector<16x16x64xf32>
    %43 = vector.broadcast %41 : vector<1x1x64xf32> to vector<16x16x64xf32>
    %44 = arith.mulf %42, %43 : vector<16x16x64xf32>
    %45 = arith.addf %37, %44 : vector<16x16x64xf32>
    %c1_31 = arith.constant 1 : index
    %c2_32 = arith.constant 2 : index
    %c0_33 = arith.constant 0 : index
    %46 = vector.load %arg11[%c1_31, %c2_32, %c0_33] : memref<18x18x1xf32, #tpu.memory_space<vmem>>, vector<16x16x1xf32>
    %c5 = arith.constant 5 : index
    %c0_34 = arith.constant 0 : index
    %47 = vector.load %arg2[%c5, %c0_34] : memref<9x64xf32, #tpu.memory_space<vmem>>, vector<1x64xf32>
    %48 = vector.shape_cast %47 : vector<1x64xf32> to vector<64xf32>
    %49 = vector.shape_cast %48 : vector<64xf32> to vector<1x1x64xf32>
    %50 = vector.broadcast %46 : vector<16x16x1xf32> to vector<16x16x64xf32>
    %51 = vector.broadcast %49 : vector<1x1x64xf32> to vector<16x16x64xf32>
    %52 = arith.mulf %50, %51 : vector<16x16x64xf32>
    %53 = arith.addf %45, %52 : vector<16x16x64xf32>
    %c2_35 = arith.constant 2 : index
    %c0_36 = arith.constant 0 : index
    %c0_37 = arith.constant 0 : index
    %54 = vector.load %arg11[%c2_35, %c0_36, %c0_37] : memref<18x18x1xf32, #tpu.memory_space<vmem>>, vector<16x16x1xf32>
    %c6 = arith.constant 6 : index
    %c0_38 = arith.constant 0 : index
    %55 = vector.load %arg2[%c6, %c0_38] : memref<9x64xf32, #tpu.memory_space<vmem>>, vector<1x64xf32>
    %56 = vector.shape_cast %55 : vector<1x64xf32> to vector<64xf32>
    %57 = vector.shape_cast %56 : vector<64xf32> to vector<1x1x64xf32>
    %58 = vector.broadcast %54 : vector<16x16x1xf32> to vector<16x16x64xf32>
    %59 = vector.broadcast %57 : vector<1x1x64xf32> to vector<16x16x64xf32>
    %60 = arith.mulf %58, %59 : vector<16x16x64xf32>
    %61 = arith.addf %53, %60 : vector<16x16x64xf32>
    %c2_39 = arith.constant 2 : index
    %c1_40 = arith.constant 1 : index
    %c0_41 = arith.constant 0 : index
    %62 = vector.load %arg11[%c2_39, %c1_40, %c0_41] : memref<18x18x1xf32, #tpu.memory_space<vmem>>, vector<16x16x1xf32>
    %c7 = arith.constant 7 : index
    %c0_42 = arith.constant 0 : index
    %63 = vector.load %arg2[%c7, %c0_42] : memref<9x64xf32, #tpu.memory_space<vmem>>, vector<1x64xf32>
    %64 = vector.shape_cast %63 : vector<1x64xf32> to vector<64xf32>
    %65 = vector.shape_cast %64 : vector<64xf32> to vector<1x1x64xf32>
    %66 = vector.broadcast %62 : vector<16x16x1xf32> to vector<16x16x64xf32>
    %67 = vector.broadcast %65 : vector<1x1x64xf32> to vector<16x16x64xf32>
    %68 = arith.mulf %66, %67 : vector<16x16x64xf32>
    %69 = arith.addf %61, %68 : vector<16x16x64xf32>
    %c2_43 = arith.constant 2 : index
    %c2_44 = arith.constant 2 : index
    %c0_45 = arith.constant 0 : index
    %70 = vector.load %arg11[%c2_43, %c2_44, %c0_45] : memref<18x18x1xf32, #tpu.memory_space<vmem>>, vector<16x16x1xf32>
    %c8 = arith.constant 8 : index
    %c0_46 = arith.constant 0 : index
    %71 = vector.load %arg2[%c8, %c0_46] : memref<9x64xf32, #tpu.memory_space<vmem>>, vector<1x64xf32>
    %72 = vector.shape_cast %71 : vector<1x64xf32> to vector<64xf32>
    %73 = vector.shape_cast %72 : vector<64xf32> to vector<1x1x64xf32>
    %74 = vector.broadcast %70 : vector<16x16x1xf32> to vector<16x16x64xf32>
    %75 = vector.broadcast %73 : vector<1x1x64xf32> to vector<16x16x64xf32>
    %76 = arith.mulf %74, %75 : vector<16x16x64xf32>
    %77 = arith.addf %69, %76 : vector<16x16x64xf32>
    %c0_47 = arith.constant 0 : index
    %c0_48 = arith.constant 0 : index
    %78 = vector.load %arg3[%c0_47, %c0_48] : memref<1x64xf32, #tpu.memory_space<vmem>>, vector<1x64xf32>
    %79 = vector.shape_cast %78 : vector<1x64xf32> to vector<64xf32>
    %80 = vector.shape_cast %79 : vector<64xf32> to vector<1x1x64xf32>
    %81 = vector.broadcast %80 : vector<1x1x64xf32> to vector<16x16x64xf32>
    %82 = arith.mulf %77, %81 : vector<16x16x64xf32>
    %c0_49 = arith.constant 0 : index
    %c0_50 = arith.constant 0 : index
    %83 = vector.load %arg4[%c0_49, %c0_50] : memref<1x64xf32, #tpu.memory_space<vmem>>, vector<1x64xf32>
    %84 = vector.shape_cast %83 : vector<1x64xf32> to vector<64xf32>
    %85 = vector.shape_cast %84 : vector<64xf32> to vector<1x1x64xf32>
    %86 = vector.broadcast %85 : vector<1x1x64xf32> to vector<16x16x64xf32>
    %87 = arith.addf %82, %86 : vector<16x16x64xf32>
    %cst_51 = arith.constant 0.000000e+00 : f32
    %88 = vector.broadcast %cst_51 : f32 to vector<16x16x64xf32>
    %89 = arith.maximumf %87, %88 : vector<16x16x64xf32>
    %cst_52 = arith.constant 0.000000e+00 : bf16
    %90 = vector.broadcast %cst_52 : bf16 to vector<18x18x64xbf16>
    %c0_53 = arith.constant 0 : index
    %c0_54 = arith.constant 0 : index
    %c0_55 = arith.constant 0 : index
    %91 = vector.load %arg12[%c0_53, %c0_54, %c0_55] : memref<18x18x64xbf16, #tpu.memory_space<vmem>>, vector<18x18x64xbf16>
    tpu.vector_store %arg12[%c0_53, %c0_54, %c0_55], %90 {strides = array<i32>} : memref<18x18x64xbf16, #tpu.memory_space<vmem>>, vector<18x18x64xbf16>,
    %92 = arith.truncf %89 : vector<16x16x64xf32> to vector<16x16x64xbf16>
    %c1_56 = arith.constant 1 : index
    %c1_57 = arith.constant 1 : index
    %c0_58 = arith.constant 0 : index
    %93 = vector.load %arg12[%c1_56, %c1_57, %c0_58] : memref<18x18x64xbf16, #tpu.memory_space<vmem>>, vector<16x16x64xbf16>
    tpu.vector_store %arg12[%c1_56, %c1_57, %c0_58], %92 {strides = array<i32>} : memref<18x18x64xbf16, #tpu.memory_space<vmem>>, vector<16x16x64xbf16>,
    %c0_59 = arith.constant 0 : index
    %c0_60 = arith.constant 0 : index
    %c0_61 = arith.constant 0 : index
    %94 = vector.load %arg12[%c0_59, %c0_60, %c0_61] : memref<18x18x64xbf16, #tpu.memory_space<vmem>>, vector<16x16x64xbf16>
    %95 = vector.shape_cast %94 : vector<16x16x64xbf16> to vector<256x64xbf16>
    %c0_62 = arith.constant 0 : index
    %c0_63 = arith.constant 0 : index
    %c0_64 = arith.constant 0 : index
    %96 = vector.load %arg5[%c0_62, %c0_63, %c0_64] : memref<9x64x128xbf16, #tpu.memory_space<vmem>>, vector<1x64x128xbf16>
    %97 = vector.shape_cast %96 : vector<1x64x128xbf16> to vector<64x128xbf16>
    %cst_65 = arith.constant dense<0.000000e+00> : vector<256x128xf32>
    %98 = tpu.matmul %95, %97, %cst_65 {dimension_numbers = #tpu.dot_dimension_numbers<[1], [0], [0], [1], [0, 0, 1, 1], [], []>} : vector<256x64xbf16>, vector<64x128xbf16>, vector<256x128xf32> -> vector<256x128xf32>
    %c0_66 = arith.constant 0 : index
    %c0_67 = arith.constant 0 : index
    %99 = vector.load %arg13[%c0_66, %c0_67] : memref<256x128xf32, #tpu.memory_space<vmem>>, vector<256x128xf32>
    tpu.vector_store %arg13[%c0_66, %c0_67], %98 {strides = array<i32>} : memref<256x128xf32, #tpu.memory_space<vmem>>, vector<256x128xf32>,
    %c0_68 = arith.constant 0 : index
    %c1_69 = arith.constant 1 : index
    %c0_70 = arith.constant 0 : index
    %100 = vector.load %arg12[%c0_68, %c1_69, %c0_70] : memref<18x18x64xbf16, #tpu.memory_space<vmem>>, vector<16x16x64xbf16>
    %101 = vector.shape_cast %100 : vector<16x16x64xbf16> to vector<256x64xbf16>
    %c1_71 = arith.constant 1 : index
    %c0_72 = arith.constant 0 : index
    %c0_73 = arith.constant 0 : index
    %102 = vector.load %arg5[%c1_71, %c0_72, %c0_73] : memref<9x64x128xbf16, #tpu.memory_space<vmem>>, vector<1x64x128xbf16>
    %103 = vector.shape_cast %102 : vector<1x64x128xbf16> to vector<64x128xbf16>
    %cst_74 = arith.constant dense<0.000000e+00> : vector<256x128xf32>
    %104 = tpu.matmul %101, %103, %cst_74 {dimension_numbers = #tpu.dot_dimension_numbers<[1], [0], [0], [1], [0, 0, 1, 1], [], []>} : vector<256x64xbf16>, vector<64x128xbf16>, vector<256x128xf32> -> vector<256x128xf32>
    %c0_75 = arith.constant 0 : index
    %c0_76 = arith.constant 0 : index
    %105 = vector.load %arg13[%c0_75, %c0_76] : memref<256x128xf32, #tpu.memory_space<vmem>>, vector<256x128xf32>
    %106 = arith.addf %105, %104 : vector<256x128xf32>
    %c0_77 = arith.constant 0 : index
    %c0_78 = arith.constant 0 : index
    %107 = vector.load %arg13[%c0_77, %c0_78] : memref<256x128xf32, #tpu.memory_space<vmem>>, vector<256x128xf32>
    tpu.vector_store %arg13[%c0_77, %c0_78], %106 {strides = array<i32>} : memref<256x128xf32, #tpu.memory_space<vmem>>, vector<256x128xf32>,
    %c0_79 = arith.constant 0 : index
    %c2_80 = arith.constant 2 : index
    %c0_81 = arith.constant 0 : index
    %108 = vector.load %arg12[%c0_79, %c2_80, %c0_81] : memref<18x18x64xbf16, #tpu.memory_space<vmem>>, vector<16x16x64xbf16>
    %109 = vector.shape_cast %108 : vector<16x16x64xbf16> to vector<256x64xbf16>
    %c2_82 = arith.constant 2 : index
    %c0_83 = arith.constant 0 : index
    %c0_84 = arith.constant 0 : index
    %110 = vector.load %arg5[%c2_82, %c0_83, %c0_84] : memref<9x64x128xbf16, #tpu.memory_space<vmem>>, vector<1x64x128xbf16>
    %111 = vector.shape_cast %110 : vector<1x64x128xbf16> to vector<64x128xbf16>
    %cst_85 = arith.constant dense<0.000000e+00> : vector<256x128xf32>
    %112 = tpu.matmul %109, %111, %cst_85 {dimension_numbers = #tpu.dot_dimension_numbers<[1], [0], [0], [1], [0, 0, 1, 1], [], []>} : vector<256x64xbf16>, vector<64x128xbf16>, vector<256x128xf32> -> vector<256x128xf32>
    %c0_86 = arith.constant 0 : index
    %c0_87 = arith.constant 0 : index
    %113 = vector.load %arg13[%c0_86, %c0_87] : memref<256x128xf32, #tpu.memory_space<vmem>>, vector<256x128xf32>
    %114 = arith.addf %113, %112 : vector<256x128xf32>
    %c0_88 = arith.constant 0 : index
    %c0_89 = arith.constant 0 : index
    %115 = vector.load %arg13[%c0_88, %c0_89] : memref<256x128xf32, #tpu.memory_space<vmem>>, vector<256x128xf32>
    tpu.vector_store %arg13[%c0_88, %c0_89], %114 {strides = array<i32>} : memref<256x128xf32, #tpu.memory_space<vmem>>, vector<256x128xf32>,
    %c1_90 = arith.constant 1 : index
    %c0_91 = arith.constant 0 : index
    %c0_92 = arith.constant 0 : index
    %116 = vector.load %arg12[%c1_90, %c0_91, %c0_92] : memref<18x18x64xbf16, #tpu.memory_space<vmem>>, vector<16x16x64xbf16>
    %117 = vector.shape_cast %116 : vector<16x16x64xbf16> to vector<256x64xbf16>
    %c3_93 = arith.constant 3 : index
    %c0_94 = arith.constant 0 : index
    %c0_95 = arith.constant 0 : index
    %118 = vector.load %arg5[%c3_93, %c0_94, %c0_95] : memref<9x64x128xbf16, #tpu.memory_space<vmem>>, vector<1x64x128xbf16>
    %119 = vector.shape_cast %118 : vector<1x64x128xbf16> to vector<64x128xbf16>
    %cst_96 = arith.constant dense<0.000000e+00> : vector<256x128xf32>
    %120 = tpu.matmul %117, %119, %cst_96 {dimension_numbers = #tpu.dot_dimension_numbers<[1], [0], [0], [1], [0, 0, 1, 1], [], []>} : vector<256x64xbf16>, vector<64x128xbf16>, vector<256x128xf32> -> vector<256x128xf32>
    %c0_97 = arith.constant 0 : index
    %c0_98 = arith.constant 0 : index
    %121 = vector.load %arg13[%c0_97, %c0_98] : memref<256x128xf32, #tpu.memory_space<vmem>>, vector<256x128xf32>
    %122 = arith.addf %121, %120 : vector<256x128xf32>
    %c0_99 = arith.constant 0 : index
    %c0_100 = arith.constant 0 : index
    %123 = vector.load %arg13[%c0_99, %c0_100] : memref<256x128xf32, #tpu.memory_space<vmem>>, vector<256x128xf32>
    tpu.vector_store %arg13[%c0_99, %c0_100], %122 {strides = array<i32>} : memref<256x128xf32, #tpu.memory_space<vmem>>, vector<256x128xf32>,
    %c1_101 = arith.constant 1 : index
    %c1_102 = arith.constant 1 : index
    %c0_103 = arith.constant 0 : index
    %124 = vector.load %arg12[%c1_101, %c1_102, %c0_103] : memref<18x18x64xbf16, #tpu.memory_space<vmem>>, vector<16x16x64xbf16>
    %125 = vector.shape_cast %124 : vector<16x16x64xbf16> to vector<256x64xbf16>
    %c4_104 = arith.constant 4 : index
    %c0_105 = arith.constant 0 : index
    %c0_106 = arith.constant 0 : index
    %126 = vector.load %arg5[%c4_104, %c0_105, %c0_106] : memref<9x64x128xbf16, #tpu.memory_space<vmem>>, vector<1x64x128xbf16>
    %127 = vector.shape_cast %126 : vector<1x64x128xbf16> to vector<64x128xbf16>
    %cst_107 = arith.constant dense<0.000000e+00> : vector<256x128xf32>
    %128 = tpu.matmul %125, %127, %cst_107 {dimension_numbers = #tpu.dot_dimension_numbers<[1], [0], [0], [1], [0, 0, 1, 1], [], []>} : vector<256x64xbf16>, vector<64x128xbf16>, vector<256x128xf32> -> vector<256x128xf32>
    %c0_108 = arith.constant 0 : index
    %c0_109 = arith.constant 0 : index
    %129 = vector.load %arg13[%c0_108, %c0_109] : memref<256x128xf32, #tpu.memory_space<vmem>>, vector<256x128xf32>
    %130 = arith.addf %129, %128 : vector<256x128xf32>
    %c0_110 = arith.constant 0 : index
    %c0_111 = arith.constant 0 : index
    %131 = vector.load %arg13[%c0_110, %c0_111] : memref<256x128xf32, #tpu.memory_space<vmem>>, vector<256x128xf32>
    tpu.vector_store %arg13[%c0_110, %c0_111], %130 {strides = array<i32>} : memref<256x128xf32, #tpu.memory_space<vmem>>, vector<256x128xf32>,
    %c1_112 = arith.constant 1 : index
    %c2_113 = arith.constant 2 : index
    %c0_114 = arith.constant 0 : index
    %132 = vector.load %arg12[%c1_112, %c2_113, %c0_114] : memref<18x18x64xbf16, #tpu.memory_space<vmem>>, vector<16x16x64xbf16>
    %133 = vector.shape_cast %132 : vector<16x16x64xbf16> to vector<256x64xbf16>
    %c5_115 = arith.constant 5 : index
    %c0_116 = arith.constant 0 : index
    %c0_117 = arith.constant 0 : index
    %134 = vector.load %arg5[%c5_115, %c0_116, %c0_117] : memref<9x64x128xbf16, #tpu.memory_space<vmem>>, vector<1x64x128xbf16>
    %135 = vector.shape_cast %134 : vector<1x64x128xbf16> to vector<64x128xbf16>
    %cst_118 = arith.constant dense<0.000000e+00> : vector<256x128xf32>
    %136 = tpu.matmul %133, %135, %cst_118 {dimension_numbers = #tpu.dot_dimension_numbers<[1], [0], [0], [1], [0, 0, 1, 1], [], []>} : vector<256x64xbf16>, vector<64x128xbf16>, vector<256x128xf32> -> vector<256x128xf32>
    %c0_119 = arith.constant 0 : index
    %c0_120 = arith.constant 0 : index
    %137 = vector.load %arg13[%c0_119, %c0_120] : memref<256x128xf32, #tpu.memory_space<vmem>>, vector<256x128xf32>
    %138 = arith.addf %137, %136 : vector<256x128xf32>
    %c0_121 = arith.constant 0 : index
    %c0_122 = arith.constant 0 : index
    %139 = vector.load %arg13[%c0_121, %c0_122] : memref<256x128xf32, #tpu.memory_space<vmem>>, vector<256x128xf32>
    tpu.vector_store %arg13[%c0_121, %c0_122], %138 {strides = array<i32>} : memref<256x128xf32, #tpu.memory_space<vmem>>, vector<256x128xf32>,
    %c2_123 = arith.constant 2 : index
    %c0_124 = arith.constant 0 : index
    %c0_125 = arith.constant 0 : index
    %140 = vector.load %arg12[%c2_123, %c0_124, %c0_125] : memref<18x18x64xbf16, #tpu.memory_space<vmem>>, vector<16x16x64xbf16>
    %141 = vector.shape_cast %140 : vector<16x16x64xbf16> to vector<256x64xbf16>
    %c6_126 = arith.constant 6 : index
    %c0_127 = arith.constant 0 : index
    %c0_128 = arith.constant 0 : index
    %142 = vector.load %arg5[%c6_126, %c0_127, %c0_128] : memref<9x64x128xbf16, #tpu.memory_space<vmem>>, vector<1x64x128xbf16>
    %143 = vector.shape_cast %142 : vector<1x64x128xbf16> to vector<64x128xbf16>
    %cst_129 = arith.constant dense<0.000000e+00> : vector<256x128xf32>
    %144 = tpu.matmul %141, %143, %cst_129 {dimension_numbers = #tpu.dot_dimension_numbers<[1], [0], [0], [1], [0, 0, 1, 1], [], []>} : vector<256x64xbf16>, vector<64x128xbf16>, vector<256x128xf32> -> vector<256x128xf32>
    %c0_130 = arith.constant 0 : index
    %c0_131 = arith.constant 0 : index
    %145 = vector.load %arg13[%c0_130, %c0_131] : memref<256x128xf32, #tpu.memory_space<vmem>>, vector<256x128xf32>
    %146 = arith.addf %145, %144 : vector<256x128xf32>
    %c0_132 = arith.constant 0 : index
    %c0_133 = arith.constant 0 : index
    %147 = vector.load %arg13[%c0_132, %c0_133] : memref<256x128xf32, #tpu.memory_space<vmem>>, vector<256x128xf32>
    tpu.vector_store %arg13[%c0_132, %c0_133], %146 {strides = array<i32>} : memref<256x128xf32, #tpu.memory_space<vmem>>, vector<256x128xf32>,
    %c2_134 = arith.constant 2 : index
    %c1_135 = arith.constant 1 : index
    %c0_136 = arith.constant 0 : index
    %148 = vector.load %arg12[%c2_134, %c1_135, %c0_136] : memref<18x18x64xbf16, #tpu.memory_space<vmem>>, vector<16x16x64xbf16>
    %149 = vector.shape_cast %148 : vector<16x16x64xbf16> to vector<256x64xbf16>
    %c7_137 = arith.constant 7 : index
    %c0_138 = arith.constant 0 : index
    %c0_139 = arith.constant 0 : index
    %150 = vector.load %arg5[%c7_137, %c0_138, %c0_139] : memref<9x64x128xbf16, #tpu.memory_space<vmem>>, vector<1x64x128xbf16>
    %151 = vector.shape_cast %150 : vector<1x64x128xbf16> to vector<64x128xbf16>
    %cst_140 = arith.constant dense<0.000000e+00> : vector<256x128xf32>
    %152 = tpu.matmul %149, %151, %cst_140 {dimension_numbers = #tpu.dot_dimension_numbers<[1], [0], [0], [1], [0, 0, 1, 1], [], []>} : vector<256x64xbf16>, vector<64x128xbf16>, vector<256x128xf32> -> vector<256x128xf32>
    %c0_141 = arith.constant 0 : index
    %c0_142 = arith.constant 0 : index
    %153 = vector.load %arg13[%c0_141, %c0_142] : memref<256x128xf32, #tpu.memory_space<vmem>>, vector<256x128xf32>
    %154 = arith.addf %153, %152 : vector<256x128xf32>
    %c0_143 = arith.constant 0 : index
    %c0_144 = arith.constant 0 : index
    %155 = vector.load %arg13[%c0_143, %c0_144] : memref<256x128xf32, #tpu.memory_space<vmem>>, vector<256x128xf32>
    tpu.vector_store %arg13[%c0_143, %c0_144], %154 {strides = array<i32>} : memref<256x128xf32, #tpu.memory_space<vmem>>, vector<256x128xf32>,
    %c2_145 = arith.constant 2 : index
    %c2_146 = arith.constant 2 : index
    %c0_147 = arith.constant 0 : index
    %156 = vector.load %arg12[%c2_145, %c2_146, %c0_147] : memref<18x18x64xbf16, #tpu.memory_space<vmem>>, vector<16x16x64xbf16>
    %157 = vector.shape_cast %156 : vector<16x16x64xbf16> to vector<256x64xbf16>
    %c8_148 = arith.constant 8 : index
    %c0_149 = arith.constant 0 : index
    %c0_150 = arith.constant 0 : index
    %158 = vector.load %arg5[%c8_148, %c0_149, %c0_150] : memref<9x64x128xbf16, #tpu.memory_space<vmem>>, vector<1x64x128xbf16>
    %159 = vector.shape_cast %158 : vector<1x64x128xbf16> to vector<64x128xbf16>
    %cst_151 = arith.constant dense<0.000000e+00> : vector<256x128xf32>
    %160 = tpu.matmul %157, %159, %cst_151 {dimension_numbers = #tpu.dot_dimension_numbers<[1], [0], [0], [1], [0, 0, 1, 1], [], []>} : vector<256x64xbf16>, vector<64x128xbf16>, vector<256x128xf32> -> vector<256x128xf32>
    %c0_152 = arith.constant 0 : index
    %c0_153 = arith.constant 0 : index
    %161 = vector.load %arg13[%c0_152, %c0_153] : memref<256x128xf32, #tpu.memory_space<vmem>>, vector<256x128xf32>
    %162 = arith.addf %161, %160 : vector<256x128xf32>
    %c0_154 = arith.constant 0 : index
    %c0_155 = arith.constant 0 : index
    %163 = vector.load %arg13[%c0_154, %c0_155] : memref<256x128xf32, #tpu.memory_space<vmem>>, vector<256x128xf32>
    tpu.vector_store %arg13[%c0_154, %c0_155], %162 {strides = array<i32>} : memref<256x128xf32, #tpu.memory_space<vmem>>, vector<256x128xf32>,
    %c0_156 = arith.constant 0 : index
    %c0_157 = arith.constant 0 : index
    %164 = vector.load %arg13[%c0_156, %c0_157] : memref<256x128xf32, #tpu.memory_space<vmem>>, vector<256x128xf32>
    %c0_158 = arith.constant 0 : index
    %c0_159 = arith.constant 0 : index
    %165 = vector.load %arg6[%c0_158, %c0_159] : memref<1x128xf32, #tpu.memory_space<vmem>>, vector<1x128xf32>
    %166 = vector.shape_cast %165 : vector<1x128xf32> to vector<128xf32>
    %167 = vector.shape_cast %166 : vector<128xf32> to vector<1x128xf32>
    %168 = vector.broadcast %167 : vector<1x128xf32> to vector<256x128xf32>
    %169 = arith.mulf %164, %168 : vector<256x128xf32>
    %c0_160 = arith.constant 0 : index
    %c0_161 = arith.constant 0 : index
    %170 = vector.load %arg7[%c0_160, %c0_161] : memref<1x128xf32, #tpu.memory_space<vmem>>, vector<1x128xf32>
    %171 = vector.shape_cast %170 : vector<1x128xf32> to vector<128xf32>
    %172 = vector.shape_cast %171 : vector<128xf32> to vector<1x128xf32>
    %173 = vector.broadcast %172 : vector<1x128xf32> to vector<256x128xf32>
    %174 = arith.addf %169, %173 : vector<256x128xf32>
    %cst_162 = arith.constant 0.000000e+00 : f32
    %175 = vector.broadcast %cst_162 : f32 to vector<256x128xf32>
    %176 = arith.maximumf %174, %175 : vector<256x128xf32>
    %cst_163 = arith.constant dense<0xFF800000> : vector<128xf32>
    %177 = vector.multi_reduction <maximumf>, %176, %cst_163 [0] : vector<256x128xf32> to vector<128xf32>
    %178 = vector.shape_cast %177 : vector<128xf32> to vector<1x128xf32>
    %c0_164 = arith.constant 0 : index
    %c0_165 = arith.constant 0 : index
    %179 = vector.load %arg8[%c0_164, %c0_165] : memref<128x128xf32, #tpu.memory_space<vmem>>, vector<128x128xf32>
    %cst_166 = arith.constant dense<0.000000e+00> : vector<1x128xf32>
    %180 = tpu.matmul %178, %179, %cst_166 {dimension_numbers = #tpu.dot_dimension_numbers<[1], [0], [0], [1], [0, 0, 1, 1], [], []>} : vector<1x128xf32>, vector<128x128xf32>, vector<1x128xf32> -> vector<1x128xf32>
    %c0_167 = arith.constant 0 : index
    %c0_168 = arith.constant 0 : index
    %181 = vector.load %arg9[%c0_167, %c0_168] : memref<1x128xf32, #tpu.memory_space<vmem>>, vector<1x128xf32>
    %182 = arith.addf %180, %181 : vector<1x128xf32>
    %cst_169 = arith.constant dense<0xFF800000> : vector<1xf32>
    %183 = vector.multi_reduction <maximumf>, %182, %cst_169 [1] : vector<1x128xf32> to vector<1xf32>
    %184 = vector.shape_cast %183 : vector<1xf32> to vector<1x1xf32>
    %185 = vector.broadcast %184 : vector<1x1xf32> to vector<1x128xf32>
    %186 = arith.subf %182, %185 : vector<1x128xf32>
    %187 = math.exp %186 : vector<1x128xf32>
    %cst_170 = arith.constant dense<0.000000e+00> : vector<1xf32>
    %188 = vector.multi_reduction <add>, %187, %cst_170 [1] : vector<1x128xf32> to vector<1xf32>
    %189 = vector.shape_cast %188 : vector<1xf32> to vector<1x1xf32>
    %190 = math.log %189 : vector<1x1xf32>
    %191 = arith.addf %184, %190 : vector<1x1xf32>
    %192 = vector.broadcast %191 : vector<1x1xf32> to vector<1x128xf32>
    %193 = arith.subf %182, %192 : vector<1x128xf32>
    %c0_171 = arith.constant 0 : index
    %c0_172 = arith.constant 0 : index
    %c0_173 = arith.constant 0 : index
    %194 = vector.load %arg10[%c0_171, %c0_172, %c0_173] : memref<1x1x128xf32, #tpu.memory_space<vmem>>, vector<1x1x128xf32>
    %195 = vector.shape_cast %194 : vector<1x1x128xf32> to vector<1x128xf32>
    %196 = vector.shape_cast %193 : vector<1x128xf32> to vector<1x1x128xf32>
    tpu.vector_store %arg10[%c0_171, %c0_172, %c0_173], %196 {strides = array<i32>} : memref<1x1x128xf32, #tpu.memory_space<vmem>>, vector<1x1x128xf32>,
    return
  }
  func.func @transform_0(%arg0: i32) -> (i32, i32, i32, i32) {
    %c0_i32 = arith.constant 0 : i32
    %c0_i32_0 = arith.constant 0 : i32
    %c0_i32_1 = arith.constant 0 : i32
    %c0_i32_2 = arith.constant 0 : i32
    return %arg0, %c0_i32, %c0_i32_0, %c0_i32_1 : i32, i32, i32, i32
  }
  func.func @transform_1(%arg0: i32) -> (i32, i32) {
    %c0_i32 = arith.constant 0 : i32
    %c0_i32_0 = arith.constant 0 : i32
    %c0_i32_1 = arith.constant 0 : i32
    return %c0_i32, %c0_i32_0 : i32, i32
  }
  func.func @transform_2(%arg0: i32) -> (i32, i32) {
    %c0_i32 = arith.constant 0 : i32
    %c0_i32_0 = arith.constant 0 : i32
    %c0_i32_1 = arith.constant 0 : i32
    return %c0_i32, %c0_i32_0 : i32, i32
  }
  func.func @transform_3(%arg0: i32) -> (i32, i32) {
    %c0_i32 = arith.constant 0 : i32
    %c0_i32_0 = arith.constant 0 : i32
    %c0_i32_1 = arith.constant 0 : i32
    return %c0_i32, %c0_i32_0 : i32, i32
  }
  func.func @transform_4(%arg0: i32) -> (i32, i32, i32) {
    %c0_i32 = arith.constant 0 : i32
    %c0_i32_0 = arith.constant 0 : i32
    %c0_i32_1 = arith.constant 0 : i32
    %c0_i32_2 = arith.constant 0 : i32
    return %c0_i32, %c0_i32_0, %c0_i32_1 : i32, i32, i32
  }
  func.func @transform_5(%arg0: i32) -> (i32, i32) {
    %c0_i32 = arith.constant 0 : i32
    %c0_i32_0 = arith.constant 0 : i32
    %c0_i32_1 = arith.constant 0 : i32
    return %c0_i32, %c0_i32_0 : i32, i32
  }
  func.func @transform_6(%arg0: i32) -> (i32, i32) {
    %c0_i32 = arith.constant 0 : i32
    %c0_i32_0 = arith.constant 0 : i32
    %c0_i32_1 = arith.constant 0 : i32
    return %c0_i32, %c0_i32_0 : i32, i32
  }
  func.func @transform_7(%arg0: i32) -> (i32, i32) {
    %c0_i32 = arith.constant 0 : i32
    %c0_i32_0 = arith.constant 0 : i32
    %c0_i32_1 = arith.constant 0 : i32
    return %c0_i32, %c0_i32_0 : i32, i32
  }
  func.func @transform_8(%arg0: i32) -> (i32, i32) {
    %c0_i32 = arith.constant 0 : i32
    %c0_i32_0 = arith.constant 0 : i32
    %c0_i32_1 = arith.constant 0 : i32
    return %c0_i32, %c0_i32_0 : i32, i32
  }
  func.func @transform_9(%arg0: i32) -> (i32, i32, i32) {
    %c0_i32 = arith.constant 0 : i32
    %c0_i32_0 = arith.constant 0 : i32
    %c0_i32_1 = arith.constant 0 : i32
    return %arg0, %c0_i32, %c0_i32_0 : i32, i32, i32
  }
}

</mosaic_0001>

<llo_original>
// kernel: cnn_forward.1
$region0: #{cnn_forward.1}
  #allocation0 [shape = 'u32[]', space=smem, size = 0x4, offset = 0x4, fixed_abs, tag = 'smem constant byte address 0x4 - core index']
  #allocation1 [shape = 'u32[144,128]{1,0:T(1,128)}', space=vmem, size = 0x12000, scoped, tag = 'internal scratch']
  #allocation2 [shape = 'f32[18,18,1]{2,1,0:T(8,128)}', space=vmem, size = 0x36000, scoped, tag = 'scratch operand']
  #allocation3 [shape = 'bf16[18,18,64]{2,1,0:T(8,128)(2,1)}', space=vmem, size = 0x1b000, scoped, tag = 'scratch operand']
  #allocation4 [shape = 'f32[256,128]{1,0:T(8,128)}', space=vmem, size = 0x20000, scoped, tag = 'scratch operand']
  %s0 = inlined_call_operand.vmem [shape: f32[2,16,16,1], index: 0, kind: input, shape index: {}]
  %s1 = inlined_call_operand.vmem [shape: f32[9,64], index: 1, kind: input, shape index: {}]
  %s2 = inlined_call_operand.vmem [shape: f32[1,64], index: 2, kind: input, shape index: {}]
  %s3 = inlined_call_operand.vmem [shape: f32[1,64], index: 3, kind: input, shape index: {}]
  %s4 = inlined_call_operand.vmem [shape: bf16[9,64,128], index: 4, kind: input, shape index: {}]
  %s5 = inlined_call_operand.vmem [shape: f32[1,128], index: 5, kind: input, shape index: {}]
  %s6 = inlined_call_operand.vmem [shape: f32[1,128], index: 6, kind: input, shape index: {}]
  %s7 = inlined_call_operand.vmem [shape: f32[128,128], index: 7, kind: input, shape index: {}]
  %s8 = inlined_call_operand.vmem [shape: f32[1,128], index: 8, kind: input, shape index: {}]
  %s9 = inlined_call_operand.hbm [shape: f32[2,1,128], index: 9, kind: output, shape index: {}]
  %s10 = sld [smem:[#allocation0]]
  $region69: #{cnn_forward.1} parent=0
    _
  %s12 = ssub.s32 1, %s10
  %s13 = scalar_select 0, %s12, %s10
  $region1: #{cnn_forward.1} parent=0
    #allocation5 [shape = 'u8[1024]{0}', space=vmem, size = 0x400, scoped, tag = 'output window, operand 0']
    #allocation6 [shape = 's32[2]{0}', space=sflag, size = 0x8, scoped, tag = 'scoped memory for cnn_forward.1']
    %14 = vsyncpa [#allocation6], 0
    %s15 = scalar_lea.sflag [#allocation6], 1
    %16 = vsyncpa %s15, 0
    loop: start=0, step=1, limit=4
    $region2: #{cnn_forward.1} parent=1 // loop_pre_header
      _
    $region3: #{cnn_forward.1} parent=1 // loop_header
      %s18 = sphi 0, %s22
      %p19 = scmp.ge.s32.totalorder %s18, 4
      %s28 = sphi 0, %s30
      %s31 = sphi 0, %s28
      %s32 = sphi 0, %s31
      %s48 = sphi 0, %s32
      %s52 = sphi 0, %s52
      %s54 = sphi 0, %s52
      %s55 = sphi 0, %s54
      %s69 = sphi 0, %s55
      %s73 = sphi 0, %s73
      %s75 = sphi 0, %s73
      %s76 = sphi 0, %s75
      %s90 = sphi 0, %s76
      %s94 = sphi 0, %s94
      %s96 = sphi 0, %s94
      %s97 = sphi 0, %s96
      %s111 = sphi 0, %s97
      %s115 = sphi 0, %s115
      %s117 = sphi 0, %s115
      %s118 = sphi 0, %s117
      %s132 = sphi 0, %s118
      %s136 = sphi 0, %s136
      %s138 = sphi 0, %s136
      %s139 = sphi 0, %s138
      %s153 = sphi 0, %s139
      %s157 = sphi 0, %s157
      %s159 = sphi 0, %s157
      %s160 = sphi 0, %s159
      %s174 = sphi 0, %s160
      %s178 = sphi 0, %s178
      %s180 = sphi 0, %s178
      %s181 = sphi 0, %s180
      %s195 = sphi 0, %s181
      %s199 = sphi 0, %s199
      %s201 = sphi 0, %s199
      %s202 = sphi 0, %s201
      %s216 = sphi 0, %s202
      %s222 = sphi 0, %s224
      %s225 = sphi 0, %s222
      %s226 = sphi 0, %s225
      %s242 = sphi 0, %s226
    $region4: #{cnn_forward.1} parent=1 // loop_header_branch
      %21 = sbr.rel (%p19) target = $region8
    $region5: #{cnn_forward.1} parent=1 // loop_body
      %s23 = ssub.s32 %s18, 1
      %s24 = ssub.s32 %s18, 2
      %s25 = sadd.s32 %s18, 1
      %s26 = ssub.s32 %s18, %s25
      %p27 = scmp.eq.s32.totalorder %s26, 0
      %s29 = sadd.s32 %s28, 1
      %s30 = scalar_select %p27, %s28, %s29
      %p33 = pneg %p27
      %p34 = scmp.eq.s32.totalorder %s18, 1
      %p35 = por %p33, %p34
      %p36 = scmp.ne.s32.totalorder %s28, %s31
      %p37 = scmp.eq.s32.totalorder %s18, 0
      %p38 = por %p36, %p37
      %p39 = scmp.ne.s32.totalorder %s28, %s31
      %p40 = scmp.eq.s32.totalorder %s23, 1
      %p41 = por %p39, %p40
      %p42 = scmp.ne.s32.totalorder %s31, %s32
      %p43 = scmp.eq.s32.totalorder %s23, 0
      %p44 = por %p42, %p43
      %p45 = scmp.ne.s32.totalorder %s31, %s32
      %p46 = scmp.eq.s32.totalorder %s24, 1
      %p47 = por %p45, %p46
      %p49 = scmp.ne.s32.totalorder %s32, %s48
      %p50 = scmp.eq.s32.totalorder %s24, 0
      %p51 = por %p49, %p50
      %s53 = sadd.s32 %s52, 1
      %p56 = scmp.eq.s32.totalorder %s18, 1
      %p57 = scmp.ne.s32.totalorder %s52, %s54
      %p58 = scmp.eq.s32.totalorder %s18, 0
      %p59 = por %p57, %p58
      %p60 = scmp.ne.s32.totalorder %s52, %s54
      %p61 = scmp.eq.s32.totalorder %s23, 1
      %p62 = por %p60, %p61
      %p63 = scmp.ne.s32.totalorder %s54, %s55
      %p64 = scmp.eq.s32.totalorder %s23, 0
      %p65 = por %p63, %p64
      %p66 = scmp.ne.s32.totalorder %s54, %s55
      %p67 = scmp.eq.s32.totalorder %s24, 1
      %p68 = por %p66, %p67
      %p70 = scmp.ne.s32.totalorder %s55, %s69
      %p71 = scmp.eq.s32.totalorder %s24, 0
      %p72 = por %p70, %p71
      %s74 = sadd.s32 %s73, 1
      %p77 = scmp.eq.s32.totalorder %s18, 1
      %p78 = scmp.ne.s32.totalorder %s73, %s75
      %p79 = scmp.eq.s32.totalorder %s18, 0
      %p80 = por %p78, %p79
      %p81 = scmp.ne.s32.totalorder %s73, %s75
      %p82 = scmp.eq.s32.totalorder %s23, 1
      %p83 = por %p81, %p82
      %p84 = scmp.ne.s32.totalorder %s75, %s76
      %p85 = scmp.eq.s32.totalorder %s23, 0
      %p86 = por %p84, %p85
      %p87 = scmp.ne.s32.totalorder %s75, %s76
      %p88 = scmp.eq.s32.totalorder %s24, 1
      %p89 = por %p87, %p88
      %p91 = scmp.ne.s32.totalorder %s76, %s90
      %p92 = scmp.eq.s32.totalorder %s24, 0
      %p93 = por %p91, %p92
      %s95 = sadd.s32 %s94, 1
      %p98 = scmp.eq.s32.totalorder %s18, 1
      %p99 = scmp.ne.s32.totalorder %s94, %s96
      %p100 = scmp.eq.s32.totalorder %s18, 0
      %p101 = por %p99, %p100
      %p102 = scmp.ne.s32.totalorder %s94, %s96
      %p103 = scmp.eq.s32.totalorder %s23, 1
      %p104 = por %p102, %p103
      %p105 = scmp.ne.s32.totalorder %s96, %s97
      %p106 = scmp.eq.s32.totalorder %s23, 0
      %p107 = por %p105, %p106
      %p108 = scmp.ne.s32.totalorder %s96, %s97
      %p109 = scmp.eq.s32.totalorder %s24, 1
      %p110 = por %p108, %p109
      %p112 = scmp.ne.s32.totalorder %s97, %s111
      %p113 = scmp.eq.s32.totalorder %s24, 0
      %p114 = por %p112, %p113
      %s116 = sadd.s32 %s115, 1
      %p119 = scmp.eq.s32.totalorder %s18, 1
      %p120 = scmp.ne.s32.totalorder %s115, %s117
      %p121 = scmp.eq.s32.totalorder %s18, 0
      %p122 = por %p120, %p121
      %p123 = scmp.ne.s32.totalorder %s115, %s117
      %p124 = scmp.eq.s32.totalorder %s23, 1
      %p125 = por %p123, %p124
      %p126 = scmp.ne.s32.totalorder %s117, %s118
      %p127 = scmp.eq.s32.totalorder %s23, 0
      %p128 = por %p126, %p127
      %p129 = scmp.ne.s32.totalorder %s117, %s118
      %p130 = scmp.eq.s32.totalorder %s24, 1
      %p131 = por %p129, %p130
      %p133 = scmp.ne.s32.totalorder %s118, %s132
      %p134 = scmp.eq.s32.totalorder %s24, 0
      %p135 = por %p133, %p134
      %s137 = sadd.s32 %s136, 1
      %p140 = scmp.eq.s32.totalorder %s18, 1
      %p141 = scmp.ne.s32.totalorder %s136, %s138
      %p142 = scmp.eq.s32.totalorder %s18, 0
      %p143 = por %p141, %p142
      %p144 = scmp.ne.s32.totalorder %s136, %s138
      %p145 = scmp.eq.s32.totalorder %s23, 1
      %p146 = por %p144, %p145
      %p147 = scmp.ne.s32.totalorder %s138, %s139
      %p148 = scmp.eq.s32.totalorder %s23, 0
      %p149 = por %p147, %p148
      %p150 = scmp.ne.s32.totalorder %s138, %s139
      %p151 = scmp.eq.s32.totalorder %s24, 1
      %p152 = por %p150, %p151
      %p154 = scmp.ne.s32.totalorder %s139, %s153
      %p155 = scmp.eq.s32.totalorder %s24, 0
      %p156 = por %p154, %p155
      %s158 = sadd.s32 %s157, 1
      %p161 = scmp.eq.s32.totalorder %s18, 1
      %p162 = scmp.ne.s32.totalorder %s157, %s159
      %p163 = scmp.eq.s32.totalorder %s18, 0
      %p164 = por %p162, %p163
      %p165 = scmp.ne.s32.totalorder %s157, %s159
      %p166 = scmp.eq.s32.totalorder %s23, 1
      %p167 = por %p165, %p166
      %p168 = scmp.ne.s32.totalorder %s159, %s160
      %p169 = scmp.eq.s32.totalorder %s23, 0
      %p170 = por %p168, %p169
      %p171 = scmp.ne.s32.totalorder %s159, %s160
      %p172 = scmp.eq.s32.totalorder %s24, 1
      %p173 = por %p171, %p172
      %p175 = scmp.ne.s32.totalorder %s160, %s174
      %p176 = scmp.eq.s32.totalorder %s24, 0
      %p177 = por %p175, %p176
      %s179 = sadd.s32 %s178, 1
      %p182 = scmp.eq.s32.totalorder %s18, 1
      %p183 = scmp.ne.s32.totalorder %s178, %s180
      %p184 = scmp.eq.s32.totalorder %s18, 0
      %p185 = por %p183, %p184
      %p186 = scmp.ne.s32.totalorder %s178, %s180
      %p187 = scmp.eq.s32.totalorder %s23, 1
      %p188 = por %p186, %p187
      %p189 = scmp.ne.s32.totalorder %s180, %s181
      %p190 = scmp.eq.s32.totalorder %s23, 0
      %p191 = por %p189, %p190
      %p192 = scmp.ne.s32.totalorder %s180, %s181
      %p193 = scmp.eq.s32.totalorder %s24, 1
      %p194 = por %p192, %p193
      %p196 = scmp.ne.s32.totalorder %s181, %s195
      %p197 = scmp.eq.s32.totalorder %s24, 0
      %p198 = por %p196, %p197
      %s200 = sadd.s32 %s199, 1
      %p203 = scmp.eq.s32.totalorder %s18, 1
      %p204 = scmp.ne.s32.totalorder %s199, %s201
      %p205 = scmp.eq.s32.totalorder %s18, 0
      %p206 = por %p204, %p205
      %p207 = scmp.ne.s32.totalorder %s199, %s201
      %p208 = scmp.eq.s32.totalorder %s23, 1
      %p209 = por %p207, %p208
      %p210 = scmp.ne.s32.totalorder %s201, %s202
      %p211 = scmp.eq.s32.totalorder %s23, 0
      %p212 = por %p210, %p211
      %p213 = scmp.ne.s32.totalorder %s201, %s202
      %p214 = scmp.eq.s32.totalorder %s24, 1
      %p215 = por %p213, %p214
      %p217 = scmp.ne.s32.totalorder %s202, %s216
      %p218 = scmp.eq.s32.totalorder %s24, 0
      %p219 = por %p217, %p218
      %s220 = ssub.s32 %s18, %s25
      %p221 = scmp.eq.s32.totalorder %s220, 0
      %s223 = sadd.s32 %s222, 1
      %s224 = scalar_select %p221, %s222, %s223
      %p227 = pneg %p221
      %p228 = scmp.eq.s32.totalorder %s18, 1
      %p229 = por %p227, %p228
      %p230 = scmp.ne.s32.totalorder %s222, %s225
      %p231 = scmp.eq.s32.totalorder %s18, 0
      %p232 = por %p230, %p231
      %p233 = scmp.ne.s32.totalorder %s222, %s225
      %p234 = scmp.eq.s32.totalorder %s23, 1
      %p235 = por %p233, %p234
      %p236 = scmp.ne.s32.totalorder %s225, %s226
      %p237 = scmp.eq.s32.totalorder %s23, 0
      %p238 = por %p236, %p237
      %p239 = scmp.ne.s32.totalorder %s225, %s226
      %p240 = scmp.eq.s32.totalorder %s24, 1
      %p241 = por %p239, %p240
      %p243 = scmp.ne.s32.totalorder %s226, %s242
      %p244 = scmp.eq.s32.totalorder %s24, 0
      %p245 = por %p243, %p244
      %p246 = scmp.le.s32.totalorder 1, %s18
      %p247 = scmp.lt.s32.totalorder %s18, 3
      %p248 = pnand %p246, %p247
      %p249 = pneg %p248
      // Predicated region
      $region9: #{cnn_forward.1} parent=5 // pred_check
        _
      $region10: #{cnn_forward.1} parent=5 // pred_check_branch
        %251 = sbr.rel (%p248) target = $region12
      $region11: #{cnn_forward.1} parent=5 // pred_region
        %s252 = ssub.s32 %s18, 1
        // Predicated region
        $region13: #{cnn_forward.1} parent=11 // pred_check
          %p253 = pneg %p65
        $region14: #{cnn_forward.1} parent=11 // pred_check_branch
          %255 = sbr.rel (%p253) target = $region16
        $region15: #{cnn_forward.1} parent=11 // pred_region
          _
        $region16: #{cnn_forward.1} parent=11 // pred_fallthru
          _
        // Predicated region
        $region17: #{cnn_forward.1} parent=11 // pred_check
          %p256 = pneg %p86
        $region18: #{cnn_forward.1} parent=11 // pred_check_branch
          %258 = sbr.rel (%p256) target = $region20
        $region19: #{cnn_forward.1} parent=11 // pred_region
          _
        $region20: #{cnn_forward.1} parent=11 // pred_fallthru
          _
        // Predicated region
        $region21: #{cnn_forward.1} parent=11 // pred_check
          %p259 = pneg %p107
        $region22: #{cnn_forward.1} parent=11 // pred_check_branch
          %261 = sbr.rel (%p259) target = $region24
        $region23: #{cnn_forward.1} parent=11 // pred_region
          _
        $region24: #{cnn_forward.1} parent=11 // pred_fallthru
          _
        // Predicated region
        $region25: #{cnn_forward.1} parent=11 // pred_check
          %p262 = pneg %p128
        $region26: #{cnn_forward.1} parent=11 // pred_check_branch
          %264 = sbr.rel (%p262) target = $region28
        $region27: #{cnn_forward.1} parent=11 // pred_region
          _
        $region28: #{cnn_forward.1} parent=11 // pred_fallthru
          _
        // Predicated region
        $region29: #{cnn_forward.1} parent=11 // pred_check
          %p265 = pneg %p149
        $region30: #{cnn_forward.1} parent=11 // pred_check_branch
          %267 = sbr.rel (%p265) target = $region32
        $region31: #{cnn_forward.1} parent=11 // pred_region
          _
        $region32: #{cnn_forward.1} parent=11 // pred_fallthru
          _
        // Predicated region
        $region33: #{cnn_forward.1} parent=11 // pred_check
          %p268 = pneg %p170
        $region34: #{cnn_forward.1} parent=11 // pred_check_branch
          %270 = sbr.rel (%p268) target = $region36
        $region35: #{cnn_forward.1} parent=11 // pred_region
          _
        $region36: #{cnn_forward.1} parent=11 // pred_fallthru
          _
        // Predicated region
        $region37: #{cnn_forward.1} parent=11 // pred_check
          %p271 = pneg %p191
        $region38: #{cnn_forward.1} parent=11 // pred_check_branch
          %273 = sbr.rel (%p271) target = $region40
        $region39: #{cnn_forward.1} parent=11 // pred_region
          _
        $region40: #{cnn_forward.1} parent=11 // pred_fallthru
          _
        // Predicated region
        $region41: #{cnn_forward.1} parent=11 // pred_check
          %p274 = pneg %p212
        $region42: #{cnn_forward.1} parent=11 // pred_check_branch
          %276 = sbr.rel (%p274) target = $region44
        $region43: #{cnn_forward.1} parent=11 // pred_region
          _
        $region44: #{cnn_forward.1} parent=11 // pred_fallthru
          _
      $region12: #{cnn_forward.1} parent=5 // pred_fallthru
        _
      %p277 = scmp.lt.s32.totalorder %s18, 2
      // Predicated region
      $region45: #{cnn_forward.1} parent=5 // pred_check
        %p278 = pneg %p277
      $region46: #{cnn_forward.1} parent=5 // pred_check_branch
        %280 = sbr.rel (%p278) target = $region48
      $region47: #{cnn_forward.1} parent=5 // pred_region
        // Predicated region
        $region49: #{cnn_forward.1} parent=47 // pred_check
          %p281 = pneg %p38
        $region50: #{cnn_forward.1} parent=47 // pred_check_branch
          %283 = sbr.rel (%p281) target = $region52
        $region51: #{cnn_forward.1} parent=47 // pred_region
          %p284 = scmp.lt.s32.totalorder %s18, 1
          %s285 = scalar_select %p284, %s18, 1
          %s286 = smul.addr %s285, 32
          %s287 = smul.addr %s286, 8
          %s288 = scalar_lea.vmem %s0, %s287
        $region52: #{cnn_forward.1} parent=47 // pred_fallthru
          _
      $region48: #{cnn_forward.1} parent=5 // pred_fallthru
        _
      %p289 = scmp.le.s32.totalorder 1, %s18
      %p290 = scmp.lt.s32.totalorder %s18, 3
      %p291 = pnand %p289, %p290
      %p292 = pneg %p291
      // Predicated region
      $region53: #{cnn_forward.1} parent=5 // pred_check
        _
      $region54: #{cnn_forward.1} parent=5 // pred_check_branch
        %294 = sbr.rel (%p291) target = $region56
      $region55: #{cnn_forward.1} parent=5 // pred_region
        %s295 = ssub.s32 %s18, 1
        %p296 = scmp.lt.s32.totalorder %s23, 1
        %s297 = scalar_select %p296, %s23, 1
        %s298 = smul.addr %s297, 32
        %s299 = smul.addr %s298, 8
        %s300 = scalar_lea.vmem %s0, %s299
        %p301 = pneg %p44
        %p302 = pneg %p41
        %p303 = pneg %p65
        %p304 = pneg %p62
        %p305 = pneg %p86
        %p306 = pneg %p83
        %p307 = pneg %p107
        %p308 = pneg %p104
        %p309 = pneg %p128
        %p310 = pneg %p125
        %p311 = pneg %p149
        %p312 = pneg %p146
        %p313 = pneg %p170
        %p314 = pneg %p167
        %p315 = pneg %p191
        %p316 = pneg %p188
        %p317 = pneg %p212
        %p318 = pneg %p209
        %p319 = pneg %p238
        %p320 = pneg %p235
        %s321 = sand.u32 %s225, 1
        %s322 = scalar_lea.sflag [#allocation6], %s321
        %s323 = sand.u32 %s225, 1
        %s324 = scalar_lea.vmem [#allocation5], %s323
        %p325 = scmp.lt.s32.totalorder %s23, 1
        %s326 = scalar_select %p325, %s23, 1
        %s327 = smul.addr %s326, 32
        %s328 = smul.addr %s327, 8
        %s329 = scalar_lea.vmem %s0, %s328
        %vm331 = vcmask 7168
        %332 = vst.msk [vmem:[#allocation2] sm:$0xff] %vm331, 0.0
        %333 = vst.msk [vmem:[#allocation2 + $0x8] sm:$0xff] %vm331, 0.0
        %vm334 = vcmask 1024
        %335 = vst.msk [vmem:[#allocation2 + $0x10] sm:$0x3] %vm334, 0.0
        %336 = vst.msk [vmem:[#allocation2 + $0x18] sm:$0xff] %vm331, 0.0
        %337 = vst.msk [vmem:[#allocation2 + $0x20] sm:$0xff] %vm331, 0.0
        %338 = vst.msk [vmem:[#allocation2 + $0x28] sm:$0x3] %vm334, 0.0
        %339 = vst.msk [vmem:[#allocation2 + $0x30] sm:$0xff] %vm331, 0.0
        %340 = vst.msk [vmem:[#allocation2 + $0x38] sm:$0xff] %vm331, 0.0
        %341 = vst.msk [vmem:[#allocation2 + $0x40] sm:$0x3] %vm334, 0.0
        %342 = vst.msk [vmem:[#allocation2 + $0x48] sm:$0xff] %vm331, 0.0
        %343 = vst.msk [vmem:[#allocation2 + $0x50] sm:$0xff] %vm331, 0.0
        %344 = vst.msk [vmem:[#allocation2 + $0x58] sm:$0x3] %vm334, 0.0
        %345 = vst.msk [vmem:[#allocation2 + $0x60] sm:$0xff] %vm331, 0.0
        %346 = vst.msk [vmem:[#allocation2 + $0x68] sm:$0xff] %vm331, 0.0
        %347 = vst.msk [vmem:[#allocation2 + $0x70] sm:$0x3] %vm334, 0.0
        %348 = vst.msk [vmem:[#allocation2 + $0x78] sm:$0xff] %vm331, 0.0
        %349 = vst.msk [vmem:[#allocation2 + $0x80] sm:$0xff] %vm331, 0.0
        %350 = vst.msk [vmem:[#allocation2 + $0x88] sm:$0x3] %vm334, 0.0
        %351 = vst.msk [vmem:[#allocation2 + $0x90] sm:$0xff] %vm331, 0.0
        %352 = vst.msk [vmem:[#allocation2 + $0x98] sm:$0xff] %vm331, 0.0
        %353 = vst.msk [vmem:[#allocation2 + $0xa0] sm:$0x3] %vm334, 0.0
        %354 = vst.msk [vmem:[#allocation2 + $0xa8] sm:$0xff] %vm331, 0.0
        %355 = vst.msk [vmem:[#allocation2 + $0xb0] sm:$0xff] %vm331, 0.0
        %356 = vst.msk [vmem:[#allocation2 + $0xb8] sm:$0x3] %vm334, 0.0
        %357 = vst.msk [vmem:[#allocation2 + $0xc0] sm:$0xff] %vm331, 0.0
        %358 = vst.msk [vmem:[#allocation2 + $0xc8] sm:$0xff] %vm331, 0.0
        %359 = vst.msk [vmem:[#allocation2 + $0xd0] sm:$0x3] %vm334, 0.0
        %360 = vst.msk [vmem:[#allocation2 + $0xd8] sm:$0xff] %vm331, 0.0
        %361 = vst.msk [vmem:[#allocation2 + $0xe0] sm:$0xff] %vm331, 0.0
        %362 = vst.msk [vmem:[#allocation2 + $0xe8] sm:$0x3] %vm334, 0.0
        %363 = vst.msk [vmem:[#allocation2 + $0xf0] sm:$0xff] %vm331, 0.0
        %364 = vst.msk [vmem:[#allocation2 + $0xf8] sm:$0xff] %vm331, 0.0
        %365 = vst.msk [vmem:[#allocation2 + $0x100] sm:$0x3] %vm334, 0.0
        %366 = vst.msk [vmem:[#allocation2 + $0x108] sm:$0xff] %vm331, 0.0
        %367 = vst.msk [vmem:[#allocation2 + $0x110] sm:$0xff] %vm331, 0.0
        %368 = vst.msk [vmem:[#allocation2 + $0x118] sm:$0x3] %vm334, 0.0
        %369 = vst.msk [vmem:[#allocation2 + $0x120] sm:$0xff] %vm331, 0.0
        %370 = vst.msk [vmem:[#allocation2 + $0x128] sm:$0xff] %vm331, 0.0
        %371 = vst.msk [vmem:[#allocation2 + $0x130] sm:$0x3] %vm334, 0.0
        %372 = vst.msk [vmem:[#allocation2 + $0x138] sm:$0xff] %vm331, 0.0
        %373 = vst.msk [vmem:[#allocation2 + $0x140] sm:$0xff] %vm331, 0.0
        %374 = vst.msk [vmem:[#allocation2 + $0x148] sm:$0x3] %vm334, 0.0
        %375 = vst.msk [vmem:[#allocation2 + $0x150] sm:$0xff] %vm331, 0.0
        %376 = vst.msk [vmem:[#allocation2 + $0x158] sm:$0xff] %vm331, 0.0
        %377 = vst.msk [vmem:[#allocation2 + $0x160] sm:$0x3] %vm334, 0.0
        %378 = vst.msk [vmem:[#allocation2 + $0x168] sm:$0xff] %vm331, 0.0
        %379 = vst.msk [vmem:[#allocation2 + $0x170] sm:$0xff] %vm331, 0.0
        %380 = vst.msk [vmem:[#allocation2 + $0x178] sm:$0x3] %vm334, 0.0
        %381 = vst.msk [vmem:[#allocation2 + $0x180] sm:$0xff] %vm331, 0.0
        %382 = vst.msk [vmem:[#allocation2 + $0x188] sm:$0xff] %vm331, 0.0
        %383 = vst.msk [vmem:[#allocation2 + $0x190] sm:$0x3] %vm334, 0.0
        %384 = vst.msk [vmem:[#allocation2 + $0x198] sm:$0xff] %vm331, 0.0
        %385 = vst.msk [vmem:[#allocation2 + $0x1a0] sm:$0xff] %vm331, 0.0
        %386 = vst.msk [vmem:[#allocation2 + $0x1a8] sm:$0x3] %vm334, 0.0
        %v387 = vld [vmem:[%s329] sm:$0xff]
        %v388 = vld [vmem:[%s329 + $0x8] sm:$0xff]
        %v389 = vld [vmem:[%s329 + $0x10] sm:$0xff]
        %v390 = vld [vmem:[%s329 + $0x18] sm:$0xff]
        %v391 = vld [vmem:[%s329 + $0x20] sm:$0xff]
        %v392 = vld [vmem:[%s329 + $0x28] sm:$0xff]
        %v393 = vld [vmem:[%s329 + $0x30] sm:$0xff]
        %v394 = vld [vmem:[%s329 + $0x38] sm:$0xff]
        %v395 = vld [vmem:[%s329 + $0x40] sm:$0xff]
        %v396 = vld [vmem:[%s329 + $0x48] sm:$0xff]
        %v397 = vld [vmem:[%s329 + $0x50] sm:$0xff]
        %v398 = vld [vmem:[%s329 + $0x58] sm:$0xff]
        %v399 = vld [vmem:[%s329 + $0x60] sm:$0xff]
        %v400 = vld [vmem:[%s329 + $0x68] sm:$0xff]
        %v401 = vld [vmem:[%s329 + $0x70] sm:$0xff]
        %v402 = vld [vmem:[%s329 + $0x78] sm:$0xff]
        %v403 = vld [vmem:[%s329 + $0x80] sm:$0xff]
        %v404 = vld [vmem:[%s329 + $0x88] sm:$0xff]
        %v405 = vld [vmem:[%s329 + $0x90] sm:$0xff]
        %v406 = vld [vmem:[%s329 + $0x98] sm:$0xff]
        %v407 = vld [vmem:[%s329 + $0xa0] sm:$0xff]
        %v408 = vld [vmem:[%s329 + $0xa8] sm:$0xff]
        %v409 = vld [vmem:[%s329 + $0xb0] sm:$0xff]
        %v410 = vld [vmem:[%s329 + $0xb8] sm:$0xff]
        %v411 = vld [vmem:[%s329 + $0xc0] sm:$0xff]
        %v412 = vld [vmem:[%s329 + $0xc8] sm:$0xff]
        %v413 = vld [vmem:[%s329 + $0xd0] sm:$0xff]
        %v414 = vld [vmem:[%s329 + $0xd8] sm:$0xff]
        %v415 = vld [vmem:[%s329 + $0xe0] sm:$0xff]
        %v416 = vld [vmem:[%s329 + $0xe8] sm:$0xff]
        %v417 = vld [vmem:[%s329 + $0xf0] sm:$0xff]
        %v418 = vld [vmem:[%s329 + $0xf8] sm:$0xff]
        %s419 = scalar_lea.vmem [#allocation2], 24
        %420 = vst.msk [vmem:[%s419 + $0x1] sm:$0xff] %vm331, %v387
        %421 = vst.msk [vmem:[%s419 + $0x9] sm:$0xff] %vm331, %v388
        %422 = vst.msk [vmem:[%s419 + $0x19] sm:$0xff] %vm331, %v389
        %423 = vst.msk [vmem:[%s419 + $0x21] sm:$0xff] %vm331, %v390
        %424 = vst.msk [vmem:[%s419 + $0x31] sm:$0xff] %vm331, %v391
        %425 = vst.msk [vmem:[%s419 + $0x39] sm:$0xff] %vm331, %v392
        %426 = vst.msk [vmem:[%s419 + $0x49] sm:$0xff] %vm331, %v393
        %427 = vst.msk [vmem:[%s419 + $0x51] sm:$0xff] %vm331, %v394
        %428 = vst.msk [vmem:[%s419 + $0x61] sm:$0xff] %vm331, %v395
        %429 = vst.msk [vmem:[%s419 + $0x69] sm:$0xff] %vm331, %v396
        %430 = vst.msk [vmem:[%s419 + $0x79] sm:$0xff] %vm331, %v397
        %431 = vst.msk [vmem:[%s419 + $0x81] sm:$0xff] %vm331, %v398
        %432 = vst.msk [vmem:[%s419 + $0x91] sm:$0xff] %vm331, %v399
        %433 = vst.msk [vmem:[%s419 + $0x99] sm:$0xff] %vm331, %v400
        %434 = vst.msk [vmem:[%s419 + $0xa9] sm:$0xff] %vm331, %v401
        %435 = vst.msk [vmem:[%s419 + $0xb1] sm:$0xff] %vm331, %v402
        %436 = vst.msk [vmem:[%s419 + $0xc1] sm:$0xff] %vm331, %v403
        %437 = vst.msk [vmem:[%s419 + $0xc9] sm:$0xff] %vm331, %v404
        %438 = vst.msk [vmem:[%s419 + $0xd9] sm:$0xff] %vm331, %v405
        %439 = vst.msk [vmem:[%s419 + $0xe1] sm:$0xff] %vm331, %v406
        %440 = vst.msk [vmem:[%s419 + $0xf1] sm:$0xff] %vm331, %v407
        %441 = vst.msk [vmem:[%s419 + $0xf9] sm:$0xff] %vm331, %v408
        %442 = vst.msk [vmem:[%s419 + $0x109] sm:$0xff] %vm331, %v409
        %443 = vst.msk [vmem:[%s419 + $0x111] sm:$0xff] %vm331, %v410
        %444 = vst.msk [vmem:[%s419 + $0x121] sm:$0xff] %vm331, %v411
        %445 = vst.msk [vmem:[%s419 + $0x129] sm:$0xff] %vm331, %v412
        %446 = vst.msk [vmem:[%s419 + $0x139] sm:$0xff] %vm331, %v413
        %447 = vst.msk [vmem:[%s419 + $0x141] sm:$0xff] %vm331, %v414
        %448 = vst.msk [vmem:[%s419 + $0x151] sm:$0xff] %vm331, %v415
        %449 = vst.msk [vmem:[%s419 + $0x159] sm:$0xff] %vm331, %v416
        %450 = vst.msk [vmem:[%s419 + $0x169] sm:$0xff] %vm331, %v417
        %451 = vst.msk [vmem:[%s419 + $0x171] sm:$0xff] %vm331, %v418
        %v452 = vld [vmem:[#allocation2] sm:$0xff]
        %v453 = vld [vmem:[#allocation2 + $0x8] sm:$0xff]
        %v454 = vld [vmem:[#allocation2 + $0x18] sm:$0xff]
        %v455 = vld [vmem:[#allocation2 + $0x20] sm:$0xff]
        %v456 = vld [vmem:[#allocation2 + $0x30] sm:$0xff]
        %v457 = vld [vmem:[#allocation2 + $0x38] sm:$0xff]
        %v458 = vld [vmem:[#allocation2 + $0x48] sm:$0xff]
        %v459 = vld [vmem:[#allocation2 + $0x50] sm:$0xff]
        %v460 = vld [vmem:[#allocation2 + $0x60] sm:$0xff]
        %v461 = vld [vmem:[#allocation2 + $0x68] sm:$0xff]
        %v462 = vld [vmem:[#allocation2 + $0x78] sm:$0xff]
        %v463 = vld [vmem:[#allocation2 + $0x80] sm:$0xff]
        %v464 = vld [vmem:[#allocation2 + $0x90] sm:$0xff]
        %v465 = vld [vmem:[#allocation2 + $0x98] sm:$0xff]
        %v466 = vld [vmem:[#allocation2 + $0xa8] sm:$0xff]
        %v467 = vld [vmem:[#allocation2 + $0xb0] sm:$0xff]
        %v468 = vld [vmem:[#allocation2 + $0xc0] sm:$0xff]
        %v469 = vld [vmem:[#allocation2 + $0xc8] sm:$0xff]
        %v470 = vld [vmem:[#allocation2 + $0xd8] sm:$0xff]
        %v471 = vld [vmem:[#allocation2 + $0xe0] sm:$0xff]
        %v472 = vld [vmem:[#allocation2 + $0xf0] sm:$0xff]
        %v473 = vld [vmem:[#allocation2 + $0xf8] sm:$0xff]
        %v474 = vld [vmem:[#allocation2 + $0x108] sm:$0xff]
        %v475 = vld [vmem:[#allocation2 + $0x110] sm:$0xff]
        %v476 = vld [vmem:[#allocation2 + $0x120] sm:$0xff]
        %v477 = vld [vmem:[#allocation2 + $0x128] sm:$0xff]
        %v478 = vld [vmem:[#allocation2 + $0x138] sm:$0xff]
        %v479 = vld [vmem:[#allocation2 + $0x140] sm:$0xff]
        %v480 = vld [vmem:[#allocation2 + $0x150] sm:$0xff]
        %v481 = vld [vmem:[#allocation2 + $0x158] sm:$0xff]
        %v482 = vld [vmem:[#allocation2 + $0x168] sm:$0xff]
        %v483 = vld [vmem:[#allocation2 + $0x170] sm:$0xff]
        %v484 = vld [vmem:[%s1] sm:$0x1]
        %486 = vset.pattern.permute.xlu0 0
        %487 = vperm.xlu0 %486, %v452
        %v488 = vpop.permute.xlu0 %487
        %491 = vset.pattern.permute.xlu0 0
        %492 = vperm.xlu0 %491, %v453
        %v493 = vpop.permute.xlu0 %492
        %496 = vset.pattern.permute.xlu0 0
        %497 = vperm.xlu0 %496, %v454
        %v498 = vpop.permute.xlu0 %497
        %501 = vset.pattern.permute.xlu0 0
        %502 = vperm.xlu0 %501, %v455
        %v503 = vpop.permute.xlu0 %502
        %506 = vset.pattern.permute.xlu0 0
        %507 = vperm.xlu0 %506, %v456
        %v508 = vpop.permute.xlu0 %507
        %511 = vset.pattern.permute.xlu0 0
        %512 = vperm.xlu0 %511, %v457
        %v513 = vpop.permute.xlu0 %512
        %516 = vset.pattern.permute.xlu0 0
        %517 = vperm.xlu0 %516, %v458
        %v518 = vpop.permute.xlu0 %517
        %521 = vset.pattern.permute.xlu0 0
        %522 = vperm.xlu0 %521, %v459
        %v523 = vpop.permute.xlu0 %522
        %526 = vset.pattern.permute.xlu0 0
        %527 = vperm.xlu0 %526, %v460
        %v528 = vpop.permute.xlu0 %527
        %531 = vset.pattern.permute.xlu0 0
        %532 = vperm.xlu0 %531, %v461
        %v533 = vpop.permute.xlu0 %532
        %536 = vset.pattern.permute.xlu0 0
        %537 = vperm.xlu0 %536, %v462
        %v538 = vpop.permute.xlu0 %537
        %541 = vset.pattern.permute.xlu0 0
        %542 = vperm.xlu0 %541, %v463
        %v543 = vpop.permute.xlu0 %542
        %546 = vset.pattern.permute.xlu0 0
        %547 = vperm.xlu0 %546, %v464
        %v548 = vpop.permute.xlu0 %547
        %551 = vset.pattern.permute.xlu0 0
        %552 = vperm.xlu0 %551, %v465
        %v553 = vpop.permute.xlu0 %552
        %556 = vset.pattern.permute.xlu0 0
        %557 = vperm.xlu0 %556, %v466
        %v558 = vpop.permute.xlu0 %557
        %561 = vset.pattern.permute.xlu0 0
        %562 = vperm.xlu0 %561, %v467
        %v563 = vpop.permute.xlu0 %562
        %566 = vset.pattern.permute.xlu0 0
        %567 = vperm.xlu0 %566, %v468
        %v568 = vpop.permute.xlu0 %567
        %571 = vset.pattern.permute.xlu0 0
        %572 = vperm.xlu0 %571, %v469
        %v573 = vpop.permute.xlu0 %572
        %576 = vset.pattern.permute.xlu0 0
        %577 = vperm.xlu0 %576, %v470
        %v578 = vpop.permute.xlu0 %577
        %581 = vset.pattern.permute.xlu0 0
        %582 = vperm.xlu0 %581, %v471
        %v583 = vpop.permute.xlu0 %582
        %586 = vset.pattern.permute.xlu0 0
        %587 = vperm.xlu0 %586, %v472
        %v588 = vpop.permute.xlu0 %587
        %591 = vset.pattern.permute.xlu0 0
        %592 = vperm.xlu0 %591, %v473
        %v593 = vpop.permute.xlu0 %592
        %596 = vset.pattern.permute.xlu0 0
        %597 = vperm.xlu0 %596, %v474
        %v598 = vpop.permute.xlu0 %597
        %601 = vset.pattern.permute.xlu0 0
        %602 = vperm.xlu0 %601, %v475
        %v603 = vpop.permute.xlu0 %602
        %606 = vset.pattern.permute.xlu0 0
        %607 = vperm.xlu0 %606, %v476
        %v608 = vpop.permute.xlu0 %607
        %611 = vset.pattern.permute.xlu0 0
        %612 = vperm.xlu0 %611, %v477
        %v613 = vpop.permute.xlu0 %612
        %616 = vset.pattern.permute.xlu0 0
        %617 = vperm.xlu0 %616, %v478
        %v618 = vpop.permute.xlu0 %617
        %621 = vset.pattern.permute.xlu0 0
        %622 = vperm.xlu0 %621, %v479
        %v623 = vpop.permute.xlu0 %622
        %626 = vset.pattern.permute.xlu0 0
        %627 = vperm.xlu0 %626, %v480
        %v628 = vpop.permute.xlu0 %627
        %631 = vset.pattern.permute.xlu0 0
        %632 = vperm.xlu0 %631, %v481
        %v633 = vpop.permute.xlu0 %632
        %636 = vset.pattern.permute.xlu0 0
        %637 = vperm.xlu0 %636, %v482
        %v638 = vpop.permute.xlu0 %637
        %641 = vset.pattern.permute.xlu0 0
        %642 = vperm.xlu0 %641, %v483
        %v643 = vpop.permute.xlu0 %642
        %v645 = vlaneseq
        %v646 = vshrl.u32 %v645, 7
        %v647 = vsub.s32 0, %v646
        %v648 = vrot.slane %v484, %v647
        %v649 = vmul.f32 %v488, %v648
        %v650 = vmul.f32 %v493, %v648
        %v651 = vmul.f32 %v498, %v648
        %v652 = vmul.f32 %v503, %v648
        %v653 = vmul.f32 %v508, %v648
        %v654 = vmul.f32 %v513, %v648
        %v655 = vmul.f32 %v518, %v648
        %v656 = vmul.f32 %v523, %v648
        %v657 = vmul.f32 %v528, %v648
        %v658 = vmul.f32 %v533, %v648
        %v659 = vmul.f32 %v538, %v648
        %v660 = vmul.f32 %v543, %v648
        %v661 = vmul.f32 %v548, %v648
        %v662 = vmul.f32 %v553, %v648
        %v663 = vmul.f32 %v558, %v648
        %v664 = vmul.f32 %v563, %v648
        %v665 = vmul.f32 %v568, %v648
        %v666 = vmul.f32 %v573, %v648
        %v667 = vmul.f32 %v578, %v648
        %v668 = vmul.f32 %v583, %v648
        %v669 = vmul.f32 %v588, %v648
        %v670 = vmul.f32 %v593, %v648
        %v671 = vmul.f32 %v598, %v648
        %v672 = vmul.f32 %v603, %v648
        %v673 = vmul.f32 %v608, %v648
        %v674 = vmul.f32 %v613, %v648
        %v675 = vmul.f32 %v618, %v648
        %v676 = vmul.f32 %v623, %v648
        %v677 = vmul.f32 %v628, %v648
        %v678 = vmul.f32 %v633, %v648
        %v679 = vmul.f32 %v638, %v648
        %v680 = vmul.f32 %v643, %v648
        %v681 = vadd.f32 %v649, 0.0
        %v682 = vadd.f32 %v650, 0.0
        %v683 = vadd.f32 %v651, 0.0
        %v684 = vadd.f32 %v652, 0.0
        %v685 = vadd.f32 %v653, 0.0
        %v686 = vadd.f32 %v654, 0.0
        %v687 = vadd.f32 %v655, 0.0
        %v688 = vadd.f32 %v656, 0.0
        %v689 = vadd.f32 %v657, 0.0
        %v690 = vadd.f32 %v658, 0.0
        %v691 = vadd.f32 %v659, 0.0
        %v692 = vadd.f32 %v660, 0.0
        %v693 = vadd.f32 %v661, 0.0
        %v694 = vadd.f32 %v662, 0.0
        %v695 = vadd.f32 %v663, 0.0
        %v696 = vadd.f32 %v664, 0.0
        %v697 = vadd.f32 %v665, 0.0
        %v698 = vadd.f32 %v666, 0.0
        %v699 = vadd.f32 %v667, 0.0
        %v700 = vadd.f32 %v668, 0.0
        %v701 = vadd.f32 %v669, 0.0
        %v702 = vadd.f32 %v670, 0.0
        %v703 = vadd.f32 %v671, 0.0
        %v704 = vadd.f32 %v672, 0.0
        %v705 = vadd.f32 %v673, 0.0
        %v706 = vadd.f32 %v674, 0.0
        %v707 = vadd.f32 %v675, 0.0
        %v708 = vadd.f32 %v676, 0.0
        %v709 = vadd.f32 %v677, 0.0
        %v710 = vadd.f32 %v678, 0.0
        %v711 = vadd.f32 %v679, 0.0
        %v712 = vadd.f32 %v680, 0.0
        %v713 = vld [vmem:[#allocation2 + $0x1] sm:$0xff]
        %v714 = vld [vmem:[#allocation2 + $0x9] sm:$0xff]
        %v715 = vld [vmem:[#allocation2 + $0x19] sm:$0xff]
        %v716 = vld [vmem:[#allocation2 + $0x21] sm:$0xff]
        %v717 = vld [vmem:[#allocation2 + $0x31] sm:$0xff]
        %v718 = vld [vmem:[#allocation2 + $0x39] sm:$0xff]
        %v719 = vld [vmem:[#allocation2 + $0x49] sm:$0xff]
        %v720 = vld [vmem:[#allocation2 + $0x51] sm:$0xff]
        %v721 = vld [vmem:[#allocation2 + $0x61] sm:$0xff]
        %v722 = vld [vmem:[#allocation2 + $0x69] sm:$0xff]
        %v723 = vld [vmem:[#allocation2 + $0x79] sm:$0xff]
        %v724 = vld [vmem:[#allocation2 + $0x81] sm:$0xff]
        %v725 = vld [vmem:[#allocation2 + $0x91] sm:$0xff]
        %v726 = vld [vmem:[#allocation2 + $0x99] sm:$0xff]
        %v727 = vld [vmem:[#allocation2 + $0xa9] sm:$0xff]
        %v728 = vld [vmem:[#allocation2 + $0xb1] sm:$0xff]
        %v729 = vld [vmem:[#allocation2 + $0xc1] sm:$0xff]
        %v730 = vld [vmem:[#allocation2 + $0xc9] sm:$0xff]
        %v731 = vld [vmem:[#allocation2 + $0xd9] sm:$0xff]
        %v732 = vld [vmem:[#allocation2 + $0xe1] sm:$0xff]
        %v733 = vld [vmem:[#allocation2 + $0xf1] sm:$0xff]
        %v734 = vld [vmem:[#allocation2 + $0xf9] sm:$0xff]
        %v735 = vld [vmem:[#allocation2 + $0x109] sm:$0xff]
        %v736 = vld [vmem:[#allocation2 + $0x111] sm:$0xff]
        %v737 = vld [vmem:[#allocation2 + $0x121] sm:$0xff]
        %v738 = vld [vmem:[#allocation2 + $0x129] sm:$0xff]
        %v739 = vld [vmem:[#allocation2 + $0x139] sm:$0xff]
        %v740 = vld [vmem:[#allocation2 + $0x141] sm:$0xff]
        %v741 = vld [vmem:[#allocation2 + $0x151] sm:$0xff]
        %v742 = vld [vmem:[#allocation2 + $0x159] sm:$0xff]
        %v743 = vld [vmem:[#allocation2 + $0x169] sm:$0xff]
        %v744 = vld [vmem:[#allocation2 + $0x171] sm:$0xff]
        %v745 = vld [vmem:[%s1 + $0x1] sm:$0x1]
        %747 = vset.pattern.permute.xlu0 0
        %748 = vperm.xlu0 %747, %v713
        %v749 = vpop.permute.xlu0 %748
        %752 = vset.pattern.permute.xlu0 0
        %753 = vperm.xlu0 %752, %v714
        %v754 = vpop.permute.xlu0 %753
        %757 = vset.pattern.permute.xlu0 0
        %758 = vperm.xlu0 %757, %v715
        %v759 = vpop.permute.xlu0 %758
        %762 = vset.pattern.permute.xlu0 0
        %763 = vperm.xlu0 %762, %v716
        %v764 = vpop.permute.xlu0 %763
        %767 = vset.pattern.permute.xlu0 0
        %768 = vperm.xlu0 %767, %v717
        %v769 = vpop.permute.xlu0 %768
        %772 = vset.pattern.permute.xlu0 0
        %773 = vperm.xlu0 %772, %v718
        %v774 = vpop.permute.xlu0 %773
        %777 = vset.pattern.permute.xlu0 0
        %778 = vperm.xlu0 %777, %v719
        %v779 = vpop.permute.xlu0 %778
        %782 = vset.pattern.permute.xlu0 0
        %783 = vperm.xlu0 %782, %v720
        %v784 = vpop.permute.xlu0 %783
        %787 = vset.pattern.permute.xlu0 0
        %788 = vperm.xlu0 %787, %v721
        %v789 = vpop.permute.xlu0 %788
        %792 = vset.pattern.permute.xlu0 0
        %793 = vperm.xlu0 %792, %v722
        %v794 = vpop.permute.xlu0 %793
        %797 = vset.pattern.permute.xlu0 0
        %798 = vperm.xlu0 %797, %v723
        %v799 = vpop.permute.xlu0 %798
        %802 = vset.pattern.permute.xlu0 0
        %803 = vperm.xlu0 %802, %v724
        %v804 = vpop.permute.xlu0 %803
        %807 = vset.pattern.permute.xlu0 0
        %808 = vperm.xlu0 %807, %v725
        %v809 = vpop.permute.xlu0 %808
        %812 = vset.pattern.permute.xlu0 0
        %813 = vperm.xlu0 %812, %v726
        %v814 = vpop.permute.xlu0 %813
        %817 = vset.pattern.permute.xlu0 0
        %818 = vperm.xlu0 %817, %v727
        %v819 = vpop.permute.xlu0 %818
        %822 = vset.pattern.permute.xlu0 0
        %823 = vperm.xlu0 %822, %v728
        %v824 = vpop.permute.xlu0 %823
        %827 = vset.pattern.permute.xlu0 0
        %828 = vperm.xlu0 %827, %v729
        %v829 = vpop.permute.xlu0 %828
        %832 = vset.pattern.permute.xlu0 0
        %833 = vperm.xlu0 %832, %v730
        %v834 = vpop.permute.xlu0 %833
        %837 = vset.pattern.permute.xlu0 0
        %838 = vperm.xlu0 %837, %v731
        %v839 = vpop.permute.xlu0 %838
        %842 = vset.pattern.permute.xlu0 0
        %843 = vperm.xlu0 %842, %v732
        %v844 = vpop.permute.xlu0 %843
        %847 = vset.pattern.permute.xlu0 0
        %848 = vperm.xlu0 %847, %v733
        %v849 = vpop.permute.xlu0 %848
        %852 = vset.pattern.permute.xlu0 0
        %853 = vperm.xlu0 %852, %v734
        %v854 = vpop.permute.xlu0 %853
        %857 = vset.pattern.permute.xlu0 0
        %858 = vperm.xlu0 %857, %v735
        %v859 = vpop.permute.xlu0 %858
        %862 = vset.pattern.permute.xlu0 0
        %863 = vperm.xlu0 %862, %v736
        %v864 = vpop.permute.xlu0 %863
        %867 = vset.pattern.permute.xlu0 0
        %868 = vperm.xlu0 %867, %v737
        %v869 = vpop.permute.xlu0 %868
        %872 = vset.pattern.permute.xlu0 0
        %873 = vperm.xlu0 %872, %v738
        %v874 = vpop.permute.xlu0 %873
        %877 = vset.pattern.permute.xlu0 0
        %878 = vperm.xlu0 %877, %v739
        %v879 = vpop.permute.xlu0 %878
        %882 = vset.pattern.permute.xlu0 0
        %883 = vperm.xlu0 %882, %v740
        %v884 = vpop.permute.xlu0 %883
        %887 = vset.pattern.permute.xlu0 0
        %888 = vperm.xlu0 %887, %v741
        %v889 = vpop.permute.xlu0 %888
        %892 = vset.pattern.permute.xlu0 0
        %893 = vperm.xlu0 %892, %v742
        %v894 = vpop.permute.xlu0 %893
        %897 = vset.pattern.permute.xlu0 0
        %898 = vperm.xlu0 %897, %v743
        %v899 = vpop.permute.xlu0 %898
        %902 = vset.pattern.permute.xlu0 0
        %903 = vperm.xlu0 %902, %v744
        %v904 = vpop.permute.xlu0 %903
        %v906 = vlaneseq
        %v907 = vshrl.u32 %v906, 7
        %v908 = vsub.s32 0, %v907
        %v909 = vrot.slane %v745, %v908
        %v910 = vmul.f32 %v749, %v909
        %v911 = vmul.f32 %v754, %v909
        %v912 = vmul.f32 %v759, %v909
        %v913 = vmul.f32 %v764, %v909
        %v914 = vmul.f32 %v769, %v909
        %v915 = vmul.f32 %v774, %v909
        %v916 = vmul.f32 %v779, %v909
        %v917 = vmul.f32 %v784, %v909
        %v918 = vmul.f32 %v789, %v909
        %v919 = vmul.f32 %v794, %v909
        %v920 = vmul.f32 %v799, %v909
        %v921 = vmul.f32 %v804, %v909
        %v922 = vmul.f32 %v809, %v909
        %v923 = vmul.f32 %v814, %v909
        %v924 = vmul.f32 %v819, %v909
        %v925 = vmul.f32 %v824, %v909
        %v926 = vmul.f32 %v829, %v909
        %v927 = vmul.f32 %v834, %v909
        %v928 = vmul.f32 %v839, %v909
        %v929 = vmul.f32 %v844, %v909
        %v930 = vmul.f32 %v849, %v909
        %v931 = vmul.f32 %v854, %v909
        %v932 = vmul.f32 %v859, %v909
        %v933 = vmul.f32 %v864, %v909
        %v934 = vmul.f32 %v869, %v909
        %v935 = vmul.f32 %v874, %v909
        %v936 = vmul.f32 %v879, %v909
        %v937 = vmul.f32 %v884, %v909
        %v938 = vmul.f32 %v889, %v909
        %v939 = vmul.f32 %v894, %v909
        %v940 = vmul.f32 %v899, %v909
        %v941 = vmul.f32 %v904, %v909
        %v942 = vadd.f32 %v681, %v910
        %v943 = vadd.f32 %v682, %v911
        %v944 = vadd.f32 %v683, %v912
        %v945 = vadd.f32 %v684, %v913
        %v946 = vadd.f32 %v685, %v914
        %v947 = vadd.f32 %v686, %v915
        %v948 = vadd.f32 %v687, %v916
        %v949 = vadd.f32 %v688, %v917
        %v950 = vadd.f32 %v689, %v918
        %v951 = vadd.f32 %v690, %v919
        %v952 = vadd.f32 %v691, %v920
        %v953 = vadd.f32 %v692, %v921
        %v954 = vadd.f32 %v693, %v922
        %v955 = vadd.f32 %v694, %v923
        %v956 = vadd.f32 %v695, %v924
        %v957 = vadd.f32 %v696, %v925
        %v958 = vadd.f32 %v697, %v926
        %v959 = vadd.f32 %v698, %v927
        %v960 = vadd.f32 %v699, %v928
        %v961 = vadd.f32 %v700, %v929
        %v962 = vadd.f32 %v701, %v930
        %v963 = vadd.f32 %v702, %v931
        %v964 = vadd.f32 %v703, %v932
        %v965 = vadd.f32 %v704, %v933
        %v966 = vadd.f32 %v705, %v934
        %v967 = vadd.f32 %v706, %v935
        %v968 = vadd.f32 %v707, %v936
        %v969 = vadd.f32 %v708, %v937
        %v970 = vadd.f32 %v709, %v938
        %v971 = vadd.f32 %v710, %v939
        %v972 = vadd.f32 %v711, %v940
        %v973 = vadd.f32 %v712, %v941
        %v974 = vld [vmem:[#allocation2 + $0x2] sm:$0xff]
        %v975 = vld [vmem:[#allocation2 + $0xa] sm:$0xff]
        %v976 = vld [vmem:[#allocation2 + $0x1a] sm:$0xff]
        %v977 = vld [vmem:[#allocation2 + $0x22] sm:$0xff]
        %v978 = vld [vmem:[#allocation2 + $0x32] sm:$0xff]
        %v979 = vld [vmem:[#allocation2 + $0x3a] sm:$0xff]
        %v980 = vld [vmem:[#allocation2 + $0x4a] sm:$0xff]
        %v981 = vld [vmem:[#allocation2 + $0x52] sm:$0xff]
        %v982 = vld [vmem:[#allocation2 + $0x62] sm:$0xff]
        %v983 = vld [vmem:[#allocation2 + $0x6a] sm:$0xff]
        %v984 = vld [vmem:[#allocation2 + $0x7a] sm:$0xff]
        %v985 = vld [vmem:[#allocation2 + $0x82] sm:$0xff]
        %v986 = vld [vmem:[#allocation2 + $0x92] sm:$0xff]
        %v987 = vld [vmem:[#allocation2 + $0x9a] sm:$0xff]
        %v988 = vld [vmem:[#allocation2 + $0xaa] sm:$0xff]
        %v989 = vld [vmem:[#allocation2 + $0xb2] sm:$0xff]
        %v990 = vld [vmem:[#allocation2 + $0xc2] sm:$0xff]
        %v991 = vld [vmem:[#allocation2 + $0xca] sm:$0xff]
        %v992 = vld [vmem:[#allocation2 + $0xda] sm:$0xff]
        %v993 = vld [vmem:[#allocation2 + $0xe2] sm:$0xff]
        %v994 = vld [vmem:[#allocation2 + $0xf2] sm:$0xff]
        %v995 = vld [vmem:[#allocation2 + $0xfa] sm:$0xff]
        %v996 = vld [vmem:[#allocation2 + $0x10a] sm:$0xff]
        %v997 = vld [vmem:[#allocation2 + $0x112] sm:$0xff]
        %v998 = vld [vmem:[#allocation2 + $0x122] sm:$0xff]
        %v999 = vld [vmem:[#allocation2 + $0x12a] sm:$0xff]
        %v1000 = vld [vmem:[#allocation2 + $0x13a] sm:$0xff]
        %v1001 = vld [vmem:[#allocation2 + $0x142] sm:$0xff]
        %v1002 = vld [vmem:[#allocation2 + $0x152] sm:$0xff]
        %v1003 = vld [vmem:[#allocation2 + $0x15a] sm:$0xff]
        %v1004 = vld [vmem:[#allocation2 + $0x16a] sm:$0xff]
        %v1005 = vld [vmem:[#allocation2 + $0x172] sm:$0xff]
        %v1006 = vld [vmem:[%s1 + $0x2] sm:$0x1]
        %1008 = vset.pattern.permute.xlu0 0
        %1009 = vperm.xlu0 %1008, %v974
        %v1010 = vpop.permute.xlu0 %1009
        %1013 = vset.pattern.permute.xlu0 0
        %1014 = vperm.xlu0 %1013, %v975
        %v1015 = vpop.permute.xlu0 %1014
        %1018 = vset.pattern.permute.xlu0 0
        %1019 = vperm.xlu0 %1018, %v976
        %v1020 = vpop.permute.xlu0 %1019
        %1023 = vset.pattern.permute.xlu0 0
        %1024 = vperm.xlu0 %1023, %v977
        %v1025 = vpop.permute.xlu0 %1024
        %1028 = vset.pattern.permute.xlu0 0
        %1029 = vperm.xlu0 %1028, %v978
        %v1030 = vpop.permute.xlu0 %1029
        %1033 = vset.pattern.permute.xlu0 0
        %1034 = vperm.xlu0 %1033, %v979
        %v1035 = vpop.permute.xlu0 %1034
        %1038 = vset.pattern.permute.xlu0 0
        %1039 = vperm.xlu0 %1038, %v980
        %v1040 = vpop.permute.xlu0 %1039
        %1043 = vset.pattern.permute.xlu0 0
        %1044 = vperm.xlu0 %1043, %v981
        %v1045 = vpop.permute.xlu0 %1044
        %1048 = vset.pattern.permute.xlu0 0
        %1049 = vperm.xlu0 %1048, %v982
        %v1050 = vpop.permute.xlu0 %1049
        %1053 = vset.pattern.permute.xlu0 0
        %1054 = vperm.xlu0 %1053, %v983
        %v1055 = vpop.permute.xlu0 %1054
        %1058 = vset.pattern.permute.xlu0 0
        %1059 = vperm.xlu0 %1058, %v984
        %v1060 = vpop.permute.xlu0 %1059
        %1063 = vset.pattern.permute.xlu0 0
        %1064 = vperm.xlu0 %1063, %v985
        %v1065 = vpop.permute.xlu0 %1064
        %1068 = vset.pattern.permute.xlu0 0
        %1069 = vperm.xlu0 %1068, %v986
        %v1070 = vpop.permute.xlu0 %1069
        %1073 = vset.pattern.permute.xlu0 0
        %1074 = vperm.xlu0 %1073, %v987
        %v1075 = vpop.permute.xlu0 %1074
        %1078 = vset.pattern.permute.xlu0 0
        %1079 = vperm.xlu0 %1078, %v988
        %v1080 = vpop.permute.xlu0 %1079
        %1083 = vset.pattern.permute.xlu0 0
        %1084 = vperm.xlu0 %1083, %v989
        %v1085 = vpop.permute.xlu0 %1084
        %1088 = vset.pattern.permute.xlu0 0
        %1089 = vperm.xlu0 %1088, %v990
        %v1090 = vpop.permute.xlu0 %1089
        %1093 = vset.pattern.permute.xlu0 0
        %1094 = vperm.xlu0 %1093, %v991
        %v1095 = vpop.permute.xlu0 %1094
        %1098 = vset.pattern.permute.xlu0 0
        %1099 = vperm.xlu0 %1098, %v992
        %v1100 = vpop.permute.xlu0 %1099
        %1103 = vset.pattern.permute.xlu0 0
        %1104 = vperm.xlu0 %1103, %v993
        %v1105 = vpop.permute.xlu0 %1104
        %1108 = vset.pattern.permute.xlu0 0
        %1109 = vperm.xlu0 %1108, %v994
        %v1110 = vpop.permute.xlu0 %1109
        %1113 = vset.pattern.permute.xlu0 0
        %1114 = vperm.xlu0 %1113, %v995
        %v1115 = vpop.permute.xlu0 %1114
        %1118 = vset.pattern.permute.xlu0 0
        %1119 = vperm.xlu0 %1118, %v996
        %v1120 = vpop.permute.xlu0 %1119
        %1123 = vset.pattern.permute.xlu0 0
        %1124 = vperm.xlu0 %1123, %v997
        %v1125 = vpop.permute.xlu0 %1124
        %1128 = vset.pattern.permute.xlu0 0
        %1129 = vperm.xlu0 %1128, %v998
        %v1130 = vpop.permute.xlu0 %1129
        %1133 = vset.pattern.permute.xlu0 0
        %1134 = vperm.xlu0 %1133, %v999
        %v1135 = vpop.permute.xlu0 %1134
        %1138 = vset.pattern.permute.xlu0 0
        %1139 = vperm.xlu0 %1138, %v1000
        %v1140 = vpop.permute.xlu0 %1139
        %1143 = vset.pattern.permute.xlu0 0
        %1144 = vperm.xlu0 %1143, %v1001
        %v1145 = vpop.permute.xlu0 %1144
        %1148 = vset.pattern.permute.xlu0 0
        %1149 = vperm.xlu0 %1148, %v1002
        %v1150 = vpop.permute.xlu0 %1149
        %1153 = vset.pattern.permute.xlu0 0
        %1154 = vperm.xlu0 %1153, %v1003
        %v1155 = vpop.permute.xlu0 %1154
        %1158 = vset.pattern.permute.xlu0 0
        %1159 = vperm.xlu0 %1158, %v1004
        %v1160 = vpop.permute.xlu0 %1159
        %1163 = vset.pattern.permute.xlu0 0
        %1164 = vperm.xlu0 %1163, %v1005
        %v1165 = vpop.permute.xlu0 %1164
        %v1167 = vlaneseq
        %v1168 = vshrl.u32 %v1167, 7
        %v1169 = vsub.s32 0, %v1168
        %v1170 = vrot.slane %v1006, %v1169
        %v1171 = vmul.f32 %v1010, %v1170
        %v1172 = vmul.f32 %v1015, %v1170
        %v1173 = vmul.f32 %v1020, %v1170
        %v1174 = vmul.f32 %v1025, %v1170
        %v1175 = vmul.f32 %v1030, %v1170
        %v1176 = vmul.f32 %v1035, %v1170
        %v1177 = vmul.f32 %v1040, %v1170
        %v1178 = vmul.f32 %v1045, %v1170
        %v1179 = vmul.f32 %v1050, %v1170
        %v1180 = vmul.f32 %v1055, %v1170
        %v1181 = vmul.f32 %v1060, %v1170
        %v1182 = vmul.f32 %v1065, %v1170
        %v1183 = vmul.f32 %v1070, %v1170
        %v1184 = vmul.f32 %v1075, %v1170
        %v1185 = vmul.f32 %v1080, %v1170
        %v1186 = vmul.f32 %v1085, %v1170
        %v1187 = vmul.f32 %v1090, %v1170
        %v1188 = vmul.f32 %v1095, %v1170
        %v1189 = vmul.f32 %v1100, %v1170
        %v1190 = vmul.f32 %v1105, %v1170
        %v1191 = vmul.f32 %v1110, %v1170
        %v1192 = vmul.f32 %v1115, %v1170
        %v1193 = vmul.f32 %v1120, %v1170
        %v1194 = vmul.f32 %v1125, %v1170
        %v1195 = vmul.f32 %v1130, %v1170
        %v1196 = vmul.f32 %v1135, %v1170
        %v1197 = vmul.f32 %v1140, %v1170
        %v1198 = vmul.f32 %v1145, %v1170
        %v1199 = vmul.f32 %v1150, %v1170
        %v1200 = vmul.f32 %v1155, %v1170
        %v1201 = vmul.f32 %v1160, %v1170
        %v1202 = vmul.f32 %v1165, %v1170
        %v1203 = vadd.f32 %v942, %v1171
        %v1204 = vadd.f32 %v943, %v1172
        %v1205 = vadd.f32 %v944, %v1173
        %v1206 = vadd.f32 %v945, %v1174
        %v1207 = vadd.f32 %v946, %v1175
        %v1208 = vadd.f32 %v947, %v1176
        %v1209 = vadd.f32 %v948, %v1177
        %v1210 = vadd.f32 %v949, %v1178
        %v1211 = vadd.f32 %v950, %v1179
        %v1212 = vadd.f32 %v951, %v1180
        %v1213 = vadd.f32 %v952, %v1181
        %v1214 = vadd.f32 %v953, %v1182
        %v1215 = vadd.f32 %v954, %v1183
        %v1216 = vadd.f32 %v955, %v1184
        %v1217 = vadd.f32 %v956, %v1185
        %v1218 = vadd.f32 %v957, %v1186
        %v1219 = vadd.f32 %v958, %v1187
        %v1220 = vadd.f32 %v959, %v1188
        %v1221 = vadd.f32 %v960, %v1189
        %v1222 = vadd.f32 %v961, %v1190
        %v1223 = vadd.f32 %v962, %v1191
        %v1224 = vadd.f32 %v963, %v1192
        %v1225 = vadd.f32 %v964, %v1193
        %v1226 = vadd.f32 %v965, %v1194
        %v1227 = vadd.f32 %v966, %v1195
        %v1228 = vadd.f32 %v967, %v1196
        %v1229 = vadd.f32 %v968, %v1197
        %v1230 = vadd.f32 %v969, %v1198
        %v1231 = vadd.f32 %v970, %v1199
        %v1232 = vadd.f32 %v971, %v1200
        %v1233 = vadd.f32 %v972, %v1201
        %v1234 = vadd.f32 %v973, %v1202
        %v1235 = vld [vmem:[%s419] sm:$0xff]
        %v1236 = vld [vmem:[%s419 + $0x8] sm:$0xff]
        %v1237 = vld [vmem:[%s419 + $0x18] sm:$0xff]
        %v1238 = vld [vmem:[%s419 + $0x20] sm:$0xff]
        %v1239 = vld [vmem:[%s419 + $0x30] sm:$0xff]
        %v1240 = vld [vmem:[%s419 + $0x38] sm:$0xff]
        %v1241 = vld [vmem:[%s419 + $0x48] sm:$0xff]
        %v1242 = vld [vmem:[%s419 + $0x50] sm:$0xff]
        %v1243 = vld [vmem:[%s419 + $0x60] sm:$0xff]
        %v1244 = vld [vmem:[%s419 + $0x68] sm:$0xff]
        %v1245 = vld [vmem:[%s419 + $0x78] sm:$0xff]
        %v1246 = vld [vmem:[%s419 + $0x80] sm:$0xff]
        %v1247 = vld [vmem:[%s419 + $0x90] sm:$0xff]
        %v1248 = vld [vmem:[%s419 + $0x98] sm:$0xff]
        %v1249 = vld [vmem:[%s419 + $0xa8] sm:$0xff]
        %v1250 = vld [vmem:[%s419 + $0xb0] sm:$0xff]
        %v1251 = vld [vmem:[%s419 + $0xc0] sm:$0xff]
        %v1252 = vld [vmem:[%s419 + $0xc8] sm:$0xff]
        %v1253 = vld [vmem:[%s419 + $0xd8] sm:$0xff]
        %v1254 = vld [vmem:[%s419 + $0xe0] sm:$0xff]
        %v1255 = vld [vmem:[%s419 + $0xf0] sm:$0xff]
        %v1256 = vld [vmem:[%s419 + $0xf8] sm:$0xff]
        %v1257 = vld [vmem:[%s419 + $0x108] sm:$0xff]
        %v1258 = vld [vmem:[%s419 + $0x110] sm:$0xff]
        %v1259 = vld [vmem:[%s419 + $0x120] sm:$0xff]
        %v1260 = vld [vmem:[%s419 + $0x128] sm:$0xff]
        %v1261 = vld [vmem:[%s419 + $0x138] sm:$0xff]
        %v1262 = vld [vmem:[%s419 + $0x140] sm:$0xff]
        %v1263 = vld [vmem:[%s419 + $0x150] sm:$0xff]
        %v1264 = vld [vmem:[%s419 + $0x158] sm:$0xff]
        %v1265 = vld [vmem:[%s419 + $0x168] sm:$0xff]
        %v1266 = vld [vmem:[%s419 + $0x170] sm:$0xff]
        %v1267 = vld [vmem:[%s1 + $0x3] sm:$0x1]
        %1269 = vset.pattern.permute.xlu0 0
        %1270 = vperm.xlu0 %1269, %v1235
        %v1271 = vpop.permute.xlu0 %1270
        %1274 = vset.pattern.permute.xlu0 0
        %1275 = vperm.xlu0 %1274, %v1236
        %v1276 = vpop.permute.xlu0 %1275
        %1279 = vset.pattern.permute.xlu0 0
        %1280 = vperm.xlu0 %1279, %v1237
        %v1281 = vpop.permute.xlu0 %1280
        %1284 = vset.pattern.permute.xlu0 0
        %1285 = vperm.xlu0 %1284, %v1238
        %v1286 = vpop.permute.xlu0 %1285
        %1289 = vset.pattern.permute.xlu0 0
        %1290 = vperm.xlu0 %1289, %v1239
        %v1291 = vpop.permute.xlu0 %1290
        %1294 = vset.pattern.permute.xlu0 0
        %1295 = vperm.xlu0 %1294, %v1240
        %v1296 = vpop.permute.xlu0 %1295
        %1299 = vset.pattern.permute.xlu0 0
        %1300 = vperm.xlu0 %1299, %v1241
        %v1301 = vpop.permute.xlu0 %1300
        %1304 = vset.pattern.permute.xlu0 0
        %1305 = vperm.xlu0 %1304, %v1242
        %v1306 = vpop.permute.xlu0 %1305
        %1309 = vset.pattern.permute.xlu0 0
        %1310 = vperm.xlu0 %1309, %v1243
        %v1311 = vpop.permute.xlu0 %1310
        %1314 = vset.pattern.permute.xlu0 0
        %1315 = vperm.xlu0 %1314, %v1244
        %v1316 = vpop.permute.xlu0 %1315
        %1319 = vset.pattern.permute.xlu0 0
        %1320 = vperm.xlu0 %1319, %v1245
        %v1321 = vpop.permute.xlu0 %1320
        %1324 = vset.pattern.permute.xlu0 0
        %1325 = vperm.xlu0 %1324, %v1246
        %v1326 = vpop.permute.xlu0 %1325
        %1329 = vset.pattern.permute.xlu0 0
        %1330 = vperm.xlu0 %1329, %v1247
        %v1331 = vpop.permute.xlu0 %1330
        %1334 = vset.pattern.permute.xlu0 0
        %1335 = vperm.xlu0 %1334, %v1248
        %v1336 = vpop.permute.xlu0 %1335
        %1339 = vset.pattern.permute.xlu0 0
        %1340 = vperm.xlu0 %1339, %v1249
        %v1341 = vpop.permute.xlu0 %1340
        %1344 = vset.pattern.permute.xlu0 0
        %1345 = vperm.xlu0 %1344, %v1250
        %v1346 = vpop.permute.xlu0 %1345
        %1349 = vset.pattern.permute.xlu0 0
        %1350 = vperm.xlu0 %1349, %v1251
        %v1351 = vpop.permute.xlu0 %1350
        %1354 = vset.pattern.permute.xlu0 0
        %1355 = vperm.xlu0 %1354, %v1252
        %v1356 = vpop.permute.xlu0 %1355
        %1359 = vset.pattern.permute.xlu0 0
        %1360 = vperm.xlu0 %1359, %v1253
        %v1361 = vpop.permute.xlu0 %1360
        %1364 = vset.pattern.permute.xlu0 0
        %1365 = vperm.xlu0 %1364, %v1254
        %v1366 = vpop.permute.xlu0 %1365
        %1369 = vset.pattern.permute.xlu0 0
        %1370 = vperm.xlu0 %1369, %v1255
        %v1371 = vpop.permute.xlu0 %1370
        %1374 = vset.pattern.permute.xlu0 0
        %1375 = vperm.xlu0 %1374, %v1256
        %v1376 = vpop.permute.xlu0 %1375
        %1379 = vset.pattern.permute.xlu0 0
        %1380 = vperm.xlu0 %1379, %v1257
        %v1381 = vpop.permute.xlu0 %1380
        %1384 = vset.pattern.permute.xlu0 0
        %1385 = vperm.xlu0 %1384, %v1258
        %v1386 = vpop.permute.xlu0 %1385
        %1389 = vset.pattern.permute.xlu0 0
        %1390 = vperm.xlu0 %1389, %v1259
        %v1391 = vpop.permute.xlu0 %1390
        %1394 = vset.pattern.permute.xlu0 0
        %1395 = vperm.xlu0 %1394, %v1260
        %v1396 = vpop.permute.xlu0 %1395
        %1399 = vset.pattern.permute.xlu0 0
        %1400 = vperm.xlu0 %1399, %v1261
        %v1401 = vpop.permute.xlu0 %1400
        %1404 = vset.pattern.permute.xlu0 0
        %1405 = vperm.xlu0 %1404, %v1262
        %v1406 = vpop.permute.xlu0 %1405
        %1409 = vset.pattern.permute.xlu0 0
        %1410 = vperm.xlu0 %1409, %v1263
        %v1411 = vpop.permute.xlu0 %1410
        %1414 = vset.pattern.permute.xlu0 0
        %1415 = vperm.xlu0 %1414, %v1264
        %v1416 = vpop.permute.xlu0 %1415
        %1419 = vset.pattern.permute.xlu0 0
        %1420 = vperm.xlu0 %1419, %v1265
        %v1421 = vpop.permute.xlu0 %1420
        %1424 = vset.pattern.permute.xlu0 0
        %1425 = vperm.xlu0 %1424, %v1266
        %v1426 = vpop.permute.xlu0 %1425
        %v1428 = vlaneseq
        %v1429 = vshrl.u32 %v1428, 7
        %v1430 = vsub.s32 0, %v1429
        %v1431 = vrot.slane %v1267, %v1430
        %v1432 = vmul.f32 %v1271, %v1431
        %v1433 = vmul.f32 %v1276, %v1431
        %v1434 = vmul.f32 %v1281, %v1431
        %v1435 = vmul.f32 %v1286, %v1431
        %v1436 = vmul.f32 %v1291, %v1431
        %v1437 = vmul.f32 %v1296, %v1431
        %v1438 = vmul.f32 %v1301, %v1431
        %v1439 = vmul.f32 %v1306, %v1431
        %v1440 = vmul.f32 %v1311, %v1431
        %v1441 = vmul.f32 %v1316, %v1431
        %v1442 = vmul.f32 %v1321, %v1431
        %v1443 = vmul.f32 %v1326, %v1431
        %v1444 = vmul.f32 %v1331, %v1431
        %v1445 = vmul.f32 %v1336, %v1431
        %v1446 = vmul.f32 %v1341, %v1431
        %v1447 = vmul.f32 %v1346, %v1431
        %v1448 = vmul.f32 %v1351, %v1431
        %v1449 = vmul.f32 %v1356, %v1431
        %v1450 = vmul.f32 %v1361, %v1431
        %v1451 = vmul.f32 %v1366, %v1431
        %v1452 = vmul.f32 %v1371, %v1431
        %v1453 = vmul.f32 %v1376, %v1431
        %v1454 = vmul.f32 %v1381, %v1431
        %v1455 = vmul.f32 %v1386, %v1431
        %v1456 = vmul.f32 %v1391, %v1431
        %v1457 = vmul.f32 %v1396, %v1431
        %v1458 = vmul.f32 %v1401, %v1431
        %v1459 = vmul.f32 %v1406, %v1431
        %v1460 = vmul.f32 %v1411, %v1431
        %v1461 = vmul.f32 %v1416, %v1431
        %v1462 = vmul.f32 %v1421, %v1431
        %v1463 = vmul.f32 %v1426, %v1431
        %v1464 = vadd.f32 %v1203, %v1432
        %v1465 = vadd.f32 %v1204, %v1433
        %v1466 = vadd.f32 %v1205, %v1434
        %v1467 = vadd.f32 %v1206, %v1435
        %v1468 = vadd.f32 %v1207, %v1436
        %v1469 = vadd.f32 %v1208, %v1437
        %v1470 = vadd.f32 %v1209, %v1438
        %v1471 = vadd.f32 %v1210, %v1439
        %v1472 = vadd.f32 %v1211, %v1440
        %v1473 = vadd.f32 %v1212, %v1441
        %v1474 = vadd.f32 %v1213, %v1442
        %v1475 = vadd.f32 %v1214, %v1443
        %v1476 = vadd.f32 %v1215, %v1444
        %v1477 = vadd.f32 %v1216, %v1445
        %v1478 = vadd.f32 %v1217, %v1446
        %v1479 = vadd.f32 %v1218, %v1447
        %v1480 = vadd.f32 %v1219, %v1448
        %v1481 = vadd.f32 %v1220, %v1449
        %v1482 = vadd.f32 %v1221, %v1450
        %v1483 = vadd.f32 %v1222, %v1451
        %v1484 = vadd.f32 %v1223, %v1452
        %v1485 = vadd.f32 %v1224, %v1453
        %v1486 = vadd.f32 %v1225, %v1454
        %v1487 = vadd.f32 %v1226, %v1455
        %v1488 = vadd.f32 %v1227, %v1456
        %v1489 = vadd.f32 %v1228, %v1457
        %v1490 = vadd.f32 %v1229, %v1458
        %v1491 = vadd.f32 %v1230, %v1459
        %v1492 = vadd.f32 %v1231, %v1460
        %v1493 = vadd.f32 %v1232, %v1461
        %v1494 = vadd.f32 %v1233, %v1462
        %v1495 = vadd.f32 %v1234, %v1463
        %v1496 = vld [vmem:[%s419 + $0x1] sm:$0xff]
        %v1497 = vld [vmem:[%s419 + $0x9] sm:$0xff]
        %v1498 = vld [vmem:[%s419 + $0x19] sm:$0xff]
        %v1499 = vld [vmem:[%s419 + $0x21] sm:$0xff]
        %v1500 = vld [vmem:[%s419 + $0x31] sm:$0xff]
        %v1501 = vld [vmem:[%s419 + $0x39] sm:$0xff]
        %v1502 = vld [vmem:[%s419 + $0x49] sm:$0xff]
        %v1503 = vld [vmem:[%s419 + $0x51] sm:$0xff]
        %v1504 = vld [vmem:[%s419 + $0x61] sm:$0xff]
        %v1505 = vld [vmem:[%s419 + $0x69] sm:$0xff]
        %v1506 = vld [vmem:[%s419 + $0x79] sm:$0xff]
        %v1507 = vld [vmem:[%s419 + $0x81] sm:$0xff]
        %v1508 = vld [vmem:[%s419 + $0x91] sm:$0xff]
        %v1509 = vld [vmem:[%s419 + $0x99] sm:$0xff]
        %v1510 = vld [vmem:[%s419 + $0xa9] sm:$0xff]
        %v1511 = vld [vmem:[%s419 + $0xb1] sm:$0xff]
        %v1512 = vld [vmem:[%s419 + $0xc1] sm:$0xff]
        %v1513 = vld [vmem:[%s419 + $0xc9] sm:$0xff]
        %v1514 = vld [vmem:[%s419 + $0xd9] sm:$0xff]
        %v1515 = vld [vmem:[%s419 + $0xe1] sm:$0xff]
        %v1516 = vld [vmem:[%s419 + $0xf1] sm:$0xff]
        %v1517 = vld [vmem:[%s419 + $0xf9] sm:$0xff]
        %v1518 = vld [vmem:[%s419 + $0x109] sm:$0xff]
        %v1519 = vld [vmem:[%s419 + $0x111] sm:$0xff]
        %v1520 = vld [vmem:[%s419 + $0x121] sm:$0xff]
        %v1521 = vld [vmem:[%s419 + $0x129] sm:$0xff]
        %v1522 = vld [vmem:[%s419 + $0x139] sm:$0xff]
        %v1523 = vld [vmem:[%s419 + $0x141] sm:$0xff]
        %v1524 = vld [vmem:[%s419 + $0x151] sm:$0xff]
        %v1525 = vld [vmem:[%s419 + $0x159] sm:$0xff]
        %v1526 = vld [vmem:[%s419 + $0x169] sm:$0xff]
        %v1527 = vld [vmem:[%s419 + $0x171] sm:$0xff]
        %v1528 = vld [vmem:[%s1 + $0x4] sm:$0x1]
        %1530 = vset.pattern.permute.xlu0 0
        %1531 = vperm.xlu0 %1530, %v1496
        %v1532 = vpop.permute.xlu0 %1531
        %1535 = vset.pattern.permute.xlu0 0
        %1536 = vperm.xlu0 %1535, %v1497
        %v1537 = vpop.permute.xlu0 %1536
        %1540 = vset.pattern.permute.xlu0 0
        %1541 = vperm.xlu0 %1540, %v1498
        %v1542 = vpop.permute.xlu0 %1541
        %1545 = vset.pattern.permute.xlu0 0
        %1546 = vperm.xlu0 %1545, %v1499
        %v1547 = vpop.permute.xlu0 %1546
        %1550 = vset.pattern.permute.xlu0 0
        %1551 = vperm.xlu0 %1550, %v1500
        %v1552 = vpop.permute.xlu0 %1551
        %1555 = vset.pattern.permute.xlu0 0
        %1556 = vperm.xlu0 %1555, %v1501
        %v1557 = vpop.permute.xlu0 %1556
        %1560 = vset.pattern.permute.xlu0 0
        %1561 = vperm.xlu0 %1560, %v1502
        %v1562 = vpop.permute.xlu0 %1561
        %1565 = vset.pattern.permute.xlu0 0
        %1566 = vperm.xlu0 %1565, %v1503
        %v1567 = vpop.permute.xlu0 %1566
        %1570 = vset.pattern.permute.xlu0 0
        %1571 = vperm.xlu0 %1570, %v1504
        %v1572 = vpop.permute.xlu0 %1571
        %1575 = vset.pattern.permute.xlu0 0
        %1576 = vperm.xlu0 %1575, %v1505
        %v1577 = vpop.permute.xlu0 %1576
        %1580 = vset.pattern.permute.xlu0 0
        %1581 = vperm.xlu0 %1580, %v1506
        %v1582 = vpop.permute.xlu0 %1581
        %1585 = vset.pattern.permute.xlu0 0
        %1586 = vperm.xlu0 %1585, %v1507
        %v1587 = vpop.permute.xlu0 %1586
        %1590 = vset.pattern.permute.xlu0 0
        %1591 = vperm.xlu0 %1590, %v1508
        %v1592 = vpop.permute.xlu0 %1591
        %1595 = vset.pattern.permute.xlu0 0
        %1596 = vperm.xlu0 %1595, %v1509
        %v1597 = vpop.permute.xlu0 %1596
        %1600 = vset.pattern.permute.xlu0 0
        %1601 = vperm.xlu0 %1600, %v1510
        %v1602 = vpop.permute.xlu0 %1601
        %1605 = vset.pattern.permute.xlu0 0
        %1606 = vperm.xlu0 %1605, %v1511
        %v1607 = vpop.permute.xlu0 %1606
        %1610 = vset.pattern.permute.xlu0 0
        %1611 = vperm.xlu0 %1610, %v1512
        %v1612 = vpop.permute.xlu0 %1611
        %1615 = vset.pattern.permute.xlu0 0
        %1616 = vperm.xlu0 %1615, %v1513
        %v1617 = vpop.permute.xlu0 %1616
        %1620 = vset.pattern.permute.xlu0 0
        %1621 = vperm.xlu0 %1620, %v1514
        %v1622 = vpop.permute.xlu0 %1621
        %1625 = vset.pattern.permute.xlu0 0
        %1626 = vperm.xlu0 %1625, %v1515
        %v1627 = vpop.permute.xlu0 %1626
        %1630 = vset.pattern.permute.xlu0 0
        %1631 = vperm.xlu0 %1630, %v1516
        %v1632 = vpop.permute.xlu0 %1631
        %1635 = vset.pattern.permute.xlu0 0
        %1636 = vperm.xlu0 %1635, %v1517
        %v1637 = vpop.permute.xlu0 %1636
        %1640 = vset.pattern.permute.xlu0 0
        %1641 = vperm.xlu0 %1640, %v1518
        %v1642 = vpop.permute.xlu0 %1641
        %1645 = vset.pattern.permute.xlu0 0
        %1646 = vperm.xlu0 %1645, %v1519
        %v1647 = vpop.permute.xlu0 %1646
        %1650 = vset.pattern.permute.xlu0 0
        %1651 = vperm.xlu0 %1650, %v1520
        %v1652 = vpop.permute.xlu0 %1651
        %1655 = vset.pattern.permute.xlu0 0
        %1656 = vperm.xlu0 %1655, %v1521
        %v1657 = vpop.permute.xlu0 %1656
        %1660 = vset.pattern.permute.xlu0 0
        %1661 = vperm.xlu0 %1660, %v1522
        %v1662 = vpop.permute.xlu0 %1661
        %1665 = vset.pattern.permute.xlu0 0
        %1666 = vperm.xlu0 %1665, %v1523
        %v1667 = vpop.permute.xlu0 %1666
        %1670 = vset.pattern.permute.xlu0 0
        %1671 = vperm.xlu0 %1670, %v1524
        %v1672 = vpop.permute.xlu0 %1671
        %1675 = vset.pattern.permute.xlu0 0
        %1676 = vperm.xlu0 %1675, %v1525
        %v1677 = vpop.permute.xlu0 %1676
        %1680 = vset.pattern.permute.xlu0 0
        %1681 = vperm.xlu0 %1680, %v1526
        %v1682 = vpop.permute.xlu0 %1681
        %1685 = vset.pattern.permute.xlu0 0
        %1686 = vperm.xlu0 %1685, %v1527
        %v1687 = vpop.permute.xlu0 %1686
        %v1689 = vlaneseq
        %v1690 = vshrl.u32 %v1689, 7
        %v1691 = vsub.s32 0, %v1690
        %v1692 = vrot.slane %v1528, %v1691
        %v1693 = vmul.f32 %v1532, %v1692
        %v1694 = vmul.f32 %v1537, %v1692
        %v1695 = vmul.f32 %v1542, %v1692
        %v1696 = vmul.f32 %v1547, %v1692
        %v1697 = vmul.f32 %v1552, %v1692
        %v1698 = vmul.f32 %v1557, %v1692
        %v1699 = vmul.f32 %v1562, %v1692
        %v1700 = vmul.f32 %v1567, %v1692
        %v1701 = vmul.f32 %v1572, %v1692
        %v1702 = vmul.f32 %v1577, %v1692
        %v1703 = vmul.f32 %v1582, %v1692
        %v1704 = vmul.f32 %v1587, %v1692
        %v1705 = vmul.f32 %v1592, %v1692
        %v1706 = vmul.f32 %v1597, %v1692
        %v1707 = vmul.f32 %v1602, %v1692
        %v1708 = vmul.f32 %v1607, %v1692
        %v1709 = vmul.f32 %v1612, %v1692
        %v1710 = vmul.f32 %v1617, %v1692
        %v1711 = vmul.f32 %v1622, %v1692
        %v1712 = vmul.f32 %v1627, %v1692
        %v1713 = vmul.f32 %v1632, %v1692
        %v1714 = vmul.f32 %v1637, %v1692
        %v1715 = vmul.f32 %v1642, %v1692
        %v1716 = vmul.f32 %v1647, %v1692
        %v1717 = vmul.f32 %v1652, %v1692
        %v1718 = vmul.f32 %v1657, %v1692
        %v1719 = vmul.f32 %v1662, %v1692
        %v1720 = vmul.f32 %v1667, %v1692
        %v1721 = vmul.f32 %v1672, %v1692
        %v1722 = vmul.f32 %v1677, %v1692
        %v1723 = vmul.f32 %v1682, %v1692
        %v1724 = vmul.f32 %v1687, %v1692
        %v1725 = vadd.f32 %v1464, %v1693
        %v1726 = vadd.f32 %v1465, %v1694
        %v1727 = vadd.f32 %v1466, %v1695
        %v1728 = vadd.f32 %v1467, %v1696
        %v1729 = vadd.f32 %v1468, %v1697
        %v1730 = vadd.f32 %v1469, %v1698
        %v1731 = vadd.f32 %v1470, %v1699
        %v1732 = vadd.f32 %v1471, %v1700
        %v1733 = vadd.f32 %v1472, %v1701
        %v1734 = vadd.f32 %v1473, %v1702
        %v1735 = vadd.f32 %v1474, %v1703
        %v1736 = vadd.f32 %v1475, %v1704
        %v1737 = vadd.f32 %v1476, %v1705
        %v1738 = vadd.f32 %v1477, %v1706
        %v1739 = vadd.f32 %v1478, %v1707
        %v1740 = vadd.f32 %v1479, %v1708
        %v1741 = vadd.f32 %v1480, %v1709
        %v1742 = vadd.f32 %v1481, %v1710
        %v1743 = vadd.f32 %v1482, %v1711
        %v1744 = vadd.f32 %v1483, %v1712
        %v1745 = vadd.f32 %v1484, %v1713
        %v1746 = vadd.f32 %v1485, %v1714
        %v1747 = vadd.f32 %v1486, %v1715
        %v1748 = vadd.f32 %v1487, %v1716
        %v1749 = vadd.f32 %v1488, %v1717
        %v1750 = vadd.f32 %v1489, %v1718
        %v1751 = vadd.f32 %v1490, %v1719
        %v1752 = vadd.f32 %v1491, %v1720
        %v1753 = vadd.f32 %v1492, %v1721
        %v1754 = vadd.f32 %v1493, %v1722
        %v1755 = vadd.f32 %v1494, %v1723
        %v1756 = vadd.f32 %v1495, %v1724
        %v1757 = vld [vmem:[%s419 + $0x2] sm:$0xff]
        %v1758 = vld [vmem:[%s419 + $0xa] sm:$0xff]
        %v1759 = vld [vmem:[%s419 + $0x1a] sm:$0xff]
        %v1760 = vld [vmem:[%s419 + $0x22] sm:$0xff]
        %v1761 = vld [vmem:[%s419 + $0x32] sm:$0xff]
        %v1762 = vld [vmem:[%s419 + $0x3a] sm:$0xff]
        %v1763 = vld [vmem:[%s419 + $0x4a] sm:$0xff]
        %v1764 = vld [vmem:[%s419 + $0x52] sm:$0xff]
        %v1765 = vld [vmem:[%s419 + $0x62] sm:$0xff]
        %v1766 = vld [vmem:[%s419 + $0x6a] sm:$0xff]
        %v1767 = vld [vmem:[%s419 + $0x7a] sm:$0xff]
        %v1768 = vld [vmem:[%s419 + $0x82] sm:$0xff]
        %v1769 = vld [vmem:[%s419 + $0x92] sm:$0xff]
        %v1770 = vld [vmem:[%s419 + $0x9a] sm:$0xff]
        %v1771 = vld [vmem:[%s419 + $0xaa] sm:$0xff]
        %v1772 = vld [vmem:[%s419 + $0xb2] sm:$0xff]
        %v1773 = vld [vmem:[%s419 + $0xc2] sm:$0xff]
        %v1774 = vld [vmem:[%s419 + $0xca] sm:$0xff]
        %v1775 = vld [vmem:[%s419 + $0xda] sm:$0xff]
        %v1776 = vld [vmem:[%s419 + $0xe2] sm:$0xff]
        %v1777 = vld [vmem:[%s419 + $0xf2] sm:$0xff]
        %v1778 = vld [vmem:[%s419 + $0xfa] sm:$0xff]
        %v1779 = vld [vmem:[%s419 + $0x10a] sm:$0xff]
        %v1780 = vld [vmem:[%s419 + $0x112] sm:$0xff]
        %v1781 = vld [vmem:[%s419 + $0x122] sm:$0xff]
        %v1782 = vld [vmem:[%s419 + $0x12a] sm:$0xff]
        %v1783 = vld [vmem:[%s419 + $0x13a] sm:$0xff]
        %v1784 = vld [vmem:[%s419 + $0x142] sm:$0xff]
        %v1785 = vld [vmem:[%s419 + $0x152] sm:$0xff]
        %v1786 = vld [vmem:[%s419 + $0x15a] sm:$0xff]
        %v1787 = vld [vmem:[%s419 + $0x16a] sm:$0xff]
        %v1788 = vld [vmem:[%s419 + $0x172] sm:$0xff]
        %v1789 = vld [vmem:[%s1 + $0x5] sm:$0x1]
        %1791 = vset.pattern.permute.xlu0 0
        %1792 = vperm.xlu0 %1791, %v1757
        %v1793 = vpop.permute.xlu0 %1792
        %1796 = vset.pattern.permute.xlu0 0
        %1797 = vperm.xlu0 %1796, %v1758
        %v1798 = vpop.permute.xlu0 %1797
        %1801 = vset.pattern.permute.xlu0 0
        %1802 = vperm.xlu0 %1801, %v1759
        %v1803 = vpop.permute.xlu0 %1802
        %1806 = vset.pattern.permute.xlu0 0
        %1807 = vperm.xlu0 %1806, %v1760
        %v1808 = vpop.permute.xlu0 %1807
        %1811 = vset.pattern.permute.xlu0 0
        %1812 = vperm.xlu0 %1811, %v1761
        %v1813 = vpop.permute.xlu0 %1812
        %1816 = vset.pattern.permute.xlu0 0
        %1817 = vperm.xlu0 %1816, %v1762
        %v1818 = vpop.permute.xlu0 %1817
        %1821 = vset.pattern.permute.xlu0 0
        %1822 = vperm.xlu0 %1821, %v1763
        %v1823 = vpop.permute.xlu0 %1822
        %1826 = vset.pattern.permute.xlu0 0
        %1827 = vperm.xlu0 %1826, %v1764
        %v1828 = vpop.permute.xlu0 %1827
        %1831 = vset.pattern.permute.xlu0 0
        %1832 = vperm.xlu0 %1831, %v1765
        %v1833 = vpop.permute.xlu0 %1832
        %1836 = vset.pattern.permute.xlu0 0
        %1837 = vperm.xlu0 %1836, %v1766
        %v1838 = vpop.permute.xlu0 %1837
        %1841 = vset.pattern.permute.xlu0 0
        %1842 = vperm.xlu0 %1841, %v1767
        %v1843 = vpop.permute.xlu0 %1842
        %1846 = vset.pattern.permute.xlu0 0
        %1847 = vperm.xlu0 %1846, %v1768
        %v1848 = vpop.permute.xlu0 %1847
        %1851 = vset.pattern.permute.xlu0 0
        %1852 = vperm.xlu0 %1851, %v1769
        %v1853 = vpop.permute.xlu0 %1852
        %1856 = vset.pattern.permute.xlu0 0
        %1857 = vperm.xlu0 %1856, %v1770
        %v1858 = vpop.permute.xlu0 %1857
        %1861 = vset.pattern.permute.xlu0 0
        %1862 = vperm.xlu0 %1861, %v1771
        %v1863 = vpop.permute.xlu0 %1862
        %1866 = vset.pattern.permute.xlu0 0
        %1867 = vperm.xlu0 %1866, %v1772
        %v1868 = vpop.permute.xlu0 %1867
        %1871 = vset.pattern.permute.xlu0 0
        %1872 = vperm.xlu0 %1871, %v1773
        %v1873 = vpop.permute.xlu0 %1872
        %1876 = vset.pattern.permute.xlu0 0
        %1877 = vperm.xlu0 %1876, %v1774
        %v1878 = vpop.permute.xlu0 %1877
        %1881 = vset.pattern.permute.xlu0 0
        %1882 = vperm.xlu0 %1881, %v1775
        %v1883 = vpop.permute.xlu0 %1882
        %1886 = vset.pattern.permute.xlu0 0
        %1887 = vperm.xlu0 %1886, %v1776
        %v1888 = vpop.permute.xlu0 %1887
        %1891 = vset.pattern.permute.xlu0 0
        %1892 = vperm.xlu0 %1891, %v1777
        %v1893 = vpop.permute.xlu0 %1892
        %1896 = vset.pattern.permute.xlu0 0
        %1897 = vperm.xlu0 %1896, %v1778
        %v1898 = vpop.permute.xlu0 %1897
        %1901 = vset.pattern.permute.xlu0 0
        %1902 = vperm.xlu0 %1901, %v1779
        %v1903 = vpop.permute.xlu0 %1902
        %1906 = vset.pattern.permute.xlu0 0
        %1907 = vperm.xlu0 %1906, %v1780
        %v1908 = vpop.permute.xlu0 %1907
        %1911 = vset.pattern.permute.xlu0 0
        %1912 = vperm.xlu0 %1911, %v1781
        %v1913 = vpop.permute.xlu0 %1912
        %1916 = vset.pattern.permute.xlu0 0
        %1917 = vperm.xlu0 %1916, %v1782
        %v1918 = vpop.permute.xlu0 %1917
        %1921 = vset.pattern.permute.xlu0 0
        %1922 = vperm.xlu0 %1921, %v1783
        %v1923 = vpop.permute.xlu0 %1922
        %1926 = vset.pattern.permute.xlu0 0
        %1927 = vperm.xlu0 %1926, %v1784
        %v1928 = vpop.permute.xlu0 %1927
        %1931 = vset.pattern.permute.xlu0 0
        %1932 = vperm.xlu0 %1931, %v1785
        %v1933 = vpop.permute.xlu0 %1932
        %1936 = vset.pattern.permute.xlu0 0
        %1937 = vperm.xlu0 %1936, %v1786
        %v1938 = vpop.permute.xlu0 %1937
        %1941 = vset.pattern.permute.xlu0 0
        %1942 = vperm.xlu0 %1941, %v1787
        %v1943 = vpop.permute.xlu0 %1942
        %1946 = vset.pattern.permute.xlu0 0
        %1947 = vperm.xlu0 %1946, %v1788
        %v1948 = vpop.permute.xlu0 %1947
        %v1950 = vlaneseq
        %v1951 = vshrl.u32 %v1950, 7
        %v1952 = vsub.s32 0, %v1951
        %v1953 = vrot.slane %v1789, %v1952
        %v1954 = vmul.f32 %v1793, %v1953
        %v1955 = vmul.f32 %v1798, %v1953
        %v1956 = vmul.f32 %v1803, %v1953
        %v1957 = vmul.f32 %v1808, %v1953
        %v1958 = vmul.f32 %v1813, %v1953
        %v1959 = vmul.f32 %v1818, %v1953
        %v1960 = vmul.f32 %v1823, %v1953
        %v1961 = vmul.f32 %v1828, %v1953
        %v1962 = vmul.f32 %v1833, %v1953
        %v1963 = vmul.f32 %v1838, %v1953
        %v1964 = vmul.f32 %v1843, %v1953
        %v1965 = vmul.f32 %v1848, %v1953
        %v1966 = vmul.f32 %v1853, %v1953
        %v1967 = vmul.f32 %v1858, %v1953
        %v1968 = vmul.f32 %v1863, %v1953
        %v1969 = vmul.f32 %v1868, %v1953
        %v1970 = vmul.f32 %v1873, %v1953
        %v1971 = vmul.f32 %v1878, %v1953
        %v1972 = vmul.f32 %v1883, %v1953
        %v1973 = vmul.f32 %v1888, %v1953
        %v1974 = vmul.f32 %v1893, %v1953
        %v1975 = vmul.f32 %v1898, %v1953
        %v1976 = vmul.f32 %v1903, %v1953
        %v1977 = vmul.f32 %v1908, %v1953
        %v1978 = vmul.f32 %v1913, %v1953
        %v1979 = vmul.f32 %v1918, %v1953
        %v1980 = vmul.f32 %v1923, %v1953
        %v1981 = vmul.f32 %v1928, %v1953
        %v1982 = vmul.f32 %v1933, %v1953
        %v1983 = vmul.f32 %v1938, %v1953
        %v1984 = vmul.f32 %v1943, %v1953
        %v1985 = vmul.f32 %v1948, %v1953
        %v1986 = vadd.f32 %v1725, %v1954
        %v1987 = vadd.f32 %v1726, %v1955
        %v1988 = vadd.f32 %v1727, %v1956
        %v1989 = vadd.f32 %v1728, %v1957
        %v1990 = vadd.f32 %v1729, %v1958
        %v1991 = vadd.f32 %v1730, %v1959
        %v1992 = vadd.f32 %v1731, %v1960
        %v1993 = vadd.f32 %v1732, %v1961
        %v1994 = vadd.f32 %v1733, %v1962
        %v1995 = vadd.f32 %v1734, %v1963
        %v1996 = vadd.f32 %v1735, %v1964
        %v1997 = vadd.f32 %v1736, %v1965
        %v1998 = vadd.f32 %v1737, %v1966
        %v1999 = vadd.f32 %v1738, %v1967
        %v2000 = vadd.f32 %v1739, %v1968
        %v2001 = vadd.f32 %v1740, %v1969
        %v2002 = vadd.f32 %v1741, %v1970
        %v2003 = vadd.f32 %v1742, %v1971
        %v2004 = vadd.f32 %v1743, %v1972
        %v2005 = vadd.f32 %v1744, %v1973
        %v2006 = vadd.f32 %v1745, %v1974
        %v2007 = vadd.f32 %v1746, %v1975
        %v2008 = vadd.f32 %v1747, %v1976
        %v2009 = vadd.f32 %v1748, %v1977
        %v2010 = vadd.f32 %v1749, %v1978
        %v2011 = vadd.f32 %v1750, %v1979
        %v2012 = vadd.f32 %v1751, %v1980
        %v2013 = vadd.f32 %v1752, %v1981
        %v2014 = vadd.f32 %v1753, %v1982
        %v2015 = vadd.f32 %v1754, %v1983
        %v2016 = vadd.f32 %v1755, %v1984
        %v2017 = vadd.f32 %v1756, %v1985
        %s2018 = scalar_lea.vmem [#allocation2], 48
        %v2019 = vld [vmem:[%s2018] sm:$0xff]
        %v2020 = vld [vmem:[%s2018 + $0x8] sm:$0xff]
        %v2021 = vld [vmem:[%s2018 + $0x18] sm:$0xff]
        %v2022 = vld [vmem:[%s2018 + $0x20] sm:$0xff]
        %v2023 = vld [vmem:[%s2018 + $0x30] sm:$0xff]
        %v2024 = vld [vmem:[%s2018 + $0x38] sm:$0xff]
        %v2025 = vld [vmem:[%s2018 + $0x48] sm:$0xff]
        %v2026 = vld [vmem:[%s2018 + $0x50] sm:$0xff]
        %v2027 = vld [vmem:[%s2018 + $0x60] sm:$0xff]
        %v2028 = vld [vmem:[%s2018 + $0x68] sm:$0xff]
        %v2029 = vld [vmem:[%s2018 + $0x78] sm:$0xff]
        %v2030 = vld [vmem:[%s2018 + $0x80] sm:$0xff]
        %v2031 = vld [vmem:[%s2018 + $0x90] sm:$0xff]
        %v2032 = vld [vmem:[%s2018 + $0x98] sm:$0xff]
        %v2033 = vld [vmem:[%s2018 + $0xa8] sm:$0xff]
        %v2034 = vld [vmem:[%s2018 + $0xb0] sm:$0xff]
        %v2035 = vld [vmem:[%s2018 + $0xc0] sm:$0xff]
        %v2036 = vld [vmem:[%s2018 + $0xc8] sm:$0xff]
        %v2037 = vld [vmem:[%s2018 + $0xd8] sm:$0xff]
        %v2038 = vld [vmem:[%s2018 + $0xe0] sm:$0xff]
        %v2039 = vld [vmem:[%s2018 + $0xf0] sm:$0xff]
        %v2040 = vld [vmem:[%s2018 + $0xf8] sm:$0xff]
        %v2041 = vld [vmem:[%s2018 + $0x108] sm:$0xff]
        %v2042 = vld [vmem:[%s2018 + $0x110] sm:$0xff]
        %v2043 = vld [vmem:[%s2018 + $0x120] sm:$0xff]
        %v2044 = vld [vmem:[%s2018 + $0x128] sm:$0xff]
        %v2045 = vld [vmem:[%s2018 + $0x138] sm:$0xff]
        %v2046 = vld [vmem:[%s2018 + $0x140] sm:$0xff]
        %v2047 = vld [vmem:[%s2018 + $0x150] sm:$0xff]
        %v2048 = vld [vmem:[%s2018 + $0x158] sm:$0xff]
        %v2049 = vld [vmem:[%s2018 + $0x168] sm:$0xff]
        %v2050 = vld [vmem:[%s2018 + $0x170] sm:$0xff]
        %v2051 = vld [vmem:[%s1 + $0x6] sm:$0x1]
        %2053 = vset.pattern.permute.xlu0 0
        %2054 = vperm.xlu0 %2053, %v2019
        %v2055 = vpop.permute.xlu0 %2054
        %2058 = vset.pattern.permute.xlu0 0
        %2059 = vperm.xlu0 %2058, %v2020
        %v2060 = vpop.permute.xlu0 %2059
        %2063 = vset.pattern.permute.xlu0 0
        %2064 = vperm.xlu0 %2063, %v2021
        %v2065 = vpop.permute.xlu0 %2064
        %2068 = vset.pattern.permute.xlu0 0
        %2069 = vperm.xlu0 %2068, %v2022
        %v2070 = vpop.permute.xlu0 %2069
        %2073 = vset.pattern.permute.xlu0 0
        %2074 = vperm.xlu0 %2073, %v2023
        %v2075 = vpop.permute.xlu0 %2074
        %2078 = vset.pattern.permute.xlu0 0
        %2079 = vperm.xlu0 %2078, %v2024
        %v2080 = vpop.permute.xlu0 %2079
        %2083 = vset.pattern.permute.xlu0 0
        %2084 = vperm.xlu0 %2083, %v2025
        %v2085 = vpop.permute.xlu0 %2084
        %2088 = vset.pattern.permute.xlu0 0
        %2089 = vperm.xlu0 %2088, %v2026
        %v2090 = vpop.permute.xlu0 %2089
        %2093 = vset.pattern.permute.xlu0 0
        %2094 = vperm.xlu0 %2093, %v2027
        %v2095 = vpop.permute.xlu0 %2094
        %2098 = vset.pattern.permute.xlu0 0
        %2099 = vperm.xlu0 %2098, %v2028
        %v2100 = vpop.permute.xlu0 %2099
        %2103 = vset.pattern.permute.xlu0 0
        %2104 = vperm.xlu0 %2103, %v2029
        %v2105 = vpop.permute.xlu0 %2104
        %2108 = vset.pattern.permute.xlu0 0
        %2109 = vperm.xlu0 %2108, %v2030
        %v2110 = vpop.permute.xlu0 %2109
        %2113 = vset.pattern.permute.xlu0 0
        %2114 = vperm.xlu0 %2113, %v2031
        %v2115 = vpop.permute.xlu0 %2114
        %2118 = vset.pattern.permute.xlu0 0
        %2119 = vperm.xlu0 %2118, %v2032
        %v2120 = vpop.permute.xlu0 %2119
        %2123 = vset.pattern.permute.xlu0 0
        %2124 = vperm.xlu0 %2123, %v2033
        %v2125 = vpop.permute.xlu0 %2124
        %2128 = vset.pattern.permute.xlu0 0
        %2129 = vperm.xlu0 %2128, %v2034
        %v2130 = vpop.permute.xlu0 %2129
        %2133 = vset.pattern.permute.xlu0 0
        %2134 = vperm.xlu0 %2133, %v2035
        %v2135 = vpop.permute.xlu0 %2134
        %2138 = vset.pattern.permute.xlu0 0
        %2139 = vperm.xlu0 %2138, %v2036
        %v2140 = vpop.permute.xlu0 %2139
        %2143 = vset.pattern.permute.xlu0 0
        %2144 = vperm.xlu0 %2143, %v2037
        %v2145 = vpop.permute.xlu0 %2144
        %2148 = vset.pattern.permute.xlu0 0
        %2149 = vperm.xlu0 %2148, %v2038
        %v2150 = vpop.permute.xlu0 %2149
        %2153 = vset.pattern.permute.xlu0 0
        %2154 = vperm.xlu0 %2153, %v2039
        %v2155 = vpop.permute.xlu0 %2154
        %2158 = vset.pattern.permute.xlu0 0
        %2159 = vperm.xlu0 %2158, %v2040
        %v2160 = vpop.permute.xlu0 %2159
        %2163 = vset.pattern.permute.xlu0 0
        %2164 = vperm.xlu0 %2163, %v2041
        %v2165 = vpop.permute.xlu0 %2164
        %2168 = vset.pattern.permute.xlu0 0
        %2169 = vperm.xlu0 %2168, %v2042
        %v2170 = vpop.permute.xlu0 %2169
        %2173 = vset.pattern.permute.xlu0 0
        %2174 = vperm.xlu0 %2173, %v2043
        %v2175 = vpop.permute.xlu0 %2174
        %2178 = vset.pattern.permute.xlu0 0
        %2179 = vperm.xlu0 %2178, %v2044
        %v2180 = vpop.permute.xlu0 %2179
        %2183 = vset.pattern.permute.xlu0 0
        %2184 = vperm.xlu0 %2183, %v2045
        %v2185 = vpop.permute.xlu0 %2184
        %2188 = vset.pattern.permute.xlu0 0
        %2189 = vperm.xlu0 %2188, %v2046
        %v2190 = vpop.permute.xlu0 %2189
        %2193 = vset.pattern.permute.xlu0 0
        %2194 = vperm.xlu0 %2193, %v2047
        %v2195 = vpop.permute.xlu0 %2194
        %2198 = vset.pattern.permute.xlu0 0
        %2199 = vperm.xlu0 %2198, %v2048
        %v2200 = vpop.permute.xlu0 %2199
        %2203 = vset.pattern.permute.xlu0 0
        %2204 = vperm.xlu0 %2203, %v2049
        %v2205 = vpop.permute.xlu0 %2204
        %2208 = vset.pattern.permute.xlu0 0
        %2209 = vperm.xlu0 %2208, %v2050
        %v2210 = vpop.permute.xlu0 %2209
        %v2212 = vlaneseq
        %v2213 = vshrl.u32 %v2212, 7
        %v2214 = vsub.s32 0, %v2213
        %v2215 = vrot.slane %v2051, %v2214
        %v2216 = vmul.f32 %v2055, %v2215
        %v2217 = vmul.f32 %v2060, %v2215
        %v2218 = vmul.f32 %v2065, %v2215
        %v2219 = vmul.f32 %v2070, %v2215
        %v2220 = vmul.f32 %v2075, %v2215
        %v2221 = vmul.f32 %v2080, %v2215
        %v2222 = vmul.f32 %v2085, %v2215
        %v2223 = vmul.f32 %v2090, %v2215
        %v2224 = vmul.f32 %v2095, %v2215
        %v2225 = vmul.f32 %v2100, %v2215
        %v2226 = vmul.f32 %v2105, %v2215
        %v2227 = vmul.f32 %v2110, %v2215
        %v2228 = vmul.f32 %v2115, %v2215
        %v2229 = vmul.f32 %v2120, %v2215
        %v2230 = vmul.f32 %v2125, %v2215
        %v2231 = vmul.f32 %v2130, %v2215
        %v2232 = vmul.f32 %v2135, %v2215
        %v2233 = vmul.f32 %v2140, %v2215
        %v2234 = vmul.f32 %v2145, %v2215
        %v2235 = vmul.f32 %v2150, %v2215
        %v2236 = vmul.f32 %v2155, %v2215
        %v2237 = vmul.f32 %v2160, %v2215
        %v2238 = vmul.f32 %v2165, %v2215
        %v2239 = vmul.f32 %v2170, %v2215
        %v2240 = vmul.f32 %v2175, %v2215
        %v2241 = vmul.f32 %v2180, %v2215
        %v2242 = vmul.f32 %v2185, %v2215
        %v2243 = vmul.f32 %v2190, %v2215
        %v2244 = vmul.f32 %v2195, %v2215
        %v2245 = vmul.f32 %v2200, %v2215
        %v2246 = vmul.f32 %v2205, %v2215
        %v2247 = vmul.f32 %v2210, %v2215
        %v2248 = vadd.f32 %v1986, %v2216
        %v2249 = vadd.f32 %v1987, %v2217
        %v2250 = vadd.f32 %v1988, %v2218
        %v2251 = vadd.f32 %v1989, %v2219
        %v2252 = vadd.f32 %v1990, %v2220
        %v2253 = vadd.f32 %v1991, %v2221
        %v2254 = vadd.f32 %v1992, %v2222
        %v2255 = vadd.f32 %v1993, %v2223
        %v2256 = vadd.f32 %v1994, %v2224
        %v2257 = vadd.f32 %v1995, %v2225
        %v2258 = vadd.f32 %v1996, %v2226
        %v2259 = vadd.f32 %v1997, %v2227
        %v2260 = vadd.f32 %v1998, %v2228
        %v2261 = vadd.f32 %v1999, %v2229
        %v2262 = vadd.f32 %v2000, %v2230
        %v2263 = vadd.f32 %v2001, %v2231
        %v2264 = vadd.f32 %v2002, %v2232
        %v2265 = vadd.f32 %v2003, %v2233
        %v2266 = vadd.f32 %v2004, %v2234
        %v2267 = vadd.f32 %v2005, %v2235
        %v2268 = vadd.f32 %v2006, %v2236
        %v2269 = vadd.f32 %v2007, %v2237
        %v2270 = vadd.f32 %v2008, %v2238
        %v2271 = vadd.f32 %v2009, %v2239
        %v2272 = vadd.f32 %v2010, %v2240
        %v2273 = vadd.f32 %v2011, %v2241
        %v2274 = vadd.f32 %v2012, %v2242
        %v2275 = vadd.f32 %v2013, %v2243
        %v2276 = vadd.f32 %v2014, %v2244
        %v2277 = vadd.f32 %v2015, %v2245
        %v2278 = vadd.f32 %v2016, %v2246
        %v2279 = vadd.f32 %v2017, %v2247
        %v2280 = vld [vmem:[%s2018 + $0x1] sm:$0xff]
        %v2281 = vld [vmem:[%s2018 + $0x9] sm:$0xff]
        %v2282 = vld [vmem:[%s2018 + $0x19] sm:$0xff]
        %v2283 = vld [vmem:[%s2018 + $0x21] sm:$0xff]
        %v2284 = vld [vmem:[%s2018 + $0x31] sm:$0xff]
        %v2285 = vld [vmem:[%s2018 + $0x39] sm:$0xff]
        %v2286 = vld [vmem:[%s2018 + $0x49] sm:$0xff]
        %v2287 = vld [vmem:[%s2018 + $0x51] sm:$0xff]
        %v2288 = vld [vmem:[%s2018 + $0x61] sm:$0xff]
        %v2289 = vld [vmem:[%s2018 + $0x69] sm:$0xff]
        %v2290 = vld [vmem:[%s2018 + $0x79] sm:$0xff]
        %v2291 = vld [vmem:[%s2018 + $0x81] sm:$0xff]
        %v2292 = vld [vmem:[%s2018 + $0x91] sm:$0xff]
        %v2293 = vld [vmem:[%s2018 + $0x99] sm:$0xff]
        %v2294 = vld [vmem:[%s2018 + $0xa9] sm:$0xff]
        %v2295 = vld [vmem:[%s2018 + $0xb1] sm:$0xff]
        %v2296 = vld [vmem:[%s2018 + $0xc1] sm:$0xff]
        %v2297 = vld [vmem:[%s2018 + $0xc9] sm:$0xff]
        %v2298 = vld [vmem:[%s2018 + $0xd9] sm:$0xff]
        %v2299 = vld [vmem:[%s2018 + $0xe1] sm:$0xff]
        %v2300 = vld [vmem:[%s2018 + $0xf1] sm:$0xff]
        %v2301 = vld [vmem:[%s2018 + $0xf9] sm:$0xff]
        %v2302 = vld [vmem:[%s2018 + $0x109] sm:$0xff]
        %v2303 = vld [vmem:[%s2018 + $0x111] sm:$0xff]
        %v2304 = vld [vmem:[%s2018 + $0x121] sm:$0xff]
        %v2305 = vld [vmem:[%s2018 + $0x129] sm:$0xff]
        %v2306 = vld [vmem:[%s2018 + $0x139] sm:$0xff]
        %v2307 = vld [vmem:[%s2018 + $0x141] sm:$0xff]
        %v2308 = vld [vmem:[%s2018 + $0x151] sm:$0xff]
        %v2309 = vld [vmem:[%s2018 + $0x159] sm:$0xff]
        %v2310 = vld [vmem:[%s2018 + $0x169] sm:$0xff]
        %v2311 = vld [vmem:[%s2018 + $0x171] sm:$0xff]
        %v2312 = vld [vmem:[%s1 + $0x7] sm:$0x1]
        %2314 = vset.pattern.permute.xlu0 0
        %2315 = vperm.xlu0 %2314, %v2280
        %v2316 = vpop.permute.xlu0 %2315
        %2319 = vset.pattern.permute.xlu0 0
        %2320 = vperm.xlu0 %2319, %v2281
        %v2321 = vpop.permute.xlu0 %2320
        %2324 = vset.pattern.permute.xlu0 0
        %2325 = vperm.xlu0 %2324, %v2282
        %v2326 = vpop.permute.xlu0 %2325
        %2329 = vset.pattern.permute.xlu0 0
        %2330 = vperm.xlu0 %2329, %v2283
        %v2331 = vpop.permute.xlu0 %2330
        %2334 = vset.pattern.permute.xlu0 0
        %2335 = vperm.xlu0 %2334, %v2284
        %v2336 = vpop.permute.xlu0 %2335
        %2339 = vset.pattern.permute.xlu0 0
        %2340 = vperm.xlu0 %2339, %v2285
        %v2341 = vpop.permute.xlu0 %2340
        %2344 = vset.pattern.permute.xlu0 0
        %2345 = vperm.xlu0 %2344, %v2286
        %v2346 = vpop.permute.xlu0 %2345
        %2349 = vset.pattern.permute.xlu0 0
        %2350 = vperm.xlu0 %2349, %v2287
        %v2351 = vpop.permute.xlu0 %2350
        %2354 = vset.pattern.permute.xlu0 0
        %2355 = vperm.xlu0 %2354, %v2288
        %v2356 = vpop.permute.xlu0 %2355
        %2359 = vset.pattern.permute.xlu0 0
        %2360 = vperm.xlu0 %2359, %v2289
        %v2361 = vpop.permute.xlu0 %2360
        %2364 = vset.pattern.permute.xlu0 0
        %2365 = vperm.xlu0 %2364, %v2290
        %v2366 = vpop.permute.xlu0 %2365
        %2369 = vset.pattern.permute.xlu0 0
        %2370 = vperm.xlu0 %2369, %v2291
        %v2371 = vpop.permute.xlu0 %2370
        %2374 = vset.pattern.permute.xlu0 0
        %2375 = vperm.xlu0 %2374, %v2292
        %v2376 = vpop.permute.xlu0 %2375
        %2379 = vset.pattern.permute.xlu0 0
        %2380 = vperm.xlu0 %2379, %v2293
        %v2381 = vpop.permute.xlu0 %2380
        %2384 = vset.pattern.permute.xlu0 0
        %2385 = vperm.xlu0 %2384, %v2294
        %v2386 = vpop.permute.xlu0 %2385
        %2389 = vset.pattern.permute.xlu0 0
        %2390 = vperm.xlu0 %2389, %v2295
        %v2391 = vpop.permute.xlu0 %2390
        %2394 = vset.pattern.permute.xlu0 0
        %2395 = vperm.xlu0 %2394, %v2296
        %v2396 = vpop.permute.xlu0 %2395
        %2399 = vset.pattern.permute.xlu0 0
        %2400 = vperm.xlu0 %2399, %v2297
        %v2401 = vpop.permute.xlu0 %2400
        %2404 = vset.pattern.permute.xlu0 0
        %2405 = vperm.xlu0 %2404, %v2298
        %v2406 = vpop.permute.xlu0 %2405
        %2409 = vset.pattern.permute.xlu0 0
        %2410 = vperm.xlu0 %2409, %v2299
        %v2411 = vpop.permute.xlu0 %2410
        %2414 = vset.pattern.permute.xlu0 0
        %2415 = vperm.xlu0 %2414, %v2300
        %v2416 = vpop.permute.xlu0 %2415
        %2419 = vset.pattern.permute.xlu0 0
        %2420 = vperm.xlu0 %2419, %v2301
        %v2421 = vpop.permute.xlu0 %2420
        %2424 = vset.pattern.permute.xlu0 0
        %2425 = vperm.xlu0 %2424, %v2302
        %v2426 = vpop.permute.xlu0 %2425
        %2429 = vset.pattern.permute.xlu0 0
        %2430 = vperm.xlu0 %2429, %v2303
        %v2431 = vpop.permute.xlu0 %2430
        %2434 = vset.pattern.permute.xlu0 0
        %2435 = vperm.xlu0 %2434, %v2304
        %v2436 = vpop.permute.xlu0 %2435
        %2439 = vset.pattern.permute.xlu0 0
        %2440 = vperm.xlu0 %2439, %v2305
        %v2441 = vpop.permute.xlu0 %2440
        %2444 = vset.pattern.permute.xlu0 0
        %2445 = vperm.xlu0 %2444, %v2306
        %v2446 = vpop.permute.xlu0 %2445
        %2449 = vset.pattern.permute.xlu0 0
        %2450 = vperm.xlu0 %2449, %v2307
        %v2451 = vpop.permute.xlu0 %2450
        %2454 = vset.pattern.permute.xlu0 0
        %2455 = vperm.xlu0 %2454, %v2308
        %v2456 = vpop.permute.xlu0 %2455
        %2459 = vset.pattern.permute.xlu0 0
        %2460 = vperm.xlu0 %2459, %v2309
        %v2461 = vpop.permute.xlu0 %2460
        %2464 = vset.pattern.permute.xlu0 0
        %2465 = vperm.xlu0 %2464, %v2310
        %v2466 = vpop.permute.xlu0 %2465
        %2469 = vset.pattern.permute.xlu0 0
        %2470 = vperm.xlu0 %2469, %v2311
        %v2471 = vpop.permute.xlu0 %2470
        %v2473 = vlaneseq
        %v2474 = vshrl.u32 %v2473, 7
        %v2475 = vsub.s32 0, %v2474
        %v2476 = vrot.slane %v2312, %v2475
        %v2477 = vmul.f32 %v2316, %v2476
        %v2478 = vmul.f32 %v2321, %v2476
        %v2479 = vmul.f32 %v2326, %v2476
        %v2480 = vmul.f32 %v2331, %v2476
        %v2481 = vmul.f32 %v2336, %v2476
        %v2482 = vmul.f32 %v2341, %v2476
        %v2483 = vmul.f32 %v2346, %v2476
        %v2484 = vmul.f32 %v2351, %v2476
        %v2485 = vmul.f32 %v2356, %v2476
        %v2486 = vmul.f32 %v2361, %v2476
        %v2487 = vmul.f32 %v2366, %v2476
        %v2488 = vmul.f32 %v2371, %v2476
        %v2489 = vmul.f32 %v2376, %v2476
        %v2490 = vmul.f32 %v2381, %v2476
        %v2491 = vmul.f32 %v2386, %v2476
        %v2492 = vmul.f32 %v2391, %v2476
        %v2493 = vmul.f32 %v2396, %v2476
        %v2494 = vmul.f32 %v2401, %v2476
        %v2495 = vmul.f32 %v2406, %v2476
        %v2496 = vmul.f32 %v2411, %v2476
        %v2497 = vmul.f32 %v2416, %v2476
        %v2498 = vmul.f32 %v2421, %v2476
        %v2499 = vmul.f32 %v2426, %v2476
        %v2500 = vmul.f32 %v2431, %v2476
        %v2501 = vmul.f32 %v2436, %v2476
        %v2502 = vmul.f32 %v2441, %v2476
        %v2503 = vmul.f32 %v2446, %v2476
        %v2504 = vmul.f32 %v2451, %v2476
        %v2505 = vmul.f32 %v2456, %v2476
        %v2506 = vmul.f32 %v2461, %v2476
        %v2507 = vmul.f32 %v2466, %v2476
        %v2508 = vmul.f32 %v2471, %v2476
        %v2509 = vadd.f32 %v2248, %v2477
        %v2510 = vadd.f32 %v2249, %v2478
        %v2511 = vadd.f32 %v2250, %v2479
        %v2512 = vadd.f32 %v2251, %v2480
        %v2513 = vadd.f32 %v2252, %v2481
        %v2514 = vadd.f32 %v2253, %v2482
        %v2515 = vadd.f32 %v2254, %v2483
        %v2516 = vadd.f32 %v2255, %v2484
        %v2517 = vadd.f32 %v2256, %v2485
        %v2518 = vadd.f32 %v2257, %v2486
        %v2519 = vadd.f32 %v2258, %v2487
        %v2520 = vadd.f32 %v2259, %v2488
        %v2521 = vadd.f32 %v2260, %v2489
        %v2522 = vadd.f32 %v2261, %v2490
        %v2523 = vadd.f32 %v2262, %v2491
        %v2524 = vadd.f32 %v2263, %v2492
        %v2525 = vadd.f32 %v2264, %v2493
        %v2526 = vadd.f32 %v2265, %v2494
        %v2527 = vadd.f32 %v2266, %v2495
        %v2528 = vadd.f32 %v2267, %v2496
        %v2529 = vadd.f32 %v2268, %v2497
        %v2530 = vadd.f32 %v2269, %v2498
        %v2531 = vadd.f32 %v2270, %v2499
        %v2532 = vadd.f32 %v2271, %v2500
        %v2533 = vadd.f32 %v2272, %v2501
        %v2534 = vadd.f32 %v2273, %v2502
        %v2535 = vadd.f32 %v2274, %v2503
        %v2536 = vadd.f32 %v2275, %v2504
        %v2537 = vadd.f32 %v2276, %v2505
        %v2538 = vadd.f32 %v2277, %v2506
        %v2539 = vadd.f32 %v2278, %v2507
        %v2540 = vadd.f32 %v2279, %v2508
        %v2541 = vld [vmem:[%s2018 + $0x2] sm:$0xff]
        %v2542 = vld [vmem:[%s2018 + $0xa] sm:$0xff]
        %v2543 = vld [vmem:[%s2018 + $0x1a] sm:$0xff]
        %v2544 = vld [vmem:[%s2018 + $0x22] sm:$0xff]
        %v2545 = vld [vmem:[%s2018 + $0x32] sm:$0xff]
        %v2546 = vld [vmem:[%s2018 + $0x3a] sm:$0xff]
        %v2547 = vld [vmem:[%s2018 + $0x4a] sm:$0xff]
        %v2548 = vld [vmem:[%s2018 + $0x52] sm:$0xff]
        %v2549 = vld [vmem:[%s2018 + $0x62] sm:$0xff]
        %v2550 = vld [vmem:[%s2018 + $0x6a] sm:$0xff]
        %v2551 = vld [vmem:[%s2018 + $0x7a] sm:$0xff]
        %v2552 = vld [vmem:[%s2018 + $0x82] sm:$0xff]
        %v2553 = vld [vmem:[%s2018 + $0x92] sm:$0xff]
        %v2554 = vld [vmem:[%s2018 + $0x9a] sm:$0xff]
        %v2555 = vld [vmem:[%s2018 + $0xaa] sm:$0xff]
        %v2556 = vld [vmem:[%s2018 + $0xb2] sm:$0xff]
        %v2557 = vld [vmem:[%s2018 + $0xc2] sm:$0xff]
        %v2558 = vld [vmem:[%s2018 + $0xca] sm:$0xff]
        %v2559 = vld [vmem:[%s2018 + $0xda] sm:$0xff]
        %v2560 = vld [vmem:[%s2018 + $0xe2] sm:$0xff]
        %v2561 = vld [vmem:[%s2018 + $0xf2] sm:$0xff]
        %v2562 = vld [vmem:[%s2018 + $0xfa] sm:$0xff]
        %v2563 = vld [vmem:[%s2018 + $0x10a] sm:$0xff]
        %v2564 = vld [vmem:[%s2018 + $0x112] sm:$0xff]
        %v2565 = vld [vmem:[%s2018 + $0x122] sm:$0xff]
        %v2566 = vld [vmem:[%s2018 + $0x12a] sm:$0xff]
        %v2567 = vld [vmem:[%s2018 + $0x13a] sm:$0xff]
        %v2568 = vld [vmem:[%s2018 + $0x142] sm:$0xff]
        %v2569 = vld [vmem:[%s2018 + $0x152] sm:$0xff]
        %v2570 = vld [vmem:[%s2018 + $0x15a] sm:$0xff]
        %v2571 = vld [vmem:[%s2018 + $0x16a] sm:$0xff]
        %v2572 = vld [vmem:[%s2018 + $0x172] sm:$0xff]
        %v2573 = vld [vmem:[%s1 + $0x8] sm:$0x1]
        %2575 = vset.pattern.permute.xlu0 0
        %2576 = vperm.xlu0 %2575, %v2541
        %v2577 = vpop.permute.xlu0 %2576
        %2580 = vset.pattern.permute.xlu0 0
        %2581 = vperm.xlu0 %2580, %v2542
        %v2582 = vpop.permute.xlu0 %2581
        %2585 = vset.pattern.permute.xlu0 0
        %2586 = vperm.xlu0 %2585, %v2543
        %v2587 = vpop.permute.xlu0 %2586
        %2590 = vset.pattern.permute.xlu0 0
        %2591 = vperm.xlu0 %2590, %v2544
        %v2592 = vpop.permute.xlu0 %2591
        %2595 = vset.pattern.permute.xlu0 0
        %2596 = vperm.xlu0 %2595, %v2545
        %v2597 = vpop.permute.xlu0 %2596
        %2600 = vset.pattern.permute.xlu0 0
        %2601 = vperm.xlu0 %2600, %v2546
        %v2602 = vpop.permute.xlu0 %2601
        %2605 = vset.pattern.permute.xlu0 0
        %2606 = vperm.xlu0 %2605, %v2547
        %v2607 = vpop.permute.xlu0 %2606
        %2610 = vset.pattern.permute.xlu0 0
        %2611 = vperm.xlu0 %2610, %v2548
        %v2612 = vpop.permute.xlu0 %2611
        %2615 = vset.pattern.permute.xlu0 0
        %2616 = vperm.xlu0 %2615, %v2549
        %v2617 = vpop.permute.xlu0 %2616
        %2620 = vset.pattern.permute.xlu0 0
        %2621 = vperm.xlu0 %2620, %v2550
        %v2622 = vpop.permute.xlu0 %2621
        %2625 = vset.pattern.permute.xlu0 0
        %2626 = vperm.xlu0 %2625, %v2551
        %v2627 = vpop.permute.xlu0 %2626
        %2630 = vset.pattern.permute.xlu0 0
        %2631 = vperm.xlu0 %2630, %v2552
        %v2632 = vpop.permute.xlu0 %2631
        %2635 = vset.pattern.permute.xlu0 0
        %2636 = vperm.xlu0 %2635, %v2553
        %v2637 = vpop.permute.xlu0 %2636
        %2640 = vset.pattern.permute.xlu0 0
        %2641 = vperm.xlu0 %2640, %v2554
        %v2642 = vpop.permute.xlu0 %2641
        %2645 = vset.pattern.permute.xlu0 0
        %2646 = vperm.xlu0 %2645, %v2555
        %v2647 = vpop.permute.xlu0 %2646
        %2650 = vset.pattern.permute.xlu0 0
        %2651 = vperm.xlu0 %2650, %v2556
        %v2652 = vpop.permute.xlu0 %2651
        %2655 = vset.pattern.permute.xlu0 0
        %2656 = vperm.xlu0 %2655, %v2557
        %v2657 = vpop.permute.xlu0 %2656
        %2660 = vset.pattern.permute.xlu0 0
        %2661 = vperm.xlu0 %2660, %v2558
        %v2662 = vpop.permute.xlu0 %2661
        %2665 = vset.pattern.permute.xlu0 0
        %2666 = vperm.xlu0 %2665, %v2559
        %v2667 = vpop.permute.xlu0 %2666
        %2670 = vset.pattern.permute.xlu0 0
        %2671 = vperm.xlu0 %2670, %v2560
        %v2672 = vpop.permute.xlu0 %2671
        %2675 = vset.pattern.permute.xlu0 0
        %2676 = vperm.xlu0 %2675, %v2561
        %v2677 = vpop.permute.xlu0 %2676
        %2680 = vset.pattern.permute.xlu0 0
        %2681 = vperm.xlu0 %2680, %v2562
        %v2682 = vpop.permute.xlu0 %2681
        %2685 = vset.pattern.permute.xlu0 0
        %2686 = vperm.xlu0 %2685, %v2563
        %v2687 = vpop.permute.xlu0 %2686
        %2690 = vset.pattern.permute.xlu0 0
        %2691 = vperm.xlu0 %2690, %v2564
        %v2692 = vpop.permute.xlu0 %2691
        %2695 = vset.pattern.permute.xlu0 0
        %2696 = vperm.xlu0 %2695, %v2565
        %v2697 = vpop.permute.xlu0 %2696
        %2700 = vset.pattern.permute.xlu0 0
        %2701 = vperm.xlu0 %2700, %v2566
        %v2702 = vpop.permute.xlu0 %2701
        %2705 = vset.pattern.permute.xlu0 0
        %2706 = vperm.xlu0 %2705, %v2567
        %v2707 = vpop.permute.xlu0 %2706
        %2710 = vset.pattern.permute.xlu0 0
        %2711 = vperm.xlu0 %2710, %v2568
        %v2712 = vpop.permute.xlu0 %2711
        %2715 = vset.pattern.permute.xlu0 0
        %2716 = vperm.xlu0 %2715, %v2569
        %v2717 = vpop.permute.xlu0 %2716
        %2720 = vset.pattern.permute.xlu0 0
        %2721 = vperm.xlu0 %2720, %v2570
        %v2722 = vpop.permute.xlu0 %2721
        %2725 = vset.pattern.permute.xlu0 0
        %2726 = vperm.xlu0 %2725, %v2571
        %v2727 = vpop.permute.xlu0 %2726
        %2730 = vset.pattern.permute.xlu0 0
        %2731 = vperm.xlu0 %2730, %v2572
        %v2732 = vpop.permute.xlu0 %2731
        %v2734 = vlaneseq
        %v2735 = vshrl.u32 %v2734, 7
        %v2736 = vsub.s32 0, %v2735
        %v2737 = vrot.slane %v2573, %v2736
        %v2738 = vmul.f32 %v2577, %v2737
        %v2739 = vmul.f32 %v2582, %v2737
        %v2740 = vmul.f32 %v2587, %v2737
        %v2741 = vmul.f32 %v2592, %v2737
        %v2742 = vmul.f32 %v2597, %v2737
        %v2743 = vmul.f32 %v2602, %v2737
        %v2744 = vmul.f32 %v2607, %v2737
        %v2745 = vmul.f32 %v2612, %v2737
        %v2746 = vmul.f32 %v2617, %v2737
        %v2747 = vmul.f32 %v2622, %v2737
        %v2748 = vmul.f32 %v2627, %v2737
        %v2749 = vmul.f32 %v2632, %v2737
        %v2750 = vmul.f32 %v2637, %v2737
        %v2751 = vmul.f32 %v2642, %v2737
        %v2752 = vmul.f32 %v2647, %v2737
        %v2753 = vmul.f32 %v2652, %v2737
        %v2754 = vmul.f32 %v2657, %v2737
        %v2755 = vmul.f32 %v2662, %v2737
        %v2756 = vmul.f32 %v2667, %v2737
        %v2757 = vmul.f32 %v2672, %v2737
        %v2758 = vmul.f32 %v2677, %v2737
        %v2759 = vmul.f32 %v2682, %v2737
        %v2760 = vmul.f32 %v2687, %v2737
        %v2761 = vmul.f32 %v2692, %v2737
        %v2762 = vmul.f32 %v2697, %v2737
        %v2763 = vmul.f32 %v2702, %v2737
        %v2764 = vmul.f32 %v2707, %v2737
        %v2765 = vmul.f32 %v2712, %v2737
        %v2766 = vmul.f32 %v2717, %v2737
        %v2767 = vmul.f32 %v2722, %v2737
        %v2768 = vmul.f32 %v2727, %v2737
        %v2769 = vmul.f32 %v2732, %v2737
        %v2770 = vadd.f32 %v2509, %v2738
        %v2771 = vadd.f32 %v2510, %v2739
        %v2772 = vadd.f32 %v2511, %v2740
        %v2773 = vadd.f32 %v2512, %v2741
        %v2774 = vadd.f32 %v2513, %v2742
        %v2775 = vadd.f32 %v2514, %v2743
        %v2776 = vadd.f32 %v2515, %v2744
        %v2777 = vadd.f32 %v2516, %v2745
        %v2778 = vadd.f32 %v2517, %v2746
        %v2779 = vadd.f32 %v2518, %v2747
        %v2780 = vadd.f32 %v2519, %v2748
        %v2781 = vadd.f32 %v2520, %v2749
        %v2782 = vadd.f32 %v2521, %v2750
        %v2783 = vadd.f32 %v2522, %v2751
        %v2784 = vadd.f32 %v2523, %v2752
        %v2785 = vadd.f32 %v2524, %v2753
        %v2786 = vadd.f32 %v2525, %v2754
        %v2787 = vadd.f32 %v2526, %v2755
        %v2788 = vadd.f32 %v2527, %v2756
        %v2789 = vadd.f32 %v2528, %v2757
        %v2790 = vadd.f32 %v2529, %v2758
        %v2791 = vadd.f32 %v2530, %v2759
        %v2792 = vadd.f32 %v2531, %v2760
        %v2793 = vadd.f32 %v2532, %v2761
        %v2794 = vadd.f32 %v2533, %v2762
        %v2795 = vadd.f32 %v2534, %v2763
        %v2796 = vadd.f32 %v2535, %v2764
        %v2797 = vadd.f32 %v2536, %v2765
        %v2798 = vadd.f32 %v2537, %v2766
        %v2799 = vadd.f32 %v2538, %v2767
        %v2800 = vadd.f32 %v2539, %v2768
        %v2801 = vadd.f32 %v2540, %v2769
        %v2802 = vld [vmem:[%s2] sm:$0x1]
        %v2804 = vlaneseq
        %v2805 = vshrl.u32 %v2804, 7
        %v2806 = vsub.s32 0, %v2805
        %v2807 = vrot.slane %v2802, %v2806
        %v2809 = vmul.f32 %v2770, %v2807
        %v2810 = vmul.f32 %v2771, %v2807
        %v2811 = vmul.f32 %v2772, %v2807
        %v2812 = vmul.f32 %v2773, %v2807
        %v2813 = vmul.f32 %v2774, %v2807
        %v2814 = vmul.f32 %v2775, %v2807
        %v2815 = vmul.f32 %v2776, %v2807
        %v2816 = vmul.f32 %v2777, %v2807
        %v2817 = vmul.f32 %v2778, %v2807
        %v2818 = vmul.f32 %v2779, %v2807
        %v2819 = vmul.f32 %v2780, %v2807
        %v2820 = vmul.f32 %v2781, %v2807
        %v2821 = vmul.f32 %v2782, %v2807
        %v2822 = vmul.f32 %v2783, %v2807
        %v2823 = vmul.f32 %v2784, %v2807
        %v2824 = vmul.f32 %v2785, %v2807
        %v2825 = vmul.f32 %v2786, %v2807
        %v2826 = vmul.f32 %v2787, %v2807
        %v2827 = vmul.f32 %v2788, %v2807
        %v2828 = vmul.f32 %v2789, %v2807
        %v2829 = vmul.f32 %v2790, %v2807
        %v2830 = vmul.f32 %v2791, %v2807
        %v2831 = vmul.f32 %v2792, %v2807
        %v2832 = vmul.f32 %v2793, %v2807
        %v2833 = vmul.f32 %v2794, %v2807
        %v2834 = vmul.f32 %v2795, %v2807
        %v2835 = vmul.f32 %v2796, %v2807
        %v2836 = vmul.f32 %v2797, %v2807
        %v2837 = vmul.f32 %v2798, %v2807
        %v2838 = vmul.f32 %v2799, %v2807
        %v2839 = vmul.f32 %v2800, %v2807
        %v2840 = vmul.f32 %v2801, %v2807
        %v2841 = vld [vmem:[%s3] sm:$0x1]
        %v2843 = vlaneseq
        %v2844 = vshrl.u32 %v2843, 7
        %v2845 = vsub.s32 0, %v2844
        %v2846 = vrot.slane %v2841, %v2845
        %v2848 = vadd.f32 %v2809, %v2846
        %v2849 = vadd.f32 %v2810, %v2846
        %v2850 = vadd.f32 %v2811, %v2846
        %v2851 = vadd.f32 %v2812, %v2846
        %v2852 = vadd.f32 %v2813, %v2846
        %v2853 = vadd.f32 %v2814, %v2846
        %v2854 = vadd.f32 %v2815, %v2846
        %v2855 = vadd.f32 %v2816, %v2846
        %v2856 = vadd.f32 %v2817, %v2846
        %v2857 = vadd.f32 %v2818, %v2846
        %v2858 = vadd.f32 %v2819, %v2846
        %v2859 = vadd.f32 %v2820, %v2846
        %v2860 = vadd.f32 %v2821, %v2846
        %v2861 = vadd.f32 %v2822, %v2846
        %v2862 = vadd.f32 %v2823, %v2846
        %v2863 = vadd.f32 %v2824, %v2846
        %v2864 = vadd.f32 %v2825, %v2846
        %v2865 = vadd.f32 %v2826, %v2846
        %v2866 = vadd.f32 %v2827, %v2846
        %v2867 = vadd.f32 %v2828, %v2846
        %v2868 = vadd.f32 %v2829, %v2846
        %v2869 = vadd.f32 %v2830, %v2846
        %v2870 = vadd.f32 %v2831, %v2846
        %v2871 = vadd.f32 %v2832, %v2846
        %v2872 = vadd.f32 %v2833, %v2846
        %v2873 = vadd.f32 %v2834, %v2846
        %v2874 = vadd.f32 %v2835, %v2846
        %v2875 = vadd.f32 %v2836, %v2846
        %v2876 = vadd.f32 %v2837, %v2846
        %v2877 = vadd.f32 %v2838, %v2846
        %v2878 = vadd.f32 %v2839, %v2846
        %v2879 = vadd.f32 %v2840, %v2846
        %v2880 = vmax.f32 %v2848, 0.0
        %v2881 = vmax.f32 %v2849, 0.0
        %v2882 = vmax.f32 %v2850, 0.0
        %v2883 = vmax.f32 %v2851, 0.0
        %v2884 = vmax.f32 %v2852, 0.0
        %v2885 = vmax.f32 %v2853, 0.0
        %v2886 = vmax.f32 %v2854, 0.0
        %v2887 = vmax.f32 %v2855, 0.0
        %v2888 = vmax.f32 %v2856, 0.0
        %v2889 = vmax.f32 %v2857, 0.0
        %v2890 = vmax.f32 %v2858, 0.0
        %v2891 = vmax.f32 %v2859, 0.0
        %v2892 = vmax.f32 %v2860, 0.0
        %v2893 = vmax.f32 %v2861, 0.0
        %v2894 = vmax.f32 %v2862, 0.0
        %v2895 = vmax.f32 %v2863, 0.0
        %v2896 = vmax.f32 %v2864, 0.0
        %v2897 = vmax.f32 %v2865, 0.0
        %v2898 = vmax.f32 %v2866, 0.0
        %v2899 = vmax.f32 %v2867, 0.0
        %v2900 = vmax.f32 %v2868, 0.0
        %v2901 = vmax.f32 %v2869, 0.0
        %v2902 = vmax.f32 %v2870, 0.0
        %v2903 = vmax.f32 %v2871, 0.0
        %v2904 = vmax.f32 %v2872, 0.0
        %v2905 = vmax.f32 %v2873, 0.0
        %v2906 = vmax.f32 %v2874, 0.0
        %v2907 = vmax.f32 %v2875, 0.0
        %v2908 = vmax.f32 %v2876, 0.0
        %v2909 = vmax.f32 %v2877, 0.0
        %v2910 = vmax.f32 %v2878, 0.0
        %v2911 = vmax.f32 %v2879, 0.0
        %vm2912 = vcmask 519168
        %2913 = vst.msk [vmem:[#allocation3] sm:$0xf] %vm2912, 0
        %2914 = vst.msk [vmem:[#allocation3 + $0x4] sm:$0xf] %vm2912, 0
        %vm2915 = vcmask 516096
        %2916 = vst.msk [vmem:[#allocation3 + $0x8] sm:$0x1] %vm2915, 0
        %2917 = vst.msk [vmem:[#allocation3 + $0xc] sm:$0xf] %vm2912, 0
        %2918 = vst.msk [vmem:[#allocation3 + $0x10] sm:$0xf] %vm2912, 0
        %2919 = vst.msk [vmem:[#allocation3 + $0x14] sm:$0x1] %vm2915, 0
        %2920 = vst.msk [vmem:[#allocation3 + $0x18] sm:$0xf] %vm2912, 0
        %2921 = vst.msk [vmem:[#allocation3 + $0x1c] sm:$0xf] %vm2912, 0
        %2922 = vst.msk [vmem:[#allocation3 + $0x20] sm:$0x1] %vm2915, 0
        %2923 = vst.msk [vmem:[#allocation3 + $0x24] sm:$0xf] %vm2912, 0
        %2924 = vst.msk [vmem:[#allocation3 + $0x28] sm:$0xf] %vm2912, 0
        %2925 = vst.msk [vmem:[#allocation3 + $0x2c] sm:$0x1] %vm2915, 0
        %2926 = vst.msk [vmem:[#allocation3 + $0x30] sm:$0xf] %vm2912, 0
        %2927 = vst.msk [vmem:[#allocation3 + $0x34] sm:$0xf] %vm2912, 0
        %2928 = vst.msk [vmem:[#allocation3 + $0x38] sm:$0x1] %vm2915, 0
        %2929 = vst.msk [vmem:[#allocation3 + $0x3c] sm:$0xf] %vm2912, 0
        %2930 = vst.msk [vmem:[#allocation3 + $0x40] sm:$0xf] %vm2912, 0
        %2931 = vst.msk [vmem:[#allocation3 + $0x44] sm:$0x1] %vm2915, 0
        %2932 = vst.msk [vmem:[#allocation3 + $0x48] sm:$0xf] %vm2912, 0
        %2933 = vst.msk [vmem:[#allocation3 + $0x4c] sm:$0xf] %vm2912, 0
        %2934 = vst.msk [vmem:[#allocation3 + $0x50] sm:$0x1] %vm2915, 0
        %2935 = vst.msk [vmem:[#allocation3 + $0x54] sm:$0xf] %vm2912, 0
        %2936 = vst.msk [vmem:[#allocation3 + $0x58] sm:$0xf] %vm2912, 0
        %2937 = vst.msk [vmem:[#allocation3 + $0x5c] sm:$0x1] %vm2915, 0
        %2938 = vst.msk [vmem:[#allocation3 + $0x60] sm:$0xf] %vm2912, 0
        %2939 = vst.msk [vmem:[#allocation3 + $0x64] sm:$0xf] %vm2912, 0
        %2940 = vst.msk [vmem:[#allocation3 + $0x68] sm:$0x1] %vm2915, 0
        %2941 = vst.msk [vmem:[#allocation3 + $0x6c] sm:$0xf] %vm2912, 0
        %2942 = vst.msk [vmem:[#allocation3 + $0x70] sm:$0xf] %vm2912, 0
        %2943 = vst.msk [vmem:[#allocation3 + $0x74] sm:$0x1] %vm2915, 0
        %2944 = vst.msk [vmem:[#allocation3 + $0x78] sm:$0xf] %vm2912, 0
        %2945 = vst.msk [vmem:[#allocation3 + $0x7c] sm:$0xf] %vm2912, 0
        %2946 = vst.msk [vmem:[#allocation3 + $0x80] sm:$0x1] %vm2915, 0
        %2947 = vst.msk [vmem:[#allocation3 + $0x84] sm:$0xf] %vm2912, 0
        %2948 = vst.msk [vmem:[#allocation3 + $0x88] sm:$0xf] %vm2912, 0
        %2949 = vst.msk [vmem:[#allocation3 + $0x8c] sm:$0x1] %vm2915, 0
        %2950 = vst.msk [vmem:[#allocation3 + $0x90] sm:$0xf] %vm2912, 0
        %2951 = vst.msk [vmem:[#allocation3 + $0x94] sm:$0xf] %vm2912, 0
        %2952 = vst.msk [vmem:[#allocation3 + $0x98] sm:$0x1] %vm2915, 0
        %2953 = vst.msk [vmem:[#allocation3 + $0x9c] sm:$0xf] %vm2912, 0
        %2954 = vst.msk [vmem:[#allocation3 + $0xa0] sm:$0xf] %vm2912, 0
        %2955 = vst.msk [vmem:[#allocation3 + $0xa4] sm:$0x1] %vm2915, 0
        %2956 = vst.msk [vmem:[#allocation3 + $0xa8] sm:$0xf] %vm2912, 0
        %2957 = vst.msk [vmem:[#allocation3 + $0xac] sm:$0xf] %vm2912, 0
        %2958 = vst.msk [vmem:[#allocation3 + $0xb0] sm:$0x1] %vm2915, 0
        %2959 = vst.msk [vmem:[#allocation3 + $0xb4] sm:$0xf] %vm2912, 0
        %2960 = vst.msk [vmem:[#allocation3 + $0xb8] sm:$0xf] %vm2912, 0
        %2961 = vst.msk [vmem:[#allocation3 + $0xbc] sm:$0x1] %vm2915, 0
        %2962 = vst.msk [vmem:[#allocation3 + $0xc0] sm:$0xf] %vm2912, 0
        %2963 = vst.msk [vmem:[#allocation3 + $0xc4] sm:$0xf] %vm2912, 0
        %2964 = vst.msk [vmem:[#allocation3 + $0xc8] sm:$0x1] %vm2915, 0
        %2965 = vst.msk [vmem:[#allocation3 + $0xcc] sm:$0xf] %vm2912, 0
        %2966 = vst.msk [vmem:[#allocation3 + $0xd0] sm:$0xf] %vm2912, 0
        %2967 = vst.msk [vmem:[#allocation3 + $0xd4] sm:$0x1] %vm2915, 0
        %v2968 = vpack.c.bf16 %v2881, %v2880
        %v2969 = vpack.c.bf16 %v2883, %v2882
        %v2970 = vpack.c.bf16 %v2885, %v2884
        %v2971 = vpack.c.bf16 %v2887, %v2886
        %v2972 = vpack.c.bf16 %v2889, %v2888
        %v2973 = vpack.c.bf16 %v2891, %v2890
        %v2974 = vpack.c.bf16 %v2893, %v2892
        %v2975 = vpack.c.bf16 %v2895, %v2894
        %v2976 = vpack.c.bf16 %v2897, %v2896
        %v2977 = vpack.c.bf16 %v2899, %v2898
        %v2978 = vpack.c.bf16 %v2901, %v2900
        %v2979 = vpack.c.bf16 %v2903, %v2902
        %v2980 = vpack.c.bf16 %v2905, %v2904
        %v2981 = vpack.c.bf16 %v2907, %v2906
        %v2982 = vpack.c.bf16 %v2909, %v2908
        %v2983 = vpack.c.bf16 %v2911, %v2910
        %v3000 = vunpack.c.l.b16 %v2968
        %v3001 = vunpack.c.h.b16 %v2968
        %v3002 = vunpack.c.l.b16 %v2969
        %v3003 = vunpack.c.h.b16 %v2969
        %v3004 = vunpack.c.l.b16 %v2970
        %v3005 = vunpack.c.h.b16 %v2970
        %v3006 = vunpack.c.l.b16 %v2971
        %v3007 = vunpack.c.h.b16 %v2971
        %v3008 = vunpack.c.l.b16 %v2972
        %v3009 = vunpack.c.h.b16 %v2972
        %v3010 = vunpack.c.l.b16 %v2973
        %v3011 = vunpack.c.h.b16 %v2973
        %v3012 = vunpack.c.l.b16 %v2974
        %v3013 = vunpack.c.h.b16 %v2974
        %v3014 = vunpack.c.l.b16 %v2975
        %v3015 = vunpack.c.h.b16 %v2975
        %v3016 = vunpack.c.l.b16 %v2976
        %v3017 = vunpack.c.h.b16 %v2976
        %v3018 = vunpack.c.l.b16 %v2977
        %v3019 = vunpack.c.h.b16 %v2977
        %v3020 = vunpack.c.l.b16 %v2978
        %v3021 = vunpack.c.h.b16 %v2978
        %v3022 = vunpack.c.l.b16 %v2979
        %v3023 = vunpack.c.h.b16 %v2979
        %v3024 = vunpack.c.l.b16 %v2980
        %v3025 = vunpack.c.h.b16 %v2980
        %v3026 = vunpack.c.l.b16 %v2981
        %v3027 = vunpack.c.h.b16 %v2981
        %v3028 = vunpack.c.l.b16 %v2982
        %v3029 = vunpack.c.h.b16 %v2982
        %v3030 = vunpack.c.l.b16 %v2983
        %v3031 = vunpack.c.h.b16 %v2983
        %v3032 = vpack.c.b16 %v3000, %v3000
        %v3033 = vpack.c.b16 %v3001, %v3001
        %v3034 = vpack.c.b16 %v3002, %v3002
        %v3035 = vpack.c.b16 %v3003, %v3003
        %v3036 = vpack.c.b16 %v3004, %v3004
        %v3037 = vpack.c.b16 %v3005, %v3005
        %v3038 = vpack.c.b16 %v3006, %v3006
        %v3039 = vpack.c.b16 %v3007, %v3007
        %v3040 = vpack.c.b16 %v3008, %v3008
        %v3041 = vpack.c.b16 %v3009, %v3009
        %v3042 = vpack.c.b16 %v3010, %v3010
        %v3043 = vpack.c.b16 %v3011, %v3011
        %v3044 = vpack.c.b16 %v3012, %v3012
        %v3045 = vpack.c.b16 %v3013, %v3013
        %v3046 = vpack.c.b16 %v3014, %v3014
        %v3047 = vpack.c.b16 %v3015, %v3015
        %v3048 = vpack.c.b16 %v3016, %v3016
        %v3049 = vpack.c.b16 %v3017, %v3017
        %v3050 = vpack.c.b16 %v3018, %v3018
        %v3051 = vpack.c.b16 %v3019, %v3019
        %v3052 = vpack.c.b16 %v3020, %v3020
        %v3053 = vpack.c.b16 %v3021, %v3021
        %v3054 = vpack.c.b16 %v3022, %v3022
        %v3055 = vpack.c.b16 %v3023, %v3023
        %v3056 = vpack.c.b16 %v3024, %v3024
        %v3057 = vpack.c.b16 %v3025, %v3025
        %v3058 = vpack.c.b16 %v3026, %v3026
        %v3059 = vpack.c.b16 %v3027, %v3027
        %v3060 = vpack.c.b16 %v3028, %v3028
        %v3061 = vpack.c.b16 %v3029, %v3029
        %v3062 = vpack.c.b16 %v3030, %v3030
        %v3063 = vpack.c.b16 %v3031, %v3031
        %vm3064 = vsmask.f32 256
        %vm3065 = vsmask.f32 4368
        %vm3066 = vmor %vm3064, %vm3065
        %v3068 = vshrl.u32 %v3032, 16
        %v3070 = vrot.slane %v3068, 7
        %v3071 = vshll.u32 %v3032, 16
        %v3073 = vor.u32 %v3070, %v3071
        %v3074 = vrot.slane %v3070, 4
        %v3076 = vshrl.u32 %v3033, 16
        %v3078 = vrot.slane %v3076, 7
        %v3079 = vshll.u32 %v3033, 16
        %v3081 = vor.u32 %v3078, %v3079
        %v3082 = vsel %vm3066, %v3074, %v3081
        %v3083 = vrot.slane %v3078, 4
        %v3085 = vshrl.u32 %v3034, 16
        %v3087 = vrot.slane %v3085, 7
        %v3088 = vshll.u32 %v3034, 16
        %v3090 = vor.u32 %v3087, %v3088
        %v3091 = vrot.slane %v3087, 4
        %v3093 = vshrl.u32 %v3035, 16
        %v3095 = vrot.slane %v3093, 7
        %v3096 = vshll.u32 %v3035, 16
        %v3098 = vor.u32 %v3095, %v3096
        %v3099 = vsel %vm3066, %v3091, %v3098
        %v3100 = vrot.slane %v3095, 4
        %v3102 = vshrl.u32 %v3036, 16
        %v3104 = vrot.slane %v3102, 7
        %v3105 = vshll.u32 %v3036, 16
        %v3107 = vor.u32 %v3104, %v3105
        %v3108 = vrot.slane %v3104, 4
        %v3110 = vshrl.u32 %v3037, 16
        %v3112 = vrot.slane %v3110, 7
        %v3113 = vshll.u32 %v3037, 16
        %v3115 = vor.u32 %v3112, %v3113
        %v3116 = vsel %vm3066, %v3108, %v3115
        %v3117 = vrot.slane %v3112, 4
        %v3119 = vshrl.u32 %v3038, 16
        %v3121 = vrot.slane %v3119, 7
        %v3122 = vshll.u32 %v3038, 16
        %v3124 = vor.u32 %v3121, %v3122
        %v3125 = vrot.slane %v3121, 4
        %v3127 = vshrl.u32 %v3039, 16
        %v3129 = vrot.slane %v3127, 7
        %v3130 = vshll.u32 %v3039, 16
        %v3132 = vor.u32 %v3129, %v3130
        %v3133 = vsel %vm3066, %v3125, %v3132
        %v3134 = vrot.slane %v3129, 4
        %v3136 = vshrl.u32 %v3040, 16
        %v3138 = vrot.slane %v3136, 7
        %v3139 = vshll.u32 %v3040, 16
        %v3141 = vor.u32 %v3138, %v3139
        %v3142 = vrot.slane %v3138, 4
        %v3144 = vshrl.u32 %v3041, 16
        %v3146 = vrot.slane %v3144, 7
        %v3147 = vshll.u32 %v3041, 16
        %v3149 = vor.u32 %v3146, %v3147
        %v3150 = vsel %vm3066, %v3142, %v3149
        %v3151 = vrot.slane %v3146, 4
        %v3153 = vshrl.u32 %v3042, 16
        %v3155 = vrot.slane %v3153, 7
        %v3156 = vshll.u32 %v3042, 16
        %v3158 = vor.u32 %v3155, %v3156
        %v3159 = vrot.slane %v3155, 4
        %v3161 = vshrl.u32 %v3043, 16
        %v3163 = vrot.slane %v3161, 7
        %v3164 = vshll.u32 %v3043, 16
        %v3166 = vor.u32 %v3163, %v3164
        %v3167 = vsel %vm3066, %v3159, %v3166
        %v3168 = vrot.slane %v3163, 4
        %v3170 = vshrl.u32 %v3044, 16
        %v3172 = vrot.slane %v3170, 7
        %v3173 = vshll.u32 %v3044, 16
        %v3175 = vor.u32 %v3172, %v3173
        %v3176 = vrot.slane %v3172, 4
        %v3178 = vshrl.u32 %v3045, 16
        %v3180 = vrot.slane %v3178, 7
        %v3181 = vshll.u32 %v3045, 16
        %v3183 = vor.u32 %v3180, %v3181
        %v3184 = vsel %vm3066, %v3176, %v3183
        %v3185 = vrot.slane %v3180, 4
        %v3187 = vshrl.u32 %v3046, 16
        %v3189 = vrot.slane %v3187, 7
        %v3190 = vshll.u32 %v3046, 16
        %v3192 = vor.u32 %v3189, %v3190
        %v3193 = vrot.slane %v3189, 4
        %v3195 = vshrl.u32 %v3047, 16
        %v3197 = vrot.slane %v3195, 7
        %v3198 = vshll.u32 %v3047, 16
        %v3200 = vor.u32 %v3197, %v3198
        %v3201 = vsel %vm3066, %v3193, %v3200
        %v3202 = vrot.slane %v3197, 4
        %v3204 = vshrl.u32 %v3048, 16
        %v3206 = vrot.slane %v3204, 7
        %v3207 = vshll.u32 %v3048, 16
        %v3209 = vor.u32 %v3206, %v3207
        %v3210 = vrot.slane %v3206, 4
        %v3212 = vshrl.u32 %v3049, 16
        %v3214 = vrot.slane %v3212, 7
        %v3215 = vshll.u32 %v3049, 16
        %v3217 = vor.u32 %v3214, %v3215
        %v3218 = vsel %vm3066, %v3210, %v3217
        %v3219 = vrot.slane %v3214, 4
        %v3221 = vshrl.u32 %v3050, 16
        %v3223 = vrot.slane %v3221, 7
        %v3224 = vshll.u32 %v3050, 16
        %v3226 = vor.u32 %v3223, %v3224
        %v3227 = vrot.slane %v3223, 4
        %v3229 = vshrl.u32 %v3051, 16
        %v3231 = vrot.slane %v3229, 7
        %v3232 = vshll.u32 %v3051, 16
        %v3234 = vor.u32 %v3231, %v3232
        %v3235 = vsel %vm3066, %v3227, %v3234
        %v3236 = vrot.slane %v3231, 4
        %v3238 = vshrl.u32 %v3052, 16
        %v3240 = vrot.slane %v3238, 7
        %v3241 = vshll.u32 %v3052, 16
        %v3243 = vor.u32 %v3240, %v3241
        %v3244 = vrot.slane %v3240, 4
        %v3246 = vshrl.u32 %v3053, 16
        %v3248 = vrot.slane %v3246, 7
        %v3249 = vshll.u32 %v3053, 16
        %v3251 = vor.u32 %v3248, %v3249
        %v3252 = vsel %vm3066, %v3244, %v3251
        %v3253 = vrot.slane %v3248, 4
        %v3255 = vshrl.u32 %v3054, 16
        %v3257 = vrot.slane %v3255, 7
        %v3258 = vshll.u32 %v3054, 16
        %v3260 = vor.u32 %v3257, %v3258
        %v3261 = vrot.slane %v3257, 4
        %v3263 = vshrl.u32 %v3055, 16
        %v3265 = vrot.slane %v3263, 7
        %v3266 = vshll.u32 %v3055, 16
        %v3268 = vor.u32 %v3265, %v3266
        %v3269 = vsel %vm3066, %v3261, %v3268
        %v3270 = vrot.slane %v3265, 4
        %v3272 = vshrl.u32 %v3056, 16
        %v3274 = vrot.slane %v3272, 7
        %v3275 = vshll.u32 %v3056, 16
        %v3277 = vor.u32 %v3274, %v3275
        %v3278 = vrot.slane %v3274, 4
        %v3280 = vshrl.u32 %v3057, 16
        %v3282 = vrot.slane %v3280, 7
        %v3283 = vshll.u32 %v3057, 16
        %v3285 = vor.u32 %v3282, %v3283
        %v3286 = vsel %vm3066, %v3278, %v3285
        %v3287 = vrot.slane %v3282, 4
        %v3289 = vshrl.u32 %v3058, 16
        %v3291 = vrot.slane %v3289, 7
        %v3292 = vshll.u32 %v3058, 16
        %v3294 = vor.u32 %v3291, %v3292
        %v3295 = vrot.slane %v3291, 4
        %v3297 = vshrl.u32 %v3059, 16
        %v3299 = vrot.slane %v3297, 7
        %v3300 = vshll.u32 %v3059, 16
        %v3302 = vor.u32 %v3299, %v3300
        %v3303 = vsel %vm3066, %v3295, %v3302
        %v3304 = vrot.slane %v3299, 4
        %v3306 = vshrl.u32 %v3060, 16
        %v3308 = vrot.slane %v3306, 7
        %v3309 = vshll.u32 %v3060, 16
        %v3311 = vor.u32 %v3308, %v3309
        %v3312 = vrot.slane %v3308, 4
        %v3314 = vshrl.u32 %v3061, 16
        %v3316 = vrot.slane %v3314, 7
        %v3317 = vshll.u32 %v3061, 16
        %v3319 = vor.u32 %v3316, %v3317
        %v3320 = vsel %vm3066, %v3312, %v3319
        %v3321 = vrot.slane %v3316, 4
        %v3323 = vshrl.u32 %v3062, 16
        %v3325 = vrot.slane %v3323, 7
        %v3326 = vshll.u32 %v3062, 16
        %v3328 = vor.u32 %v3325, %v3326
        %v3329 = vrot.slane %v3325, 4
        %v3331 = vshrl.u32 %v3063, 16
        %v3333 = vrot.slane %v3331, 7
        %v3334 = vshll.u32 %v3063, 16
        %v3336 = vor.u32 %v3333, %v3334
        %v3337 = vsel %vm3066, %v3329, %v3336
        %v3338 = vrot.slane %v3333, 4
        %s3387 = scalar_lea.vmem [#allocation3], 12
        %vm3388 = vcmask 519168
        %vm3389 = vsmask.f32 7938
        %vm3390 = vmand %vm3388, %vm3389
        %v3391 = vld [vmem:[%s3387] sm:$0xf]
        %v3392 = vsel %vm3390, %v3073, %v3391
        %3393 = vst [vmem:[%s3387] sm:$0xf] %v3392
        %3394 = vst.msk [vmem:[%s3387 + $0x4] sm:$0xf] %vm2912, %v3082
        %vm3395 = vcmask 516096
        %vm3396 = vmand %vm3395, %vm3064
        %v3397 = vld [vmem:[%s3387 + $0x8] sm:$0x1]
        %v3398 = vsel %vm3396, %v3083, %v3397
        %3399 = vst [vmem:[%s3387 + $0x8] sm:$0x1] %v3398
        %v3400 = vld [vmem:[%s3387 + $0xc] sm:$0xf]
        %v3401 = vsel %vm3390, %v3090, %v3400
        %3402 = vst [vmem:[%s3387 + $0xc] sm:$0xf] %v3401
        %3403 = vst.msk [vmem:[%s3387 + $0x10] sm:$0xf] %vm2912, %v3099
        %v3404 = vld [vmem:[%s3387 + $0x14] sm:$0x1]
        %v3405 = vsel %vm3396, %v3100, %v3404
        %3406 = vst [vmem:[%s3387 + $0x14] sm:$0x1] %v3405
        %v3407 = vld [vmem:[%s3387 + $0x18] sm:$0xf]
        %v3408 = vsel %vm3390, %v3107, %v3407
        %3409 = vst [vmem:[%s3387 + $0x18] sm:$0xf] %v3408
        %3410 = vst.msk [vmem:[%s3387 + $0x1c] sm:$0xf] %vm2912, %v3116
        %v3411 = vld [vmem:[%s3387 + $0x20] sm:$0x1]
        %v3412 = vsel %vm3396, %v3117, %v3411
        %3413 = vst [vmem:[%s3387 + $0x20] sm:$0x1] %v3412
        %v3414 = vld [vmem:[%s3387 + $0x24] sm:$0xf]
        %v3415 = vsel %vm3390, %v3124, %v3414
        %3416 = vst [vmem:[%s3387 + $0x24] sm:$0xf] %v3415
        %3417 = vst.msk [vmem:[%s3387 + $0x28] sm:$0xf] %vm2912, %v3133
        %v3418 = vld [vmem:[%s3387 + $0x2c] sm:$0x1]
        %v3419 = vsel %vm3396, %v3134, %v3418
        %3420 = vst [vmem:[%s3387 + $0x2c] sm:$0x1] %v3419
        %v3421 = vld [vmem:[%s3387 + $0x30] sm:$0xf]
        %v3422 = vsel %vm3390, %v3141, %v3421
        %3423 = vst [vmem:[%s3387 + $0x30] sm:$0xf] %v3422
        %3424 = vst.msk [vmem:[%s3387 + $0x34] sm:$0xf] %vm2912, %v3150
        %v3425 = vld [vmem:[%s3387 + $0x38] sm:$0x1]
        %v3426 = vsel %vm3396, %v3151, %v3425
        %3427 = vst [vmem:[%s3387 + $0x38] sm:$0x1] %v3426
        %v3428 = vld [vmem:[%s3387 + $0x3c] sm:$0xf]
        %v3429 = vsel %vm3390, %v3158, %v3428
        %3430 = vst [vmem:[%s3387 + $0x3c] sm:$0xf] %v3429
        %3431 = vst.msk [vmem:[%s3387 + $0x40] sm:$0xf] %vm2912, %v3167
        %v3432 = vld [vmem:[%s3387 + $0x44] sm:$0x1]
        %v3433 = vsel %vm3396, %v3168, %v3432
        %3434 = vst [vmem:[%s3387 + $0x44] sm:$0x1] %v3433
        %v3435 = vld [vmem:[%s3387 + $0x48] sm:$0xf]
        %v3436 = vsel %vm3390, %v3175, %v3435
        %3437 = vst [vmem:[%s3387 + $0x48] sm:$0xf] %v3436
        %3438 = vst.msk [vmem:[%s3387 + $0x4c] sm:$0xf] %vm2912, %v3184
        %v3439 = vld [vmem:[%s3387 + $0x50] sm:$0x1]
        %v3440 = vsel %vm3396, %v3185, %v3439
        %3441 = vst [vmem:[%s3387 + $0x50] sm:$0x1] %v3440
        %v3442 = vld [vmem:[%s3387 + $0x54] sm:$0xf]
        %v3443 = vsel %vm3390, %v3192, %v3442
        %3444 = vst [vmem:[%s3387 + $0x54] sm:$0xf] %v3443
        %3445 = vst.msk [vmem:[%s3387 + $0x58] sm:$0xf] %vm2912, %v3201
        %v3446 = vld [vmem:[%s3387 + $0x5c] sm:$0x1]
        %v3447 = vsel %vm3396, %v3202, %v3446
        %3448 = vst [vmem:[%s3387 + $0x5c] sm:$0x1] %v3447
        %v3449 = vld [vmem:[%s3387 + $0x60] sm:$0xf]
        %v3450 = vsel %vm3390, %v3209, %v3449
        %3451 = vst [vmem:[%s3387 + $0x60] sm:$0xf] %v3450
        %3452 = vst.msk [vmem:[%s3387 + $0x64] sm:$0xf] %vm2912, %v3218
        %v3453 = vld [vmem:[%s3387 + $0x68] sm:$0x1]
        %v3454 = vsel %vm3396, %v3219, %v3453
        %3455 = vst [vmem:[%s3387 + $0x68] sm:$0x1] %v3454
        %v3456 = vld [vmem:[%s3387 + $0x6c] sm:$0xf]
        %v3457 = vsel %vm3390, %v3226, %v3456
        %3458 = vst [vmem:[%s3387 + $0x6c] sm:$0xf] %v3457
        %3459 = vst.msk [vmem:[%s3387 + $0x70] sm:$0xf] %vm2912, %v3235
        %v3460 = vld [vmem:[%s3387 + $0x74] sm:$0x1]
        %v3461 = vsel %vm3396, %v3236, %v3460
        %3462 = vst [vmem:[%s3387 + $0x74] sm:$0x1] %v3461
        %v3463 = vld [vmem:[%s3387 + $0x78] sm:$0xf]
        %v3464 = vsel %vm3390, %v3243, %v3463
        %3465 = vst [vmem:[%s3387 + $0x78] sm:$0xf] %v3464
        %3466 = vst.msk [vmem:[%s3387 + $0x7c] sm:$0xf] %vm2912, %v3252
        %v3467 = vld [vmem:[%s3387 + $0x80] sm:$0x1]
        %v3468 = vsel %vm3396, %v3253, %v3467
        %3469 = vst [vmem:[%s3387 + $0x80] sm:$0x1] %v3468
        %v3470 = vld [vmem:[%s3387 + $0x84] sm:$0xf]
        %v3471 = vsel %vm3390, %v3260, %v3470
        %3472 = vst [vmem:[%s3387 + $0x84] sm:$0xf] %v3471
        %3473 = vst.msk [vmem:[%s3387 + $0x88] sm:$0xf] %vm2912, %v3269
        %v3474 = vld [vmem:[%s3387 + $0x8c] sm:$0x1]
        %v3475 = vsel %vm3396, %v3270, %v3474
        %3476 = vst [vmem:[%s3387 + $0x8c] sm:$0x1] %v3475
        %v3477 = vld [vmem:[%s3387 + $0x90] sm:$0xf]
        %v3478 = vsel %vm3390, %v3277, %v3477
        %3479 = vst [vmem:[%s3387 + $0x90] sm:$0xf] %v3478
        %3480 = vst.msk [vmem:[%s3387 + $0x94] sm:$0xf] %vm2912, %v3286
        %v3481 = vld [vmem:[%s3387 + $0x98] sm:$0x1]
        %v3482 = vsel %vm3396, %v3287, %v3481
        %3483 = vst [vmem:[%s3387 + $0x98] sm:$0x1] %v3482
        %v3484 = vld [vmem:[%s3387 + $0x9c] sm:$0xf]
        %v3485 = vsel %vm3390, %v3294, %v3484
        %3486 = vst [vmem:[%s3387 + $0x9c] sm:$0xf] %v3485
        %3487 = vst.msk [vmem:[%s3387 + $0xa0] sm:$0xf] %vm2912, %v3303
        %v3488 = vld [vmem:[%s3387 + $0xa4] sm:$0x1]
        %v3489 = vsel %vm3396, %v3304, %v3488
        %3490 = vst [vmem:[%s3387 + $0xa4] sm:$0x1] %v3489
        %v3491 = vld [vmem:[%s3387 + $0xa8] sm:$0xf]
        %v3492 = vsel %vm3390, %v3311, %v3491
        %3493 = vst [vmem:[%s3387 + $0xa8] sm:$0xf] %v3492
        %3494 = vst.msk [vmem:[%s3387 + $0xac] sm:$0xf] %vm2912, %v3320
        %v3495 = vld [vmem:[%s3387 + $0xb0] sm:$0x1]
        %v3496 = vsel %vm3396, %v3321, %v3495
        %3497 = vst [vmem:[%s3387 + $0xb0] sm:$0x1] %v3496
        %v3498 = vld [vmem:[%s3387 + $0xb4] sm:$0xf]
        %v3499 = vsel %vm3390, %v3328, %v3498
        %3500 = vst [vmem:[%s3387 + $0xb4] sm:$0xf] %v3499
        %3501 = vst.msk [vmem:[%s3387 + $0xb8] sm:$0xf] %vm2912, %v3337
        %v3502 = vld [vmem:[%s3387 + $0xbc] sm:$0x1]
        %v3503 = vsel %vm3396, %v3338, %v3502
        %3504 = vst [vmem:[%s3387 + $0xbc] sm:$0x1] %v3503
        %v3505 = vld [vmem:[#allocation3] sm:$0xf]
        %v3506 = vld [vmem:[#allocation3 + $0x4] sm:$0xf]
        %v3507 = vld [vmem:[#allocation3 + $0xc] sm:$0xf]
        %v3508 = vld [vmem:[#allocation3 + $0x10] sm:$0xf]
        %v3509 = vld [vmem:[#allocation3 + $0x18] sm:$0xf]
        %v3510 = vld [vmem:[#allocation3 + $0x1c] sm:$0xf]
        %v3511 = vld [vmem:[#allocation3 + $0x24] sm:$0xf]
        %v3512 = vld [vmem:[#allocation3 + $0x28] sm:$0xf]
        %v3513 = vld [vmem:[#allocation3 + $0x30] sm:$0xf]
        %v3514 = vld [vmem:[#allocation3 + $0x34] sm:$0xf]
        %v3515 = vld [vmem:[#allocation3 + $0x3c] sm:$0xf]
        %v3516 = vld [vmem:[#allocation3 + $0x40] sm:$0xf]
        %v3517 = vld [vmem:[#allocation3 + $0x48] sm:$0xf]
        %v3518 = vld [vmem:[#allocation3 + $0x4c] sm:$0xf]
        %v3519 = vld [vmem:[#allocation3 + $0x54] sm:$0xf]
        %v3520 = vld [vmem:[#allocation3 + $0x58] sm:$0xf]
        %v3521 = vld [vmem:[#allocation3 + $0x60] sm:$0xf]
        %v3522 = vld [vmem:[#allocation3 + $0x64] sm:$0xf]
        %v3523 = vld [vmem:[#allocation3 + $0x6c] sm:$0xf]
        %v3524 = vld [vmem:[#allocation3 + $0x70] sm:$0xf]
        %v3525 = vld [vmem:[#allocation3 + $0x78] sm:$0xf]
        %v3526 = vld [vmem:[#allocation3 + $0x7c] sm:$0xf]
        %v3527 = vld [vmem:[#allocation3 + $0x84] sm:$0xf]
        %v3528 = vld [vmem:[#allocation3 + $0x88] sm:$0xf]
        %v3529 = vld [vmem:[#allocation3 + $0x90] sm:$0xf]
        %v3530 = vld [vmem:[#allocation3 + $0x94] sm:$0xf]
        %v3531 = vld [vmem:[#allocation3 + $0x9c] sm:$0xf]
        %v3532 = vld [vmem:[#allocation3 + $0xa0] sm:$0xf]
        %v3533 = vld [vmem:[#allocation3 + $0xa8] sm:$0xf]
        %v3534 = vld [vmem:[#allocation3 + $0xac] sm:$0xf]
        %v3535 = vld [vmem:[#allocation3 + $0xb4] sm:$0xf]
        %v3536 = vld [vmem:[#allocation3 + $0xb8] sm:$0xf]
        %v3537 = vld [vmem:[%s4] sm:$0xf]
        %v3538 = vld [vmem:[%s4 + $0x4] sm:$0xf]
        %v3539 = vld [vmem:[%s4 + $0x8] sm:$0xf]
        %v3540 = vld [vmem:[%s4 + $0xc] sm:$0xf]
        %v3541 = vld [vmem:[%s4 + $0x10] sm:$0xf]
        %v3542 = vld [vmem:[%s4 + $0x14] sm:$0xf]
        %v3543 = vld [vmem:[%s4 + $0x18] sm:$0xf]
        %v3544 = vld [vmem:[%s4 + $0x1c] sm:$0xf]
        %v3577 = vunpack.c.l.b16 %v3505
        %v3578 = vunpack.c.l.b16 %v3506
        %v3579 = vunpack.c.l.b16 %v3507
        %v3580 = vunpack.c.l.b16 %v3508
        %v3581 = vunpack.c.l.b16 %v3509
        %v3582 = vunpack.c.l.b16 %v3510
        %v3583 = vunpack.c.l.b16 %v3511
        %v3584 = vunpack.c.l.b16 %v3512
        %v3585 = vunpack.c.l.b16 %v3513
        %v3586 = vunpack.c.l.b16 %v3514
        %v3587 = vunpack.c.l.b16 %v3515
        %v3588 = vunpack.c.l.b16 %v3516
        %v3589 = vunpack.c.l.b16 %v3517
        %v3590 = vunpack.c.l.b16 %v3518
        %v3591 = vunpack.c.l.b16 %v3519
        %v3592 = vunpack.c.l.b16 %v3520
        %v3593 = vunpack.c.l.b16 %v3521
        %v3594 = vunpack.c.l.b16 %v3522
        %v3595 = vunpack.c.l.b16 %v3523
        %v3596 = vunpack.c.l.b16 %v3524
        %v3597 = vunpack.c.l.b16 %v3525
        %v3598 = vunpack.c.l.b16 %v3526
        %v3599 = vunpack.c.l.b16 %v3527
        %v3600 = vunpack.c.l.b16 %v3528
        %v3601 = vunpack.c.l.b16 %v3529
        %v3602 = vunpack.c.l.b16 %v3530
        %v3603 = vunpack.c.l.b16 %v3531
        %v3604 = vunpack.c.l.b16 %v3532
        %v3605 = vunpack.c.l.b16 %v3533
        %v3606 = vunpack.c.l.b16 %v3534
        %v3607 = vunpack.c.l.b16 %v3535
        %v3608 = vunpack.c.l.b16 %v3536
        %v3609 = vpack.c.b16 %v3578, %v3577
        %v3610 = vpack.c.b16 %v3580, %v3579
        %v3611 = vpack.c.b16 %v3582, %v3581
        %v3612 = vpack.c.b16 %v3584, %v3583
        %v3613 = vpack.c.b16 %v3586, %v3585
        %v3614 = vpack.c.b16 %v3588, %v3587
        %v3615 = vpack.c.b16 %v3590, %v3589
        %v3616 = vpack.c.b16 %v3592, %v3591
        %v3617 = vpack.c.b16 %v3594, %v3593
        %v3618 = vpack.c.b16 %v3596, %v3595
        %v3619 = vpack.c.b16 %v3598, %v3597
        %v3620 = vpack.c.b16 %v3600, %v3599
        %v3621 = vpack.c.b16 %v3602, %v3601
        %v3622 = vpack.c.b16 %v3604, %v3603
        %v3623 = vpack.c.b16 %v3606, %v3605
        %v3624 = vpack.c.b16 %v3608, %v3607
        %v3633 = vunpack.c.l.b16 %v3537
        %v3634 = vunpack.c.l.b16 %v3538
        %v3635 = vunpack.c.l.b16 %v3539
        %v3636 = vunpack.c.l.b16 %v3540
        %v3637 = vunpack.c.l.b16 %v3541
        %v3638 = vunpack.c.l.b16 %v3542
        %v3639 = vunpack.c.l.b16 %v3543
        %v3640 = vunpack.c.l.b16 %v3544
        %v3641 = vpack.c.b16 %v3634, %v3633
        %v3642 = vpack.c.b16 %v3636, %v3635
        %v3643 = vpack.c.b16 %v3638, %v3637
        %v3644 = vpack.c.b16 %v3640, %v3639
        %vm3649 = vcmask 523264
        %v3651 = vsel %vm3649, %v3609, 0
        %v3654 = vsel %vm3649, %v3610, 0
        %v3657 = vsel %vm3649, %v3611, 0
        %v3660 = vsel %vm3649, %v3612, 0
        %v3663 = vsel %vm3649, %v3613, 0
        %v3666 = vsel %vm3649, %v3614, 0
        %v3669 = vsel %vm3649, %v3615, 0
        %v3672 = vsel %vm3649, %v3616, 0
        %v3675 = vsel %vm3649, %v3617, 0
        %v3678 = vsel %vm3649, %v3618, 0
        %v3681 = vsel %vm3649, %v3619, 0
        %v3684 = vsel %vm3649, %v3620, 0
        %v3687 = vsel %vm3649, %v3621, 0
        %v3690 = vsel %vm3649, %v3622, 0
        %v3693 = vsel %vm3649, %v3623, 0
        %v3696 = vsel %vm3649, %v3624, 0
        %3698 = vmatprep.subr.bf16.mxu0 0
        %3699 = vmatpush1.bf16.msra.mxu0 0
        %3700 = vmatprep.subr.bf16.mxu0 0
        %3701 = vmatpush1.bf16.msra.mxu0 0
        %3702 = vmatprep.subr.bf16.mxu0 0
        %3703 = vmatpush1.bf16.msra.mxu0 0
        %3704 = vmatprep.subr.bf16.mxu0 0
        %3705 = vmatpush1.bf16.msra.mxu0 0
        %3706 = vmatprep.subr.bf16.mxu0 0
        %3707 = vmatpush1.bf16.msra.mxu0 %v3644
        %3708 = vmatprep.subr.bf16.mxu0 0
        %3709 = vmatpush1.bf16.msra.mxu0 %v3643
        %3710 = vmatprep.subr.bf16.mxu0 0
        %3711 = vmatpush1.bf16.msra.mxu0 %v3642
        %3712 = vmatprep.subr.bf16.mxu0 0
        %3713 = vmatpush1.bf16.msra.mxu0 %v3641
        %3714 = vmatprep.subr.bf16.mxu0 0
        %3715 = vmatpush2.bf16.msra.mxu0 0
        %3716 = vmatprep.subr.bf16.mxu0 0
        %3717 = vmatpush2.bf16.msra.mxu0 0
        %3718 = vmatprep.subr.bf16.mxu0 0
        %3719 = vmatpush2.bf16.msra.mxu0 0
        %3720 = vmatprep.subr.bf16.mxu0 0
        %3721 = vmatpush2.bf16.msra.mxu0 0
        %3722 = vmatprep.subr.bf16.mxu0 0
        %3723 = vmatpush2.bf16.msra.mxu0 0
        %3724 = vmatprep.subr.bf16.mxu0 0
        %3725 = vmatpush2.bf16.msra.mxu0 0
        %3726 = vmatprep.subr.bf16.mxu0 0
        %3727 = vmatpush2.bf16.msra.mxu0 0
        %3728 = vmatprep.subr.bf16.mxu0 0
        %3729 = vmatpush2.bf16.msra.mxu0 0
        %3730 = vmatprep.mubr.bf16.mxu0 0
        %3731 = vmatmul.mubr.bf16.gmra.mxu0 %v3651
        %v3732 = vpop.f32.mrf.mxu0
        %v3733 = vadd.f32 0.0, %v3732
        %v3734 = vpop.f32.mrf.mxu0
        %v3735 = vpop.f32.mrf.mxu0
        %v3736 = vadd.f32 0.0, %v3735
        %v3737 = vpop.f32.mrf.mxu0
        %3738 = vmatprep.mubr.bf16.mxu0 0
        %3739 = vmatmul.mubr.bf16.gmra.mxu0 %v3654
        %v3740 = vpop.f32.mrf.mxu0
        %v3741 = vadd.f32 0.0, %v3740
        %v3742 = vpop.f32.mrf.mxu0
        %v3743 = vpop.f32.mrf.mxu0
        %v3744 = vadd.f32 0.0, %v3743
        %v3745 = vpop.f32.mrf.mxu0
        %3746 = vmatprep.mubr.bf16.mxu0 0
        %3747 = vmatmul.mubr.bf16.gmra.mxu0 %v3657
        %v3748 = vpop.f32.mrf.mxu0
        %v3749 = vadd.f32 0.0, %v3748
        %v3750 = vpop.f32.mrf.mxu0
        %v3751 = vpop.f32.mrf.mxu0
        %v3752 = vadd.f32 0.0, %v3751
        %v3753 = vpop.f32.mrf.mxu0
        %3754 = vmatprep.mubr.bf16.mxu0 0
        %3755 = vmatmul.mubr.bf16.gmra.mxu0 %v3660
        %v3756 = vpop.f32.mrf.mxu0
        %v3757 = vadd.f32 0.0, %v3756
        %v3758 = vpop.f32.mrf.mxu0
        %v3759 = vpop.f32.mrf.mxu0
        %v3760 = vadd.f32 0.0, %v3759
        %v3761 = vpop.f32.mrf.mxu0
        %3762 = vmatprep.mubr.bf16.mxu0 0
        %3763 = vmatmul.mubr.bf16.gmra.mxu0 %v3663
        %v3764 = vpop.f32.mrf.mxu0
        %v3765 = vadd.f32 0.0, %v3764
        %v3766 = vpop.f32.mrf.mxu0
        %v3767 = vpop.f32.mrf.mxu0
        %v3768 = vadd.f32 0.0, %v3767
        %v3769 = vpop.f32.mrf.mxu0
        %3770 = vmatprep.mubr.bf16.mxu0 0
        %3771 = vmatmul.mubr.bf16.gmra.mxu0 %v3666
        %v3772 = vpop.f32.mrf.mxu0
        %v3773 = vadd.f32 0.0, %v3772
        %v3774 = vpop.f32.mrf.mxu0
        %v3775 = vpop.f32.mrf.mxu0
        %v3776 = vadd.f32 0.0, %v3775
        %v3777 = vpop.f32.mrf.mxu0
        %3778 = vmatprep.mubr.bf16.mxu0 0
        %3779 = vmatmul.mubr.bf16.gmra.mxu0 %v3669
        %v3780 = vpop.f32.mrf.mxu0
        %v3781 = vadd.f32 0.0, %v3780
        %v3782 = vpop.f32.mrf.mxu0
        %v3783 = vpop.f32.mrf.mxu0
        %v3784 = vadd.f32 0.0, %v3783
        %v3785 = vpop.f32.mrf.mxu0
        %3786 = vmatprep.mubr.bf16.mxu0 0
        %3787 = vmatmul.mubr.bf16.gmra.mxu0 %v3672
        %v3788 = vpop.f32.mrf.mxu0
        %v3789 = vadd.f32 0.0, %v3788
        %v3790 = vpop.f32.mrf.mxu0
        %v3791 = vpop.f32.mrf.mxu0
        %v3792 = vadd.f32 0.0, %v3791
        %v3793 = vpop.f32.mrf.mxu0
        %3794 = vmatprep.mubr.bf16.mxu0 0
        %3795 = vmatmul.mubr.bf16.gmra.mxu0 %v3675
        %v3796 = vpop.f32.mrf.mxu0
        %v3797 = vadd.f32 0.0, %v3796
        %v3798 = vpop.f32.mrf.mxu0
        %v3799 = vpop.f32.mrf.mxu0
        %v3800 = vadd.f32 0.0, %v3799
        %v3801 = vpop.f32.mrf.mxu0
        %3802 = vmatprep.mubr.bf16.mxu0 0
        %3803 = vmatmul.mubr.bf16.gmra.mxu0 %v3678
        %v3804 = vpop.f32.mrf.mxu0
        %v3805 = vadd.f32 0.0, %v3804
        %v3806 = vpop.f32.mrf.mxu0
        %v3807 = vpop.f32.mrf.mxu0
        %v3808 = vadd.f32 0.0, %v3807
        %v3809 = vpop.f32.mrf.mxu0
        %3810 = vmatprep.mubr.bf16.mxu0 0
        %3811 = vmatmul.mubr.bf16.gmra.mxu0 %v3681
        %v3812 = vpop.f32.mrf.mxu0
        %v3813 = vadd.f32 0.0, %v3812
        %v3814 = vpop.f32.mrf.mxu0
        %v3815 = vpop.f32.mrf.mxu0
        %v3816 = vadd.f32 0.0, %v3815
        %v3817 = vpop.f32.mrf.mxu0
        %3818 = vmatprep.mubr.bf16.mxu0 0
        %3819 = vmatmul.mubr.bf16.gmra.mxu0 %v3684
        %v3820 = vpop.f32.mrf.mxu0
        %v3821 = vadd.f32 0.0, %v3820
        %v3822 = vpop.f32.mrf.mxu0
        %v3823 = vpop.f32.mrf.mxu0
        %v3824 = vadd.f32 0.0, %v3823
        %v3825 = vpop.f32.mrf.mxu0
        %3826 = vmatprep.mubr.bf16.mxu0 0
        %3827 = vmatmul.mubr.bf16.gmra.mxu0 %v3687
        %v3828 = vpop.f32.mrf.mxu0
        %v3829 = vadd.f32 0.0, %v3828
        %v3830 = vpop.f32.mrf.mxu0
        %v3831 = vpop.f32.mrf.mxu0
        %v3832 = vadd.f32 0.0, %v3831
        %v3833 = vpop.f32.mrf.mxu0
        %3834 = vmatprep.mubr.bf16.mxu0 0
        %3835 = vmatmul.mubr.bf16.gmra.mxu0 %v3690
        %v3836 = vpop.f32.mrf.mxu0
        %v3837 = vadd.f32 0.0, %v3836
        %v3838 = vpop.f32.mrf.mxu0
        %v3839 = vpop.f32.mrf.mxu0
        %v3840 = vadd.f32 0.0, %v3839
        %v3841 = vpop.f32.mrf.mxu0
        %3842 = vmatprep.mubr.bf16.mxu0 0
        %3843 = vmatmul.mubr.bf16.gmra.mxu0 %v3693
        %v3844 = vpop.f32.mrf.mxu0
        %v3845 = vadd.f32 0.0, %v3844
        %v3846 = vpop.f32.mrf.mxu0
        %v3847 = vpop.f32.mrf.mxu0
        %v3848 = vadd.f32 0.0, %v3847
        %v3849 = vpop.f32.mrf.mxu0
        %3850 = vmatprep.mubr.bf16.mxu0 0
        %3851 = vmatmul.mubr.bf16.gmra.mxu0 %v3696
        %v3852 = vpop.f32.mrf.mxu0
        %v3853 = vadd.f32 0.0, %v3852
        %v3854 = vpop.f32.mrf.mxu0
        %v3855 = vpop.f32.mrf.mxu0
        %v3856 = vadd.f32 0.0, %v3855
        %v3857 = vpop.f32.mrf.mxu0
        %3858 = vdwg.mxu0
        %3859 = vst [vmem:[#allocation4] sm:$0xff] %v3733
        %3860 = vst [vmem:[#allocation4 + $0x8] sm:$0xff] %v3736
        %3861 = vst [vmem:[#allocation4 + $0x10] sm:$0xff] %v3741
        %3862 = vst [vmem:[#allocation4 + $0x18] sm:$0xff] %v3744
        %3863 = vst [vmem:[#allocation4 + $0x20] sm:$0xff] %v3749
        %3864 = vst [vmem:[#allocation4 + $0x28] sm:$0xff] %v3752
        %3865 = vst [vmem:[#allocation4 + $0x30] sm:$0xff] %v3757
        %3866 = vst [vmem:[#allocation4 + $0x38] sm:$0xff] %v3760
        %3867 = vst [vmem:[#allocation4 + $0x40] sm:$0xff] %v3765
        %3868 = vst [vmem:[#allocation4 + $0x48] sm:$0xff] %v3768
        %3869 = vst [vmem:[#allocation4 + $0x50] sm:$0xff] %v3773
        %3870 = vst [vmem:[#allocation4 + $0x58] sm:$0xff] %v3776
        %3871 = vst [vmem:[#allocation4 + $0x60] sm:$0xff] %v3781
        %3872 = vst [vmem:[#allocation4 + $0x68] sm:$0xff] %v3784
        %3873 = vst [vmem:[#allocation4 + $0x70] sm:$0xff] %v3789
        %3874 = vst [vmem:[#allocation4 + $0x78] sm:$0xff] %v3792
        %3875 = vst [vmem:[#allocation4 + $0x80] sm:$0xff] %v3797
        %3876 = vst [vmem:[#allocation4 + $0x88] sm:$0xff] %v3800
        %3877 = vst [vmem:[#allocation4 + $0x90] sm:$0xff] %v3805
        %3878 = vst [vmem:[#allocation4 + $0x98] sm:$0xff] %v3808
        %3879 = vst [vmem:[#allocation4 + $0xa0] sm:$0xff] %v3813
        %3880 = vst [vmem:[#allocation4 + $0xa8] sm:$0xff] %v3816
        %3881 = vst [vmem:[#allocation4 + $0xb0] sm:$0xff] %v3821
        %3882 = vst [vmem:[#allocation4 + $0xb8] sm:$0xff] %v3824
        %3883 = vst [vmem:[#allocation4 + $0xc0] sm:$0xff] %v3829
        %3884 = vst [vmem:[#allocation4 + $0xc8] sm:$0xff] %v3832
        %3885 = vst [vmem:[#allocation4 + $0xd0] sm:$0xff] %v3837
        %3886 = vst [vmem:[#allocation4 + $0xd8] sm:$0xff] %v3840
        %3887 = vst [vmem:[#allocation4 + $0xe0] sm:$0xff] %v3845
        %3888 = vst [vmem:[#allocation4 + $0xe8] sm:$0xff] %v3848
        %3889 = vst [vmem:[#allocation4 + $0xf0] sm:$0xff] %v3853
        %3890 = vst [vmem:[#allocation4 + $0xf8] sm:$0xff] %v3856
        %v3891 = vld [vmem:[#allocation3] sm:$0xf]
        %v3892 = vld [vmem:[#allocation3 + $0x4] sm:$0xf]
        %v3893 = vld [vmem:[#allocation3 + $0x8] sm:$0x1]
        %v3894 = vld [vmem:[#allocation3 + $0xc] sm:$0xf]
        %v3895 = vld [vmem:[#allocation3 + $0x10] sm:$0xf]
        %v3896 = vld [vmem:[#allocation3 + $0x14] sm:$0x1]
        %v3897 = vld [vmem:[#allocation3 + $0x18] sm:$0xf]
        %v3898 = vld [vmem:[#allocation3 + $0x1c] sm:$0xf]
        %v3899 = vld [vmem:[#allocation3 + $0x20] sm:$0x1]
        %v3900 = vld [vmem:[#allocation3 + $0x24] sm:$0xf]
        %v3901 = vld [vmem:[#allocation3 + $0x28] sm:$0xf]
        %v3902 = vld [vmem:[#allocation3 + $0x2c] sm:$0x1]
        %v3903 = vld [vmem:[#allocation3 + $0x30] sm:$0xf]
        %v3904 = vld [vmem:[#allocation3 + $0x34] sm:$0xf]
        %v3905 = vld [vmem:[#allocation3 + $0x38] sm:$0x1]
        %v3906 = vld [vmem:[#allocation3 + $0x3c] sm:$0xf]
        %v3907 = vld [vmem:[#allocation3 + $0x40] sm:$0xf]
        %v3908 = vld [vmem:[#allocation3 + $0x44] sm:$0x1]
        %v3909 = vld [vmem:[#allocation3 + $0x48] sm:$0xf]
        %v3910 = vld [vmem:[#allocation3 + $0x4c] sm:$0xf]
        %v3911 = vld [vmem:[#allocation3 + $0x50] sm:$0x1]
        %v3912 = vld [vmem:[#allocation3 + $0x54] sm:$0xf]
        %v3913 = vld [vmem:[#allocation3 + $0x58] sm:$0xf]
        %v3914 = vld [vmem:[#allocation3 + $0x5c] sm:$0x1]
        %v3915 = vld [vmem:[#allocation3 + $0x60] sm:$0xf]
        %v3916 = vld [vmem:[#allocation3 + $0x64] sm:$0xf]
        %v3917 = vld [vmem:[#allocation3 + $0x68] sm:$0x1]
        %v3918 = vld [vmem:[#allocation3 + $0x6c] sm:$0xf]
        %v3919 = vld [vmem:[#allocation3 + $0x70] sm:$0xf]
        %v3920 = vld [vmem:[#allocation3 + $0x74] sm:$0x1]
        %v3921 = vld [vmem:[#allocation3 + $0x78] sm:$0xf]
        %v3922 = vld [vmem:[#allocation3 + $0x7c] sm:$0xf]
        %v3923 = vld [vmem:[#allocation3 + $0x80] sm:$0x1]
        %v3924 = vld [vmem:[#allocation3 + $0x84] sm:$0xf]
        %v3925 = vld [vmem:[#allocation3 + $0x88] sm:$0xf]
        %v3926 = vld [vmem:[#allocation3 + $0x8c] sm:$0x1]
        %v3927 = vld [vmem:[#allocation3 + $0x90] sm:$0xf]
        %v3928 = vld [vmem:[#allocation3 + $0x94] sm:$0xf]
        %v3929 = vld [vmem:[#allocation3 + $0x98] sm:$0x1]
        %v3930 = vld [vmem:[#allocation3 + $0x9c] sm:$0xf]
        %v3931 = vld [vmem:[#allocation3 + $0xa0] sm:$0xf]
        %v3932 = vld [vmem:[#allocation3 + $0xa4] sm:$0x1]
        %v3933 = vld [vmem:[#allocation3 + $0xa8] sm:$0xf]
        %v3934 = vld [vmem:[#allocation3 + $0xac] sm:$0xf]
        %v3935 = vld [vmem:[#allocation3 + $0xb0] sm:$0x1]
        %v3936 = vld [vmem:[#allocation3 + $0xb4] sm:$0xf]
        %v3937 = vld [vmem:[#allocation3 + $0xb8] sm:$0xf]
        %v3938 = vld [vmem:[#allocation3 + $0xbc] sm:$0x1]
        %vm3939 = vsmask.f32 3328
        %vm3940 = vsmask.f32 7440
        %vm3941 = vmor %vm3939, %vm3940
        %v3943 = vshrl.u32 %v3891, 16
        %v3945 = vrot.slane %v3943, 4
        %v3946 = vshll.u32 %v3891, 16
        %v3948 = vrot.slane %v3946, 5
        %v3949 = vor.u32 %v3945, %v3948
        %v3950 = vrot.slane %v3949, 4
        %v3952 = vshll.u32 %v3892, 16
        %v3954 = vrot.slane %v3952, 5
        %v3955 = vsel %vm3941, %v3950, %v3954
        %v3956 = vshrl.u32 %v3892, 16
        %v3958 = vrot.slane %v3956, 4
        %v3959 = vor.u32 %v3958, %v3954
        %v3960 = vrot.slane %v3959, 4
        %v3962 = vshll.u32 %v3893, 16
        %v3964 = vrot.slane %v3962, 5
        %v3965 = vsel %vm3941, %v3960, %v3964
        %v3967 = vshrl.u32 %v3894, 16
        %v3969 = vrot.slane %v3967, 4
        %v3970 = vshll.u32 %v3894, 16
        %v3972 = vrot.slane %v3970, 5
        %v3973 = vor.u32 %v3969, %v3972
        %v3974 = vrot.slane %v3973, 4
        %v3976 = vshll.u32 %v3895, 16
        %v3978 = vrot.slane %v3976, 5
        %v3979 = vsel %vm3941, %v3974, %v3978
        %v3980 = vshrl.u32 %v3895, 16
        %v3982 = vrot.slane %v3980, 4
        %v3983 = vor.u32 %v3982, %v3978
        %v3984 = vrot.slane %v3983, 4
        %v3986 = vshll.u32 %v3896, 16
        %v3988 = vrot.slane %v3986, 5
        %v3989 = vsel %vm3941, %v3984, %v3988
        %v3991 = vshrl.u32 %v3897, 16
        %v3993 = vrot.slane %v3991, 4
        %v3994 = vshll.u32 %v3897, 16
        %v3996 = vrot.slane %v3994, 5
        %v3997 = vor.u32 %v3993, %v3996
        %v3998 = vrot.slane %v3997, 4
        %v4000 = vshll.u32 %v3898, 16
        %v4002 = vrot.slane %v4000, 5
        %v4003 = vsel %vm3941, %v3998, %v4002
        %v4004 = vshrl.u32 %v3898, 16
        %v4006 = vrot.slane %v4004, 4
        %v4007 = vor.u32 %v4006, %v4002
        %v4008 = vrot.slane %v4007, 4
        %v4010 = vshll.u32 %v3899, 16
        %v4012 = vrot.slane %v4010, 5
        %v4013 = vsel %vm3941, %v4008, %v4012
        %v4015 = vshrl.u32 %v3900, 16
        %v4017 = vrot.slane %v4015, 4
        %v4018 = vshll.u32 %v3900, 16
        %v4020 = vrot.slane %v4018, 5
        %v4021 = vor.u32 %v4017, %v4020
        %v4022 = vrot.slane %v4021, 4
        %v4024 = vshll.u32 %v3901, 16
        %v4026 = vrot.slane %v4024, 5
        %v4027 = vsel %vm3941, %v4022, %v4026
        %v4028 = vshrl.u32 %v3901, 16
        %v4030 = vrot.slane %v4028, 4
        %v4031 = vor.u32 %v4030, %v4026
        %v4032 = vrot.slane %v4031, 4
        %v4034 = vshll.u32 %v3902, 16
        %v4036 = vrot.slane %v4034, 5
        %v4037 = vsel %vm3941, %v4032, %v4036
        %v4039 = vshrl.u32 %v3903, 16
        %v4041 = vrot.slane %v4039, 4
        %v4042 = vshll.u32 %v3903, 16
        %v4044 = vrot.slane %v4042, 5
        %v4045 = vor.u32 %v4041, %v4044
        %v4046 = vrot.slane %v4045, 4
        %v4048 = vshll.u32 %v3904, 16
        %v4050 = vrot.slane %v4048, 5
        %v4051 = vsel %vm3941, %v4046, %v4050
        %v4052 = vshrl.u32 %v3904, 16
        %v4054 = vrot.slane %v4052, 4
        %v4055 = vor.u32 %v4054, %v4050
        %v4056 = vrot.slane %v4055, 4
        %v4058 = vshll.u32 %v3905, 16
        %v4060 = vrot.slane %v4058, 5
        %v4061 = vsel %vm3941, %v4056, %v4060
        %v4063 = vshrl.u32 %v3906, 16
        %v4065 = vrot.slane %v4063, 4
        %v4066 = vshll.u32 %v3906, 16
        %v4068 = vrot.slane %v4066, 5
        %v4069 = vor.u32 %v4065, %v4068
        %v4070 = vrot.slane %v4069, 4
        %v4072 = vshll.u32 %v3907, 16
        %v4074 = vrot.slane %v4072, 5
        %v4075 = vsel %vm3941, %v4070, %v4074
        %v4076 = vshrl.u32 %v3907, 16
        %v4078 = vrot.slane %v4076, 4
        %v4079 = vor.u32 %v4078, %v4074
        %v4080 = vrot.slane %v4079, 4
        %v4082 = vshll.u32 %v3908, 16
        %v4084 = vrot.slane %v4082, 5
        %v4085 = vsel %vm3941, %v4080, %v4084
        %v4087 = vshrl.u32 %v3909, 16
        %v4089 = vrot.slane %v4087, 4
        %v4090 = vshll.u32 %v3909, 16
        %v4092 = vrot.slane %v4090, 5
        %v4093 = vor.u32 %v4089, %v4092
        %v4094 = vrot.slane %v4093, 4
        %v4096 = vshll.u32 %v3910, 16
        %v4098 = vrot.slane %v4096, 5
        %v4099 = vsel %vm3941, %v4094, %v4098
        %v4100 = vshrl.u32 %v3910, 16
        %v4102 = vrot.slane %v4100, 4
        %v4103 = vor.u32 %v4102, %v4098
        %v4104 = vrot.slane %v4103, 4
        %v4106 = vshll.u32 %v3911, 16
        %v4108 = vrot.slane %v4106, 5
        %v4109 = vsel %vm3941, %v4104, %v4108
        %v4111 = vshrl.u32 %v3912, 16
        %v4113 = vrot.slane %v4111, 4
        %v4114 = vshll.u32 %v3912, 16
        %v4116 = vrot.slane %v4114, 5
        %v4117 = vor.u32 %v4113, %v4116
        %v4118 = vrot.slane %v4117, 4
        %v4120 = vshll.u32 %v3913, 16
        %v4122 = vrot.slane %v4120, 5
        %v4123 = vsel %vm3941, %v4118, %v4122
        %v4124 = vshrl.u32 %v3913, 16
        %v4126 = vrot.slane %v4124, 4
        %v4127 = vor.u32 %v4126, %v4122
        %v4128 = vrot.slane %v4127, 4
        %v4130 = vshll.u32 %v3914, 16
        %v4132 = vrot.slane %v4130, 5
        %v4133 = vsel %vm3941, %v4128, %v4132
        %v4135 = vshrl.u32 %v3915, 16
        %v4137 = vrot.slane %v4135, 4
        %v4138 = vshll.u32 %v3915, 16
        %v4140 = vrot.slane %v4138, 5
        %v4141 = vor.u32 %v4137, %v4140
        %v4142 = vrot.slane %v4141, 4
        %v4144 = vshll.u32 %v3916, 16
        %v4146 = vrot.slane %v4144, 5
        %v4147 = vsel %vm3941, %v4142, %v4146
        %v4148 = vshrl.u32 %v3916, 16
        %v4150 = vrot.slane %v4148, 4
        %v4151 = vor.u32 %v4150, %v4146
        %v4152 = vrot.slane %v4151, 4
        %v4154 = vshll.u32 %v3917, 16
        %v4156 = vrot.slane %v4154, 5
        %v4157 = vsel %vm3941, %v4152, %v4156
        %v4159 = vshrl.u32 %v3918, 16
        %v4161 = vrot.slane %v4159, 4
        %v4162 = vshll.u32 %v3918, 16
        %v4164 = vrot.slane %v4162, 5
        %v4165 = vor.u32 %v4161, %v4164
        %v4166 = vrot.slane %v4165, 4
        %v4168 = vshll.u32 %v3919, 16
        %v4170 = vrot.slane %v4168, 5
        %v4171 = vsel %vm3941, %v4166, %v4170
        %v4172 = vshrl.u32 %v3919, 16
        %v4174 = vrot.slane %v4172, 4
        %v4175 = vor.u32 %v4174, %v4170
        %v4176 = vrot.slane %v4175, 4
        %v4178 = vshll.u32 %v3920, 16
        %v4180 = vrot.slane %v4178, 5
        %v4181 = vsel %vm3941, %v4176, %v4180
        %v4183 = vshrl.u32 %v3921, 16
        %v4185 = vrot.slane %v4183, 4
        %v4186 = vshll.u32 %v3921, 16
        %v4188 = vrot.slane %v4186, 5
        %v4189 = vor.u32 %v4185, %v4188
        %v4190 = vrot.slane %v4189, 4
        %v4192 = vshll.u32 %v3922, 16
        %v4194 = vrot.slane %v4192, 5
        %v4195 = vsel %vm3941, %v4190, %v4194
        %v4196 = vshrl.u32 %v3922, 16
        %v4198 = vrot.slane %v4196, 4
        %v4199 = vor.u32 %v4198, %v4194
        %v4200 = vrot.slane %v4199, 4
        %v4202 = vshll.u32 %v3923, 16
        %v4204 = vrot.slane %v4202, 5
        %v4205 = vsel %vm3941, %v4200, %v4204
        %v4207 = vshrl.u32 %v3924, 16
        %v4209 = vrot.slane %v4207, 4
        %v4210 = vshll.u32 %v3924, 16
        %v4212 = vrot.slane %v4210, 5
        %v4213 = vor.u32 %v4209, %v4212
        %v4214 = vrot.slane %v4213, 4
        %v4216 = vshll.u32 %v3925, 16
        %v4218 = vrot.slane %v4216, 5
        %v4219 = vsel %vm3941, %v4214, %v4218
        %v4220 = vshrl.u32 %v3925, 16
        %v4222 = vrot.slane %v4220, 4
        %v4223 = vor.u32 %v4222, %v4218
        %v4224 = vrot.slane %v4223, 4
        %v4226 = vshll.u32 %v3926, 16
        %v4228 = vrot.slane %v4226, 5
        %v4229 = vsel %vm3941, %v4224, %v4228
        %v4231 = vshrl.u32 %v3927, 16
        %v4233 = vrot.slane %v4231, 4
        %v4234 = vshll.u32 %v3927, 16
        %v4236 = vrot.slane %v4234, 5
        %v4237 = vor.u32 %v4233, %v4236
        %v4238 = vrot.slane %v4237, 4
        %v4240 = vshll.u32 %v3928, 16
        %v4242 = vrot.slane %v4240, 5
        %v4243 = vsel %vm3941, %v4238, %v4242
        %v4244 = vshrl.u32 %v3928, 16
        %v4246 = vrot.slane %v4244, 4
        %v4247 = vor.u32 %v4246, %v4242
        %v4248 = vrot.slane %v4247, 4
        %v4250 = vshll.u32 %v3929, 16
        %v4252 = vrot.slane %v4250, 5
        %v4253 = vsel %vm3941, %v4248, %v4252
        %v4255 = vshrl.u32 %v3930, 16
        %v4257 = vrot.slane %v4255, 4
        %v4258 = vshll.u32 %v3930, 16
        %v4260 = vrot.slane %v4258, 5
        %v4261 = vor.u32 %v4257, %v4260
        %v4262 = vrot.slane %v4261, 4
        %v4264 = vshll.u32 %v3931, 16
        %v4266 = vrot.slane %v4264, 5
        %v4267 = vsel %vm3941, %v4262, %v4266
        %v4268 = vshrl.u32 %v3931, 16
        %v4270 = vrot.slane %v4268, 4
        %v4271 = vor.u32 %v4270, %v4266
        %v4272 = vrot.slane %v4271, 4
        %v4274 = vshll.u32 %v3932, 16
        %v4276 = vrot.slane %v4274, 5
        %v4277 = vsel %vm3941, %v4272, %v4276
        %v4279 = vshrl.u32 %v3933, 16
        %v4281 = vrot.slane %v4279, 4
        %v4282 = vshll.u32 %v3933, 16
        %v4284 = vrot.slane %v4282, 5
        %v4285 = vor.u32 %v4281, %v4284
        %v4286 = vrot.slane %v4285, 4
        %v4288 = vshll.u32 %v3934, 16
        %v4290 = vrot.slane %v4288, 5
        %v4291 = vsel %vm3941, %v4286, %v4290
        %v4292 = vshrl.u32 %v3934, 16
        %v4294 = vrot.slane %v4292, 4
        %v4295 = vor.u32 %v4294, %v4290
        %v4296 = vrot.slane %v4295, 4
        %v4298 = vshll.u32 %v3935, 16
        %v4300 = vrot.slane %v4298, 5
        %v4301 = vsel %vm3941, %v4296, %v4300
        %v4303 = vshrl.u32 %v3936, 16
        %v4305 = vrot.slane %v4303, 4
        %v4306 = vshll.u32 %v3936, 16
        %v4308 = vrot.slane %v4306, 5
        %v4309 = vor.u32 %v4305, %v4308
        %v4310 = vrot.slane %v4309, 4
        %v4312 = vshll.u32 %v3937, 16
        %v4314 = vrot.slane %v4312, 5
        %v4315 = vsel %vm3941, %v4310, %v4314
        %v4316 = vshrl.u32 %v3937, 16
        %v4318 = vrot.slane %v4316, 4
        %v4319 = vor.u32 %v4318, %v4314
        %v4320 = vrot.slane %v4319, 4
        %v4322 = vshll.u32 %v3938, 16
        %v4324 = vrot.slane %v4322, 5
        %v4325 = vsel %vm3941, %v4320, %v4324
        %s4326 = scalar_lea.vmem %s4, 32
        %v4327 = vld [vmem:[%s4326] sm:$0xf]
        %v4328 = vld [vmem:[%s4326 + $0x4] sm:$0xf]
        %v4329 = vld [vmem:[%s4326 + $0x8] sm:$0xf]
        %v4330 = vld [vmem:[%s4326 + $0xc] sm:$0xf]
        %v4331 = vld [vmem:[%s4326 + $0x10] sm:$0xf]
        %v4332 = vld [vmem:[%s4326 + $0x14] sm:$0xf]
        %v4333 = vld [vmem:[%s4326 + $0x18] sm:$0xf]
        %v4334 = vld [vmem:[%s4326 + $0x1c] sm:$0xf]
        %v4335 = vunpack.c.l.b16 %v3955
        %v4336 = vunpack.c.l.b16 %v3965
        %v4337 = vunpack.c.l.b16 %v3979
        %v4338 = vunpack.c.l.b16 %v3989
        %v4339 = vunpack.c.l.b16 %v4003
        %v4340 = vunpack.c.l.b16 %v4013
        %v4341 = vunpack.c.l.b16 %v4027
        %v4342 = vunpack.c.l.b16 %v4037
        %v4343 = vunpack.c.l.b16 %v4051
        %v4344 = vunpack.c.l.b16 %v4061
        %v4345 = vunpack.c.l.b16 %v4075
        %v4346 = vunpack.c.l.b16 %v4085
        %v4347 = vunpack.c.l.b16 %v4099
        %v4348 = vunpack.c.l.b16 %v4109
        %v4349 = vunpack.c.l.b16 %v4123
        %v4350 = vunpack.c.l.b16 %v4133
        %v4351 = vunpack.c.l.b16 %v4147
        %v4352 = vunpack.c.l.b16 %v4157
        %v4353 = vunpack.c.l.b16 %v4171
        %v4354 = vunpack.c.l.b16 %v4181
        %v4355 = vunpack.c.l.b16 %v4195
        %v4356 = vunpack.c.l.b16 %v4205
        %v4357 = vunpack.c.l.b16 %v4219
        %v4358 = vunpack.c.l.b16 %v4229
        %v4359 = vunpack.c.l.b16 %v4243
        %v4360 = vunpack.c.l.b16 %v4253
        %v4361 = vunpack.c.l.b16 %v4267
        %v4362 = vunpack.c.l.b16 %v4277
        %v4363 = vunpack.c.l.b16 %v4291
        %v4364 = vunpack.c.l.b16 %v4301
        %v4365 = vunpack.c.l.b16 %v4315
        %v4366 = vunpack.c.l.b16 %v4325
        %v4367 = vpack.c.b16 %v4336, %v4335
        %v4368 = vpack.c.b16 %v4338, %v4337
        %v4369 = vpack.c.b16 %v4340, %v4339
        %v4370 = vpack.c.b16 %v4342, %v4341
        %v4371 = vpack.c.b16 %v4344, %v4343
        %v4372 = vpack.c.b16 %v4346, %v4345
        %v4373 = vpack.c.b16 %v4348, %v4347
        %v4374 = vpack.c.b16 %v4350, %v4349
        %v4375 = vpack.c.b16 %v4352, %v4351
        %v4376 = vpack.c.b16 %v4354, %v4353
        %v4377 = vpack.c.b16 %v4356, %v4355
        %v4378 = vpack.c.b16 %v4358, %v4357
        %v4379 = vpack.c.b16 %v4360, %v4359
        %v4380 = vpack.c.b16 %v4362, %v4361
        %v4381 = vpack.c.b16 %v4364, %v4363
        %v4382 = vpack.c.b16 %v4366, %v4365
        %v4391 = vunpack.c.l.b16 %v4327
        %v4392 = vunpack.c.l.b16 %v4328
        %v4393 = vunpack.c.l.b16 %v4329
        %v4394 = vunpack.c.l.b16 %v4330
        %v4395 = vunpack.c.l.b16 %v4331
        %v4396 = vunpack.c.l.b16 %v4332
        %v4397 = vunpack.c.l.b16 %v4333
        %v4398 = vunpack.c.l.b16 %v4334
        %v4399 = vpack.c.b16 %v4392, %v4391
        %v4400 = vpack.c.b16 %v4394, %v4393
        %v4401 = vpack.c.b16 %v4396, %v4395
        %v4402 = vpack.c.b16 %v4398, %v4397
        %v4408 = vsel %vm3649, %v4367, 0
        %v4411 = vsel %vm3649, %v4368, 0
        %v4414 = vsel %vm3649, %v4369, 0
        %v4417 = vsel %vm3649, %v4370, 0
        %v4420 = vsel %vm3649, %v4371, 0
        %v4423 = vsel %vm3649, %v4372, 0
        %v4426 = vsel %vm3649, %v4373, 0
        %v4429 = vsel %vm3649, %v4374, 0
        %v4432 = vsel %vm3649, %v4375, 0
        %v4435 = vsel %vm3649, %v4376, 0
        %v4438 = vsel %vm3649, %v4377, 0
        %v4441 = vsel %vm3649, %v4378, 0
        %v4444 = vsel %vm3649, %v4379, 0
        %v4447 = vsel %vm3649, %v4380, 0
        %v4450 = vsel %vm3649, %v4381, 0
        %v4453 = vsel %vm3649, %v4382, 0
        %4455 = vmatprep.subr.bf16.mxu0 0
        %4456 = vmatpush1.bf16.msra.mxu0 0
        %4457 = vmatprep.subr.bf16.mxu0 0
        %4458 = vmatpush1.bf16.msra.mxu0 0
        %4459 = vmatprep.subr.bf16.mxu0 0
        %4460 = vmatpush1.bf16.msra.mxu0 0
        %4461 = vmatprep.subr.bf16.mxu0 0
        %4462 = vmatpush1.bf16.msra.mxu0 0
        %4463 = vmatprep.subr.bf16.mxu0 0
        %4464 = vmatpush1.bf16.msra.mxu0 %v4402
        %4465 = vmatprep.subr.bf16.mxu0 0
        %4466 = vmatpush1.bf16.msra.mxu0 %v4401
        %4467 = vmatprep.subr.bf16.mxu0 0
        %4468 = vmatpush1.bf16.msra.mxu0 %v4400
        %4469 = vmatprep.subr.bf16.mxu0 0
        %4470 = vmatpush1.bf16.msra.mxu0 %v4399
        %4471 = vmatprep.subr.bf16.mxu0 0
        %4472 = vmatpush2.bf16.msra.mxu0 0
        %4473 = vmatprep.subr.bf16.mxu0 0
        %4474 = vmatpush2.bf16.msra.mxu0 0
        %4475 = vmatprep.subr.bf16.mxu0 0
        %4476 = vmatpush2.bf16.msra.mxu0 0
        %4477 = vmatprep.subr.bf16.mxu0 0
        %4478 = vmatpush2.bf16.msra.mxu0 0
        %4479 = vmatprep.subr.bf16.mxu0 0
        %4480 = vmatpush2.bf16.msra.mxu0 0
        %4481 = vmatprep.subr.bf16.mxu0 0
        %4482 = vmatpush2.bf16.msra.mxu0 0
        %4483 = vmatprep.subr.bf16.mxu0 0
        %4484 = vmatpush2.bf16.msra.mxu0 0
        %4485 = vmatprep.subr.bf16.mxu0 0
        %4486 = vmatpush2.bf16.msra.mxu0 0
        %4487 = vmatprep.mubr.bf16.mxu0 0
        %4488 = vmatmul.mubr.bf16.gmra.mxu0 %v4408
        %v4489 = vpop.f32.mrf.mxu0
        %v4490 = vadd.f32 0.0, %v4489
        %v4491 = vpop.f32.mrf.mxu0
        %v4492 = vpop.f32.mrf.mxu0
        %v4493 = vadd.f32 0.0, %v4492
        %v4494 = vpop.f32.mrf.mxu0
        %4495 = vmatprep.mubr.bf16.mxu0 0
        %4496 = vmatmul.mubr.bf16.gmra.mxu0 %v4411
        %v4497 = vpop.f32.mrf.mxu0
        %v4498 = vadd.f32 0.0, %v4497
        %v4499 = vpop.f32.mrf.mxu0
        %v4500 = vpop.f32.mrf.mxu0
        %v4501 = vadd.f32 0.0, %v4500
        %v4502 = vpop.f32.mrf.mxu0
        %4503 = vmatprep.mubr.bf16.mxu0 0
        %4504 = vmatmul.mubr.bf16.gmra.mxu0 %v4414
        %v4505 = vpop.f32.mrf.mxu0
        %v4506 = vadd.f32 0.0, %v4505
        %v4507 = vpop.f32.mrf.mxu0
        %v4508 = vpop.f32.mrf.mxu0
        %v4509 = vadd.f32 0.0, %v4508
        %v4510 = vpop.f32.mrf.mxu0
        %4511 = vmatprep.mubr.bf16.mxu0 0
        %4512 = vmatmul.mubr.bf16.gmra.mxu0 %v4417
        %v4513 = vpop.f32.mrf.mxu0
        %v4514 = vadd.f32 0.0, %v4513
        %v4515 = vpop.f32.mrf.mxu0
        %v4516 = vpop.f32.mrf.mxu0
        %v4517 = vadd.f32 0.0, %v4516
        %v4518 = vpop.f32.mrf.mxu0
        %4519 = vmatprep.mubr.bf16.mxu0 0
        %4520 = vmatmul.mubr.bf16.gmra.mxu0 %v4420
        %v4521 = vpop.f32.mrf.mxu0
        %v4522 = vadd.f32 0.0, %v4521
        %v4523 = vpop.f32.mrf.mxu0
        %v4524 = vpop.f32.mrf.mxu0
        %v4525 = vadd.f32 0.0, %v4524
        %v4526 = vpop.f32.mrf.mxu0
        %4527 = vmatprep.mubr.bf16.mxu0 0
        %4528 = vmatmul.mubr.bf16.gmra.mxu0 %v4423
        %v4529 = vpop.f32.mrf.mxu0
        %v4530 = vadd.f32 0.0, %v4529
        %v4531 = vpop.f32.mrf.mxu0
        %v4532 = vpop.f32.mrf.mxu0
        %v4533 = vadd.f32 0.0, %v4532
        %v4534 = vpop.f32.mrf.mxu0
        %4535 = vmatprep.mubr.bf16.mxu0 0
        %4536 = vmatmul.mubr.bf16.gmra.mxu0 %v4426
        %v4537 = vpop.f32.mrf.mxu0
        %v4538 = vadd.f32 0.0, %v4537
        %v4539 = vpop.f32.mrf.mxu0
        %v4540 = vpop.f32.mrf.mxu0
        %v4541 = vadd.f32 0.0, %v4540
        %v4542 = vpop.f32.mrf.mxu0
        %4543 = vmatprep.mubr.bf16.mxu0 0
        %4544 = vmatmul.mubr.bf16.gmra.mxu0 %v4429
        %v4545 = vpop.f32.mrf.mxu0
        %v4546 = vadd.f32 0.0, %v4545
        %v4547 = vpop.f32.mrf.mxu0
        %v4548 = vpop.f32.mrf.mxu0
        %v4549 = vadd.f32 0.0, %v4548
        %v4550 = vpop.f32.mrf.mxu0
        %4551 = vmatprep.mubr.bf16.mxu0 0
        %4552 = vmatmul.mubr.bf16.gmra.mxu0 %v4432
        %v4553 = vpop.f32.mrf.mxu0
        %v4554 = vadd.f32 0.0, %v4553
        %v4555 = vpop.f32.mrf.mxu0
        %v4556 = vpop.f32.mrf.mxu0
        %v4557 = vadd.f32 0.0, %v4556
        %v4558 = vpop.f32.mrf.mxu0
        %4559 = vmatprep.mubr.bf16.mxu0 0
        %4560 = vmatmul.mubr.bf16.gmra.mxu0 %v4435
        %v4561 = vpop.f32.mrf.mxu0
        %v4562 = vadd.f32 0.0, %v4561
        %v4563 = vpop.f32.mrf.mxu0
        %v4564 = vpop.f32.mrf.mxu0
        %v4565 = vadd.f32 0.0, %v4564
        %v4566 = vpop.f32.mrf.mxu0
        %4567 = vmatprep.mubr.bf16.mxu0 0
        %4568 = vmatmul.mubr.bf16.gmra.mxu0 %v4438
        %v4569 = vpop.f32.mrf.mxu0
        %v4570 = vadd.f32 0.0, %v4569
        %v4571 = vpop.f32.mrf.mxu0
        %v4572 = vpop.f32.mrf.mxu0
        %v4573 = vadd.f32 0.0, %v4572
        %v4574 = vpop.f32.mrf.mxu0
        %4575 = vmatprep.mubr.bf16.mxu0 0
        %4576 = vmatmul.mubr.bf16.gmra.mxu0 %v4441
        %v4577 = vpop.f32.mrf.mxu0
        %v4578 = vadd.f32 0.0, %v4577
        %v4579 = vpop.f32.mrf.mxu0
        %v4580 = vpop.f32.mrf.mxu0
        %v4581 = vadd.f32 0.0, %v4580
        %v4582 = vpop.f32.mrf.mxu0
        %4583 = vmatprep.mubr.bf16.mxu0 0
        %4584 = vmatmul.mubr.bf16.gmra.mxu0 %v4444
        %v4585 = vpop.f32.mrf.mxu0
        %v4586 = vadd.f32 0.0, %v4585
        %v4587 = vpop.f32.mrf.mxu0
        %v4588 = vpop.f32.mrf.mxu0
        %v4589 = vadd.f32 0.0, %v4588
        %v4590 = vpop.f32.mrf.mxu0
        %4591 = vmatprep.mubr.bf16.mxu0 0
        %4592 = vmatmul.mubr.bf16.gmra.mxu0 %v4447
        %v4593 = vpop.f32.mrf.mxu0
        %v4594 = vadd.f32 0.0, %v4593
        %v4595 = vpop.f32.mrf.mxu0
        %v4596 = vpop.f32.mrf.mxu0
        %v4597 = vadd.f32 0.0, %v4596
        %v4598 = vpop.f32.mrf.mxu0
        %4599 = vmatprep.mubr.bf16.mxu0 0
        %4600 = vmatmul.mubr.bf16.gmra.mxu0 %v4450
        %v4601 = vpop.f32.mrf.mxu0
        %v4602 = vadd.f32 0.0, %v4601
        %v4603 = vpop.f32.mrf.mxu0
        %v4604 = vpop.f32.mrf.mxu0
        %v4605 = vadd.f32 0.0, %v4604
        %v4606 = vpop.f32.mrf.mxu0
        %4607 = vmatprep.mubr.bf16.mxu0 0
        %4608 = vmatmul.mubr.bf16.gmra.mxu0 %v4453
        %v4609 = vpop.f32.mrf.mxu0
        %v4610 = vadd.f32 0.0, %v4609
        %v4611 = vpop.f32.mrf.mxu0
        %v4612 = vpop.f32.mrf.mxu0
        %v4613 = vadd.f32 0.0, %v4612
        %v4614 = vpop.f32.mrf.mxu0
        %4615 = vdwg.mxu0
        %v4616 = vld [vmem:[#allocation4] sm:$0xff]
        %v4617 = vld [vmem:[#allocation4 + $0x8] sm:$0xff]
        %v4618 = vld [vmem:[#allocation4 + $0x10] sm:$0xff]
        %v4619 = vld [vmem:[#allocation4 + $0x18] sm:$0xff]
        %v4620 = vld [vmem:[#allocation4 + $0x20] sm:$0xff]
        %v4621 = vld [vmem:[#allocation4 + $0x28] sm:$0xff]
        %v4622 = vld [vmem:[#allocation4 + $0x30] sm:$0xff]
        %v4623 = vld [vmem:[#allocation4 + $0x38] sm:$0xff]
        %v4624 = vld [vmem:[#allocation4 + $0x40] sm:$0xff]
        %v4625 = vld [vmem:[#allocation4 + $0x48] sm:$0xff]
        %v4626 = vld [vmem:[#allocation4 + $0x50] sm:$0xff]
        %v4627 = vld [vmem:[#allocation4 + $0x58] sm:$0xff]
        %v4628 = vld [vmem:[#allocation4 + $0x60] sm:$0xff]
        %v4629 = vld [vmem:[#allocation4 + $0x68] sm:$0xff]
        %v4630 = vld [vmem:[#allocation4 + $0x70] sm:$0xff]
        %v4631 = vld [vmem:[#allocation4 + $0x78] sm:$0xff]
        %v4632 = vld [vmem:[#allocation4 + $0x80] sm:$0xff]
        %v4633 = vld [vmem:[#allocation4 + $0x88] sm:$0xff]
        %v4634 = vld [vmem:[#allocation4 + $0x90] sm:$0xff]
        %v4635 = vld [vmem:[#allocation4 + $0x98] sm:$0xff]
        %v4636 = vld [vmem:[#allocation4 + $0xa0] sm:$0xff]
        %v4637 = vld [vmem:[#allocation4 + $0xa8] sm:$0xff]
        %v4638 = vld [vmem:[#allocation4 + $0xb0] sm:$0xff]
        %v4639 = vld [vmem:[#allocation4 + $0xb8] sm:$0xff]
        %v4640 = vld [vmem:[#allocation4 + $0xc0] sm:$0xff]
        %v4641 = vld [vmem:[#allocation4 + $0xc8] sm:$0xff]
        %v4642 = vld [vmem:[#allocation4 + $0xd0] sm:$0xff]
        %v4643 = vld [vmem:[#allocation4 + $0xd8] sm:$0xff]
        %v4644 = vld [vmem:[#allocation4 + $0xe0] sm:$0xff]
        %v4645 = vld [vmem:[#allocation4 + $0xe8] sm:$0xff]
        %v4646 = vld [vmem:[#allocation4 + $0xf0] sm:$0xff]
        %v4647 = vld [vmem:[#allocation4 + $0xf8] sm:$0xff]
        %v4648 = vadd.f32 %v4616, %v4490
        %v4649 = vadd.f32 %v4617, %v4493
        %v4650 = vadd.f32 %v4618, %v4498
        %v4651 = vadd.f32 %v4619, %v4501
        %v4652 = vadd.f32 %v4620, %v4506
        %v4653 = vadd.f32 %v4621, %v4509
        %v4654 = vadd.f32 %v4622, %v4514
        %v4655 = vadd.f32 %v4623, %v4517
        %v4656 = vadd.f32 %v4624, %v4522
        %v4657 = vadd.f32 %v4625, %v4525
        %v4658 = vadd.f32 %v4626, %v4530
        %v4659 = vadd.f32 %v4627, %v4533
        %v4660 = vadd.f32 %v4628, %v4538
        %v4661 = vadd.f32 %v4629, %v4541
        %v4662 = vadd.f32 %v4630, %v4546
        %v4663 = vadd.f32 %v4631, %v4549
        %v4664 = vadd.f32 %v4632, %v4554
        %v4665 = vadd.f32 %v4633, %v4557
        %v4666 = vadd.f32 %v4634, %v4562
        %v4667 = vadd.f32 %v4635, %v4565
        %v4668 = vadd.f32 %v4636, %v4570
        %v4669 = vadd.f32 %v4637, %v4573
        %v4670 = vadd.f32 %v4638, %v4578
        %v4671 = vadd.f32 %v4639, %v4581
        %v4672 = vadd.f32 %v4640, %v4586
        %v4673 = vadd.f32 %v4641, %v4589
        %v4674 = vadd.f32 %v4642, %v4594
        %v4675 = vadd.f32 %v4643, %v4597
        %v4676 = vadd.f32 %v4644, %v4602
        %v4677 = vadd.f32 %v4645, %v4605
        %v4678 = vadd.f32 %v4646, %v4610
        %v4679 = vadd.f32 %v4647, %v4613
        %4680 = vst [vmem:[#allocation4] sm:$0xff] %v4648
        %4681 = vst [vmem:[#allocation4 + $0x8] sm:$0xff] %v4649
        %4682 = vst [vmem:[#allocation4 + $0x10] sm:$0xff] %v4650
        %4683 = vst [vmem:[#allocation4 + $0x18] sm:$0xff] %v4651
        %4684 = vst [vmem:[#allocation4 + $0x20] sm:$0xff] %v4652
        %4685 = vst [vmem:[#allocation4 + $0x28] sm:$0xff] %v4653
        %4686 = vst [vmem:[#allocation4 + $0x30] sm:$0xff] %v4654
        %4687 = vst [vmem:[#allocation4 + $0x38] sm:$0xff] %v4655
        %4688 = vst [vmem:[#allocation4 + $0x40] sm:$0xff] %v4656
        %4689 = vst [vmem:[#allocation4 + $0x48] sm:$0xff] %v4657
        %4690 = vst [vmem:[#allocation4 + $0x50] sm:$0xff] %v4658
        %4691 = vst [vmem:[#allocation4 + $0x58] sm:$0xff] %v4659
        %4692 = vst [vmem:[#allocation4 + $0x60] sm:$0xff] %v4660
        %4693 = vst [vmem:[#allocation4 + $0x68] sm:$0xff] %v4661
        %4694 = vst [vmem:[#allocation4 + $0x70] sm:$0xff] %v4662
        %4695 = vst [vmem:[#allocation4 + $0x78] sm:$0xff] %v4663
        %4696 = vst [vmem:[#allocation4 + $0x80] sm:$0xff] %v4664
        %4697 = vst [vmem:[#allocation4 + $0x88] sm:$0xff] %v4665
        %4698 = vst [vmem:[#allocation4 + $0x90] sm:$0xff] %v4666
        %4699 = vst [vmem:[#allocation4 + $0x98] sm:$0xff] %v4667
        %4700 = vst [vmem:[#allocation4 + $0xa0] sm:$0xff] %v4668
        %4701 = vst [vmem:[#allocation4 + $0xa8] sm:$0xff] %v4669
        %4702 = vst [vmem:[#allocation4 + $0xb0] sm:$0xff] %v4670
        %4703 = vst [vmem:[#allocation4 + $0xb8] sm:$0xff] %v4671
        %4704 = vst [vmem:[#allocation4 + $0xc0] sm:$0xff] %v4672
        %4705 = vst [vmem:[#allocation4 + $0xc8] sm:$0xff] %v4673
        %4706 = vst [vmem:[#allocation4 + $0xd0] sm:$0xff] %v4674
        %4707 = vst [vmem:[#allocation4 + $0xd8] sm:$0xff] %v4675
        %4708 = vst [vmem:[#allocation4 + $0xe0] sm:$0xff] %v4676
        %4709 = vst [vmem:[#allocation4 + $0xe8] sm:$0xff] %v4677
        %4710 = vst [vmem:[#allocation4 + $0xf0] sm:$0xff] %v4678
        %4711 = vst [vmem:[#allocation4 + $0xf8] sm:$0xff] %v4679
        %v4712 = vld [vmem:[#allocation3] sm:$0xe]
        %v4713 = vld [vmem:[#allocation3 + $0x4] sm:$0xf]
        %v4714 = vld [vmem:[#allocation3 + $0x8] sm:$0x1]
        %v4715 = vld [vmem:[#allocation3 + $0xc] sm:$0xe]
        %v4716 = vld [vmem:[#allocation3 + $0x10] sm:$0xf]
        %v4717 = vld [vmem:[#allocation3 + $0x14] sm:$0x1]
        %v4718 = vld [vmem:[#allocation3 + $0x18] sm:$0xe]
        %v4719 = vld [vmem:[#allocation3 + $0x1c] sm:$0xf]
        %v4720 = vld [vmem:[#allocation3 + $0x20] sm:$0x1]
        %v4721 = vld [vmem:[#allocation3 + $0x24] sm:$0xe]
        %v4722 = vld [vmem:[#allocation3 + $0x28] sm:$0xf]
        %v4723 = vld [vmem:[#allocation3 + $0x2c] sm:$0x1]
        %v4724 = vld [vmem:[#allocation3 + $0x30] sm:$0xe]
        %v4725 = vld [vmem:[#allocation3 + $0x34] sm:$0xf]
        %v4726 = vld [vmem:[#allocation3 + $0x38] sm:$0x1]
        %v4727 = vld [vmem:[#allocation3 + $0x3c] sm:$0xe]
        %v4728 = vld [vmem:[#allocation3 + $0x40] sm:$0xf]
        %v4729 = vld [vmem:[#allocation3 + $0x44] sm:$0x1]
        %v4730 = vld [vmem:[#allocation3 + $0x48] sm:$0xe]
        %v4731 = vld [vmem:[#allocation3 + $0x4c] sm:$0xf]
        %v4732 = vld [vmem:[#allocation3 + $0x50] sm:$0x1]
        %v4733 = vld [vmem:[#allocation3 + $0x54] sm:$0xe]
        %v4734 = vld [vmem:[#allocation3 + $0x58] sm:$0xf]
        %v4735 = vld [vmem:[#allocation3 + $0x5c] sm:$0x1]
        %v4736 = vld [vmem:[#allocation3 + $0x60] sm:$0xe]
        %v4737 = vld [vmem:[#allocation3 + $0x64] sm:$0xf]
        %v4738 = vld [vmem:[#allocation3 + $0x68] sm:$0x1]
        %v4739 = vld [vmem:[#allocation3 + $0x6c] sm:$0xe]
        %v4740 = vld [vmem:[#allocation3 + $0x70] sm:$0xf]
        %v4741 = vld [vmem:[#allocation3 + $0x74] sm:$0x1]
        %v4742 = vld [vmem:[#allocation3 + $0x78] sm:$0xe]
        %v4743 = vld [vmem:[#allocation3 + $0x7c] sm:$0xf]
        %v4744 = vld [vmem:[#allocation3 + $0x80] sm:$0x1]
        %v4745 = vld [vmem:[#allocation3 + $0x84] sm:$0xe]
        %v4746 = vld [vmem:[#allocation3 + $0x88] sm:$0xf]
        %v4747 = vld [vmem:[#allocation3 + $0x8c] sm:$0x1]
        %v4748 = vld [vmem:[#allocation3 + $0x90] sm:$0xe]
        %v4749 = vld [vmem:[#allocation3 + $0x94] sm:$0xf]
        %v4750 = vld [vmem:[#allocation3 + $0x98] sm:$0x1]
        %v4751 = vld [vmem:[#allocation3 + $0x9c] sm:$0xe]
        %v4752 = vld [vmem:[#allocation3 + $0xa0] sm:$0xf]
        %v4753 = vld [vmem:[#allocation3 + $0xa4] sm:$0x1]
        %v4754 = vld [vmem:[#allocation3 + $0xa8] sm:$0xe]
        %v4755 = vld [vmem:[#allocation3 + $0xac] sm:$0xf]
        %v4756 = vld [vmem:[#allocation3 + $0xb0] sm:$0x1]
        %v4757 = vld [vmem:[#allocation3 + $0xb4] sm:$0xe]
        %v4758 = vld [vmem:[#allocation3 + $0xb8] sm:$0xf]
        %v4759 = vld [vmem:[#allocation3 + $0xbc] sm:$0x1]
        %vm4808 = vcmask 1042432
        %vm4809 = vcmask 1046532
        %vm4810 = vmor %vm4808, %vm4809
        %v4811 = vrot.slane %v4712, 5
        %v4812 = vrot.slane %v4811, 4
        %v4813 = vrot.slane %v4713, 5
        %v4814 = vsel %vm4810, %v4812, %v4813
        %v4815 = vrot.slane %v4813, 4
        %v4816 = vrot.slane %v4714, 5
        %v4817 = vsel %vm4810, %v4815, %v4816
        %v4818 = vrot.slane %v4715, 5
        %v4819 = vrot.slane %v4818, 4
        %v4820 = vrot.slane %v4716, 5
        %v4821 = vsel %vm4810, %v4819, %v4820
        %v4822 = vrot.slane %v4820, 4
        %v4823 = vrot.slane %v4717, 5
        %v4824 = vsel %vm4810, %v4822, %v4823
        %v4825 = vrot.slane %v4718, 5
        %v4826 = vrot.slane %v4825, 4
        %v4827 = vrot.slane %v4719, 5
        %v4828 = vsel %vm4810, %v4826, %v4827
        %v4829 = vrot.slane %v4827, 4
        %v4830 = vrot.slane %v4720, 5
        %v4831 = vsel %vm4810, %v4829, %v4830
        %v4832 = vrot.slane %v4721, 5
        %v4833 = vrot.slane %v4832, 4
        %v4834 = vrot.slane %v4722, 5
        %v4835 = vsel %vm4810, %v4833, %v4834
        %v4836 = vrot.slane %v4834, 4
        %v4837 = vrot.slane %v4723, 5
        %v4838 = vsel %vm4810, %v4836, %v4837
        %v4839 = vrot.slane %v4724, 5
        %v4840 = vrot.slane %v4839, 4
        %v4841 = vrot.slane %v4725, 5
        %v4842 = vsel %vm4810, %v4840, %v4841
        %v4843 = vrot.slane %v4841, 4
        %v4844 = vrot.slane %v4726, 5
        %v4845 = vsel %vm4810, %v4843, %v4844
        %v4846 = vrot.slane %v4727, 5
        %v4847 = vrot.slane %v4846, 4
        %v4848 = vrot.slane %v4728, 5
        %v4849 = vsel %vm4810, %v4847, %v4848
        %v4850 = vrot.slane %v4848, 4
        %v4851 = vrot.slane %v4729, 5
        %v4852 = vsel %vm4810, %v4850, %v4851
        %v4853 = vrot.slane %v4730, 5
        %v4854 = vrot.slane %v4853, 4
        %v4855 = vrot.slane %v4731, 5
        %v4856 = vsel %vm4810, %v4854, %v4855
        %v4857 = vrot.slane %v4855, 4
        %v4858 = vrot.slane %v4732, 5
        %v4859 = vsel %vm4810, %v4857, %v4858
        %v4860 = vrot.slane %v4733, 5
        %v4861 = vrot.slane %v4860, 4
        %v4862 = vrot.slane %v4734, 5
        %v4863 = vsel %vm4810, %v4861, %v4862
        %v4864 = vrot.slane %v4862, 4
        %v4865 = vrot.slane %v4735, 5
        %v4866 = vsel %vm4810, %v4864, %v4865
        %v4867 = vrot.slane %v4736, 5
        %v4868 = vrot.slane %v4867, 4
        %v4869 = vrot.slane %v4737, 5
        %v4870 = vsel %vm4810, %v4868, %v4869
        %v4871 = vrot.slane %v4869, 4
        %v4872 = vrot.slane %v4738, 5
        %v4873 = vsel %vm4810, %v4871, %v4872
        %v4874 = vrot.slane %v4739, 5
        %v4875 = vrot.slane %v4874, 4
        %v4876 = vrot.slane %v4740, 5
        %v4877 = vsel %vm4810, %v4875, %v4876
        %v4878 = vrot.slane %v4876, 4
        %v4879 = vrot.slane %v4741, 5
        %v4880 = vsel %vm4810, %v4878, %v4879
        %v4881 = vrot.slane %v4742, 5
        %v4882 = vrot.slane %v4881, 4
        %v4883 = vrot.slane %v4743, 5
        %v4884 = vsel %vm4810, %v4882, %v4883
        %v4885 = vrot.slane %v4883, 4
        %v4886 = vrot.slane %v4744, 5
        %v4887 = vsel %vm4810, %v4885, %v4886
        %v4888 = vrot.slane %v4745, 5
        %v4889 = vrot.slane %v4888, 4
        %v4890 = vrot.slane %v4746, 5
        %v4891 = vsel %vm4810, %v4889, %v4890
        %v4892 = vrot.slane %v4890, 4
        %v4893 = vrot.slane %v4747, 5
        %v4894 = vsel %vm4810, %v4892, %v4893
        %v4895 = vrot.slane %v4748, 5
        %v4896 = vrot.slane %v4895, 4
        %v4897 = vrot.slane %v4749, 5
        %v4898 = vsel %vm4810, %v4896, %v4897
        %v4899 = vrot.slane %v4897, 4
        %v4900 = vrot.slane %v4750, 5
        %v4901 = vsel %vm4810, %v4899, %v4900
        %v4902 = vrot.slane %v4751, 5
        %v4903 = vrot.slane %v4902, 4
        %v4904 = vrot.slane %v4752, 5
        %v4905 = vsel %vm4810, %v4903, %v4904
        %v4906 = vrot.slane %v4904, 4
        %v4907 = vrot.slane %v4753, 5
        %v4908 = vsel %vm4810, %v4906, %v4907
        %v4909 = vrot.slane %v4754, 5
        %v4910 = vrot.slane %v4909, 4
        %v4911 = vrot.slane %v4755, 5
        %v4912 = vsel %vm4810, %v4910, %v4911
        %v4913 = vrot.slane %v4911, 4
        %v4914 = vrot.slane %v4756, 5
        %v4915 = vsel %vm4810, %v4913, %v4914
        %v4916 = vrot.slane %v4757, 5
        %v4917 = vrot.slane %v4916, 4
        %v4918 = vrot.slane %v4758, 5
        %v4919 = vsel %vm4810, %v4917, %v4918
        %v4920 = vrot.slane %v4918, 4
        %v4921 = vrot.slane %v4759, 5
        %v4922 = vsel %vm4810, %v4920, %v4921
        %s4923 = scalar_lea.vmem %s4, 64
        %v4924 = vld [vmem:[%s4923] sm:$0xf]
        %v4925 = vld [vmem:[%s4923 + $0x4] sm:$0xf]
        %v4926 = vld [vmem:[%s4923 + $0x8] sm:$0xf]
        %v4927 = vld [vmem:[%s4923 + $0xc] sm:$0xf]
        %v4928 = vld [vmem:[%s4923 + $0x10] sm:$0xf]
        %v4929 = vld [vmem:[%s4923 + $0x14] sm:$0xf]
        %v4930 = vld [vmem:[%s4923 + $0x18] sm:$0xf]
        %v4931 = vld [vmem:[%s4923 + $0x1c] sm:$0xf]
        %v4932 = vunpack.c.l.b16 %v4814
        %v4933 = vunpack.c.l.b16 %v4817
        %v4934 = vunpack.c.l.b16 %v4821
        %v4935 = vunpack.c.l.b16 %v4824
        %v4936 = vunpack.c.l.b16 %v4828
        %v4937 = vunpack.c.l.b16 %v4831
        %v4938 = vunpack.c.l.b16 %v4835
        %v4939 = vunpack.c.l.b16 %v4838
        %v4940 = vunpack.c.l.b16 %v4842
        %v4941 = vunpack.c.l.b16 %v4845
        %v4942 = vunpack.c.l.b16 %v4849
        %v4943 = vunpack.c.l.b16 %v4852
        %v4944 = vunpack.c.l.b16 %v4856
        %v4945 = vunpack.c.l.b16 %v4859
        %v4946 = vunpack.c.l.b16 %v4863
        %v4947 = vunpack.c.l.b16 %v4866
        %v4948 = vunpack.c.l.b16 %v4870
        %v4949 = vunpack.c.l.b16 %v4873
        %v4950 = vunpack.c.l.b16 %v4877
        %v4951 = vunpack.c.l.b16 %v4880
        %v4952 = vunpack.c.l.b16 %v4884
        %v4953 = vunpack.c.l.b16 %v4887
        %v4954 = vunpack.c.l.b16 %v4891
        %v4955 = vunpack.c.l.b16 %v4894
        %v4956 = vunpack.c.l.b16 %v4898
        %v4957 = vunpack.c.l.b16 %v4901
        %v4958 = vunpack.c.l.b16 %v4905
        %v4959 = vunpack.c.l.b16 %v4908
        %v4960 = vunpack.c.l.b16 %v4912
        %v4961 = vunpack.c.l.b16 %v4915
        %v4962 = vunpack.c.l.b16 %v4919
        %v4963 = vunpack.c.l.b16 %v4922
        %v4964 = vpack.c.b16 %v4933, %v4932
        %v4965 = vpack.c.b16 %v4935, %v4934
        %v4966 = vpack.c.b16 %v4937, %v4936
        %v4967 = vpack.c.b16 %v4939, %v4938
        %v4968 = vpack.c.b16 %v4941, %v4940
        %v4969 = vpack.c.b16 %v4943, %v4942
        %v4970 = vpack.c.b16 %v4945, %v4944
        %v4971 = vpack.c.b16 %v4947, %v4946
        %v4972 = vpack.c.b16 %v4949, %v4948
        %v4973 = vpack.c.b16 %v4951, %v4950
        %v4974 = vpack.c.b16 %v4953, %v4952
        %v4975 = vpack.c.b16 %v4955, %v4954
        %v4976 = vpack.c.b16 %v4957, %v4956
        %v4977 = vpack.c.b16 %v4959, %v4958
        %v4978 = vpack.c.b16 %v4961, %v4960
        %v4979 = vpack.c.b16 %v4963, %v4962
        %v4988 = vunpack.c.l.b16 %v4924
        %v4989 = vunpack.c.l.b16 %v4925
        %v4990 = vunpack.c.l.b16 %v4926
        %v4991 = vunpack.c.l.b16 %v4927
        %v4992 = vunpack.c.l.b16 %v4928
        %v4993 = vunpack.c.l.b16 %v4929
        %v4994 = vunpack.c.l.b16 %v4930
        %v4995 = vunpack.c.l.b16 %v4931
        %v4996 = vpack.c.b16 %v4989, %v4988
        %v4997 = vpack.c.b16 %v4991, %v4990
        %v4998 = vpack.c.b16 %v4993, %v4992
        %v4999 = vpack.c.b16 %v4995, %v4994
        %v5005 = vsel %vm3649, %v4964, 0
        %v5008 = vsel %vm3649, %v4965, 0
        %v5011 = vsel %vm3649, %v4966, 0
        %v5014 = vsel %vm3649, %v4967, 0
        %v5017 = vsel %vm3649, %v4968, 0
        %v5020 = vsel %vm3649, %v4969, 0
        %v5023 = vsel %vm3649, %v4970, 0
        %v5026 = vsel %vm3649, %v4971, 0
        %v5029 = vsel %vm3649, %v4972, 0
        %v5032 = vsel %vm3649, %v4973, 0
        %v5035 = vsel %vm3649, %v4974, 0
        %v5038 = vsel %vm3649, %v4975, 0
        %v5041 = vsel %vm3649, %v4976, 0
        %v5044 = vsel %vm3649, %v4977, 0
        %v5047 = vsel %vm3649, %v4978, 0
        %v5050 = vsel %vm3649, %v4979, 0
        %5052 = vmatprep.subr.bf16.mxu0 0
        %5053 = vmatpush1.bf16.msra.mxu0 0
        %5054 = vmatprep.subr.bf16.mxu0 0
        %5055 = vmatpush1.bf16.msra.mxu0 0
        %5056 = vmatprep.subr.bf16.mxu0 0
        %5057 = vmatpush1.bf16.msra.mxu0 0
        %5058 = vmatprep.subr.bf16.mxu0 0
        %5059 = vmatpush1.bf16.msra.mxu0 0
        %5060 = vmatprep.subr.bf16.mxu0 0
        %5061 = vmatpush1.bf16.msra.mxu0 %v4999
        %5062 = vmatprep.subr.bf16.mxu0 0
        %5063 = vmatpush1.bf16.msra.mxu0 %v4998
        %5064 = vmatprep.subr.bf16.mxu0 0
        %5065 = vmatpush1.bf16.msra.mxu0 %v4997
        %5066 = vmatprep.subr.bf16.mxu0 0
        %5067 = vmatpush1.bf16.msra.mxu0 %v4996
        %5068 = vmatprep.subr.bf16.mxu0 0
        %5069 = vmatpush2.bf16.msra.mxu0 0
        %5070 = vmatprep.subr.bf16.mxu0 0
        %5071 = vmatpush2.bf16.msra.mxu0 0
        %5072 = vmatprep.subr.bf16.mxu0 0
        %5073 = vmatpush2.bf16.msra.mxu0 0
        %5074 = vmatprep.subr.bf16.mxu0 0
        %5075 = vmatpush2.bf16.msra.mxu0 0
        %5076 = vmatprep.subr.bf16.mxu0 0
        %5077 = vmatpush2.bf16.msra.mxu0 0
        %5078 = vmatprep.subr.bf16.mxu0 0
        %5079 = vmatpush2.bf16.msra.mxu0 0
        %5080 = vmatprep.subr.bf16.mxu0 0
        %5081 = vmatpush2.bf16.msra.mxu0 0
        %5082 = vmatprep.subr.bf16.mxu0 0
        %5083 = vmatpush2.bf16.msra.mxu0 0
        %5084 = vmatprep.mubr.bf16.mxu0 0
        %5085 = vmatmul.mubr.bf16.gmra.mxu0 %v5005
        %v5086 = vpop.f32.mrf.mxu0
        %v5087 = vadd.f32 0.0, %v5086
        %v5088 = vpop.f32.mrf.mxu0
        %v5089 = vpop.f32.mrf.mxu0
        %v5090 = vadd.f32 0.0, %v5089
        %v5091 = vpop.f32.mrf.mxu0
        %5092 = vmatprep.mubr.bf16.mxu0 0
        %5093 = vmatmul.mubr.bf16.gmra.mxu0 %v5008
        %v5094 = vpop.f32.mrf.mxu0
        %v5095 = vadd.f32 0.0, %v5094
        %v5096 = vpop.f32.mrf.mxu0
        %v5097 = vpop.f32.mrf.mxu0
        %v5098 = vadd.f32 0.0, %v5097
        %v5099 = vpop.f32.mrf.mxu0
        %5100 = vmatprep.mubr.bf16.mxu0 0
        %5101 = vmatmul.mubr.bf16.gmra.mxu0 %v5011
        %v5102 = vpop.f32.mrf.mxu0
        %v5103 = vadd.f32 0.0, %v5102
        %v5104 = vpop.f32.mrf.mxu0
        %v5105 = vpop.f32.mrf.mxu0
        %v5106 = vadd.f32 0.0, %v5105
        %v5107 = vpop.f32.mrf.mxu0
        %5108 = vmatprep.mubr.bf16.mxu0 0
        %5109 = vmatmul.mubr.bf16.gmra.mxu0 %v5014
        %v5110 = vpop.f32.mrf.mxu0
        %v5111 = vadd.f32 0.0, %v5110
        %v5112 = vpop.f32.mrf.mxu0
        %v5113 = vpop.f32.mrf.mxu0
        %v5114 = vadd.f32 0.0, %v5113
        %v5115 = vpop.f32.mrf.mxu0
        %5116 = vmatprep.mubr.bf16.mxu0 0
        %5117 = vmatmul.mubr.bf16.gmra.mxu0 %v5017
        %v5118 = vpop.f32.mrf.mxu0
        %v5119 = vadd.f32 0.0, %v5118
        %v5120 = vpop.f32.mrf.mxu0
        %v5121 = vpop.f32.mrf.mxu0
        %v5122 = vadd.f32 0.0, %v5121
        %v5123 = vpop.f32.mrf.mxu0
        %5124 = vmatprep.mubr.bf16.mxu0 0
        %5125 = vmatmul.mubr.bf16.gmra.mxu0 %v5020
        %v5126 = vpop.f32.mrf.mxu0
        %v5127 = vadd.f32 0.0, %v5126
        %v5128 = vpop.f32.mrf.mxu0
        %v5129 = vpop.f32.mrf.mxu0
        %v5130 = vadd.f32 0.0, %v5129
        %v5131 = vpop.f32.mrf.mxu0
        %5132 = vmatprep.mubr.bf16.mxu0 0
        %5133 = vmatmul.mubr.bf16.gmra.mxu0 %v5023
        %v5134 = vpop.f32.mrf.mxu0
        %v5135 = vadd.f32 0.0, %v5134
        %v5136 = vpop.f32.mrf.mxu0
        %v5137 = vpop.f32.mrf.mxu0
        %v5138 = vadd.f32 0.0, %v5137
        %v5139 = vpop.f32.mrf.mxu0
        %5140 = vmatprep.mubr.bf16.mxu0 0
        %5141 = vmatmul.mubr.bf16.gmra.mxu0 %v5026
        %v5142 = vpop.f32.mrf.mxu0
        %v5143 = vadd.f32 0.0, %v5142
        %v5144 = vpop.f32.mrf.mxu0
        %v5145 = vpop.f32.mrf.mxu0
        %v5146 = vadd.f32 0.0, %v5145
        %v5147 = vpop.f32.mrf.mxu0
        %5148 = vmatprep.mubr.bf16.mxu0 0
        %5149 = vmatmul.mubr.bf16.gmra.mxu0 %v5029
        %v5150 = vpop.f32.mrf.mxu0
        %v5151 = vadd.f32 0.0, %v5150
        %v5152 = vpop.f32.mrf.mxu0
        %v5153 = vpop.f32.mrf.mxu0
        %v5154 = vadd.f32 0.0, %v5153
        %v5155 = vpop.f32.mrf.mxu0
        %5156 = vmatprep.mubr.bf16.mxu0 0
        %5157 = vmatmul.mubr.bf16.gmra.mxu0 %v5032
        %v5158 = vpop.f32.mrf.mxu0
        %v5159 = vadd.f32 0.0, %v5158
        %v5160 = vpop.f32.mrf.mxu0
        %v5161 = vpop.f32.mrf.mxu0
        %v5162 = vadd.f32 0.0, %v5161
        %v5163 = vpop.f32.mrf.mxu0
        %5164 = vmatprep.mubr.bf16.mxu0 0
        %5165 = vmatmul.mubr.bf16.gmra.mxu0 %v5035
        %v5166 = vpop.f32.mrf.mxu0
        %v5167 = vadd.f32 0.0, %v5166
        %v5168 = vpop.f32.mrf.mxu0
        %v5169 = vpop.f32.mrf.mxu0
        %v5170 = vadd.f32 0.0, %v5169
        %v5171 = vpop.f32.mrf.mxu0
        %5172 = vmatprep.mubr.bf16.mxu0 0
        %5173 = vmatmul.mubr.bf16.gmra.mxu0 %v5038
        %v5174 = vpop.f32.mrf.mxu0
        %v5175 = vadd.f32 0.0, %v5174
        %v5176 = vpop.f32.mrf.mxu0
        %v5177 = vpop.f32.mrf.mxu0
        %v5178 = vadd.f32 0.0, %v5177
        %v5179 = vpop.f32.mrf.mxu0
        %5180 = vmatprep.mubr.bf16.mxu0 0
        %5181 = vmatmul.mubr.bf16.gmra.mxu0 %v5041
        %v5182 = vpop.f32.mrf.mxu0
        %v5183 = vadd.f32 0.0, %v5182
        %v5184 = vpop.f32.mrf.mxu0
        %v5185 = vpop.f32.mrf.mxu0
        %v5186 = vadd.f32 0.0, %v5185
        %v5187 = vpop.f32.mrf.mxu0
        %5188 = vmatprep.mubr.bf16.mxu0 0
        %5189 = vmatmul.mubr.bf16.gmra.mxu0 %v5044
        %v5190 = vpop.f32.mrf.mxu0
        %v5191 = vadd.f32 0.0, %v5190
        %v5192 = vpop.f32.mrf.mxu0
        %v5193 = vpop.f32.mrf.mxu0
        %v5194 = vadd.f32 0.0, %v5193
        %v5195 = vpop.f32.mrf.mxu0
        %5196 = vmatprep.mubr.bf16.mxu0 0
        %5197 = vmatmul.mubr.bf16.gmra.mxu0 %v5047
        %v5198 = vpop.f32.mrf.mxu0
        %v5199 = vadd.f32 0.0, %v5198
        %v5200 = vpop.f32.mrf.mxu0
        %v5201 = vpop.f32.mrf.mxu0
        %v5202 = vadd.f32 0.0, %v5201
        %v5203 = vpop.f32.mrf.mxu0
        %5204 = vmatprep.mubr.bf16.mxu0 0
        %5205 = vmatmul.mubr.bf16.gmra.mxu0 %v5050
        %v5206 = vpop.f32.mrf.mxu0
        %v5207 = vadd.f32 0.0, %v5206
        %v5208 = vpop.f32.mrf.mxu0
        %v5209 = vpop.f32.mrf.mxu0
        %v5210 = vadd.f32 0.0, %v5209
        %v5211 = vpop.f32.mrf.mxu0
        %5212 = vdwg.mxu0
        %v5213 = vld [vmem:[#allocation4] sm:$0xff]
        %v5214 = vld [vmem:[#allocation4 + $0x8] sm:$0xff]
        %v5215 = vld [vmem:[#allocation4 + $0x10] sm:$0xff]
        %v5216 = vld [vmem:[#allocation4 + $0x18] sm:$0xff]
        %v5217 = vld [vmem:[#allocation4 + $0x20] sm:$0xff]
        %v5218 = vld [vmem:[#allocation4 + $0x28] sm:$0xff]
        %v5219 = vld [vmem:[#allocation4 + $0x30] sm:$0xff]
        %v5220 = vld [vmem:[#allocation4 + $0x38] sm:$0xff]
        %v5221 = vld [vmem:[#allocation4 + $0x40] sm:$0xff]
        %v5222 = vld [vmem:[#allocation4 + $0x48] sm:$0xff]
        %v5223 = vld [vmem:[#allocation4 + $0x50] sm:$0xff]
        %v5224 = vld [vmem:[#allocation4 + $0x58] sm:$0xff]
        %v5225 = vld [vmem:[#allocation4 + $0x60] sm:$0xff]
        %v5226 = vld [vmem:[#allocation4 + $0x68] sm:$0xff]
        %v5227 = vld [vmem:[#allocation4 + $0x70] sm:$0xff]
        %v5228 = vld [vmem:[#allocation4 + $0x78] sm:$0xff]
        %v5229 = vld [vmem:[#allocation4 + $0x80] sm:$0xff]
        %v5230 = vld [vmem:[#allocation4 + $0x88] sm:$0xff]
        %v5231 = vld [vmem:[#allocation4 + $0x90] sm:$0xff]
        %v5232 = vld [vmem:[#allocation4 + $0x98] sm:$0xff]
        %v5233 = vld [vmem:[#allocation4 + $0xa0] sm:$0xff]
        %v5234 = vld [vmem:[#allocation4 + $0xa8] sm:$0xff]
        %v5235 = vld [vmem:[#allocation4 + $0xb0] sm:$0xff]
        %v5236 = vld [vmem:[#allocation4 + $0xb8] sm:$0xff]
        %v5237 = vld [vmem:[#allocation4 + $0xc0] sm:$0xff]
        %v5238 = vld [vmem:[#allocation4 + $0xc8] sm:$0xff]
        %v5239 = vld [vmem:[#allocation4 + $0xd0] sm:$0xff]
        %v5240 = vld [vmem:[#allocation4 + $0xd8] sm:$0xff]
        %v5241 = vld [vmem:[#allocation4 + $0xe0] sm:$0xff]
        %v5242 = vld [vmem:[#allocation4 + $0xe8] sm:$0xff]
        %v5243 = vld [vmem:[#allocation4 + $0xf0] sm:$0xff]
        %v5244 = vld [vmem:[#allocation4 + $0xf8] sm:$0xff]
        %v5245 = vadd.f32 %v5213, %v5087
        %v5246 = vadd.f32 %v5214, %v5090
        %v5247 = vadd.f32 %v5215, %v5095
        %v5248 = vadd.f32 %v5216, %v5098
        %v5249 = vadd.f32 %v5217, %v5103
        %v5250 = vadd.f32 %v5218, %v5106
        %v5251 = vadd.f32 %v5219, %v5111
        %v5252 = vadd.f32 %v5220, %v5114
        %v5253 = vadd.f32 %v5221, %v5119
        %v5254 = vadd.f32 %v5222, %v5122
        %v5255 = vadd.f32 %v5223, %v5127
        %v5256 = vadd.f32 %v5224, %v5130
        %v5257 = vadd.f32 %v5225, %v5135
        %v5258 = vadd.f32 %v5226, %v5138
        %v5259 = vadd.f32 %v5227, %v5143
        %v5260 = vadd.f32 %v5228, %v5146
        %v5261 = vadd.f32 %v5229, %v5151
        %v5262 = vadd.f32 %v5230, %v5154
        %v5263 = vadd.f32 %v5231, %v5159
        %v5264 = vadd.f32 %v5232, %v5162
        %v5265 = vadd.f32 %v5233, %v5167
        %v5266 = vadd.f32 %v5234, %v5170
        %v5267 = vadd.f32 %v5235, %v5175
        %v5268 = vadd.f32 %v5236, %v5178
        %v5269 = vadd.f32 %v5237, %v5183
        %v5270 = vadd.f32 %v5238, %v5186
        %v5271 = vadd.f32 %v5239, %v5191
        %v5272 = vadd.f32 %v5240, %v5194
        %v5273 = vadd.f32 %v5241, %v5199
        %v5274 = vadd.f32 %v5242, %v5202
        %v5275 = vadd.f32 %v5243, %v5207
        %v5276 = vadd.f32 %v5244, %v5210
        %5277 = vst [vmem:[#allocation4] sm:$0xff] %v5245
        %5278 = vst [vmem:[#allocation4 + $0x8] sm:$0xff] %v5246
        %5279 = vst [vmem:[#allocation4 + $0x10] sm:$0xff] %v5247
        %5280 = vst [vmem:[#allocation4 + $0x18] sm:$0xff] %v5248
        %5281 = vst [vmem:[#allocation4 + $0x20] sm:$0xff] %v5249
        %5282 = vst [vmem:[#allocation4 + $0x28] sm:$0xff] %v5250
        %5283 = vst [vmem:[#allocation4 + $0x30] sm:$0xff] %v5251
        %5284 = vst [vmem:[#allocation4 + $0x38] sm:$0xff] %v5252
        %5285 = vst [vmem:[#allocation4 + $0x40] sm:$0xff] %v5253
        %5286 = vst [vmem:[#allocation4 + $0x48] sm:$0xff] %v5254
        %5287 = vst [vmem:[#allocation4 + $0x50] sm:$0xff] %v5255
        %5288 = vst [vmem:[#allocation4 + $0x58] sm:$0xff] %v5256
        %5289 = vst [vmem:[#allocation4 + $0x60] sm:$0xff] %v5257
        %5290 = vst [vmem:[#allocation4 + $0x68] sm:$0xff] %v5258
        %5291 = vst [vmem:[#allocation4 + $0x70] sm:$0xff] %v5259
        %5292 = vst [vmem:[#allocation4 + $0x78] sm:$0xff] %v5260
        %5293 = vst [vmem:[#allocation4 + $0x80] sm:$0xff] %v5261
        %5294 = vst [vmem:[#allocation4 + $0x88] sm:$0xff] %v5262
        %5295 = vst [vmem:[#allocation4 + $0x90] sm:$0xff] %v5263
        %5296 = vst [vmem:[#allocation4 + $0x98] sm:$0xff] %v5264
        %5297 = vst [vmem:[#allocation4 + $0xa0] sm:$0xff] %v5265
        %5298 = vst [vmem:[#allocation4 + $0xa8] sm:$0xff] %v5266
        %5299 = vst [vmem:[#allocation4 + $0xb0] sm:$0xff] %v5267
        %5300 = vst [vmem:[#allocation4 + $0xb8] sm:$0xff] %v5268
        %5301 = vst [vmem:[#allocation4 + $0xc0] sm:$0xff] %v5269
        %5302 = vst [vmem:[#allocation4 + $0xc8] sm:$0xff] %v5270
        %5303 = vst [vmem:[#allocation4 + $0xd0] sm:$0xff] %v5271
        %5304 = vst [vmem:[#allocation4 + $0xd8] sm:$0xff] %v5272
        %5305 = vst [vmem:[#allocation4 + $0xe0] sm:$0xff] %v5273
        %5306 = vst [vmem:[#allocation4 + $0xe8] sm:$0xff] %v5274
        %5307 = vst [vmem:[#allocation4 + $0xf0] sm:$0xff] %v5275
        %5308 = vst [vmem:[#allocation4 + $0xf8] sm:$0xff] %v5276
        %v5309 = vld [vmem:[%s3387] sm:$0xf]
        %v5310 = vld [vmem:[%s3387 + $0x4] sm:$0xf]
        %v5311 = vld [vmem:[%s3387 + $0xc] sm:$0xf]
        %v5312 = vld [vmem:[%s3387 + $0x10] sm:$0xf]
        %v5313 = vld [vmem:[%s3387 + $0x18] sm:$0xf]
        %v5314 = vld [vmem:[%s3387 + $0x1c] sm:$0xf]
        %v5315 = vld [vmem:[%s3387 + $0x24] sm:$0xf]
        %v5316 = vld [vmem:[%s3387 + $0x28] sm:$0xf]
        %v5317 = vld [vmem:[%s3387 + $0x30] sm:$0xf]
        %v5318 = vld [vmem:[%s3387 + $0x34] sm:$0xf]
        %v5319 = vld [vmem:[%s3387 + $0x3c] sm:$0xf]
        %v5320 = vld [vmem:[%s3387 + $0x40] sm:$0xf]
        %v5321 = vld [vmem:[%s3387 + $0x48] sm:$0xf]
        %v5322 = vld [vmem:[%s3387 + $0x4c] sm:$0xf]
        %v5323 = vld [vmem:[%s3387 + $0x54] sm:$0xf]
        %v5324 = vld [vmem:[%s3387 + $0x58] sm:$0xf]
        %v5325 = vld [vmem:[%s3387 + $0x60] sm:$0xf]
        %v5326 = vld [vmem:[%s3387 + $0x64] sm:$0xf]
        %v5327 = vld [vmem:[%s3387 + $0x6c] sm:$0xf]
        %v5328 = vld [vmem:[%s3387 + $0x70] sm:$0xf]
        %v5329 = vld [vmem:[%s3387 + $0x78] sm:$0xf]
        %v5330 = vld [vmem:[%s3387 + $0x7c] sm:$0xf]
        %v5331 = vld [vmem:[%s3387 + $0x84] sm:$0xf]
        %v5332 = vld [vmem:[%s3387 + $0x88] sm:$0xf]
        %v5333 = vld [vmem:[%s3387 + $0x90] sm:$0xf]
        %v5334 = vld [vmem:[%s3387 + $0x94] sm:$0xf]
        %v5335 = vld [vmem:[%s3387 + $0x9c] sm:$0xf]
        %v5336 = vld [vmem:[%s3387 + $0xa0] sm:$0xf]
        %v5337 = vld [vmem:[%s3387 + $0xa8] sm:$0xf]
        %v5338 = vld [vmem:[%s3387 + $0xac] sm:$0xf]
        %v5339 = vld [vmem:[%s3387 + $0xb4] sm:$0xf]
        %v5340 = vld [vmem:[%s3387 + $0xb8] sm:$0xf]
        %s5341 = scalar_lea.vmem %s4, 96
        %v5342 = vld [vmem:[%s5341] sm:$0xf]
        %v5343 = vld [vmem:[%s5341 + $0x4] sm:$0xf]
        %v5344 = vld [vmem:[%s5341 + $0x8] sm:$0xf]
        %v5345 = vld [vmem:[%s5341 + $0xc] sm:$0xf]
        %v5346 = vld [vmem:[%s5341 + $0x10] sm:$0xf]
        %v5347 = vld [vmem:[%s5341 + $0x14] sm:$0xf]
        %v5348 = vld [vmem:[%s5341 + $0x18] sm:$0xf]
        %v5349 = vld [vmem:[%s5341 + $0x1c] sm:$0xf]
        %v5382 = vunpack.c.l.b16 %v5309
        %v5383 = vunpack.c.l.b16 %v5310
        %v5384 = vunpack.c.l.b16 %v5311
        %v5385 = vunpack.c.l.b16 %v5312
        %v5386 = vunpack.c.l.b16 %v5313
        %v5387 = vunpack.c.l.b16 %v5314
        %v5388 = vunpack.c.l.b16 %v5315
        %v5389 = vunpack.c.l.b16 %v5316
        %v5390 = vunpack.c.l.b16 %v5317
        %v5391 = vunpack.c.l.b16 %v5318
        %v5392 = vunpack.c.l.b16 %v5319
        %v5393 = vunpack.c.l.b16 %v5320
        %v5394 = vunpack.c.l.b16 %v5321
        %v5395 = vunpack.c.l.b16 %v5322
        %v5396 = vunpack.c.l.b16 %v5323
        %v5397 = vunpack.c.l.b16 %v5324
        %v5398 = vunpack.c.l.b16 %v5325
        %v5399 = vunpack.c.l.b16 %v5326
        %v5400 = vunpack.c.l.b16 %v5327
        %v5401 = vunpack.c.l.b16 %v5328
        %v5402 = vunpack.c.l.b16 %v5329
        %v5403 = vunpack.c.l.b16 %v5330
        %v5404 = vunpack.c.l.b16 %v5331
        %v5405 = vunpack.c.l.b16 %v5332
        %v5406 = vunpack.c.l.b16 %v5333
        %v5407 = vunpack.c.l.b16 %v5334
        %v5408 = vunpack.c.l.b16 %v5335
        %v5409 = vunpack.c.l.b16 %v5336
        %v5410 = vunpack.c.l.b16 %v5337
        %v5411 = vunpack.c.l.b16 %v5338
        %v5412 = vunpack.c.l.b16 %v5339
        %v5413 = vunpack.c.l.b16 %v5340
        %v5414 = vpack.c.b16 %v5383, %v5382
        %v5415 = vpack.c.b16 %v5385, %v5384
        %v5416 = vpack.c.b16 %v5387, %v5386
        %v5417 = vpack.c.b16 %v5389, %v5388
        %v5418 = vpack.c.b16 %v5391, %v5390
        %v5419 = vpack.c.b16 %v5393, %v5392
        %v5420 = vpack.c.b16 %v5395, %v5394
        %v5421 = vpack.c.b16 %v5397, %v5396
        %v5422 = vpack.c.b16 %v5399, %v5398
        %v5423 = vpack.c.b16 %v5401, %v5400
        %v5424 = vpack.c.b16 %v5403, %v5402
        %v5425 = vpack.c.b16 %v5405, %v5404
        %v5426 = vpack.c.b16 %v5407, %v5406
        %v5427 = vpack.c.b16 %v5409, %v5408
        %v5428 = vpack.c.b16 %v5411, %v5410
        %v5429 = vpack.c.b16 %v5413, %v5412
        %v5438 = vunpack.c.l.b16 %v5342
        %v5439 = vunpack.c.l.b16 %v5343
        %v5440 = vunpack.c.l.b16 %v5344
        %v5441 = vunpack.c.l.b16 %v5345
        %v5442 = vunpack.c.l.b16 %v5346
        %v5443 = vunpack.c.l.b16 %v5347
        %v5444 = vunpack.c.l.b16 %v5348
        %v5445 = vunpack.c.l.b16 %v5349
        %v5446 = vpack.c.b16 %v5439, %v5438
        %v5447 = vpack.c.b16 %v5441, %v5440
        %v5448 = vpack.c.b16 %v5443, %v5442
        %v5449 = vpack.c.b16 %v5445, %v5444
        %v5455 = vsel %vm3649, %v5414, 0
        %v5458 = vsel %vm3649, %v5415, 0
        %v5461 = vsel %vm3649, %v5416, 0
        %v5464 = vsel %vm3649, %v5417, 0
        %v5467 = vsel %vm3649, %v5418, 0
        %v5470 = vsel %vm3649, %v5419, 0
        %v5473 = vsel %vm3649, %v5420, 0
        %v5476 = vsel %vm3649, %v5421, 0
        %v5479 = vsel %vm3649, %v5422, 0
        %v5482 = vsel %vm3649, %v5423, 0
        %v5485 = vsel %vm3649, %v5424, 0
        %v5488 = vsel %vm3649, %v5425, 0
        %v5491 = vsel %vm3649, %v5426, 0
        %v5494 = vsel %vm3649, %v5427, 0
        %v5497 = vsel %vm3649, %v5428, 0
        %v5500 = vsel %vm3649, %v5429, 0
        %5502 = vmatprep.subr.bf16.mxu0 0
        %5503 = vmatpush1.bf16.msra.mxu0 0
        %5504 = vmatprep.subr.bf16.mxu0 0
        %5505 = vmatpush1.bf16.msra.mxu0 0
        %5506 = vmatprep.subr.bf16.mxu0 0
        %5507 = vmatpush1.bf16.msra.mxu0 0
        %5508 = vmatprep.subr.bf16.mxu0 0
        %5509 = vmatpush1.bf16.msra.mxu0 0
        %5510 = vmatprep.subr.bf16.mxu0 0
        %5511 = vmatpush1.bf16.msra.mxu0 %v5449
        %5512 = vmatprep.subr.bf16.mxu0 0
        %5513 = vmatpush1.bf16.msra.mxu0 %v5448
        %5514 = vmatprep.subr.bf16.mxu0 0
        %5515 = vmatpush1.bf16.msra.mxu0 %v5447
        %5516 = vmatprep.subr.bf16.mxu0 0
        %5517 = vmatpush1.bf16.msra.mxu0 %v5446
        %5518 = vmatprep.subr.bf16.mxu0 0
        %5519 = vmatpush2.bf16.msra.mxu0 0
        %5520 = vmatprep.subr.bf16.mxu0 0
        %5521 = vmatpush2.bf16.msra.mxu0 0
        %5522 = vmatprep.subr.bf16.mxu0 0
        %5523 = vmatpush2.bf16.msra.mxu0 0
        %5524 = vmatprep.subr.bf16.mxu0 0
        %5525 = vmatpush2.bf16.msra.mxu0 0
        %5526 = vmatprep.subr.bf16.mxu0 0
        %5527 = vmatpush2.bf16.msra.mxu0 0
        %5528 = vmatprep.subr.bf16.mxu0 0
        %5529 = vmatpush2.bf16.msra.mxu0 0
        %5530 = vmatprep.subr.bf16.mxu0 0
        %5531 = vmatpush2.bf16.msra.mxu0 0
        %5532 = vmatprep.subr.bf16.mxu0 0
        %5533 = vmatpush2.bf16.msra.mxu0 0
        %5534 = vmatprep.mubr.bf16.mxu0 0
        %5535 = vmatmul.mubr.bf16.gmra.mxu0 %v5455
        %v5536 = vpop.f32.mrf.mxu0
        %v5537 = vadd.f32 0.0, %v5536
        %v5538 = vpop.f32.mrf.mxu0
        %v5539 = vpop.f32.mrf.mxu0
        %v5540 = vadd.f32 0.0, %v5539
        %v5541 = vpop.f32.mrf.mxu0
        %5542 = vmatprep.mubr.bf16.mxu0 0
        %5543 = vmatmul.mubr.bf16.gmra.mxu0 %v5458
        %v5544 = vpop.f32.mrf.mxu0
        %v5545 = vadd.f32 0.0, %v5544
        %v5546 = vpop.f32.mrf.mxu0
        %v5547 = vpop.f32.mrf.mxu0
        %v5548 = vadd.f32 0.0, %v5547
        %v5549 = vpop.f32.mrf.mxu0
        %5550 = vmatprep.mubr.bf16.mxu0 0
        %5551 = vmatmul.mubr.bf16.gmra.mxu0 %v5461
        %v5552 = vpop.f32.mrf.mxu0
        %v5553 = vadd.f32 0.0, %v5552
        %v5554 = vpop.f32.mrf.mxu0
        %v5555 = vpop.f32.mrf.mxu0
        %v5556 = vadd.f32 0.0, %v5555
        %v5557 = vpop.f32.mrf.mxu0
        %5558 = vmatprep.mubr.bf16.mxu0 0
        %5559 = vmatmul.mubr.bf16.gmra.mxu0 %v5464
        %v5560 = vpop.f32.mrf.mxu0
        %v5561 = vadd.f32 0.0, %v5560
        %v5562 = vpop.f32.mrf.mxu0
        %v5563 = vpop.f32.mrf.mxu0
        %v5564 = vadd.f32 0.0, %v5563
        %v5565 = vpop.f32.mrf.mxu0
        %5566 = vmatprep.mubr.bf16.mxu0 0
        %5567 = vmatmul.mubr.bf16.gmra.mxu0 %v5467
        %v5568 = vpop.f32.mrf.mxu0
        %v5569 = vadd.f32 0.0, %v5568
        %v5570 = vpop.f32.mrf.mxu0
        %v5571 = vpop.f32.mrf.mxu0
        %v5572 = vadd.f32 0.0, %v5571
        %v5573 = vpop.f32.mrf.mxu0
        %5574 = vmatprep.mubr.bf16.mxu0 0
        %5575 = vmatmul.mubr.bf16.gmra.mxu0 %v5470
        %v5576 = vpop.f32.mrf.mxu0
        %v5577 = vadd.f32 0.0, %v5576
        %v5578 = vpop.f32.mrf.mxu0
        %v5579 = vpop.f32.mrf.mxu0
        %v5580 = vadd.f32 0.0, %v5579
        %v5581 = vpop.f32.mrf.mxu0
        %5582 = vmatprep.mubr.bf16.mxu0 0
        %5583 = vmatmul.mubr.bf16.gmra.mxu0 %v5473
        %v5584 = vpop.f32.mrf.mxu0
        %v5585 = vadd.f32 0.0, %v5584
        %v5586 = vpop.f32.mrf.mxu0
        %v5587 = vpop.f32.mrf.mxu0
        %v5588 = vadd.f32 0.0, %v5587
        %v5589 = vpop.f32.mrf.mxu0
        %5590 = vmatprep.mubr.bf16.mxu0 0
        %5591 = vmatmul.mubr.bf16.gmra.mxu0 %v5476
        %v5592 = vpop.f32.mrf.mxu0
        %v5593 = vadd.f32 0.0, %v5592
        %v5594 = vpop.f32.mrf.mxu0
        %v5595 = vpop.f32.mrf.mxu0
        %v5596 = vadd.f32 0.0, %v5595
        %v5597 = vpop.f32.mrf.mxu0
        %5598 = vmatprep.mubr.bf16.mxu0 0
        %5599 = vmatmul.mubr.bf16.gmra.mxu0 %v5479
        %v5600 = vpop.f32.mrf.mxu0
        %v5601 = vadd.f32 0.0, %v5600
        %v5602 = vpop.f32.mrf.mxu0
        %v5603 = vpop.f32.mrf.mxu0
        %v5604 = vadd.f32 0.0, %v5603
        %v5605 = vpop.f32.mrf.mxu0
        %5606 = vmatprep.mubr.bf16.mxu0 0
        %5607 = vmatmul.mubr.bf16.gmra.mxu0 %v5482
        %v5608 = vpop.f32.mrf.mxu0
        %v5609 = vadd.f32 0.0, %v5608
        %v5610 = vpop.f32.mrf.mxu0
        %v5611 = vpop.f32.mrf.mxu0
        %v5612 = vadd.f32 0.0, %v5611
        %v5613 = vpop.f32.mrf.mxu0
        %5614 = vmatprep.mubr.bf16.mxu0 0
        %5615 = vmatmul.mubr.bf16.gmra.mxu0 %v5485
        %v5616 = vpop.f32.mrf.mxu0
        %v5617 = vadd.f32 0.0, %v5616
        %v5618 = vpop.f32.mrf.mxu0
        %v5619 = vpop.f32.mrf.mxu0
        %v5620 = vadd.f32 0.0, %v5619
        %v5621 = vpop.f32.mrf.mxu0
        %5622 = vmatprep.mubr.bf16.mxu0 0
        %5623 = vmatmul.mubr.bf16.gmra.mxu0 %v5488
        %v5624 = vpop.f32.mrf.mxu0
        %v5625 = vadd.f32 0.0, %v5624
        %v5626 = vpop.f32.mrf.mxu0
        %v5627 = vpop.f32.mrf.mxu0
        %v5628 = vadd.f32 0.0, %v5627
        %v5629 = vpop.f32.mrf.mxu0
        %5630 = vmatprep.mubr.bf16.mxu0 0
        %5631 = vmatmul.mubr.bf16.gmra.mxu0 %v5491
        %v5632 = vpop.f32.mrf.mxu0
        %v5633 = vadd.f32 0.0, %v5632
        %v5634 = vpop.f32.mrf.mxu0
        %v5635 = vpop.f32.mrf.mxu0
        %v5636 = vadd.f32 0.0, %v5635
        %v5637 = vpop.f32.mrf.mxu0
        %5638 = vmatprep.mubr.bf16.mxu0 0
        %5639 = vmatmul.mubr.bf16.gmra.mxu0 %v5494
        %v5640 = vpop.f32.mrf.mxu0
        %v5641 = vadd.f32 0.0, %v5640
        %v5642 = vpop.f32.mrf.mxu0
        %v5643 = vpop.f32.mrf.mxu0
        %v5644 = vadd.f32 0.0, %v5643
        %v5645 = vpop.f32.mrf.mxu0
        %5646 = vmatprep.mubr.bf16.mxu0 0
        %5647 = vmatmul.mubr.bf16.gmra.mxu0 %v5497
        %v5648 = vpop.f32.mrf.mxu0
        %v5649 = vadd.f32 0.0, %v5648
        %v5650 = vpop.f32.mrf.mxu0
        %v5651 = vpop.f32.mrf.mxu0
        %v5652 = vadd.f32 0.0, %v5651
        %v5653 = vpop.f32.mrf.mxu0
        %5654 = vmatprep.mubr.bf16.mxu0 0
        %5655 = vmatmul.mubr.bf16.gmra.mxu0 %v5500
        %v5656 = vpop.f32.mrf.mxu0
        %v5657 = vadd.f32 0.0, %v5656
        %v5658 = vpop.f32.mrf.mxu0
        %v5659 = vpop.f32.mrf.mxu0
        %v5660 = vadd.f32 0.0, %v5659
        %v5661 = vpop.f32.mrf.mxu0
        %5662 = vdwg.mxu0
        %v5663 = vld [vmem:[#allocation4] sm:$0xff]
        %v5664 = vld [vmem:[#allocation4 + $0x8] sm:$0xff]
        %v5665 = vld [vmem:[#allocation4 + $0x10] sm:$0xff]
        %v5666 = vld [vmem:[#allocation4 + $0x18] sm:$0xff]
        %v5667 = vld [vmem:[#allocation4 + $0x20] sm:$0xff]
        %v5668 = vld [vmem:[#allocation4 + $0x28] sm:$0xff]
        %v5669 = vld [vmem:[#allocation4 + $0x30] sm:$0xff]
        %v5670 = vld [vmem:[#allocation4 + $0x38] sm:$0xff]
        %v5671 = vld [vmem:[#allocation4 + $0x40] sm:$0xff]
        %v5672 = vld [vmem:[#allocation4 + $0x48] sm:$0xff]
        %v5673 = vld [vmem:[#allocation4 + $0x50] sm:$0xff]
        %v5674 = vld [vmem:[#allocation4 + $0x58] sm:$0xff]
        %v5675 = vld [vmem:[#allocation4 + $0x60] sm:$0xff]
        %v5676 = vld [vmem:[#allocation4 + $0x68] sm:$0xff]
        %v5677 = vld [vmem:[#allocation4 + $0x70] sm:$0xff]
        %v5678 = vld [vmem:[#allocation4 + $0x78] sm:$0xff]
        %v5679 = vld [vmem:[#allocation4 + $0x80] sm:$0xff]
        %v5680 = vld [vmem:[#allocation4 + $0x88] sm:$0xff]
        %v5681 = vld [vmem:[#allocation4 + $0x90] sm:$0xff]
        %v5682 = vld [vmem:[#allocation4 + $0x98] sm:$0xff]
        %v5683 = vld [vmem:[#allocation4 + $0xa0] sm:$0xff]
        %v5684 = vld [vmem:[#allocation4 + $0xa8] sm:$0xff]
        %v5685 = vld [vmem:[#allocation4 + $0xb0] sm:$0xff]
        %v5686 = vld [vmem:[#allocation4 + $0xb8] sm:$0xff]
        %v5687 = vld [vmem:[#allocation4 + $0xc0] sm:$0xff]
        %v5688 = vld [vmem:[#allocation4 + $0xc8] sm:$0xff]
        %v5689 = vld [vmem:[#allocation4 + $0xd0] sm:$0xff]
        %v5690 = vld [vmem:[#allocation4 + $0xd8] sm:$0xff]
        %v5691 = vld [vmem:[#allocation4 + $0xe0] sm:$0xff]
        %v5692 = vld [vmem:[#allocation4 + $0xe8] sm:$0xff]
        %v5693 = vld [vmem:[#allocation4 + $0xf0] sm:$0xff]
        %v5694 = vld [vmem:[#allocation4 + $0xf8] sm:$0xff]
        %v5695 = vadd.f32 %v5663, %v5537
        %v5696 = vadd.f32 %v5664, %v5540
        %v5697 = vadd.f32 %v5665, %v5545
        %v5698 = vadd.f32 %v5666, %v5548
        %v5699 = vadd.f32 %v5667, %v5553
        %v5700 = vadd.f32 %v5668, %v5556
        %v5701 = vadd.f32 %v5669, %v5561
        %v5702 = vadd.f32 %v5670, %v5564
        %v5703 = vadd.f32 %v5671, %v5569
        %v5704 = vadd.f32 %v5672, %v5572
        %v5705 = vadd.f32 %v5673, %v5577
        %v5706 = vadd.f32 %v5674, %v5580
        %v5707 = vadd.f32 %v5675, %v5585
        %v5708 = vadd.f32 %v5676, %v5588
        %v5709 = vadd.f32 %v5677, %v5593
        %v5710 = vadd.f32 %v5678, %v5596
        %v5711 = vadd.f32 %v5679, %v5601
        %v5712 = vadd.f32 %v5680, %v5604
        %v5713 = vadd.f32 %v5681, %v5609
        %v5714 = vadd.f32 %v5682, %v5612
        %v5715 = vadd.f32 %v5683, %v5617
        %v5716 = vadd.f32 %v5684, %v5620
        %v5717 = vadd.f32 %v5685, %v5625
        %v5718 = vadd.f32 %v5686, %v5628
        %v5719 = vadd.f32 %v5687, %v5633
        %v5720 = vadd.f32 %v5688, %v5636
        %v5721 = vadd.f32 %v5689, %v5641
        %v5722 = vadd.f32 %v5690, %v5644
        %v5723 = vadd.f32 %v5691, %v5649
        %v5724 = vadd.f32 %v5692, %v5652
        %v5725 = vadd.f32 %v5693, %v5657
        %v5726 = vadd.f32 %v5694, %v5660
        %5727 = vst [vmem:[#allocation4] sm:$0xff] %v5695
        %5728 = vst [vmem:[#allocation4 + $0x8] sm:$0xff] %v5696
        %5729 = vst [vmem:[#allocation4 + $0x10] sm:$0xff] %v5697
        %5730 = vst [vmem:[#allocation4 + $0x18] sm:$0xff] %v5698
        %5731 = vst [vmem:[#allocation4 + $0x20] sm:$0xff] %v5699
        %5732 = vst [vmem:[#allocation4 + $0x28] sm:$0xff] %v5700
        %5733 = vst [vmem:[#allocation4 + $0x30] sm:$0xff] %v5701
        %5734 = vst [vmem:[#allocation4 + $0x38] sm:$0xff] %v5702
        %5735 = vst [vmem:[#allocation4 + $0x40] sm:$0xff] %v5703
        %5736 = vst [vmem:[#allocation4 + $0x48] sm:$0xff] %v5704
        %5737 = vst [vmem:[#allocation4 + $0x50] sm:$0xff] %v5705
        %5738 = vst [vmem:[#allocation4 + $0x58] sm:$0xff] %v5706
        %5739 = vst [vmem:[#allocation4 + $0x60] sm:$0xff] %v5707
        %5740 = vst [vmem:[#allocation4 + $0x68] sm:$0xff] %v5708
        %5741 = vst [vmem:[#allocation4 + $0x70] sm:$0xff] %v5709
        %5742 = vst [vmem:[#allocation4 + $0x78] sm:$0xff] %v5710
        %5743 = vst [vmem:[#allocation4 + $0x80] sm:$0xff] %v5711
        %5744 = vst [vmem:[#allocation4 + $0x88] sm:$0xff] %v5712
        %5745 = vst [vmem:[#allocation4 + $0x90] sm:$0xff] %v5713
        %5746 = vst [vmem:[#allocation4 + $0x98] sm:$0xff] %v5714
        %5747 = vst [vmem:[#allocation4 + $0xa0] sm:$0xff] %v5715
        %5748 = vst [vmem:[#allocation4 + $0xa8] sm:$0xff] %v5716
        %5749 = vst [vmem:[#allocation4 + $0xb0] sm:$0xff] %v5717
        %5750 = vst [vmem:[#allocation4 + $0xb8] sm:$0xff] %v5718
        %5751 = vst [vmem:[#allocation4 + $0xc0] sm:$0xff] %v5719
        %5752 = vst [vmem:[#allocation4 + $0xc8] sm:$0xff] %v5720
        %5753 = vst [vmem:[#allocation4 + $0xd0] sm:$0xff] %v5721
        %5754 = vst [vmem:[#allocation4 + $0xd8] sm:$0xff] %v5722
        %5755 = vst [vmem:[#allocation4 + $0xe0] sm:$0xff] %v5723
        %5756 = vst [vmem:[#allocation4 + $0xe8] sm:$0xff] %v5724
        %5757 = vst [vmem:[#allocation4 + $0xf0] sm:$0xff] %v5725
        %5758 = vst [vmem:[#allocation4 + $0xf8] sm:$0xff] %v5726
        %v5759 = vld [vmem:[%s3387] sm:$0xf]
        %v5760 = vld [vmem:[%s3387 + $0x4] sm:$0xf]
        %v5761 = vld [vmem:[%s3387 + $0x8] sm:$0x1]
        %v5762 = vld [vmem:[%s3387 + $0xc] sm:$0xf]
        %v5763 = vld [vmem:[%s3387 + $0x10] sm:$0xf]
        %v5764 = vld [vmem:[%s3387 + $0x14] sm:$0x1]
        %v5765 = vld [vmem:[%s3387 + $0x18] sm:$0xf]
        %v5766 = vld [vmem:[%s3387 + $0x1c] sm:$0xf]
        %v5767 = vld [vmem:[%s3387 + $0x20] sm:$0x1]
        %v5768 = vld [vmem:[%s3387 + $0x24] sm:$0xf]
        %v5769 = vld [vmem:[%s3387 + $0x28] sm:$0xf]
        %v5770 = vld [vmem:[%s3387 + $0x2c] sm:$0x1]
        %v5771 = vld [vmem:[%s3387 + $0x30] sm:$0xf]
        %v5772 = vld [vmem:[%s3387 + $0x34] sm:$0xf]
        %v5773 = vld [vmem:[%s3387 + $0x38] sm:$0x1]
        %v5774 = vld [vmem:[%s3387 + $0x3c] sm:$0xf]
        %v5775 = vld [vmem:[%s3387 + $0x40] sm:$0xf]
        %v5776 = vld [vmem:[%s3387 + $0x44] sm:$0x1]
        %v5777 = vld [vmem:[%s3387 + $0x48] sm:$0xf]
        %v5778 = vld [vmem:[%s3387 + $0x4c] sm:$0xf]
        %v5779 = vld [vmem:[%s3387 + $0x50] sm:$0x1]
        %v5780 = vld [vmem:[%s3387 + $0x54] sm:$0xf]
        %v5781 = vld [vmem:[%s3387 + $0x58] sm:$0xf]
        %v5782 = vld [vmem:[%s3387 + $0x5c] sm:$0x1]
        %v5783 = vld [vmem:[%s3387 + $0x60] sm:$0xf]
        %v5784 = vld [vmem:[%s3387 + $0x64] sm:$0xf]
        %v5785 = vld [vmem:[%s3387 + $0x68] sm:$0x1]
        %v5786 = vld [vmem:[%s3387 + $0x6c] sm:$0xf]
        %v5787 = vld [vmem:[%s3387 + $0x70] sm:$0xf]
        %v5788 = vld [vmem:[%s3387 + $0x74] sm:$0x1]
        %v5789 = vld [vmem:[%s3387 + $0x78] sm:$0xf]
        %v5790 = vld [vmem:[%s3387 + $0x7c] sm:$0xf]
        %v5791 = vld [vmem:[%s3387 + $0x80] sm:$0x1]
        %v5792 = vld [vmem:[%s3387 + $0x84] sm:$0xf]
        %v5793 = vld [vmem:[%s3387 + $0x88] sm:$0xf]
        %v5794 = vld [vmem:[%s3387 + $0x8c] sm:$0x1]
        %v5795 = vld [vmem:[%s3387 + $0x90] sm:$0xf]
        %v5796 = vld [vmem:[%s3387 + $0x94] sm:$0xf]
        %v5797 = vld [vmem:[%s3387 + $0x98] sm:$0x1]
        %v5798 = vld [vmem:[%s3387 + $0x9c] sm:$0xf]
        %v5799 = vld [vmem:[%s3387 + $0xa0] sm:$0xf]
        %v5800 = vld [vmem:[%s3387 + $0xa4] sm:$0x1]
        %v5801 = vld [vmem:[%s3387 + $0xa8] sm:$0xf]
        %v5802 = vld [vmem:[%s3387 + $0xac] sm:$0xf]
        %v5803 = vld [vmem:[%s3387 + $0xb0] sm:$0x1]
        %v5804 = vld [vmem:[%s3387 + $0xb4] sm:$0xf]
        %v5805 = vld [vmem:[%s3387 + $0xb8] sm:$0xf]
        %v5806 = vld [vmem:[%s3387 + $0xbc] sm:$0x1]
        %v5808 = vshrl.u32 %v5759, 16
        %v5810 = vrot.slane %v5808, 4
        %v5811 = vshll.u32 %v5759, 16
        %v5813 = vrot.slane %v5811, 5
        %v5814 = vor.u32 %v5810, %v5813
        %v5815 = vrot.slane %v5814, 4
        %v5817 = vshll.u32 %v5760, 16
        %v5819 = vrot.slane %v5817, 5
        %v5820 = vsel %vm3941, %v5815, %v5819
        %v5821 = vshrl.u32 %v5760, 16
        %v5823 = vrot.slane %v5821, 4
        %v5824 = vor.u32 %v5823, %v5819
        %v5825 = vrot.slane %v5824, 4
        %v5827 = vshll.u32 %v5761, 16
        %v5829 = vrot.slane %v5827, 5
        %v5830 = vsel %vm3941, %v5825, %v5829
        %v5832 = vshrl.u32 %v5762, 16
        %v5834 = vrot.slane %v5832, 4
        %v5835 = vshll.u32 %v5762, 16
        %v5837 = vrot.slane %v5835, 5
        %v5838 = vor.u32 %v5834, %v5837
        %v5839 = vrot.slane %v5838, 4
        %v5841 = vshll.u32 %v5763, 16
        %v5843 = vrot.slane %v5841, 5
        %v5844 = vsel %vm3941, %v5839, %v5843
        %v5845 = vshrl.u32 %v5763, 16
        %v5847 = vrot.slane %v5845, 4
        %v5848 = vor.u32 %v5847, %v5843
        %v5849 = vrot.slane %v5848, 4
        %v5851 = vshll.u32 %v5764, 16
        %v5853 = vrot.slane %v5851, 5
        %v5854 = vsel %vm3941, %v5849, %v5853
        %v5856 = vshrl.u32 %v5765, 16
        %v5858 = vrot.slane %v5856, 4
        %v5859 = vshll.u32 %v5765, 16
        %v5861 = vrot.slane %v5859, 5
        %v5862 = vor.u32 %v5858, %v5861
        %v5863 = vrot.slane %v5862, 4
        %v5865 = vshll.u32 %v5766, 16
        %v5867 = vrot.slane %v5865, 5
        %v5868 = vsel %vm3941, %v5863, %v5867
        %v5869 = vshrl.u32 %v5766, 16
        %v5871 = vrot.slane %v5869, 4
        %v5872 = vor.u32 %v5871, %v5867
        %v5873 = vrot.slane %v5872, 4
        %v5875 = vshll.u32 %v5767, 16
        %v5877 = vrot.slane %v5875, 5
        %v5878 = vsel %vm3941, %v5873, %v5877
        %v5880 = vshrl.u32 %v5768, 16
        %v5882 = vrot.slane %v5880, 4
        %v5883 = vshll.u32 %v5768, 16
        %v5885 = vrot.slane %v5883, 5
        %v5886 = vor.u32 %v5882, %v5885
        %v5887 = vrot.slane %v5886, 4
        %v5889 = vshll.u32 %v5769, 16
        %v5891 = vrot.slane %v5889, 5
        %v5892 = vsel %vm3941, %v5887, %v5891
        %v5893 = vshrl.u32 %v5769, 16
        %v5895 = vrot.slane %v5893, 4
        %v5896 = vor.u32 %v5895, %v5891
        %v5897 = vrot.slane %v5896, 4
        %v5899 = vshll.u32 %v5770, 16
        %v5901 = vrot.slane %v5899, 5
        %v5902 = vsel %vm3941, %v5897, %v5901
        %v5904 = vshrl.u32 %v5771, 16
        %v5906 = vrot.slane %v5904, 4
        %v5907 = vshll.u32 %v5771, 16
        %v5909 = vrot.slane %v5907, 5
        %v5910 = vor.u32 %v5906, %v5909
        %v5911 = vrot.slane %v5910, 4
        %v5913 = vshll.u32 %v5772, 16
        %v5915 = vrot.slane %v5913, 5
        %v5916 = vsel %vm3941, %v5911, %v5915
        %v5917 = vshrl.u32 %v5772, 16
        %v5919 = vrot.slane %v5917, 4
        %v5920 = vor.u32 %v5919, %v5915
        %v5921 = vrot.slane %v5920, 4
        %v5923 = vshll.u32 %v5773, 16
        %v5925 = vrot.slane %v5923, 5
        %v5926 = vsel %vm3941, %v5921, %v5925
        %v5928 = vshrl.u32 %v5774, 16
        %v5930 = vrot.slane %v5928, 4
        %v5931 = vshll.u32 %v5774, 16
        %v5933 = vrot.slane %v5931, 5
        %v5934 = vor.u32 %v5930, %v5933
        %v5935 = vrot.slane %v5934, 4
        %v5937 = vshll.u32 %v5775, 16
        %v5939 = vrot.slane %v5937, 5
        %v5940 = vsel %vm3941, %v5935, %v5939
        %v5941 = vshrl.u32 %v5775, 16
        %v5943 = vrot.slane %v5941, 4
        %v5944 = vor.u32 %v5943, %v5939
        %v5945 = vrot.slane %v5944, 4
        %v5947 = vshll.u32 %v5776, 16
        %v5949 = vrot.slane %v5947, 5
        %v5950 = vsel %vm3941, %v5945, %v5949
        %v5952 = vshrl.u32 %v5777, 16
        %v5954 = vrot.slane %v5952, 4
        %v5955 = vshll.u32 %v5777, 16
        %v5957 = vrot.slane %v5955, 5
        %v5958 = vor.u32 %v5954, %v5957
        %v5959 = vrot.slane %v5958, 4
        %v5961 = vshll.u32 %v5778, 16
        %v5963 = vrot.slane %v5961, 5
        %v5964 = vsel %vm3941, %v5959, %v5963
        %v5965 = vshrl.u32 %v5778, 16
        %v5967 = vrot.slane %v5965, 4
        %v5968 = vor.u32 %v5967, %v5963
        %v5969 = vrot.slane %v5968, 4
        %v5971 = vshll.u32 %v5779, 16
        %v5973 = vrot.slane %v5971, 5
        %v5974 = vsel %vm3941, %v5969, %v5973
        %v5976 = vshrl.u32 %v5780, 16
        %v5978 = vrot.slane %v5976, 4
        %v5979 = vshll.u32 %v5780, 16
        %v5981 = vrot.slane %v5979, 5
        %v5982 = vor.u32 %v5978, %v5981
        %v5983 = vrot.slane %v5982, 4
        %v5985 = vshll.u32 %v5781, 16
        %v5987 = vrot.slane %v5985, 5
        %v5988 = vsel %vm3941, %v5983, %v5987
        %v5989 = vshrl.u32 %v5781, 16
        %v5991 = vrot.slane %v5989, 4
        %v5992 = vor.u32 %v5991, %v5987
        %v5993 = vrot.slane %v5992, 4
        %v5995 = vshll.u32 %v5782, 16
        %v5997 = vrot.slane %v5995, 5
        %v5998 = vsel %vm3941, %v5993, %v5997
        %v6000 = vshrl.u32 %v5783, 16
        %v6002 = vrot.slane %v6000, 4
        %v6003 = vshll.u32 %v5783, 16
        %v6005 = vrot.slane %v6003, 5
        %v6006 = vor.u32 %v6002, %v6005
        %v6007 = vrot.slane %v6006, 4
        %v6009 = vshll.u32 %v5784, 16
        %v6011 = vrot.slane %v6009, 5
        %v6012 = vsel %vm3941, %v6007, %v6011
        %v6013 = vshrl.u32 %v5784, 16
        %v6015 = vrot.slane %v6013, 4
        %v6016 = vor.u32 %v6015, %v6011
        %v6017 = vrot.slane %v6016, 4
        %v6019 = vshll.u32 %v5785, 16
        %v6021 = vrot.slane %v6019, 5
        %v6022 = vsel %vm3941, %v6017, %v6021
        %v6024 = vshrl.u32 %v5786, 16
        %v6026 = vrot.slane %v6024, 4
        %v6027 = vshll.u32 %v5786, 16
        %v6029 = vrot.slane %v6027, 5
        %v6030 = vor.u32 %v6026, %v6029
        %v6031 = vrot.slane %v6030, 4
        %v6033 = vshll.u32 %v5787, 16
        %v6035 = vrot.slane %v6033, 5
        %v6036 = vsel %vm3941, %v6031, %v6035
        %v6037 = vshrl.u32 %v5787, 16
        %v6039 = vrot.slane %v6037, 4
        %v6040 = vor.u32 %v6039, %v6035
        %v6041 = vrot.slane %v6040, 4
        %v6043 = vshll.u32 %v5788, 16
        %v6045 = vrot.slane %v6043, 5
        %v6046 = vsel %vm3941, %v6041, %v6045
        %v6048 = vshrl.u32 %v5789, 16
        %v6050 = vrot.slane %v6048, 4
        %v6051 = vshll.u32 %v5789, 16
        %v6053 = vrot.slane %v6051, 5
        %v6054 = vor.u32 %v6050, %v6053
        %v6055 = vrot.slane %v6054, 4
        %v6057 = vshll.u32 %v5790, 16
        %v6059 = vrot.slane %v6057, 5
        %v6060 = vsel %vm3941, %v6055, %v6059
        %v6061 = vshrl.u32 %v5790, 16
        %v6063 = vrot.slane %v6061, 4
        %v6064 = vor.u32 %v6063, %v6059
        %v6065 = vrot.slane %v6064, 4
        %v6067 = vshll.u32 %v5791, 16
        %v6069 = vrot.slane %v6067, 5
        %v6070 = vsel %vm3941, %v6065, %v6069
        %v6072 = vshrl.u32 %v5792, 16
        %v6074 = vrot.slane %v6072, 4
        %v6075 = vshll.u32 %v5792, 16
        %v6077 = vrot.slane %v6075, 5
        %v6078 = vor.u32 %v6074, %v6077
        %v6079 = vrot.slane %v6078, 4
        %v6081 = vshll.u32 %v5793, 16
        %v6083 = vrot.slane %v6081, 5
        %v6084 = vsel %vm3941, %v6079, %v6083
        %v6085 = vshrl.u32 %v5793, 16
        %v6087 = vrot.slane %v6085, 4
        %v6088 = vor.u32 %v6087, %v6083
        %v6089 = vrot.slane %v6088, 4
        %v6091 = vshll.u32 %v5794, 16
        %v6093 = vrot.slane %v6091, 5
        %v6094 = vsel %vm3941, %v6089, %v6093
        %v6096 = vshrl.u32 %v5795, 16
        %v6098 = vrot.slane %v6096, 4
        %v6099 = vshll.u32 %v5795, 16
        %v6101 = vrot.slane %v6099, 5
        %v6102 = vor.u32 %v6098, %v6101
        %v6103 = vrot.slane %v6102, 4
        %v6105 = vshll.u32 %v5796, 16
        %v6107 = vrot.slane %v6105, 5
        %v6108 = vsel %vm3941, %v6103, %v6107
        %v6109 = vshrl.u32 %v5796, 16
        %v6111 = vrot.slane %v6109, 4
        %v6112 = vor.u32 %v6111, %v6107
        %v6113 = vrot.slane %v6112, 4
        %v6115 = vshll.u32 %v5797, 16
        %v6117 = vrot.slane %v6115, 5
        %v6118 = vsel %vm3941, %v6113, %v6117
        %v6120 = vshrl.u32 %v5798, 16
        %v6122 = vrot.slane %v6120, 4
        %v6123 = vshll.u32 %v5798, 16
        %v6125 = vrot.slane %v6123, 5
        %v6126 = vor.u32 %v6122, %v6125
        %v6127 = vrot.slane %v6126, 4
        %v6129 = vshll.u32 %v5799, 16
        %v6131 = vrot.slane %v6129, 5
        %v6132 = vsel %vm3941, %v6127, %v6131
        %v6133 = vshrl.u32 %v5799, 16
        %v6135 = vrot.slane %v6133, 4
        %v6136 = vor.u32 %v6135, %v6131
        %v6137 = vrot.slane %v6136, 4
        %v6139 = vshll.u32 %v5800, 16
        %v6141 = vrot.slane %v6139, 5
        %v6142 = vsel %vm3941, %v6137, %v6141
        %v6144 = vshrl.u32 %v5801, 16
        %v6146 = vrot.slane %v6144, 4
        %v6147 = vshll.u32 %v5801, 16
        %v6149 = vrot.slane %v6147, 5
        %v6150 = vor.u32 %v6146, %v6149
        %v6151 = vrot.slane %v6150, 4
        %v6153 = vshll.u32 %v5802, 16
        %v6155 = vrot.slane %v6153, 5
        %v6156 = vsel %vm3941, %v6151, %v6155
        %v6157 = vshrl.u32 %v5802, 16
        %v6159 = vrot.slane %v6157, 4
        %v6160 = vor.u32 %v6159, %v6155
        %v6161 = vrot.slane %v6160, 4
        %v6163 = vshll.u32 %v5803, 16
        %v6165 = vrot.slane %v6163, 5
        %v6166 = vsel %vm3941, %v6161, %v6165
        %v6168 = vshrl.u32 %v5804, 16
        %v6170 = vrot.slane %v6168, 4
        %v6171 = vshll.u32 %v5804, 16
        %v6173 = vrot.slane %v6171, 5
        %v6174 = vor.u32 %v6170, %v6173
        %v6175 = vrot.slane %v6174, 4
        %v6177 = vshll.u32 %v5805, 16
        %v6179 = vrot.slane %v6177, 5
        %v6180 = vsel %vm3941, %v6175, %v6179
        %v6181 = vshrl.u32 %v5805, 16
        %v6183 = vrot.slane %v6181, 4
        %v6184 = vor.u32 %v6183, %v6179
        %v6185 = vrot.slane %v6184, 4
        %v6187 = vshll.u32 %v5806, 16
        %v6189 = vrot.slane %v6187, 5
        %v6190 = vsel %vm3941, %v6185, %v6189
        %s6191 = scalar_lea.vmem %s4, 128
        %v6192 = vld [vmem:[%s6191] sm:$0xf]
        %v6193 = vld [vmem:[%s6191 + $0x4] sm:$0xf]
        %v6194 = vld [vmem:[%s6191 + $0x8] sm:$0xf]
        %v6195 = vld [vmem:[%s6191 + $0xc] sm:$0xf]
        %v6196 = vld [vmem:[%s6191 + $0x10] sm:$0xf]
        %v6197 = vld [vmem:[%s6191 + $0x14] sm:$0xf]
        %v6198 = vld [vmem:[%s6191 + $0x18] sm:$0xf]
        %v6199 = vld [vmem:[%s6191 + $0x1c] sm:$0xf]
        %v6200 = vunpack.c.l.b16 %v5820
        %v6201 = vunpack.c.l.b16 %v5830
        %v6202 = vunpack.c.l.b16 %v5844
        %v6203 = vunpack.c.l.b16 %v5854
        %v6204 = vunpack.c.l.b16 %v5868
        %v6205 = vunpack.c.l.b16 %v5878
        %v6206 = vunpack.c.l.b16 %v5892
        %v6207 = vunpack.c.l.b16 %v5902
        %v6208 = vunpack.c.l.b16 %v5916
        %v6209 = vunpack.c.l.b16 %v5926
        %v6210 = vunpack.c.l.b16 %v5940
        %v6211 = vunpack.c.l.b16 %v5950
        %v6212 = vunpack.c.l.b16 %v5964
        %v6213 = vunpack.c.l.b16 %v5974
        %v6214 = vunpack.c.l.b16 %v5988
        %v6215 = vunpack.c.l.b16 %v5998
        %v6216 = vunpack.c.l.b16 %v6012
        %v6217 = vunpack.c.l.b16 %v6022
        %v6218 = vunpack.c.l.b16 %v6036
        %v6219 = vunpack.c.l.b16 %v6046
        %v6220 = vunpack.c.l.b16 %v6060
        %v6221 = vunpack.c.l.b16 %v6070
        %v6222 = vunpack.c.l.b16 %v6084
        %v6223 = vunpack.c.l.b16 %v6094
        %v6224 = vunpack.c.l.b16 %v6108
        %v6225 = vunpack.c.l.b16 %v6118
        %v6226 = vunpack.c.l.b16 %v6132
        %v6227 = vunpack.c.l.b16 %v6142
        %v6228 = vunpack.c.l.b16 %v6156
        %v6229 = vunpack.c.l.b16 %v6166
        %v6230 = vunpack.c.l.b16 %v6180
        %v6231 = vunpack.c.l.b16 %v6190
        %v6232 = vpack.c.b16 %v6201, %v6200
        %v6233 = vpack.c.b16 %v6203, %v6202
        %v6234 = vpack.c.b16 %v6205, %v6204
        %v6235 = vpack.c.b16 %v6207, %v6206
        %v6236 = vpack.c.b16 %v6209, %v6208
        %v6237 = vpack.c.b16 %v6211, %v6210
        %v6238 = vpack.c.b16 %v6213, %v6212
        %v6239 = vpack.c.b16 %v6215, %v6214
        %v6240 = vpack.c.b16 %v6217, %v6216
        %v6241 = vpack.c.b16 %v6219, %v6218
        %v6242 = vpack.c.b16 %v6221, %v6220
        %v6243 = vpack.c.b16 %v6223, %v6222
        %v6244 = vpack.c.b16 %v6225, %v6224
        %v6245 = vpack.c.b16 %v6227, %v6226
        %v6246 = vpack.c.b16 %v6229, %v6228
        %v6247 = vpack.c.b16 %v6231, %v6230
        %v6256 = vunpack.c.l.b16 %v6192
        %v6257 = vunpack.c.l.b16 %v6193
        %v6258 = vunpack.c.l.b16 %v6194
        %v6259 = vunpack.c.l.b16 %v6195
        %v6260 = vunpack.c.l.b16 %v6196
        %v6261 = vunpack.c.l.b16 %v6197
        %v6262 = vunpack.c.l.b16 %v6198
        %v6263 = vunpack.c.l.b16 %v6199
        %v6264 = vpack.c.b16 %v6257, %v6256
        %v6265 = vpack.c.b16 %v6259, %v6258
        %v6266 = vpack.c.b16 %v6261, %v6260
        %v6267 = vpack.c.b16 %v6263, %v6262
        %v6273 = vsel %vm3649, %v6232, 0
        %v6276 = vsel %vm3649, %v6233, 0
        %v6279 = vsel %vm3649, %v6234, 0
        %v6282 = vsel %vm3649, %v6235, 0
        %v6285 = vsel %vm3649, %v6236, 0
        %v6288 = vsel %vm3649, %v6237, 0
        %v6291 = vsel %vm3649, %v6238, 0
        %v6294 = vsel %vm3649, %v6239, 0
        %v6297 = vsel %vm3649, %v6240, 0
        %v6300 = vsel %vm3649, %v6241, 0
        %v6303 = vsel %vm3649, %v6242, 0
        %v6306 = vsel %vm3649, %v6243, 0
        %v6309 = vsel %vm3649, %v6244, 0
        %v6312 = vsel %vm3649, %v6245, 0
        %v6315 = vsel %vm3649, %v6246, 0
        %v6318 = vsel %vm3649, %v6247, 0
        %6320 = vmatprep.subr.bf16.mxu0 0
        %6321 = vmatpush1.bf16.msra.mxu0 0
        %6322 = vmatprep.subr.bf16.mxu0 0
        %6323 = vmatpush1.bf16.msra.mxu0 0
        %6324 = vmatprep.subr.bf16.mxu0 0
        %6325 = vmatpush1.bf16.msra.mxu0 0
        %6326 = vmatprep.subr.bf16.mxu0 0
        %6327 = vmatpush1.bf16.msra.mxu0 0
        %6328 = vmatprep.subr.bf16.mxu0 0
        %6329 = vmatpush1.bf16.msra.mxu0 %v6267
        %6330 = vmatprep.subr.bf16.mxu0 0
        %6331 = vmatpush1.bf16.msra.mxu0 %v6266
        %6332 = vmatprep.subr.bf16.mxu0 0
        %6333 = vmatpush1.bf16.msra.mxu0 %v6265
        %6334 = vmatprep.subr.bf16.mxu0 0
        %6335 = vmatpush1.bf16.msra.mxu0 %v6264
        %6336 = vmatprep.subr.bf16.mxu0 0
        %6337 = vmatpush2.bf16.msra.mxu0 0
        %6338 = vmatprep.subr.bf16.mxu0 0
        %6339 = vmatpush2.bf16.msra.mxu0 0
        %6340 = vmatprep.subr.bf16.mxu0 0
        %6341 = vmatpush2.bf16.msra.mxu0 0
        %6342 = vmatprep.subr.bf16.mxu0 0
        %6343 = vmatpush2.bf16.msra.mxu0 0
        %6344 = vmatprep.subr.bf16.mxu0 0
        %6345 = vmatpush2.bf16.msra.mxu0 0
        %6346 = vmatprep.subr.bf16.mxu0 0
        %6347 = vmatpush2.bf16.msra.mxu0 0
        %6348 = vmatprep.subr.bf16.mxu0 0
        %6349 = vmatpush2.bf16.msra.mxu0 0
        %6350 = vmatprep.subr.bf16.mxu0 0
        %6351 = vmatpush2.bf16.msra.mxu0 0
        %6352 = vmatprep.mubr.bf16.mxu0 0
        %6353 = vmatmul.mubr.bf16.gmra.mxu0 %v6273
        %v6354 = vpop.f32.mrf.mxu0
        %v6355 = vadd.f32 0.0, %v6354
        %v6356 = vpop.f32.mrf.mxu0
        %v6357 = vpop.f32.mrf.mxu0
        %v6358 = vadd.f32 0.0, %v6357
        %v6359 = vpop.f32.mrf.mxu0
        %6360 = vmatprep.mubr.bf16.mxu0 0
        %6361 = vmatmul.mubr.bf16.gmra.mxu0 %v6276
        %v6362 = vpop.f32.mrf.mxu0
        %v6363 = vadd.f32 0.0, %v6362
        %v6364 = vpop.f32.mrf.mxu0
        %v6365 = vpop.f32.mrf.mxu0
        %v6366 = vadd.f32 0.0, %v6365
        %v6367 = vpop.f32.mrf.mxu0
        %6368 = vmatprep.mubr.bf16.mxu0 0
        %6369 = vmatmul.mubr.bf16.gmra.mxu0 %v6279
        %v6370 = vpop.f32.mrf.mxu0
        %v6371 = vadd.f32 0.0, %v6370
        %v6372 = vpop.f32.mrf.mxu0
        %v6373 = vpop.f32.mrf.mxu0
        %v6374 = vadd.f32 0.0, %v6373
        %v6375 = vpop.f32.mrf.mxu0
        %6376 = vmatprep.mubr.bf16.mxu0 0
        %6377 = vmatmul.mubr.bf16.gmra.mxu0 %v6282
        %v6378 = vpop.f32.mrf.mxu0
        %v6379 = vadd.f32 0.0, %v6378
        %v6380 = vpop.f32.mrf.mxu0
        %v6381 = vpop.f32.mrf.mxu0
        %v6382 = vadd.f32 0.0, %v6381
        %v6383 = vpop.f32.mrf.mxu0
        %6384 = vmatprep.mubr.bf16.mxu0 0
        %6385 = vmatmul.mubr.bf16.gmra.mxu0 %v6285
        %v6386 = vpop.f32.mrf.mxu0
        %v6387 = vadd.f32 0.0, %v6386
        %v6388 = vpop.f32.mrf.mxu0
        %v6389 = vpop.f32.mrf.mxu0
        %v6390 = vadd.f32 0.0, %v6389
        %v6391 = vpop.f32.mrf.mxu0
        %6392 = vmatprep.mubr.bf16.mxu0 0
        %6393 = vmatmul.mubr.bf16.gmra.mxu0 %v6288
        %v6394 = vpop.f32.mrf.mxu0
        %v6395 = vadd.f32 0.0, %v6394
        %v6396 = vpop.f32.mrf.mxu0
        %v6397 = vpop.f32.mrf.mxu0
        %v6398 = vadd.f32 0.0, %v6397
        %v6399 = vpop.f32.mrf.mxu0
        %6400 = vmatprep.mubr.bf16.mxu0 0
        %6401 = vmatmul.mubr.bf16.gmra.mxu0 %v6291
        %v6402 = vpop.f32.mrf.mxu0
        %v6403 = vadd.f32 0.0, %v6402
        %v6404 = vpop.f32.mrf.mxu0
        %v6405 = vpop.f32.mrf.mxu0
        %v6406 = vadd.f32 0.0, %v6405
        %v6407 = vpop.f32.mrf.mxu0
        %6408 = vmatprep.mubr.bf16.mxu0 0
        %6409 = vmatmul.mubr.bf16.gmra.mxu0 %v6294
        %v6410 = vpop.f32.mrf.mxu0
        %v6411 = vadd.f32 0.0, %v6410
        %v6412 = vpop.f32.mrf.mxu0
        %v6413 = vpop.f32.mrf.mxu0
        %v6414 = vadd.f32 0.0, %v6413
        %v6415 = vpop.f32.mrf.mxu0
        %6416 = vmatprep.mubr.bf16.mxu0 0
        %6417 = vmatmul.mubr.bf16.gmra.mxu0 %v6297
        %v6418 = vpop.f32.mrf.mxu0
        %v6419 = vadd.f32 0.0, %v6418
        %v6420 = vpop.f32.mrf.mxu0
        %v6421 = vpop.f32.mrf.mxu0
        %v6422 = vadd.f32 0.0, %v6421
        %v6423 = vpop.f32.mrf.mxu0
        %6424 = vmatprep.mubr.bf16.mxu0 0
        %6425 = vmatmul.mubr.bf16.gmra.mxu0 %v6300
        %v6426 = vpop.f32.mrf.mxu0
        %v6427 = vadd.f32 0.0, %v6426
        %v6428 = vpop.f32.mrf.mxu0
        %v6429 = vpop.f32.mrf.mxu0
        %v6430 = vadd.f32 0.0, %v6429
        %v6431 = vpop.f32.mrf.mxu0
        %6432 = vmatprep.mubr.bf16.mxu0 0
        %6433 = vmatmul.mubr.bf16.gmra.mxu0 %v6303
        %v6434 = vpop.f32.mrf.mxu0
        %v6435 = vadd.f32 0.0, %v6434
        %v6436 = vpop.f32.mrf.mxu0
        %v6437 = vpop.f32.mrf.mxu0
        %v6438 = vadd.f32 0.0, %v6437
        %v6439 = vpop.f32.mrf.mxu0
        %6440 = vmatprep.mubr.bf16.mxu0 0
        %6441 = vmatmul.mubr.bf16.gmra.mxu0 %v6306
        %v6442 = vpop.f32.mrf.mxu0
        %v6443 = vadd.f32 0.0, %v6442
        %v6444 = vpop.f32.mrf.mxu0
        %v6445 = vpop.f32.mrf.mxu0
        %v6446 = vadd.f32 0.0, %v6445
        %v6447 = vpop.f32.mrf.mxu0
        %6448 = vmatprep.mubr.bf16.mxu0 0
        %6449 = vmatmul.mubr.bf16.gmra.mxu0 %v6309
        %v6450 = vpop.f32.mrf.mxu0
        %v6451 = vadd.f32 0.0, %v6450
        %v6452 = vpop.f32.mrf.mxu0
        %v6453 = vpop.f32.mrf.mxu0
        %v6454 = vadd.f32 0.0, %v6453
        %v6455 = vpop.f32.mrf.mxu0
        %6456 = vmatprep.mubr.bf16.mxu0 0
        %6457 = vmatmul.mubr.bf16.gmra.mxu0 %v6312
        %v6458 = vpop.f32.mrf.mxu0
        %v6459 = vadd.f32 0.0, %v6458
        %v6460 = vpop.f32.mrf.mxu0
        %v6461 = vpop.f32.mrf.mxu0
        %v6462 = vadd.f32 0.0, %v6461
        %v6463 = vpop.f32.mrf.mxu0
        %6464 = vmatprep.mubr.bf16.mxu0 0
        %6465 = vmatmul.mubr.bf16.gmra.mxu0 %v6315
        %v6466 = vpop.f32.mrf.mxu0
        %v6467 = vadd.f32 0.0, %v6466
        %v6468 = vpop.f32.mrf.mxu0
        %v6469 = vpop.f32.mrf.mxu0
        %v6470 = vadd.f32 0.0, %v6469
        %v6471 = vpop.f32.mrf.mxu0
        %6472 = vmatprep.mubr.bf16.mxu0 0
        %6473 = vmatmul.mubr.bf16.gmra.mxu0 %v6318
        %v6474 = vpop.f32.mrf.mxu0
        %v6475 = vadd.f32 0.0, %v6474
        %v6476 = vpop.f32.mrf.mxu0
        %v6477 = vpop.f32.mrf.mxu0
        %v6478 = vadd.f32 0.0, %v6477
        %v6479 = vpop.f32.mrf.mxu0
        %6480 = vdwg.mxu0
        %v6481 = vld [vmem:[#allocation4] sm:$0xff]
        %v6482 = vld [vmem:[#allocation4 + $0x8] sm:$0xff]
        %v6483 = vld [vmem:[#allocation4 + $0x10] sm:$0xff]
        %v6484 = vld [vmem:[#allocation4 + $0x18] sm:$0xff]
        %v6485 = vld [vmem:[#allocation4 + $0x20] sm:$0xff]
        %v6486 = vld [vmem:[#allocation4 + $0x28] sm:$0xff]
        %v6487 = vld [vmem:[#allocation4 + $0x30] sm:$0xff]
        %v6488 = vld [vmem:[#allocation4 + $0x38] sm:$0xff]
        %v6489 = vld [vmem:[#allocation4 + $0x40] sm:$0xff]
        %v6490 = vld [vmem:[#allocation4 + $0x48] sm:$0xff]
        %v6491 = vld [vmem:[#allocation4 + $0x50] sm:$0xff]
        %v6492 = vld [vmem:[#allocation4 + $0x58] sm:$0xff]
        %v6493 = vld [vmem:[#allocation4 + $0x60] sm:$0xff]
        %v6494 = vld [vmem:[#allocation4 + $0x68] sm:$0xff]
        %v6495 = vld [vmem:[#allocation4 + $0x70] sm:$0xff]
        %v6496 = vld [vmem:[#allocation4 + $0x78] sm:$0xff]
        %v6497 = vld [vmem:[#allocation4 + $0x80] sm:$0xff]
        %v6498 = vld [vmem:[#allocation4 + $0x88] sm:$0xff]
        %v6499 = vld [vmem:[#allocation4 + $0x90] sm:$0xff]
        %v6500 = vld [vmem:[#allocation4 + $0x98] sm:$0xff]
        %v6501 = vld [vmem:[#allocation4 + $0xa0] sm:$0xff]
        %v6502 = vld [vmem:[#allocation4 + $0xa8] sm:$0xff]
        %v6503 = vld [vmem:[#allocation4 + $0xb0] sm:$0xff]
        %v6504 = vld [vmem:[#allocation4 + $0xb8] sm:$0xff]
        %v6505 = vld [vmem:[#allocation4 + $0xc0] sm:$0xff]
        %v6506 = vld [vmem:[#allocation4 + $0xc8] sm:$0xff]
        %v6507 = vld [vmem:[#allocation4 + $0xd0] sm:$0xff]
        %v6508 = vld [vmem:[#allocation4 + $0xd8] sm:$0xff]
        %v6509 = vld [vmem:[#allocation4 + $0xe0] sm:$0xff]
        %v6510 = vld [vmem:[#allocation4 + $0xe8] sm:$0xff]
        %v6511 = vld [vmem:[#allocation4 + $0xf0] sm:$0xff]
        %v6512 = vld [vmem:[#allocation4 + $0xf8] sm:$0xff]
        %v6513 = vadd.f32 %v6481, %v6355
        %v6514 = vadd.f32 %v6482, %v6358
        %v6515 = vadd.f32 %v6483, %v6363
        %v6516 = vadd.f32 %v6484, %v6366
        %v6517 = vadd.f32 %v6485, %v6371
        %v6518 = vadd.f32 %v6486, %v6374
        %v6519 = vadd.f32 %v6487, %v6379
        %v6520 = vadd.f32 %v6488, %v6382
        %v6521 = vadd.f32 %v6489, %v6387
        %v6522 = vadd.f32 %v6490, %v6390
        %v6523 = vadd.f32 %v6491, %v6395
        %v6524 = vadd.f32 %v6492, %v6398
        %v6525 = vadd.f32 %v6493, %v6403
        %v6526 = vadd.f32 %v6494, %v6406
        %v6527 = vadd.f32 %v6495, %v6411
        %v6528 = vadd.f32 %v6496, %v6414
        %v6529 = vadd.f32 %v6497, %v6419
        %v6530 = vadd.f32 %v6498, %v6422
        %v6531 = vadd.f32 %v6499, %v6427
        %v6532 = vadd.f32 %v6500, %v6430
        %v6533 = vadd.f32 %v6501, %v6435
        %v6534 = vadd.f32 %v6502, %v6438
        %v6535 = vadd.f32 %v6503, %v6443
        %v6536 = vadd.f32 %v6504, %v6446
        %v6537 = vadd.f32 %v6505, %v6451
        %v6538 = vadd.f32 %v6506, %v6454
        %v6539 = vadd.f32 %v6507, %v6459
        %v6540 = vadd.f32 %v6508, %v6462
        %v6541 = vadd.f32 %v6509, %v6467
        %v6542 = vadd.f32 %v6510, %v6470
        %v6543 = vadd.f32 %v6511, %v6475
        %v6544 = vadd.f32 %v6512, %v6478
        %6545 = vst [vmem:[#allocation4] sm:$0xff] %v6513
        %6546 = vst [vmem:[#allocation4 + $0x8] sm:$0xff] %v6514
        %6547 = vst [vmem:[#allocation4 + $0x10] sm:$0xff] %v6515
        %6548 = vst [vmem:[#allocation4 + $0x18] sm:$0xff] %v6516
        %6549 = vst [vmem:[#allocation4 + $0x20] sm:$0xff] %v6517
        %6550 = vst [vmem:[#allocation4 + $0x28] sm:$0xff] %v6518
        %6551 = vst [vmem:[#allocation4 + $0x30] sm:$0xff] %v6519
        %6552 = vst [vmem:[#allocation4 + $0x38] sm:$0xff] %v6520
        %6553 = vst [vmem:[#allocation4 + $0x40] sm:$0xff] %v6521
        %6554 = vst [vmem:[#allocation4 + $0x48] sm:$0xff] %v6522
        %6555 = vst [vmem:[#allocation4 + $0x50] sm:$0xff] %v6523
        %6556 = vst [vmem:[#allocation4 + $0x58] sm:$0xff] %v6524
        %6557 = vst [vmem:[#allocation4 + $0x60] sm:$0xff] %v6525
        %6558 = vst [vmem:[#allocation4 + $0x68] sm:$0xff] %v6526
        %6559 = vst [vmem:[#allocation4 + $0x70] sm:$0xff] %v6527
        %6560 = vst [vmem:[#allocation4 + $0x78] sm:$0xff] %v6528
        %6561 = vst [vmem:[#allocation4 + $0x80] sm:$0xff] %v6529
        %6562 = vst [vmem:[#allocation4 + $0x88] sm:$0xff] %v6530
        %6563 = vst [vmem:[#allocation4 + $0x90] sm:$0xff] %v6531
        %6564 = vst [vmem:[#allocation4 + $0x98] sm:$0xff] %v6532
        %6565 = vst [vmem:[#allocation4 + $0xa0] sm:$0xff] %v6533
        %6566 = vst [vmem:[#allocation4 + $0xa8] sm:$0xff] %v6534
        %6567 = vst [vmem:[#allocation4 + $0xb0] sm:$0xff] %v6535
        %6568 = vst [vmem:[#allocation4 + $0xb8] sm:$0xff] %v6536
        %6569 = vst [vmem:[#allocation4 + $0xc0] sm:$0xff] %v6537
        %6570 = vst [vmem:[#allocation4 + $0xc8] sm:$0xff] %v6538
        %6571 = vst [vmem:[#allocation4 + $0xd0] sm:$0xff] %v6539
        %6572 = vst [vmem:[#allocation4 + $0xd8] sm:$0xff] %v6540
        %6573 = vst [vmem:[#allocation4 + $0xe0] sm:$0xff] %v6541
        %6574 = vst [vmem:[#allocation4 + $0xe8] sm:$0xff] %v6542
        %6575 = vst [vmem:[#allocation4 + $0xf0] sm:$0xff] %v6543
        %6576 = vst [vmem:[#allocation4 + $0xf8] sm:$0xff] %v6544
        %v6577 = vld [vmem:[%s3387] sm:$0xe]
        %v6578 = vld [vmem:[%s3387 + $0x4] sm:$0xf]
        %v6579 = vld [vmem:[%s3387 + $0x8] sm:$0x1]
        %v6580 = vld [vmem:[%s3387 + $0xc] sm:$0xe]
        %v6581 = vld [vmem:[%s3387 + $0x10] sm:$0xf]
        %v6582 = vld [vmem:[%s3387 + $0x14] sm:$0x1]
        %v6583 = vld [vmem:[%s3387 + $0x18] sm:$0xe]
        %v6584 = vld [vmem:[%s3387 + $0x1c] sm:$0xf]
        %v6585 = vld [vmem:[%s3387 + $0x20] sm:$0x1]
        %v6586 = vld [vmem:[%s3387 + $0x24] sm:$0xe]
        %v6587 = vld [vmem:[%s3387 + $0x28] sm:$0xf]
        %v6588 = vld [vmem:[%s3387 + $0x2c] sm:$0x1]
        %v6589 = vld [vmem:[%s3387 + $0x30] sm:$0xe]
        %v6590 = vld [vmem:[%s3387 + $0x34] sm:$0xf]
        %v6591 = vld [vmem:[%s3387 + $0x38] sm:$0x1]
        %v6592 = vld [vmem:[%s3387 + $0x3c] sm:$0xe]
        %v6593 = vld [vmem:[%s3387 + $0x40] sm:$0xf]
        %v6594 = vld [vmem:[%s3387 + $0x44] sm:$0x1]
        %v6595 = vld [vmem:[%s3387 + $0x48] sm:$0xe]
        %v6596 = vld [vmem:[%s3387 + $0x4c] sm:$0xf]
        %v6597 = vld [vmem:[%s3387 + $0x50] sm:$0x1]
        %v6598 = vld [vmem:[%s3387 + $0x54] sm:$0xe]
        %v6599 = vld [vmem:[%s3387 + $0x58] sm:$0xf]
        %v6600 = vld [vmem:[%s3387 + $0x5c] sm:$0x1]
        %v6601 = vld [vmem:[%s3387 + $0x60] sm:$0xe]
        %v6602 = vld [vmem:[%s3387 + $0x64] sm:$0xf]
        %v6603 = vld [vmem:[%s3387 + $0x68] sm:$0x1]
        %v6604 = vld [vmem:[%s3387 + $0x6c] sm:$0xe]
        %v6605 = vld [vmem:[%s3387 + $0x70] sm:$0xf]
        %v6606 = vld [vmem:[%s3387 + $0x74] sm:$0x1]
        %v6607 = vld [vmem:[%s3387 + $0x78] sm:$0xe]
        %v6608 = vld [vmem:[%s3387 + $0x7c] sm:$0xf]
        %v6609 = vld [vmem:[%s3387 + $0x80] sm:$0x1]
        %v6610 = vld [vmem:[%s3387 + $0x84] sm:$0xe]
        %v6611 = vld [vmem:[%s3387 + $0x88] sm:$0xf]
        %v6612 = vld [vmem:[%s3387 + $0x8c] sm:$0x1]
        %v6613 = vld [vmem:[%s3387 + $0x90] sm:$0xe]
        %v6614 = vld [vmem:[%s3387 + $0x94] sm:$0xf]
        %v6615 = vld [vmem:[%s3387 + $0x98] sm:$0x1]
        %v6616 = vld [vmem:[%s3387 + $0x9c] sm:$0xe]
        %v6617 = vld [vmem:[%s3387 + $0xa0] sm:$0xf]
        %v6618 = vld [vmem:[%s3387 + $0xa4] sm:$0x1]
        %v6619 = vld [vmem:[%s3387 + $0xa8] sm:$0xe]
        %v6620 = vld [vmem:[%s3387 + $0xac] sm:$0xf]
        %v6621 = vld [vmem:[%s3387 + $0xb0] sm:$0x1]
        %v6622 = vld [vmem:[%s3387 + $0xb4] sm:$0xe]
        %v6623 = vld [vmem:[%s3387 + $0xb8] sm:$0xf]
        %v6624 = vld [vmem:[%s3387 + $0xbc] sm:$0x1]
        %v6673 = vrot.slane %v6577, 5
        %v6674 = vrot.slane %v6673, 4
        %v6675 = vrot.slane %v6578, 5
        %v6676 = vsel %vm4810, %v6674, %v6675
        %v6677 = vrot.slane %v6675, 4
        %v6678 = vrot.slane %v6579, 5
        %v6679 = vsel %vm4810, %v6677, %v6678
        %v6680 = vrot.slane %v6580, 5
        %v6681 = vrot.slane %v6680, 4
        %v6682 = vrot.slane %v6581, 5
        %v6683 = vsel %vm4810, %v6681, %v6682
        %v6684 = vrot.slane %v6682, 4
        %v6685 = vrot.slane %v6582, 5
        %v6686 = vsel %vm4810, %v6684, %v6685
        %v6687 = vrot.slane %v6583, 5
        %v6688 = vrot.slane %v6687, 4
        %v6689 = vrot.slane %v6584, 5
        %v6690 = vsel %vm4810, %v6688, %v6689
        %v6691 = vrot.slane %v6689, 4
        %v6692 = vrot.slane %v6585, 5
        %v6693 = vsel %vm4810, %v6691, %v6692
        %v6694 = vrot.slane %v6586, 5
        %v6695 = vrot.slane %v6694, 4
        %v6696 = vrot.slane %v6587, 5
        %v6697 = vsel %vm4810, %v6695, %v6696
        %v6698 = vrot.slane %v6696, 4
        %v6699 = vrot.slane %v6588, 5
        %v6700 = vsel %vm4810, %v6698, %v6699
        %v6701 = vrot.slane %v6589, 5
        %v6702 = vrot.slane %v6701, 4
        %v6703 = vrot.slane %v6590, 5
        %v6704 = vsel %vm4810, %v6702, %v6703
        %v6705 = vrot.slane %v6703, 4
        %v6706 = vrot.slane %v6591, 5
        %v6707 = vsel %vm4810, %v6705, %v6706
        %v6708 = vrot.slane %v6592, 5
        %v6709 = vrot.slane %v6708, 4
        %v6710 = vrot.slane %v6593, 5
        %v6711 = vsel %vm4810, %v6709, %v6710
        %v6712 = vrot.slane %v6710, 4
        %v6713 = vrot.slane %v6594, 5
        %v6714 = vsel %vm4810, %v6712, %v6713
        %v6715 = vrot.slane %v6595, 5
        %v6716 = vrot.slane %v6715, 4
        %v6717 = vrot.slane %v6596, 5
        %v6718 = vsel %vm4810, %v6716, %v6717
        %v6719 = vrot.slane %v6717, 4
        %v6720 = vrot.slane %v6597, 5
        %v6721 = vsel %vm4810, %v6719, %v6720
        %v6722 = vrot.slane %v6598, 5
        %v6723 = vrot.slane %v6722, 4
        %v6724 = vrot.slane %v6599, 5
        %v6725 = vsel %vm4810, %v6723, %v6724
        %v6726 = vrot.slane %v6724, 4
        %v6727 = vrot.slane %v6600, 5
        %v6728 = vsel %vm4810, %v6726, %v6727
        %v6729 = vrot.slane %v6601, 5
        %v6730 = vrot.slane %v6729, 4
        %v6731 = vrot.slane %v6602, 5
        %v6732 = vsel %vm4810, %v6730, %v6731
        %v6733 = vrot.slane %v6731, 4
        %v6734 = vrot.slane %v6603, 5
        %v6735 = vsel %vm4810, %v6733, %v6734
        %v6736 = vrot.slane %v6604, 5
        %v6737 = vrot.slane %v6736, 4
        %v6738 = vrot.slane %v6605, 5
        %v6739 = vsel %vm4810, %v6737, %v6738
        %v6740 = vrot.slane %v6738, 4
        %v6741 = vrot.slane %v6606, 5
        %v6742 = vsel %vm4810, %v6740, %v6741
        %v6743 = vrot.slane %v6607, 5
        %v6744 = vrot.slane %v6743, 4
        %v6745 = vrot.slane %v6608, 5
        %v6746 = vsel %vm4810, %v6744, %v6745
        %v6747 = vrot.slane %v6745, 4
        %v6748 = vrot.slane %v6609, 5
        %v6749 = vsel %vm4810, %v6747, %v6748
        %v6750 = vrot.slane %v6610, 5
        %v6751 = vrot.slane %v6750, 4
        %v6752 = vrot.slane %v6611, 5
        %v6753 = vsel %vm4810, %v6751, %v6752
        %v6754 = vrot.slane %v6752, 4
        %v6755 = vrot.slane %v6612, 5
        %v6756 = vsel %vm4810, %v6754, %v6755
        %v6757 = vrot.slane %v6613, 5
        %v6758 = vrot.slane %v6757, 4
        %v6759 = vrot.slane %v6614, 5
        %v6760 = vsel %vm4810, %v6758, %v6759
        %v6761 = vrot.slane %v6759, 4
        %v6762 = vrot.slane %v6615, 5
        %v6763 = vsel %vm4810, %v6761, %v6762
        %v6764 = vrot.slane %v6616, 5
        %v6765 = vrot.slane %v6764, 4
        %v6766 = vrot.slane %v6617, 5
        %v6767 = vsel %vm4810, %v6765, %v6766
        %v6768 = vrot.slane %v6766, 4
        %v6769 = vrot.slane %v6618, 5
        %v6770 = vsel %vm4810, %v6768, %v6769
        %v6771 = vrot.slane %v6619, 5
        %v6772 = vrot.slane %v6771, 4
        %v6773 = vrot.slane %v6620, 5
        %v6774 = vsel %vm4810, %v6772, %v6773
        %v6775 = vrot.slane %v6773, 4
        %v6776 = vrot.slane %v6621, 5
        %v6777 = vsel %vm4810, %v6775, %v6776
        %v6778 = vrot.slane %v6622, 5
        %v6779 = vrot.slane %v6778, 4
        %v6780 = vrot.slane %v6623, 5
        %v6781 = vsel %vm4810, %v6779, %v6780
        %v6782 = vrot.slane %v6780, 4
        %v6783 = vrot.slane %v6624, 5
        %v6784 = vsel %vm4810, %v6782, %v6783
        %s6785 = scalar_lea.vmem %s4, 160
        %v6786 = vld [vmem:[%s6785] sm:$0xf]
        %v6787 = vld [vmem:[%s6785 + $0x4] sm:$0xf]
        %v6788 = vld [vmem:[%s6785 + $0x8] sm:$0xf]
        %v6789 = vld [vmem:[%s6785 + $0xc] sm:$0xf]
        %v6790 = vld [vmem:[%s6785 + $0x10] sm:$0xf]
        %v6791 = vld [vmem:[%s6785 + $0x14] sm:$0xf]
        %v6792 = vld [vmem:[%s6785 + $0x18] sm:$0xf]
        %v6793 = vld [vmem:[%s6785 + $0x1c] sm:$0xf]
        %v6794 = vunpack.c.l.b16 %v6676
        %v6795 = vunpack.c.l.b16 %v6679
        %v6796 = vunpack.c.l.b16 %v6683
        %v6797 = vunpack.c.l.b16 %v6686
        %v6798 = vunpack.c.l.b16 %v6690
        %v6799 = vunpack.c.l.b16 %v6693
        %v6800 = vunpack.c.l.b16 %v6697
        %v6801 = vunpack.c.l.b16 %v6700
        %v6802 = vunpack.c.l.b16 %v6704
        %v6803 = vunpack.c.l.b16 %v6707
        %v6804 = vunpack.c.l.b16 %v6711
        %v6805 = vunpack.c.l.b16 %v6714
        %v6806 = vunpack.c.l.b16 %v6718
        %v6807 = vunpack.c.l.b16 %v6721
        %v6808 = vunpack.c.l.b16 %v6725
        %v6809 = vunpack.c.l.b16 %v6728
        %v6810 = vunpack.c.l.b16 %v6732
        %v6811 = vunpack.c.l.b16 %v6735
        %v6812 = vunpack.c.l.b16 %v6739
        %v6813 = vunpack.c.l.b16 %v6742
        %v6814 = vunpack.c.l.b16 %v6746
        %v6815 = vunpack.c.l.b16 %v6749
        %v6816 = vunpack.c.l.b16 %v6753
        %v6817 = vunpack.c.l.b16 %v6756
        %v6818 = vunpack.c.l.b16 %v6760
        %v6819 = vunpack.c.l.b16 %v6763
        %v6820 = vunpack.c.l.b16 %v6767
        %v6821 = vunpack.c.l.b16 %v6770
        %v6822 = vunpack.c.l.b16 %v6774
        %v6823 = vunpack.c.l.b16 %v6777
        %v6824 = vunpack.c.l.b16 %v6781
        %v6825 = vunpack.c.l.b16 %v6784
        %v6826 = vpack.c.b16 %v6795, %v6794
        %v6827 = vpack.c.b16 %v6797, %v6796
        %v6828 = vpack.c.b16 %v6799, %v6798
        %v6829 = vpack.c.b16 %v6801, %v6800
        %v6830 = vpack.c.b16 %v6803, %v6802
        %v6831 = vpack.c.b16 %v6805, %v6804
        %v6832 = vpack.c.b16 %v6807, %v6806
        %v6833 = vpack.c.b16 %v6809, %v6808
        %v6834 = vpack.c.b16 %v6811, %v6810
        %v6835 = vpack.c.b16 %v6813, %v6812
        %v6836 = vpack.c.b16 %v6815, %v6814
        %v6837 = vpack.c.b16 %v6817, %v6816
        %v6838 = vpack.c.b16 %v6819, %v6818
        %v6839 = vpack.c.b16 %v6821, %v6820
        %v6840 = vpack.c.b16 %v6823, %v6822
        %v6841 = vpack.c.b16 %v6825, %v6824
        %v6850 = vunpack.c.l.b16 %v6786
        %v6851 = vunpack.c.l.b16 %v6787
        %v6852 = vunpack.c.l.b16 %v6788
        %v6853 = vunpack.c.l.b16 %v6789
        %v6854 = vunpack.c.l.b16 %v6790
        %v6855 = vunpack.c.l.b16 %v6791
        %v6856 = vunpack.c.l.b16 %v6792
        %v6857 = vunpack.c.l.b16 %v6793
        %v6858 = vpack.c.b16 %v6851, %v6850
        %v6859 = vpack.c.b16 %v6853, %v6852
        %v6860 = vpack.c.b16 %v6855, %v6854
        %v6861 = vpack.c.b16 %v6857, %v6856
        %v6867 = vsel %vm3649, %v6826, 0
        %v6870 = vsel %vm3649, %v6827, 0
        %v6873 = vsel %vm3649, %v6828, 0
        %v6876 = vsel %vm3649, %v6829, 0
        %v6879 = vsel %vm3649, %v6830, 0
        %v6882 = vsel %vm3649, %v6831, 0
        %v6885 = vsel %vm3649, %v6832, 0
        %v6888 = vsel %vm3649, %v6833, 0
        %v6891 = vsel %vm3649, %v6834, 0
        %v6894 = vsel %vm3649, %v6835, 0
        %v6897 = vsel %vm3649, %v6836, 0
        %v6900 = vsel %vm3649, %v6837, 0
        %v6903 = vsel %vm3649, %v6838, 0
        %v6906 = vsel %vm3649, %v6839, 0
        %v6909 = vsel %vm3649, %v6840, 0
        %v6912 = vsel %vm3649, %v6841, 0
        %6914 = vmatprep.subr.bf16.mxu0 0
        %6915 = vmatpush1.bf16.msra.mxu0 0
        %6916 = vmatprep.subr.bf16.mxu0 0
        %6917 = vmatpush1.bf16.msra.mxu0 0
        %6918 = vmatprep.subr.bf16.mxu0 0
        %6919 = vmatpush1.bf16.msra.mxu0 0
        %6920 = vmatprep.subr.bf16.mxu0 0
        %6921 = vmatpush1.bf16.msra.mxu0 0
        %6922 = vmatprep.subr.bf16.mxu0 0
        %6923 = vmatpush1.bf16.msra.mxu0 %v6861
        %6924 = vmatprep.subr.bf16.mxu0 0
        %6925 = vmatpush1.bf16.msra.mxu0 %v6860
        %6926 = vmatprep.subr.bf16.mxu0 0
        %6927 = vmatpush1.bf16.msra.mxu0 %v6859
        %6928 = vmatprep.subr.bf16.mxu0 0
        %6929 = vmatpush1.bf16.msra.mxu0 %v6858
        %6930 = vmatprep.subr.bf16.mxu0 0
        %6931 = vmatpush2.bf16.msra.mxu0 0
        %6932 = vmatprep.subr.bf16.mxu0 0
        %6933 = vmatpush2.bf16.msra.mxu0 0
        %6934 = vmatprep.subr.bf16.mxu0 0
        %6935 = vmatpush2.bf16.msra.mxu0 0
        %6936 = vmatprep.subr.bf16.mxu0 0
        %6937 = vmatpush2.bf16.msra.mxu0 0
        %6938 = vmatprep.subr.bf16.mxu0 0
        %6939 = vmatpush2.bf16.msra.mxu0 0
        %6940 = vmatprep.subr.bf16.mxu0 0
        %6941 = vmatpush2.bf16.msra.mxu0 0
        %6942 = vmatprep.subr.bf16.mxu0 0
        %6943 = vmatpush2.bf16.msra.mxu0 0
        %6944 = vmatprep.subr.bf16.mxu0 0
        %6945 = vmatpush2.bf16.msra.mxu0 0
        %6946 = vmatprep.mubr.bf16.mxu0 0
        %6947 = vmatmul.mubr.bf16.gmra.mxu0 %v6867
        %v6948 = vpop.f32.mrf.mxu0
        %v6949 = vadd.f32 0.0, %v6948
        %v6950 = vpop.f32.mrf.mxu0
        %v6951 = vpop.f32.mrf.mxu0
        %v6952 = vadd.f32 0.0, %v6951
        %v6953 = vpop.f32.mrf.mxu0
        %6954 = vmatprep.mubr.bf16.mxu0 0
        %6955 = vmatmul.mubr.bf16.gmra.mxu0 %v6870
        %v6956 = vpop.f32.mrf.mxu0
        %v6957 = vadd.f32 0.0, %v6956
        %v6958 = vpop.f32.mrf.mxu0
        %v6959 = vpop.f32.mrf.mxu0
        %v6960 = vadd.f32 0.0, %v6959
        %v6961 = vpop.f32.mrf.mxu0
        %6962 = vmatprep.mubr.bf16.mxu0 0
        %6963 = vmatmul.mubr.bf16.gmra.mxu0 %v6873
        %v6964 = vpop.f32.mrf.mxu0
        %v6965 = vadd.f32 0.0, %v6964
        %v6966 = vpop.f32.mrf.mxu0
        %v6967 = vpop.f32.mrf.mxu0
        %v6968 = vadd.f32 0.0, %v6967
        %v6969 = vpop.f32.mrf.mxu0
        %6970 = vmatprep.mubr.bf16.mxu0 0
        %6971 = vmatmul.mubr.bf16.gmra.mxu0 %v6876
        %v6972 = vpop.f32.mrf.mxu0
        %v6973 = vadd.f32 0.0, %v6972
        %v6974 = vpop.f32.mrf.mxu0
        %v6975 = vpop.f32.mrf.mxu0
        %v6976 = vadd.f32 0.0, %v6975
        %v6977 = vpop.f32.mrf.mxu0
        %6978 = vmatprep.mubr.bf16.mxu0 0
        %6979 = vmatmul.mubr.bf16.gmra.mxu0 %v6879
        %v6980 = vpop.f32.mrf.mxu0
        %v6981 = vadd.f32 0.0, %v6980
        %v6982 = vpop.f32.mrf.mxu0
        %v6983 = vpop.f32.mrf.mxu0
        %v6984 = vadd.f32 0.0, %v6983
        %v6985 = vpop.f32.mrf.mxu0
        %6986 = vmatprep.mubr.bf16.mxu0 0
        %6987 = vmatmul.mubr.bf16.gmra.mxu0 %v6882
        %v6988 = vpop.f32.mrf.mxu0
        %v6989 = vadd.f32 0.0, %v6988
        %v6990 = vpop.f32.mrf.mxu0
        %v6991 = vpop.f32.mrf.mxu0
        %v6992 = vadd.f32 0.0, %v6991
        %v6993 = vpop.f32.mrf.mxu0
        %6994 = vmatprep.mubr.bf16.mxu0 0
        %6995 = vmatmul.mubr.bf16.gmra.mxu0 %v6885
        %v6996 = vpop.f32.mrf.mxu0
        %v6997 = vadd.f32 0.0, %v6996
        %v6998 = vpop.f32.mrf.mxu0
        %v6999 = vpop.f32.mrf.mxu0
        %v7000 = vadd.f32 0.0, %v6999
        %v7001 = vpop.f32.mrf.mxu0
        %7002 = vmatprep.mubr.bf16.mxu0 0
        %7003 = vmatmul.mubr.bf16.gmra.mxu0 %v6888
        %v7004 = vpop.f32.mrf.mxu0
        %v7005 = vadd.f32 0.0, %v7004
        %v7006 = vpop.f32.mrf.mxu0
        %v7007 = vpop.f32.mrf.mxu0
        %v7008 = vadd.f32 0.0, %v7007
        %v7009 = vpop.f32.mrf.mxu0
        %7010 = vmatprep.mubr.bf16.mxu0 0
        %7011 = vmatmul.mubr.bf16.gmra.mxu0 %v6891
        %v7012 = vpop.f32.mrf.mxu0
        %v7013 = vadd.f32 0.0, %v7012
        %v7014 = vpop.f32.mrf.mxu0
        %v7015 = vpop.f32.mrf.mxu0
        %v7016 = vadd.f32 0.0, %v7015
        %v7017 = vpop.f32.mrf.mxu0
        %7018 = vmatprep.mubr.bf16.mxu0 0
        %7019 = vmatmul.mubr.bf16.gmra.mxu0 %v6894
        %v7020 = vpop.f32.mrf.mxu0
        %v7021 = vadd.f32 0.0, %v7020
        %v7022 = vpop.f32.mrf.mxu0
        %v7023 = vpop.f32.mrf.mxu0
        %v7024 = vadd.f32 0.0, %v7023
        %v7025 = vpop.f32.mrf.mxu0
        %7026 = vmatprep.mubr.bf16.mxu0 0
        %7027 = vmatmul.mubr.bf16.gmra.mxu0 %v6897
        %v7028 = vpop.f32.mrf.mxu0
        %v7029 = vadd.f32 0.0, %v7028
        %v7030 = vpop.f32.mrf.mxu0
        %v7031 = vpop.f32.mrf.mxu0
        %v7032 = vadd.f32 0.0, %v7031
        %v7033 = vpop.f32.mrf.mxu0
        %7034 = vmatprep.mubr.bf16.mxu0 0
        %7035 = vmatmul.mubr.bf16.gmra.mxu0 %v6900
        %v7036 = vpop.f32.mrf.mxu0
        %v7037 = vadd.f32 0.0, %v7036
        %v7038 = vpop.f32.mrf.mxu0
        %v7039 = vpop.f32.mrf.mxu0
        %v7040 = vadd.f32 0.0, %v7039
        %v7041 = vpop.f32.mrf.mxu0
        %7042 = vmatprep.mubr.bf16.mxu0 0
        %7043 = vmatmul.mubr.bf16.gmra.mxu0 %v6903
        %v7044 = vpop.f32.mrf.mxu0
        %v7045 = vadd.f32 0.0, %v7044
        %v7046 = vpop.f32.mrf.mxu0
        %v7047 = vpop.f32.mrf.mxu0
        %v7048 = vadd.f32 0.0, %v7047
        %v7049 = vpop.f32.mrf.mxu0
        %7050 = vmatprep.mubr.bf16.mxu0 0
        %7051 = vmatmul.mubr.bf16.gmra.mxu0 %v6906
        %v7052 = vpop.f32.mrf.mxu0
        %v7053 = vadd.f32 0.0, %v7052
        %v7054 = vpop.f32.mrf.mxu0
        %v7055 = vpop.f32.mrf.mxu0
        %v7056 = vadd.f32 0.0, %v7055
        %v7057 = vpop.f32.mrf.mxu0
        %7058 = vmatprep.mubr.bf16.mxu0 0
        %7059 = vmatmul.mubr.bf16.gmra.mxu0 %v6909
        %v7060 = vpop.f32.mrf.mxu0
        %v7061 = vadd.f32 0.0, %v7060
        %v7062 = vpop.f32.mrf.mxu0
        %v7063 = vpop.f32.mrf.mxu0
        %v7064 = vadd.f32 0.0, %v7063
        %v7065 = vpop.f32.mrf.mxu0
        %7066 = vmatprep.mubr.bf16.mxu0 0
        %7067 = vmatmul.mubr.bf16.gmra.mxu0 %v6912
        %v7068 = vpop.f32.mrf.mxu0
        %v7069 = vadd.f32 0.0, %v7068
        %v7070 = vpop.f32.mrf.mxu0
        %v7071 = vpop.f32.mrf.mxu0
        %v7072 = vadd.f32 0.0, %v7071
        %v7073 = vpop.f32.mrf.mxu0
        %7074 = vdwg.mxu0
        %v7075 = vld [vmem:[#allocation4] sm:$0xff]
        %v7076 = vld [vmem:[#allocation4 + $0x8] sm:$0xff]
        %v7077 = vld [vmem:[#allocation4 + $0x10] sm:$0xff]
        %v7078 = vld [vmem:[#allocation4 + $0x18] sm:$0xff]
        %v7079 = vld [vmem:[#allocation4 + $0x20] sm:$0xff]
        %v7080 = vld [vmem:[#allocation4 + $0x28] sm:$0xff]
        %v7081 = vld [vmem:[#allocation4 + $0x30] sm:$0xff]
        %v7082 = vld [vmem:[#allocation4 + $0x38] sm:$0xff]
        %v7083 = vld [vmem:[#allocation4 + $0x40] sm:$0xff]
        %v7084 = vld [vmem:[#allocation4 + $0x48] sm:$0xff]
        %v7085 = vld [vmem:[#allocation4 + $0x50] sm:$0xff]
        %v7086 = vld [vmem:[#allocation4 + $0x58] sm:$0xff]
        %v7087 = vld [vmem:[#allocation4 + $0x60] sm:$0xff]
        %v7088 = vld [vmem:[#allocation4 + $0x68] sm:$0xff]
        %v7089 = vld [vmem:[#allocation4 + $0x70] sm:$0xff]
        %v7090 = vld [vmem:[#allocation4 + $0x78] sm:$0xff]
        %v7091 = vld [vmem:[#allocation4 + $0x80] sm:$0xff]
        %v7092 = vld [vmem:[#allocation4 + $0x88] sm:$0xff]
        %v7093 = vld [vmem:[#allocation4 + $0x90] sm:$0xff]
        %v7094 = vld [vmem:[#allocation4 + $0x98] sm:$0xff]
        %v7095 = vld [vmem:[#allocation4 + $0xa0] sm:$0xff]
        %v7096 = vld [vmem:[#allocation4 + $0xa8] sm:$0xff]
        %v7097 = vld [vmem:[#allocation4 + $0xb0] sm:$0xff]
        %v7098 = vld [vmem:[#allocation4 + $0xb8] sm:$0xff]
        %v7099 = vld [vmem:[#allocation4 + $0xc0] sm:$0xff]
        %v7100 = vld [vmem:[#allocation4 + $0xc8] sm:$0xff]
        %v7101 = vld [vmem:[#allocation4 + $0xd0] sm:$0xff]
        %v7102 = vld [vmem:[#allocation4 + $0xd8] sm:$0xff]
        %v7103 = vld [vmem:[#allocation4 + $0xe0] sm:$0xff]
        %v7104 = vld [vmem:[#allocation4 + $0xe8] sm:$0xff]
        %v7105 = vld [vmem:[#allocation4 + $0xf0] sm:$0xff]
        %v7106 = vld [vmem:[#allocation4 + $0xf8] sm:$0xff]
        %v7107 = vadd.f32 %v7075, %v6949
        %v7108 = vadd.f32 %v7076, %v6952
        %v7109 = vadd.f32 %v7077, %v6957
        %v7110 = vadd.f32 %v7078, %v6960
        %v7111 = vadd.f32 %v7079, %v6965
        %v7112 = vadd.f32 %v7080, %v6968
        %v7113 = vadd.f32 %v7081, %v6973
        %v7114 = vadd.f32 %v7082, %v6976
        %v7115 = vadd.f32 %v7083, %v6981
        %v7116 = vadd.f32 %v7084, %v6984
        %v7117 = vadd.f32 %v7085, %v6989
        %v7118 = vadd.f32 %v7086, %v6992
        %v7119 = vadd.f32 %v7087, %v6997
        %v7120 = vadd.f32 %v7088, %v7000
        %v7121 = vadd.f32 %v7089, %v7005
        %v7122 = vadd.f32 %v7090, %v7008
        %v7123 = vadd.f32 %v7091, %v7013
        %v7124 = vadd.f32 %v7092, %v7016
        %v7125 = vadd.f32 %v7093, %v7021
        %v7126 = vadd.f32 %v7094, %v7024
        %v7127 = vadd.f32 %v7095, %v7029
        %v7128 = vadd.f32 %v7096, %v7032
        %v7129 = vadd.f32 %v7097, %v7037
        %v7130 = vadd.f32 %v7098, %v7040
        %v7131 = vadd.f32 %v7099, %v7045
        %v7132 = vadd.f32 %v7100, %v7048
        %v7133 = vadd.f32 %v7101, %v7053
        %v7134 = vadd.f32 %v7102, %v7056
        %v7135 = vadd.f32 %v7103, %v7061
        %v7136 = vadd.f32 %v7104, %v7064
        %v7137 = vadd.f32 %v7105, %v7069
        %v7138 = vadd.f32 %v7106, %v7072
        %7139 = vst [vmem:[#allocation4] sm:$0xff] %v7107
        %7140 = vst [vmem:[#allocation4 + $0x8] sm:$0xff] %v7108
        %7141 = vst [vmem:[#allocation4 + $0x10] sm:$0xff] %v7109
        %7142 = vst [vmem:[#allocation4 + $0x18] sm:$0xff] %v7110
        %7143 = vst [vmem:[#allocation4 + $0x20] sm:$0xff] %v7111
        %7144 = vst [vmem:[#allocation4 + $0x28] sm:$0xff] %v7112
        %7145 = vst [vmem:[#allocation4 + $0x30] sm:$0xff] %v7113
        %7146 = vst [vmem:[#allocation4 + $0x38] sm:$0xff] %v7114
        %7147 = vst [vmem:[#allocation4 + $0x40] sm:$0xff] %v7115
        %7148 = vst [vmem:[#allocation4 + $0x48] sm:$0xff] %v7116
        %7149 = vst [vmem:[#allocation4 + $0x50] sm:$0xff] %v7117
        %7150 = vst [vmem:[#allocation4 + $0x58] sm:$0xff] %v7118
        %7151 = vst [vmem:[#allocation4 + $0x60] sm:$0xff] %v7119
        %7152 = vst [vmem:[#allocation4 + $0x68] sm:$0xff] %v7120
        %7153 = vst [vmem:[#allocation4 + $0x70] sm:$0xff] %v7121
        %7154 = vst [vmem:[#allocation4 + $0x78] sm:$0xff] %v7122
        %7155 = vst [vmem:[#allocation4 + $0x80] sm:$0xff] %v7123
        %7156 = vst [vmem:[#allocation4 + $0x88] sm:$0xff] %v7124
        %7157 = vst [vmem:[#allocation4 + $0x90] sm:$0xff] %v7125
        %7158 = vst [vmem:[#allocation4 + $0x98] sm:$0xff] %v7126
        %7159 = vst [vmem:[#allocation4 + $0xa0] sm:$0xff] %v7127
        %7160 = vst [vmem:[#allocation4 + $0xa8] sm:$0xff] %v7128
        %7161 = vst [vmem:[#allocation4 + $0xb0] sm:$0xff] %v7129
        %7162 = vst [vmem:[#allocation4 + $0xb8] sm:$0xff] %v7130
        %7163 = vst [vmem:[#allocation4 + $0xc0] sm:$0xff] %v7131
        %7164 = vst [vmem:[#allocation4 + $0xc8] sm:$0xff] %v7132
        %7165 = vst [vmem:[#allocation4 + $0xd0] sm:$0xff] %v7133
        %7166 = vst [vmem:[#allocation4 + $0xd8] sm:$0xff] %v7134
        %7167 = vst [vmem:[#allocation4 + $0xe0] sm:$0xff] %v7135
        %7168 = vst [vmem:[#allocation4 + $0xe8] sm:$0xff] %v7136
        %7169 = vst [vmem:[#allocation4 + $0xf0] sm:$0xff] %v7137
        %7170 = vst [vmem:[#allocation4 + $0xf8] sm:$0xff] %v7138
        %s7171 = scalar_lea.vmem [#allocation3], 24
        %v7172 = vld [vmem:[%s7171] sm:$0xf]
        %v7173 = vld [vmem:[%s7171 + $0x4] sm:$0xf]
        %v7174 = vld [vmem:[%s7171 + $0xc] sm:$0xf]
        %v7175 = vld [vmem:[%s7171 + $0x10] sm:$0xf]
        %v7176 = vld [vmem:[%s7171 + $0x18] sm:$0xf]
        %v7177 = vld [vmem:[%s7171 + $0x1c] sm:$0xf]
        %v7178 = vld [vmem:[%s7171 + $0x24] sm:$0xf]
        %v7179 = vld [vmem:[%s7171 + $0x28] sm:$0xf]
        %v7180 = vld [vmem:[%s7171 + $0x30] sm:$0xf]
        %v7181 = vld [vmem:[%s7171 + $0x34] sm:$0xf]
        %v7182 = vld [vmem:[%s7171 + $0x3c] sm:$0xf]
        %v7183 = vld [vmem:[%s7171 + $0x40] sm:$0xf]
        %v7184 = vld [vmem:[%s7171 + $0x48] sm:$0xf]
        %v7185 = vld [vmem:[%s7171 + $0x4c] sm:$0xf]
        %v7186 = vld [vmem:[%s7171 + $0x54] sm:$0xf]
        %v7187 = vld [vmem:[%s7171 + $0x58] sm:$0xf]
        %v7188 = vld [vmem:[%s7171 + $0x60] sm:$0xf]
        %v7189 = vld [vmem:[%s7171 + $0x64] sm:$0xf]
        %v7190 = vld [vmem:[%s7171 + $0x6c] sm:$0xf]
        %v7191 = vld [vmem:[%s7171 + $0x70] sm:$0xf]
        %v7192 = vld [vmem:[%s7171 + $0x78] sm:$0xf]
        %v7193 = vld [vmem:[%s7171 + $0x7c] sm:$0xf]
        %v7194 = vld [vmem:[%s7171 + $0x84] sm:$0xf]
        %v7195 = vld [vmem:[%s7171 + $0x88] sm:$0xf]
        %v7196 = vld [vmem:[%s7171 + $0x90] sm:$0xf]
        %v7197 = vld [vmem:[%s7171 + $0x94] sm:$0xf]
        %v7198 = vld [vmem:[%s7171 + $0x9c] sm:$0xf]
        %v7199 = vld [vmem:[%s7171 + $0xa0] sm:$0xf]
        %v7200 = vld [vmem:[%s7171 + $0xa8] sm:$0xf]
        %v7201 = vld [vmem:[%s7171 + $0xac] sm:$0xf]
        %v7202 = vld [vmem:[%s7171 + $0xb4] sm:$0xf]
        %v7203 = vld [vmem:[%s7171 + $0xb8] sm:$0xf]
        %s7204 = scalar_lea.vmem %s4, 192
        %v7205 = vld [vmem:[%s7204] sm:$0xf]
        %v7206 = vld [vmem:[%s7204 + $0x4] sm:$0xf]
        %v7207 = vld [vmem:[%s7204 + $0x8] sm:$0xf]
        %v7208 = vld [vmem:[%s7204 + $0xc] sm:$0xf]
        %v7209 = vld [vmem:[%s7204 + $0x10] sm:$0xf]
        %v7210 = vld [vmem:[%s7204 + $0x14] sm:$0xf]
        %v7211 = vld [vmem:[%s7204 + $0x18] sm:$0xf]
        %v7212 = vld [vmem:[%s7204 + $0x1c] sm:$0xf]
        %v7245 = vunpack.c.l.b16 %v7172
        %v7246 = vunpack.c.l.b16 %v7173
        %v7247 = vunpack.c.l.b16 %v7174
        %v7248 = vunpack.c.l.b16 %v7175
        %v7249 = vunpack.c.l.b16 %v7176
        %v7250 = vunpack.c.l.b16 %v7177
        %v7251 = vunpack.c.l.b16 %v7178
        %v7252 = vunpack.c.l.b16 %v7179
        %v7253 = vunpack.c.l.b16 %v7180
        %v7254 = vunpack.c.l.b16 %v7181
        %v7255 = vunpack.c.l.b16 %v7182
        %v7256 = vunpack.c.l.b16 %v7183
        %v7257 = vunpack.c.l.b16 %v7184
        %v7258 = vunpack.c.l.b16 %v7185
        %v7259 = vunpack.c.l.b16 %v7186
        %v7260 = vunpack.c.l.b16 %v7187
        %v7261 = vunpack.c.l.b16 %v7188
        %v7262 = vunpack.c.l.b16 %v7189
        %v7263 = vunpack.c.l.b16 %v7190
        %v7264 = vunpack.c.l.b16 %v7191
        %v7265 = vunpack.c.l.b16 %v7192
        %v7266 = vunpack.c.l.b16 %v7193
        %v7267 = vunpack.c.l.b16 %v7194
        %v7268 = vunpack.c.l.b16 %v7195
        %v7269 = vunpack.c.l.b16 %v7196
        %v7270 = vunpack.c.l.b16 %v7197
        %v7271 = vunpack.c.l.b16 %v7198
        %v7272 = vunpack.c.l.b16 %v7199
        %v7273 = vunpack.c.l.b16 %v7200
        %v7274 = vunpack.c.l.b16 %v7201
        %v7275 = vunpack.c.l.b16 %v7202
        %v7276 = vunpack.c.l.b16 %v7203
        %v7277 = vpack.c.b16 %v7246, %v7245
        %v7278 = vpack.c.b16 %v7248, %v7247
        %v7279 = vpack.c.b16 %v7250, %v7249
        %v7280 = vpack.c.b16 %v7252, %v7251
        %v7281 = vpack.c.b16 %v7254, %v7253
        %v7282 = vpack.c.b16 %v7256, %v7255
        %v7283 = vpack.c.b16 %v7258, %v7257
        %v7284 = vpack.c.b16 %v7260, %v7259
        %v7285 = vpack.c.b16 %v7262, %v7261
        %v7286 = vpack.c.b16 %v7264, %v7263
        %v7287 = vpack.c.b16 %v7266, %v7265
        %v7288 = vpack.c.b16 %v7268, %v7267
        %v7289 = vpack.c.b16 %v7270, %v7269
        %v7290 = vpack.c.b16 %v7272, %v7271
        %v7291 = vpack.c.b16 %v7274, %v7273
        %v7292 = vpack.c.b16 %v7276, %v7275
        %v7301 = vunpack.c.l.b16 %v7205
        %v7302 = vunpack.c.l.b16 %v7206
        %v7303 = vunpack.c.l.b16 %v7207
        %v7304 = vunpack.c.l.b16 %v7208
        %v7305 = vunpack.c.l.b16 %v7209
        %v7306 = vunpack.c.l.b16 %v7210
        %v7307 = vunpack.c.l.b16 %v7211
        %v7308 = vunpack.c.l.b16 %v7212
        %v7309 = vpack.c.b16 %v7302, %v7301
        %v7310 = vpack.c.b16 %v7304, %v7303
        %v7311 = vpack.c.b16 %v7306, %v7305
        %v7312 = vpack.c.b16 %v7308, %v7307
        %v7318 = vsel %vm3649, %v7277, 0
        %v7321 = vsel %vm3649, %v7278, 0
        %v7324 = vsel %vm3649, %v7279, 0
        %v7327 = vsel %vm3649, %v7280, 0
        %v7330 = vsel %vm3649, %v7281, 0
        %v7333 = vsel %vm3649, %v7282, 0
        %v7336 = vsel %vm3649, %v7283, 0
        %v7339 = vsel %vm3649, %v7284, 0
        %v7342 = vsel %vm3649, %v7285, 0
        %v7345 = vsel %vm3649, %v7286, 0
        %v7348 = vsel %vm3649, %v7287, 0
        %v7351 = vsel %vm3649, %v7288, 0
        %v7354 = vsel %vm3649, %v7289, 0
        %v7357 = vsel %vm3649, %v7290, 0
        %v7360 = vsel %vm3649, %v7291, 0
        %v7363 = vsel %vm3649, %v7292, 0
        %7365 = vmatprep.subr.bf16.mxu0 0
        %7366 = vmatpush1.bf16.msra.mxu0 0
        %7367 = vmatprep.subr.bf16.mxu0 0
        %7368 = vmatpush1.bf16.msra.mxu0 0
        %7369 = vmatprep.subr.bf16.mxu0 0
        %7370 = vmatpush1.bf16.msra.mxu0 0
        %7371 = vmatprep.subr.bf16.mxu0 0
        %7372 = vmatpush1.bf16.msra.mxu0 0
        %7373 = vmatprep.subr.bf16.mxu0 0
        %7374 = vmatpush1.bf16.msra.mxu0 %v7312
        %7375 = vmatprep.subr.bf16.mxu0 0
        %7376 = vmatpush1.bf16.msra.mxu0 %v7311
        %7377 = vmatprep.subr.bf16.mxu0 0
        %7378 = vmatpush1.bf16.msra.mxu0 %v7310
        %7379 = vmatprep.subr.bf16.mxu0 0
        %7380 = vmatpush1.bf16.msra.mxu0 %v7309
        %7381 = vmatprep.subr.bf16.mxu0 0
        %7382 = vmatpush2.bf16.msra.mxu0 0
        %7383 = vmatprep.subr.bf16.mxu0 0
        %7384 = vmatpush2.bf16.msra.mxu0 0
        %7385 = vmatprep.subr.bf16.mxu0 0
        %7386 = vmatpush2.bf16.msra.mxu0 0
        %7387 = vmatprep.subr.bf16.mxu0 0
        %7388 = vmatpush2.bf16.msra.mxu0 0
        %7389 = vmatprep.subr.bf16.mxu0 0
        %7390 = vmatpush2.bf16.msra.mxu0 0
        %7391 = vmatprep.subr.bf16.mxu0 0
        %7392 = vmatpush2.bf16.msra.mxu0 0
        %7393 = vmatprep.subr.bf16.mxu0 0
        %7394 = vmatpush2.bf16.msra.mxu0 0
        %7395 = vmatprep.subr.bf16.mxu0 0
        %7396 = vmatpush2.bf16.msra.mxu0 0
        %7397 = vmatprep.mubr.bf16.mxu0 0
        %7398 = vmatmul.mubr.bf16.gmra.mxu0 %v7318
        %v7399 = vpop.f32.mrf.mxu0
        %v7400 = vadd.f32 0.0, %v7399
        %v7401 = vpop.f32.mrf.mxu0
        %v7402 = vpop.f32.mrf.mxu0
        %v7403 = vadd.f32 0.0, %v7402
        %v7404 = vpop.f32.mrf.mxu0
        %7405 = vmatprep.mubr.bf16.mxu0 0
        %7406 = vmatmul.mubr.bf16.gmra.mxu0 %v7321
        %v7407 = vpop.f32.mrf.mxu0
        %v7408 = vadd.f32 0.0, %v7407
        %v7409 = vpop.f32.mrf.mxu0
        %v7410 = vpop.f32.mrf.mxu0
        %v7411 = vadd.f32 0.0, %v7410
        %v7412 = vpop.f32.mrf.mxu0
        %7413 = vmatprep.mubr.bf16.mxu0 0
        %7414 = vmatmul.mubr.bf16.gmra.mxu0 %v7324
        %v7415 = vpop.f32.mrf.mxu0
        %v7416 = vadd.f32 0.0, %v7415
        %v7417 = vpop.f32.mrf.mxu0
        %v7418 = vpop.f32.mrf.mxu0
        %v7419 = vadd.f32 0.0, %v7418
        %v7420 = vpop.f32.mrf.mxu0
        %7421 = vmatprep.mubr.bf16.mxu0 0
        %7422 = vmatmul.mubr.bf16.gmra.mxu0 %v7327
        %v7423 = vpop.f32.mrf.mxu0
        %v7424 = vadd.f32 0.0, %v7423
        %v7425 = vpop.f32.mrf.mxu0
        %v7426 = vpop.f32.mrf.mxu0
        %v7427 = vadd.f32 0.0, %v7426
        %v7428 = vpop.f32.mrf.mxu0
        %7429 = vmatprep.mubr.bf16.mxu0 0
        %7430 = vmatmul.mubr.bf16.gmra.mxu0 %v7330
        %v7431 = vpop.f32.mrf.mxu0
        %v7432 = vadd.f32 0.0, %v7431
        %v7433 = vpop.f32.mrf.mxu0
        %v7434 = vpop.f32.mrf.mxu0
        %v7435 = vadd.f32 0.0, %v7434
        %v7436 = vpop.f32.mrf.mxu0
        %7437 = vmatprep.mubr.bf16.mxu0 0
        %7438 = vmatmul.mubr.bf16.gmra.mxu0 %v7333
        %v7439 = vpop.f32.mrf.mxu0
        %v7440 = vadd.f32 0.0, %v7439
        %v7441 = vpop.f32.mrf.mxu0
        %v7442 = vpop.f32.mrf.mxu0
        %v7443 = vadd.f32 0.0, %v7442
        %v7444 = vpop.f32.mrf.mxu0
        %7445 = vmatprep.mubr.bf16.mxu0 0
        %7446 = vmatmul.mubr.bf16.gmra.mxu0 %v7336
        %v7447 = vpop.f32.mrf.mxu0
        %v7448 = vadd.f32 0.0, %v7447
        %v7449 = vpop.f32.mrf.mxu0
        %v7450 = vpop.f32.mrf.mxu0
        %v7451 = vadd.f32 0.0, %v7450
        %v7452 = vpop.f32.mrf.mxu0
        %7453 = vmatprep.mubr.bf16.mxu0 0
        %7454 = vmatmul.mubr.bf16.gmra.mxu0 %v7339
        %v7455 = vpop.f32.mrf.mxu0
        %v7456 = vadd.f32 0.0, %v7455
        %v7457 = vpop.f32.mrf.mxu0
        %v7458 = vpop.f32.mrf.mxu0
        %v7459 = vadd.f32 0.0, %v7458
        %v7460 = vpop.f32.mrf.mxu0
        %7461 = vmatprep.mubr.bf16.mxu0 0
        %7462 = vmatmul.mubr.bf16.gmra.mxu0 %v7342
        %v7463 = vpop.f32.mrf.mxu0
        %v7464 = vadd.f32 0.0, %v7463
        %v7465 = vpop.f32.mrf.mxu0
        %v7466 = vpop.f32.mrf.mxu0
        %v7467 = vadd.f32 0.0, %v7466
        %v7468 = vpop.f32.mrf.mxu0
        %7469 = vmatprep.mubr.bf16.mxu0 0
        %7470 = vmatmul.mubr.bf16.gmra.mxu0 %v7345
        %v7471 = vpop.f32.mrf.mxu0
        %v7472 = vadd.f32 0.0, %v7471
        %v7473 = vpop.f32.mrf.mxu0
        %v7474 = vpop.f32.mrf.mxu0
        %v7475 = vadd.f32 0.0, %v7474
        %v7476 = vpop.f32.mrf.mxu0
        %7477 = vmatprep.mubr.bf16.mxu0 0
        %7478 = vmatmul.mubr.bf16.gmra.mxu0 %v7348
        %v7479 = vpop.f32.mrf.mxu0
        %v7480 = vadd.f32 0.0, %v7479
        %v7481 = vpop.f32.mrf.mxu0
        %v7482 = vpop.f32.mrf.mxu0
        %v7483 = vadd.f32 0.0, %v7482
        %v7484 = vpop.f32.mrf.mxu0
        %7485 = vmatprep.mubr.bf16.mxu0 0
        %7486 = vmatmul.mubr.bf16.gmra.mxu0 %v7351
        %v7487 = vpop.f32.mrf.mxu0
        %v7488 = vadd.f32 0.0, %v7487
        %v7489 = vpop.f32.mrf.mxu0
        %v7490 = vpop.f32.mrf.mxu0
        %v7491 = vadd.f32 0.0, %v7490
        %v7492 = vpop.f32.mrf.mxu0
        %7493 = vmatprep.mubr.bf16.mxu0 0
        %7494 = vmatmul.mubr.bf16.gmra.mxu0 %v7354
        %v7495 = vpop.f32.mrf.mxu0
        %v7496 = vadd.f32 0.0, %v7495
        %v7497 = vpop.f32.mrf.mxu0
        %v7498 = vpop.f32.mrf.mxu0
        %v7499 = vadd.f32 0.0, %v7498
        %v7500 = vpop.f32.mrf.mxu0
        %7501 = vmatprep.mubr.bf16.mxu0 0
        %7502 = vmatmul.mubr.bf16.gmra.mxu0 %v7357
        %v7503 = vpop.f32.mrf.mxu0
        %v7504 = vadd.f32 0.0, %v7503
        %v7505 = vpop.f32.mrf.mxu0
        %v7506 = vpop.f32.mrf.mxu0
        %v7507 = vadd.f32 0.0, %v7506
        %v7508 = vpop.f32.mrf.mxu0
        %7509 = vmatprep.mubr.bf16.mxu0 0
        %7510 = vmatmul.mubr.bf16.gmra.mxu0 %v7360
        %v7511 = vpop.f32.mrf.mxu0
        %v7512 = vadd.f32 0.0, %v7511
        %v7513 = vpop.f32.mrf.mxu0
        %v7514 = vpop.f32.mrf.mxu0
        %v7515 = vadd.f32 0.0, %v7514
        %v7516 = vpop.f32.mrf.mxu0
        %7517 = vmatprep.mubr.bf16.mxu0 0
        %7518 = vmatmul.mubr.bf16.gmra.mxu0 %v7363
        %v7519 = vpop.f32.mrf.mxu0
        %v7520 = vadd.f32 0.0, %v7519
        %v7521 = vpop.f32.mrf.mxu0
        %v7522 = vpop.f32.mrf.mxu0
        %v7523 = vadd.f32 0.0, %v7522
        %v7524 = vpop.f32.mrf.mxu0
        %7525 = vdwg.mxu0
        %v7526 = vld [vmem:[#allocation4] sm:$0xff]
        %v7527 = vld [vmem:[#allocation4 + $0x8] sm:$0xff]
        %v7528 = vld [vmem:[#allocation4 + $0x10] sm:$0xff]
        %v7529 = vld [vmem:[#allocation4 + $0x18] sm:$0xff]
        %v7530 = vld [vmem:[#allocation4 + $0x20] sm:$0xff]
        %v7531 = vld [vmem:[#allocation4 + $0x28] sm:$0xff]
        %v7532 = vld [vmem:[#allocation4 + $0x30] sm:$0xff]
        %v7533 = vld [vmem:[#allocation4 + $0x38] sm:$0xff]
        %v7534 = vld [vmem:[#allocation4 + $0x40] sm:$0xff]
        %v7535 = vld [vmem:[#allocation4 + $0x48] sm:$0xff]
        %v7536 = vld [vmem:[#allocation4 + $0x50] sm:$0xff]
        %v7537 = vld [vmem:[#allocation4 + $0x58] sm:$0xff]
        %v7538 = vld [vmem:[#allocation4 + $0x60] sm:$0xff]
        %v7539 = vld [vmem:[#allocation4 + $0x68] sm:$0xff]
        %v7540 = vld [vmem:[#allocation4 + $0x70] sm:$0xff]
        %v7541 = vld [vmem:[#allocation4 + $0x78] sm:$0xff]
        %v7542 = vld [vmem:[#allocation4 + $0x80] sm:$0xff]
        %v7543 = vld [vmem:[#allocation4 + $0x88] sm:$0xff]
        %v7544 = vld [vmem:[#allocation4 + $0x90] sm:$0xff]
        %v7545 = vld [vmem:[#allocation4 + $0x98] sm:$0xff]
        %v7546 = vld [vmem:[#allocation4 + $0xa0] sm:$0xff]
        %v7547 = vld [vmem:[#allocation4 + $0xa8] sm:$0xff]
        %v7548 = vld [vmem:[#allocation4 + $0xb0] sm:$0xff]
        %v7549 = vld [vmem:[#allocation4 + $0xb8] sm:$0xff]
        %v7550 = vld [vmem:[#allocation4 + $0xc0] sm:$0xff]
        %v7551 = vld [vmem:[#allocation4 + $0xc8] sm:$0xff]
        %v7552 = vld [vmem:[#allocation4 + $0xd0] sm:$0xff]
        %v7553 = vld [vmem:[#allocation4 + $0xd8] sm:$0xff]
        %v7554 = vld [vmem:[#allocation4 + $0xe0] sm:$0xff]
        %v7555 = vld [vmem:[#allocation4 + $0xe8] sm:$0xff]
        %v7556 = vld [vmem:[#allocation4 + $0xf0] sm:$0xff]
        %v7557 = vld [vmem:[#allocation4 + $0xf8] sm:$0xff]
        %v7558 = vadd.f32 %v7526, %v7400
        %v7559 = vadd.f32 %v7527, %v7403
        %v7560 = vadd.f32 %v7528, %v7408
        %v7561 = vadd.f32 %v7529, %v7411
        %v7562 = vadd.f32 %v7530, %v7416
        %v7563 = vadd.f32 %v7531, %v7419
        %v7564 = vadd.f32 %v7532, %v7424
        %v7565 = vadd.f32 %v7533, %v7427
        %v7566 = vadd.f32 %v7534, %v7432
        %v7567 = vadd.f32 %v7535, %v7435
        %v7568 = vadd.f32 %v7536, %v7440
        %v7569 = vadd.f32 %v7537, %v7443
        %v7570 = vadd.f32 %v7538, %v7448
        %v7571 = vadd.f32 %v7539, %v7451
        %v7572 = vadd.f32 %v7540, %v7456
        %v7573 = vadd.f32 %v7541, %v7459
        %v7574 = vadd.f32 %v7542, %v7464
        %v7575 = vadd.f32 %v7543, %v7467
        %v7576 = vadd.f32 %v7544, %v7472
        %v7577 = vadd.f32 %v7545, %v7475
        %v7578 = vadd.f32 %v7546, %v7480
        %v7579 = vadd.f32 %v7547, %v7483
        %v7580 = vadd.f32 %v7548, %v7488
        %v7581 = vadd.f32 %v7549, %v7491
        %v7582 = vadd.f32 %v7550, %v7496
        %v7583 = vadd.f32 %v7551, %v7499
        %v7584 = vadd.f32 %v7552, %v7504
        %v7585 = vadd.f32 %v7553, %v7507
        %v7586 = vadd.f32 %v7554, %v7512
        %v7587 = vadd.f32 %v7555, %v7515
        %v7588 = vadd.f32 %v7556, %v7520
        %v7589 = vadd.f32 %v7557, %v7523
        %7590 = vst [vmem:[#allocation4] sm:$0xff] %v7558
        %7591 = vst [vmem:[#allocation4 + $0x8] sm:$0xff] %v7559
        %7592 = vst [vmem:[#allocation4 + $0x10] sm:$0xff] %v7560
        %7593 = vst [vmem:[#allocation4 + $0x18] sm:$0xff] %v7561
        %7594 = vst [vmem:[#allocation4 + $0x20] sm:$0xff] %v7562
        %7595 = vst [vmem:[#allocation4 + $0x28] sm:$0xff] %v7563
        %7596 = vst [vmem:[#allocation4 + $0x30] sm:$0xff] %v7564
        %7597 = vst [vmem:[#allocation4 + $0x38] sm:$0xff] %v7565
        %7598 = vst [vmem:[#allocation4 + $0x40] sm:$0xff] %v7566
        %7599 = vst [vmem:[#allocation4 + $0x48] sm:$0xff] %v7567
        %7600 = vst [vmem:[#allocation4 + $0x50] sm:$0xff] %v7568
        %7601 = vst [vmem:[#allocation4 + $0x58] sm:$0xff] %v7569
        %7602 = vst [vmem:[#allocation4 + $0x60] sm:$0xff] %v7570
        %7603 = vst [vmem:[#allocation4 + $0x68] sm:$0xff] %v7571
        %7604 = vst [vmem:[#allocation4 + $0x70] sm:$0xff] %v7572
        %7605 = vst [vmem:[#allocation4 + $0x78] sm:$0xff] %v7573
        %7606 = vst [vmem:[#allocation4 + $0x80] sm:$0xff] %v7574
        %7607 = vst [vmem:[#allocation4 + $0x88] sm:$0xff] %v7575
        %7608 = vst [vmem:[#allocation4 + $0x90] sm:$0xff] %v7576
        %7609 = vst [vmem:[#allocation4 + $0x98] sm:$0xff] %v7577
        %7610 = vst [vmem:[#allocation4 + $0xa0] sm:$0xff] %v7578
        %7611 = vst [vmem:[#allocation4 + $0xa8] sm:$0xff] %v7579
        %7612 = vst [vmem:[#allocation4 + $0xb0] sm:$0xff] %v7580
        %7613 = vst [vmem:[#allocation4 + $0xb8] sm:$0xff] %v7581
        %7614 = vst [vmem:[#allocation4 + $0xc0] sm:$0xff] %v7582
        %7615 = vst [vmem:[#allocation4 + $0xc8] sm:$0xff] %v7583
        %7616 = vst [vmem:[#allocation4 + $0xd0] sm:$0xff] %v7584
        %7617 = vst [vmem:[#allocation4 + $0xd8] sm:$0xff] %v7585
        %7618 = vst [vmem:[#allocation4 + $0xe0] sm:$0xff] %v7586
        %7619 = vst [vmem:[#allocation4 + $0xe8] sm:$0xff] %v7587
        %7620 = vst [vmem:[#allocation4 + $0xf0] sm:$0xff] %v7588
        %7621 = vst [vmem:[#allocation4 + $0xf8] sm:$0xff] %v7589
        %v7622 = vld [vmem:[%s7171] sm:$0xf]
        %v7623 = vld [vmem:[%s7171 + $0x4] sm:$0xf]
        %v7624 = vld [vmem:[%s7171 + $0x8] sm:$0x1]
        %v7625 = vld [vmem:[%s7171 + $0xc] sm:$0xf]
        %v7626 = vld [vmem:[%s7171 + $0x10] sm:$0xf]
        %v7627 = vld [vmem:[%s7171 + $0x14] sm:$0x1]
        %v7628 = vld [vmem:[%s7171 + $0x18] sm:$0xf]
        %v7629 = vld [vmem:[%s7171 + $0x1c] sm:$0xf]
        %v7630 = vld [vmem:[%s7171 + $0x20] sm:$0x1]
        %v7631 = vld [vmem:[%s7171 + $0x24] sm:$0xf]
        %v7632 = vld [vmem:[%s7171 + $0x28] sm:$0xf]
        %v7633 = vld [vmem:[%s7171 + $0x2c] sm:$0x1]
        %v7634 = vld [vmem:[%s7171 + $0x30] sm:$0xf]
        %v7635 = vld [vmem:[%s7171 + $0x34] sm:$0xf]
        %v7636 = vld [vmem:[%s7171 + $0x38] sm:$0x1]
        %v7637 = vld [vmem:[%s7171 + $0x3c] sm:$0xf]
        %v7638 = vld [vmem:[%s7171 + $0x40] sm:$0xf]
        %v7639 = vld [vmem:[%s7171 + $0x44] sm:$0x1]
        %v7640 = vld [vmem:[%s7171 + $0x48] sm:$0xf]
        %v7641 = vld [vmem:[%s7171 + $0x4c] sm:$0xf]
        %v7642 = vld [vmem:[%s7171 + $0x50] sm:$0x1]
        %v7643 = vld [vmem:[%s7171 + $0x54] sm:$0xf]
        %v7644 = vld [vmem:[%s7171 + $0x58] sm:$0xf]
        %v7645 = vld [vmem:[%s7171 + $0x5c] sm:$0x1]
        %v7646 = vld [vmem:[%s7171 + $0x60] sm:$0xf]
        %v7647 = vld [vmem:[%s7171 + $0x64] sm:$0xf]
        %v7648 = vld [vmem:[%s7171 + $0x68] sm:$0x1]
        %v7649 = vld [vmem:[%s7171 + $0x6c] sm:$0xf]
        %v7650 = vld [vmem:[%s7171 + $0x70] sm:$0xf]
        %v7651 = vld [vmem:[%s7171 + $0x74] sm:$0x1]
        %v7652 = vld [vmem:[%s7171 + $0x78] sm:$0xf]
        %v7653 = vld [vmem:[%s7171 + $0x7c] sm:$0xf]
        %v7654 = vld [vmem:[%s7171 + $0x80] sm:$0x1]
        %v7655 = vld [vmem:[%s7171 + $0x84] sm:$0xf]
        %v7656 = vld [vmem:[%s7171 + $0x88] sm:$0xf]
        %v7657 = vld [vmem:[%s7171 + $0x8c] sm:$0x1]
        %v7658 = vld [vmem:[%s7171 + $0x90] sm:$0xf]
        %v7659 = vld [vmem:[%s7171 + $0x94] sm:$0xf]
        %v7660 = vld [vmem:[%s7171 + $0x98] sm:$0x1]
        %v7661 = vld [vmem:[%s7171 + $0x9c] sm:$0xf]
        %v7662 = vld [vmem:[%s7171 + $0xa0] sm:$0xf]
        %v7663 = vld [vmem:[%s7171 + $0xa4] sm:$0x1]
        %v7664 = vld [vmem:[%s7171 + $0xa8] sm:$0xf]
        %v7665 = vld [vmem:[%s7171 + $0xac] sm:$0xf]
        %v7666 = vld [vmem:[%s7171 + $0xb0] sm:$0x1]
        %v7667 = vld [vmem:[%s7171 + $0xb4] sm:$0xf]
        %v7668 = vld [vmem:[%s7171 + $0xb8] sm:$0xf]
        %v7669 = vld [vmem:[%s7171 + $0xbc] sm:$0x1]
        %v7671 = vshrl.u32 %v7622, 16
        %v7673 = vrot.slane %v7671, 4
        %v7674 = vshll.u32 %v7622, 16
        %v7676 = vrot.slane %v7674, 5
        %v7677 = vor.u32 %v7673, %v7676
        %v7678 = vrot.slane %v7677, 4
        %v7680 = vshll.u32 %v7623, 16
        %v7682 = vrot.slane %v7680, 5
        %v7683 = vsel %vm3941, %v7678, %v7682
        %v7684 = vshrl.u32 %v7623, 16
        %v7686 = vrot.slane %v7684, 4
        %v7687 = vor.u32 %v7686, %v7682
        %v7688 = vrot.slane %v7687, 4
        %v7690 = vshll.u32 %v7624, 16
        %v7692 = vrot.slane %v7690, 5
        %v7693 = vsel %vm3941, %v7688, %v7692
        %v7695 = vshrl.u32 %v7625, 16
        %v7697 = vrot.slane %v7695, 4
        %v7698 = vshll.u32 %v7625, 16
        %v7700 = vrot.slane %v7698, 5
        %v7701 = vor.u32 %v7697, %v7700
        %v7702 = vrot.slane %v7701, 4
        %v7704 = vshll.u32 %v7626, 16
        %v7706 = vrot.slane %v7704, 5
        %v7707 = vsel %vm3941, %v7702, %v7706
        %v7708 = vshrl.u32 %v7626, 16
        %v7710 = vrot.slane %v7708, 4
        %v7711 = vor.u32 %v7710, %v7706
        %v7712 = vrot.slane %v7711, 4
        %v7714 = vshll.u32 %v7627, 16
        %v7716 = vrot.slane %v7714, 5
        %v7717 = vsel %vm3941, %v7712, %v7716
        %v7719 = vshrl.u32 %v7628, 16
        %v7721 = vrot.slane %v7719, 4
        %v7722 = vshll.u32 %v7628, 16
        %v7724 = vrot.slane %v7722, 5
        %v7725 = vor.u32 %v7721, %v7724
        %v7726 = vrot.slane %v7725, 4
        %v7728 = vshll.u32 %v7629, 16
        %v7730 = vrot.slane %v7728, 5
        %v7731 = vsel %vm3941, %v7726, %v7730
        %v7732 = vshrl.u32 %v7629, 16
        %v7734 = vrot.slane %v7732, 4
        %v7735 = vor.u32 %v7734, %v7730
        %v7736 = vrot.slane %v7735, 4
        %v7738 = vshll.u32 %v7630, 16
        %v7740 = vrot.slane %v7738, 5
        %v7741 = vsel %vm3941, %v7736, %v7740
        %v7743 = vshrl.u32 %v7631, 16
        %v7745 = vrot.slane %v7743, 4
        %v7746 = vshll.u32 %v7631, 16
        %v7748 = vrot.slane %v7746, 5
        %v7749 = vor.u32 %v7745, %v7748
        %v7750 = vrot.slane %v7749, 4
        %v7752 = vshll.u32 %v7632, 16
        %v7754 = vrot.slane %v7752, 5
        %v7755 = vsel %vm3941, %v7750, %v7754
        %v7756 = vshrl.u32 %v7632, 16
        %v7758 = vrot.slane %v7756, 4
        %v7759 = vor.u32 %v7758, %v7754
        %v7760 = vrot.slane %v7759, 4
        %v7762 = vshll.u32 %v7633, 16
        %v7764 = vrot.slane %v7762, 5
        %v7765 = vsel %vm3941, %v7760, %v7764
        %v7767 = vshrl.u32 %v7634, 16
        %v7769 = vrot.slane %v7767, 4
        %v7770 = vshll.u32 %v7634, 16
        %v7772 = vrot.slane %v7770, 5
        %v7773 = vor.u32 %v7769, %v7772
        %v7774 = vrot.slane %v7773, 4
        %v7776 = vshll.u32 %v7635, 16
        %v7778 = vrot.slane %v7776, 5
        %v7779 = vsel %vm3941, %v7774, %v7778
        %v7780 = vshrl.u32 %v7635, 16
        %v7782 = vrot.slane %v7780, 4
        %v7783 = vor.u32 %v7782, %v7778
        %v7784 = vrot.slane %v7783, 4
        %v7786 = vshll.u32 %v7636, 16
        %v7788 = vrot.slane %v7786, 5
        %v7789 = vsel %vm3941, %v7784, %v7788
        %v7791 = vshrl.u32 %v7637, 16
        %v7793 = vrot.slane %v7791, 4
        %v7794 = vshll.u32 %v7637, 16
        %v7796 = vrot.slane %v7794, 5
        %v7797 = vor.u32 %v7793, %v7796
        %v7798 = vrot.slane %v7797, 4
        %v7800 = vshll.u32 %v7638, 16
        %v7802 = vrot.slane %v7800, 5
        %v7803 = vsel %vm3941, %v7798, %v7802
        %v7804 = vshrl.u32 %v7638, 16
        %v7806 = vrot.slane %v7804, 4
        %v7807 = vor.u32 %v7806, %v7802
        %v7808 = vrot.slane %v7807, 4
        %v7810 = vshll.u32 %v7639, 16
        %v7812 = vrot.slane %v7810, 5
        %v7813 = vsel %vm3941, %v7808, %v7812
        %v7815 = vshrl.u32 %v7640, 16
        %v7817 = vrot.slane %v7815, 4
        %v7818 = vshll.u32 %v7640, 16
        %v7820 = vrot.slane %v7818, 5
        %v7821 = vor.u32 %v7817, %v7820
        %v7822 = vrot.slane %v7821, 4
        %v7824 = vshll.u32 %v7641, 16
        %v7826 = vrot.slane %v7824, 5
        %v7827 = vsel %vm3941, %v7822, %v7826
        %v7828 = vshrl.u32 %v7641, 16
        %v7830 = vrot.slane %v7828, 4
        %v7831 = vor.u32 %v7830, %v7826
        %v7832 = vrot.slane %v7831, 4
        %v7834 = vshll.u32 %v7642, 16
        %v7836 = vrot.slane %v7834, 5
        %v7837 = vsel %vm3941, %v7832, %v7836
        %v7839 = vshrl.u32 %v7643, 16
        %v7841 = vrot.slane %v7839, 4
        %v7842 = vshll.u32 %v7643, 16
        %v7844 = vrot.slane %v7842, 5
        %v7845 = vor.u32 %v7841, %v7844
        %v7846 = vrot.slane %v7845, 4
        %v7848 = vshll.u32 %v7644, 16
        %v7850 = vrot.slane %v7848, 5
        %v7851 = vsel %vm3941, %v7846, %v7850
        %v7852 = vshrl.u32 %v7644, 16
        %v7854 = vrot.slane %v7852, 4
        %v7855 = vor.u32 %v7854, %v7850
        %v7856 = vrot.slane %v7855, 4
        %v7858 = vshll.u32 %v7645, 16
        %v7860 = vrot.slane %v7858, 5
        %v7861 = vsel %vm3941, %v7856, %v7860
        %v7863 = vshrl.u32 %v7646, 16
        %v7865 = vrot.slane %v7863, 4
        %v7866 = vshll.u32 %v7646, 16
        %v7868 = vrot.slane %v7866, 5
        %v7869 = vor.u32 %v7865, %v7868
        %v7870 = vrot.slane %v7869, 4
        %v7872 = vshll.u32 %v7647, 16
        %v7874 = vrot.slane %v7872, 5
        %v7875 = vsel %vm3941, %v7870, %v7874
        %v7876 = vshrl.u32 %v7647, 16
        %v7878 = vrot.slane %v7876, 4
        %v7879 = vor.u32 %v7878, %v7874
        %v7880 = vrot.slane %v7879, 4
        %v7882 = vshll.u32 %v7648, 16
        %v7884 = vrot.slane %v7882, 5
        %v7885 = vsel %vm3941, %v7880, %v7884
        %v7887 = vshrl.u32 %v7649, 16
        %v7889 = vrot.slane %v7887, 4
        %v7890 = vshll.u32 %v7649, 16
        %v7892 = vrot.slane %v7890, 5
        %v7893 = vor.u32 %v7889, %v7892
        %v7894 = vrot.slane %v7893, 4
        %v7896 = vshll.u32 %v7650, 16
        %v7898 = vrot.slane %v7896, 5
        %v7899 = vsel %vm3941, %v7894, %v7898
        %v7900 = vshrl.u32 %v7650, 16
        %v7902 = vrot.slane %v7900, 4
        %v7903 = vor.u32 %v7902, %v7898
        %v7904 = vrot.slane %v7903, 4
        %v7906 = vshll.u32 %v7651, 16
        %v7908 = vrot.slane %v7906, 5
        %v7909 = vsel %vm3941, %v7904, %v7908
        %v7911 = vshrl.u32 %v7652, 16
        %v7913 = vrot.slane %v7911, 4
        %v7914 = vshll.u32 %v7652, 16
        %v7916 = vrot.slane %v7914, 5
        %v7917 = vor.u32 %v7913, %v7916
        %v7918 = vrot.slane %v7917, 4
        %v7920 = vshll.u32 %v7653, 16
        %v7922 = vrot.slane %v7920, 5
        %v7923 = vsel %vm3941, %v7918, %v7922
        %v7924 = vshrl.u32 %v7653, 16
        %v7926 = vrot.slane %v7924, 4
        %v7927 = vor.u32 %v7926, %v7922
        %v7928 = vrot.slane %v7927, 4
        %v7930 = vshll.u32 %v7654, 16
        %v7932 = vrot.slane %v7930, 5
        %v7933 = vsel %vm3941, %v7928, %v7932
        %v7935 = vshrl.u32 %v7655, 16
        %v7937 = vrot.slane %v7935, 4
        %v7938 = vshll.u32 %v7655, 16
        %v7940 = vrot.slane %v7938, 5
        %v7941 = vor.u32 %v7937, %v7940
        %v7942 = vrot.slane %v7941, 4
        %v7944 = vshll.u32 %v7656, 16
        %v7946 = vrot.slane %v7944, 5
        %v7947 = vsel %vm3941, %v7942, %v7946
        %v7948 = vshrl.u32 %v7656, 16
        %v7950 = vrot.slane %v7948, 4
        %v7951 = vor.u32 %v7950, %v7946
        %v7952 = vrot.slane %v7951, 4
        %v7954 = vshll.u32 %v7657, 16
        %v7956 = vrot.slane %v7954, 5
        %v7957 = vsel %vm3941, %v7952, %v7956
        %v7959 = vshrl.u32 %v7658, 16
        %v7961 = vrot.slane %v7959, 4
        %v7962 = vshll.u32 %v7658, 16
        %v7964 = vrot.slane %v7962, 5
        %v7965 = vor.u32 %v7961, %v7964
        %v7966 = vrot.slane %v7965, 4
        %v7968 = vshll.u32 %v7659, 16
        %v7970 = vrot.slane %v7968, 5
        %v7971 = vsel %vm3941, %v7966, %v7970
        %v7972 = vshrl.u32 %v7659, 16
        %v7974 = vrot.slane %v7972, 4
        %v7975 = vor.u32 %v7974, %v7970
        %v7976 = vrot.slane %v7975, 4
        %v7978 = vshll.u32 %v7660, 16
        %v7980 = vrot.slane %v7978, 5
        %v7981 = vsel %vm3941, %v7976, %v7980
        %v7983 = vshrl.u32 %v7661, 16
        %v7985 = vrot.slane %v7983, 4
        %v7986 = vshll.u32 %v7661, 16
        %v7988 = vrot.slane %v7986, 5
        %v7989 = vor.u32 %v7985, %v7988
        %v7990 = vrot.slane %v7989, 4
        %v7992 = vshll.u32 %v7662, 16
        %v7994 = vrot.slane %v7992, 5
        %v7995 = vsel %vm3941, %v7990, %v7994
        %v7996 = vshrl.u32 %v7662, 16
        %v7998 = vrot.slane %v7996, 4
        %v7999 = vor.u32 %v7998, %v7994
        %v8000 = vrot.slane %v7999, 4
        %v8002 = vshll.u32 %v7663, 16
        %v8004 = vrot.slane %v8002, 5
        %v8005 = vsel %vm3941, %v8000, %v8004
        %v8007 = vshrl.u32 %v7664, 16
        %v8009 = vrot.slane %v8007, 4
        %v8010 = vshll.u32 %v7664, 16
        %v8012 = vrot.slane %v8010, 5
        %v8013 = vor.u32 %v8009, %v8012
        %v8014 = vrot.slane %v8013, 4
        %v8016 = vshll.u32 %v7665, 16
        %v8018 = vrot.slane %v8016, 5
        %v8019 = vsel %vm3941, %v8014, %v8018
        %v8020 = vshrl.u32 %v7665, 16
        %v8022 = vrot.slane %v8020, 4
        %v8023 = vor.u32 %v8022, %v8018
        %v8024 = vrot.slane %v8023, 4
        %v8026 = vshll.u32 %v7666, 16
        %v8028 = vrot.slane %v8026, 5
        %v8029 = vsel %vm3941, %v8024, %v8028
        %v8031 = vshrl.u32 %v7667, 16
        %v8033 = vrot.slane %v8031, 4
        %v8034 = vshll.u32 %v7667, 16
        %v8036 = vrot.slane %v8034, 5
        %v8037 = vor.u32 %v8033, %v8036
        %v8038 = vrot.slane %v8037, 4
        %v8040 = vshll.u32 %v7668, 16
        %v8042 = vrot.slane %v8040, 5
        %v8043 = vsel %vm3941, %v8038, %v8042
        %v8044 = vshrl.u32 %v7668, 16
        %v8046 = vrot.slane %v8044, 4
        %v8047 = vor.u32 %v8046, %v8042
        %v8048 = vrot.slane %v8047, 4
        %v8050 = vshll.u32 %v7669, 16
        %v8052 = vrot.slane %v8050, 5
        %v8053 = vsel %vm3941, %v8048, %v8052
        %s8054 = scalar_lea.vmem %s4, 224
        %v8055 = vld [vmem:[%s8054] sm:$0xf]
        %v8056 = vld [vmem:[%s8054 + $0x4] sm:$0xf]
        %v8057 = vld [vmem:[%s8054 + $0x8] sm:$0xf]
        %v8058 = vld [vmem:[%s8054 + $0xc] sm:$0xf]
        %v8059 = vld [vmem:[%s8054 + $0x10] sm:$0xf]
        %v8060 = vld [vmem:[%s8054 + $0x14] sm:$0xf]
        %v8061 = vld [vmem:[%s8054 + $0x18] sm:$0xf]
        %v8062 = vld [vmem:[%s8054 + $0x1c] sm:$0xf]
        %v8063 = vunpack.c.l.b16 %v7683
        %v8064 = vunpack.c.l.b16 %v7693
        %v8065 = vunpack.c.l.b16 %v7707
        %v8066 = vunpack.c.l.b16 %v7717
        %v8067 = vunpack.c.l.b16 %v7731
        %v8068 = vunpack.c.l.b16 %v7741
        %v8069 = vunpack.c.l.b16 %v7755
        %v8070 = vunpack.c.l.b16 %v7765
        %v8071 = vunpack.c.l.b16 %v7779
        %v8072 = vunpack.c.l.b16 %v7789
        %v8073 = vunpack.c.l.b16 %v7803
        %v8074 = vunpack.c.l.b16 %v7813
        %v8075 = vunpack.c.l.b16 %v7827
        %v8076 = vunpack.c.l.b16 %v7837
        %v8077 = vunpack.c.l.b16 %v7851
        %v8078 = vunpack.c.l.b16 %v7861
        %v8079 = vunpack.c.l.b16 %v7875
        %v8080 = vunpack.c.l.b16 %v7885
        %v8081 = vunpack.c.l.b16 %v7899
        %v8082 = vunpack.c.l.b16 %v7909
        %v8083 = vunpack.c.l.b16 %v7923
        %v8084 = vunpack.c.l.b16 %v7933
        %v8085 = vunpack.c.l.b16 %v7947
        %v8086 = vunpack.c.l.b16 %v7957
        %v8087 = vunpack.c.l.b16 %v7971
        %v8088 = vunpack.c.l.b16 %v7981
        %v8089 = vunpack.c.l.b16 %v7995
        %v8090 = vunpack.c.l.b16 %v8005
        %v8091 = vunpack.c.l.b16 %v8019
        %v8092 = vunpack.c.l.b16 %v8029
        %v8093 = vunpack.c.l.b16 %v8043
        %v8094 = vunpack.c.l.b16 %v8053
        %v8095 = vpack.c.b16 %v8064, %v8063
        %v8096 = vpack.c.b16 %v8066, %v8065
        %v8097 = vpack.c.b16 %v8068, %v8067
        %v8098 = vpack.c.b16 %v8070, %v8069
        %v8099 = vpack.c.b16 %v8072, %v8071
        %v8100 = vpack.c.b16 %v8074, %v8073
        %v8101 = vpack.c.b16 %v8076, %v8075
        %v8102 = vpack.c.b16 %v8078, %v8077
        %v8103 = vpack.c.b16 %v8080, %v8079
        %v8104 = vpack.c.b16 %v8082, %v8081
        %v8105 = vpack.c.b16 %v8084, %v8083
        %v8106 = vpack.c.b16 %v8086, %v8085
        %v8107 = vpack.c.b16 %v8088, %v8087
        %v8108 = vpack.c.b16 %v8090, %v8089
        %v8109 = vpack.c.b16 %v8092, %v8091
        %v8110 = vpack.c.b16 %v8094, %v8093
        %v8119 = vunpack.c.l.b16 %v8055
        %v8120 = vunpack.c.l.b16 %v8056
        %v8121 = vunpack.c.l.b16 %v8057
        %v8122 = vunpack.c.l.b16 %v8058
        %v8123 = vunpack.c.l.b16 %v8059
        %v8124 = vunpack.c.l.b16 %v8060
        %v8125 = vunpack.c.l.b16 %v8061
        %v8126 = vunpack.c.l.b16 %v8062
        %v8127 = vpack.c.b16 %v8120, %v8119
        %v8128 = vpack.c.b16 %v8122, %v8121
        %v8129 = vpack.c.b16 %v8124, %v8123
        %v8130 = vpack.c.b16 %v8126, %v8125
        %v8136 = vsel %vm3649, %v8095, 0
        %v8139 = vsel %vm3649, %v8096, 0
        %v8142 = vsel %vm3649, %v8097, 0
        %v8145 = vsel %vm3649, %v8098, 0
        %v8148 = vsel %vm3649, %v8099, 0
        %v8151 = vsel %vm3649, %v8100, 0
        %v8154 = vsel %vm3649, %v8101, 0
        %v8157 = vsel %vm3649, %v8102, 0
        %v8160 = vsel %vm3649, %v8103, 0
        %v8163 = vsel %vm3649, %v8104, 0
        %v8166 = vsel %vm3649, %v8105, 0
        %v8169 = vsel %vm3649, %v8106, 0
        %v8172 = vsel %vm3649, %v8107, 0
        %v8175 = vsel %vm3649, %v8108, 0
        %v8178 = vsel %vm3649, %v8109, 0
        %v8181 = vsel %vm3649, %v8110, 0
        %8183 = vmatprep.subr.bf16.mxu0 0
        %8184 = vmatpush1.bf16.msra.mxu0 0
        %8185 = vmatprep.subr.bf16.mxu0 0
        %8186 = vmatpush1.bf16.msra.mxu0 0
        %8187 = vmatprep.subr.bf16.mxu0 0
        %8188 = vmatpush1.bf16.msra.mxu0 0
        %8189 = vmatprep.subr.bf16.mxu0 0
        %8190 = vmatpush1.bf16.msra.mxu0 0
        %8191 = vmatprep.subr.bf16.mxu0 0
        %8192 = vmatpush1.bf16.msra.mxu0 %v8130
        %8193 = vmatprep.subr.bf16.mxu0 0
        %8194 = vmatpush1.bf16.msra.mxu0 %v8129
        %8195 = vmatprep.subr.bf16.mxu0 0
        %8196 = vmatpush1.bf16.msra.mxu0 %v8128
        %8197 = vmatprep.subr.bf16.mxu0 0
        %8198 = vmatpush1.bf16.msra.mxu0 %v8127
        %8199 = vmatprep.subr.bf16.mxu0 0
        %8200 = vmatpush2.bf16.msra.mxu0 0
        %8201 = vmatprep.subr.bf16.mxu0 0
        %8202 = vmatpush2.bf16.msra.mxu0 0
        %8203 = vmatprep.subr.bf16.mxu0 0
        %8204 = vmatpush2.bf16.msra.mxu0 0
        %8205 = vmatprep.subr.bf16.mxu0 0
        %8206 = vmatpush2.bf16.msra.mxu0 0
        %8207 = vmatprep.subr.bf16.mxu0 0
        %8208 = vmatpush2.bf16.msra.mxu0 0
        %8209 = vmatprep.subr.bf16.mxu0 0
        %8210 = vmatpush2.bf16.msra.mxu0 0
        %8211 = vmatprep.subr.bf16.mxu0 0
        %8212 = vmatpush2.bf16.msra.mxu0 0
        %8213 = vmatprep.subr.bf16.mxu0 0
        %8214 = vmatpush2.bf16.msra.mxu0 0
        %8215 = vmatprep.mubr.bf16.mxu0 0
        %8216 = vmatmul.mubr.bf16.gmra.mxu0 %v8136
        %v8217 = vpop.f32.mrf.mxu0
        %v8218 = vadd.f32 0.0, %v8217
        %v8219 = vpop.f32.mrf.mxu0
        %v8220 = vpop.f32.mrf.mxu0
        %v8221 = vadd.f32 0.0, %v8220
        %v8222 = vpop.f32.mrf.mxu0
        %8223 = vmatprep.mubr.bf16.mxu0 0
        %8224 = vmatmul.mubr.bf16.gmra.mxu0 %v8139
        %v8225 = vpop.f32.mrf.mxu0
        %v8226 = vadd.f32 0.0, %v8225
        %v8227 = vpop.f32.mrf.mxu0
        %v8228 = vpop.f32.mrf.mxu0
        %v8229 = vadd.f32 0.0, %v8228
        %v8230 = vpop.f32.mrf.mxu0
        %8231 = vmatprep.mubr.bf16.mxu0 0
        %8232 = vmatmul.mubr.bf16.gmra.mxu0 %v8142
        %v8233 = vpop.f32.mrf.mxu0
        %v8234 = vadd.f32 0.0, %v8233
        %v8235 = vpop.f32.mrf.mxu0
        %v8236 = vpop.f32.mrf.mxu0
        %v8237 = vadd.f32 0.0, %v8236
        %v8238 = vpop.f32.mrf.mxu0
        %8239 = vmatprep.mubr.bf16.mxu0 0
        %8240 = vmatmul.mubr.bf16.gmra.mxu0 %v8145
        %v8241 = vpop.f32.mrf.mxu0
        %v8242 = vadd.f32 0.0, %v8241
        %v8243 = vpop.f32.mrf.mxu0
        %v8244 = vpop.f32.mrf.mxu0
        %v8245 = vadd.f32 0.0, %v8244
        %v8246 = vpop.f32.mrf.mxu0
        %8247 = vmatprep.mubr.bf16.mxu0 0
        %8248 = vmatmul.mubr.bf16.gmra.mxu0 %v8148
        %v8249 = vpop.f32.mrf.mxu0
        %v8250 = vadd.f32 0.0, %v8249
        %v8251 = vpop.f32.mrf.mxu0
        %v8252 = vpop.f32.mrf.mxu0
        %v8253 = vadd.f32 0.0, %v8252
        %v8254 = vpop.f32.mrf.mxu0
        %8255 = vmatprep.mubr.bf16.mxu0 0
        %8256 = vmatmul.mubr.bf16.gmra.mxu0 %v8151
        %v8257 = vpop.f32.mrf.mxu0
        %v8258 = vadd.f32 0.0, %v8257
        %v8259 = vpop.f32.mrf.mxu0
        %v8260 = vpop.f32.mrf.mxu0
        %v8261 = vadd.f32 0.0, %v8260
        %v8262 = vpop.f32.mrf.mxu0
        %8263 = vmatprep.mubr.bf16.mxu0 0
        %8264 = vmatmul.mubr.bf16.gmra.mxu0 %v8154
        %v8265 = vpop.f32.mrf.mxu0
        %v8266 = vadd.f32 0.0, %v8265
        %v8267 = vpop.f32.mrf.mxu0
        %v8268 = vpop.f32.mrf.mxu0
        %v8269 = vadd.f32 0.0, %v8268
        %v8270 = vpop.f32.mrf.mxu0
        %8271 = vmatprep.mubr.bf16.mxu0 0
        %8272 = vmatmul.mubr.bf16.gmra.mxu0 %v8157
        %v8273 = vpop.f32.mrf.mxu0
        %v8274 = vadd.f32 0.0, %v8273
        %v8275 = vpop.f32.mrf.mxu0
        %v8276 = vpop.f32.mrf.mxu0
        %v8277 = vadd.f32 0.0, %v8276
        %v8278 = vpop.f32.mrf.mxu0
        %8279 = vmatprep.mubr.bf16.mxu0 0
        %8280 = vmatmul.mubr.bf16.gmra.mxu0 %v8160
        %v8281 = vpop.f32.mrf.mxu0
        %v8282 = vadd.f32 0.0, %v8281
        %v8283 = vpop.f32.mrf.mxu0
        %v8284 = vpop.f32.mrf.mxu0
        %v8285 = vadd.f32 0.0, %v8284
        %v8286 = vpop.f32.mrf.mxu0
        %8287 = vmatprep.mubr.bf16.mxu0 0
        %8288 = vmatmul.mubr.bf16.gmra.mxu0 %v8163
        %v8289 = vpop.f32.mrf.mxu0
        %v8290 = vadd.f32 0.0, %v8289
        %v8291 = vpop.f32.mrf.mxu0
        %v8292 = vpop.f32.mrf.mxu0
        %v8293 = vadd.f32 0.0, %v8292
        %v8294 = vpop.f32.mrf.mxu0
        %8295 = vmatprep.mubr.bf16.mxu0 0
        %8296 = vmatmul.mubr.bf16.gmra.mxu0 %v8166
        %v8297 = vpop.f32.mrf.mxu0
        %v8298 = vadd.f32 0.0, %v8297
        %v8299 = vpop.f32.mrf.mxu0
        %v8300 = vpop.f32.mrf.mxu0
        %v8301 = vadd.f32 0.0, %v8300
        %v8302 = vpop.f32.mrf.mxu0
        %8303 = vmatprep.mubr.bf16.mxu0 0
        %8304 = vmatmul.mubr.bf16.gmra.mxu0 %v8169
        %v8305 = vpop.f32.mrf.mxu0
        %v8306 = vadd.f32 0.0, %v8305
        %v8307 = vpop.f32.mrf.mxu0
        %v8308 = vpop.f32.mrf.mxu0
        %v8309 = vadd.f32 0.0, %v8308
        %v8310 = vpop.f32.mrf.mxu0
        %8311 = vmatprep.mubr.bf16.mxu0 0
        %8312 = vmatmul.mubr.bf16.gmra.mxu0 %v8172
        %v8313 = vpop.f32.mrf.mxu0
        %v8314 = vadd.f32 0.0, %v8313
        %v8315 = vpop.f32.mrf.mxu0
        %v8316 = vpop.f32.mrf.mxu0
        %v8317 = vadd.f32 0.0, %v8316
        %v8318 = vpop.f32.mrf.mxu0
        %8319 = vmatprep.mubr.bf16.mxu0 0
        %8320 = vmatmul.mubr.bf16.gmra.mxu0 %v8175
        %v8321 = vpop.f32.mrf.mxu0
        %v8322 = vadd.f32 0.0, %v8321
        %v8323 = vpop.f32.mrf.mxu0
        %v8324 = vpop.f32.mrf.mxu0
        %v8325 = vadd.f32 0.0, %v8324
        %v8326 = vpop.f32.mrf.mxu0
        %8327 = vmatprep.mubr.bf16.mxu0 0
        %8328 = vmatmul.mubr.bf16.gmra.mxu0 %v8178
        %v8329 = vpop.f32.mrf.mxu0
        %v8330 = vadd.f32 0.0, %v8329
        %v8331 = vpop.f32.mrf.mxu0
        %v8332 = vpop.f32.mrf.mxu0
        %v8333 = vadd.f32 0.0, %v8332
        %v8334 = vpop.f32.mrf.mxu0
        %8335 = vmatprep.mubr.bf16.mxu0 0
        %8336 = vmatmul.mubr.bf16.gmra.mxu0 %v8181
        %v8337 = vpop.f32.mrf.mxu0
        %v8338 = vadd.f32 0.0, %v8337
        %v8339 = vpop.f32.mrf.mxu0
        %v8340 = vpop.f32.mrf.mxu0
        %v8341 = vadd.f32 0.0, %v8340
        %v8342 = vpop.f32.mrf.mxu0
        %8343 = vdwg.mxu0
        %v8344 = vld [vmem:[#allocation4] sm:$0xff]
        %v8345 = vld [vmem:[#allocation4 + $0x8] sm:$0xff]
        %v8346 = vld [vmem:[#allocation4 + $0x10] sm:$0xff]
        %v8347 = vld [vmem:[#allocation4 + $0x18] sm:$0xff]
        %v8348 = vld [vmem:[#allocation4 + $0x20] sm:$0xff]
        %v8349 = vld [vmem:[#allocation4 + $0x28] sm:$0xff]
        %v8350 = vld [vmem:[#allocation4 + $0x30] sm:$0xff]
        %v8351 = vld [vmem:[#allocation4 + $0x38] sm:$0xff]
        %v8352 = vld [vmem:[#allocation4 + $0x40] sm:$0xff]
        %v8353 = vld [vmem:[#allocation4 + $0x48] sm:$0xff]
        %v8354 = vld [vmem:[#allocation4 + $0x50] sm:$0xff]
        %v8355 = vld [vmem:[#allocation4 + $0x58] sm:$0xff]
        %v8356 = vld [vmem:[#allocation4 + $0x60] sm:$0xff]
        %v8357 = vld [vmem:[#allocation4 + $0x68] sm:$0xff]
        %v8358 = vld [vmem:[#allocation4 + $0x70] sm:$0xff]
        %v8359 = vld [vmem:[#allocation4 + $0x78] sm:$0xff]
        %v8360 = vld [vmem:[#allocation4 + $0x80] sm:$0xff]
        %v8361 = vld [vmem:[#allocation4 + $0x88] sm:$0xff]
        %v8362 = vld [vmem:[#allocation4 + $0x90] sm:$0xff]
        %v8363 = vld [vmem:[#allocation4 + $0x98] sm:$0xff]
        %v8364 = vld [vmem:[#allocation4 + $0xa0] sm:$0xff]
        %v8365 = vld [vmem:[#allocation4 + $0xa8] sm:$0xff]
        %v8366 = vld [vmem:[#allocation4 + $0xb0] sm:$0xff]
        %v8367 = vld [vmem:[#allocation4 + $0xb8] sm:$0xff]
        %v8368 = vld [vmem:[#allocation4 + $0xc0] sm:$0xff]
        %v8369 = vld [vmem:[#allocation4 + $0xc8] sm:$0xff]
        %v8370 = vld [vmem:[#allocation4 + $0xd0] sm:$0xff]
        %v8371 = vld [vmem:[#allocation4 + $0xd8] sm:$0xff]
        %v8372 = vld [vmem:[#allocation4 + $0xe0] sm:$0xff]
        %v8373 = vld [vmem:[#allocation4 + $0xe8] sm:$0xff]
        %v8374 = vld [vmem:[#allocation4 + $0xf0] sm:$0xff]
        %v8375 = vld [vmem:[#allocation4 + $0xf8] sm:$0xff]
        %v8376 = vadd.f32 %v8344, %v8218
        %v8377 = vadd.f32 %v8345, %v8221
        %v8378 = vadd.f32 %v8346, %v8226
        %v8379 = vadd.f32 %v8347, %v8229
        %v8380 = vadd.f32 %v8348, %v8234
        %v8381 = vadd.f32 %v8349, %v8237
        %v8382 = vadd.f32 %v8350, %v8242
        %v8383 = vadd.f32 %v8351, %v8245
        %v8384 = vadd.f32 %v8352, %v8250
        %v8385 = vadd.f32 %v8353, %v8253
        %v8386 = vadd.f32 %v8354, %v8258
        %v8387 = vadd.f32 %v8355, %v8261
        %v8388 = vadd.f32 %v8356, %v8266
        %v8389 = vadd.f32 %v8357, %v8269
        %v8390 = vadd.f32 %v8358, %v8274
        %v8391 = vadd.f32 %v8359, %v8277
        %v8392 = vadd.f32 %v8360, %v8282
        %v8393 = vadd.f32 %v8361, %v8285
        %v8394 = vadd.f32 %v8362, %v8290
        %v8395 = vadd.f32 %v8363, %v8293
        %v8396 = vadd.f32 %v8364, %v8298
        %v8397 = vadd.f32 %v8365, %v8301
        %v8398 = vadd.f32 %v8366, %v8306
        %v8399 = vadd.f32 %v8367, %v8309
        %v8400 = vadd.f32 %v8368, %v8314
        %v8401 = vadd.f32 %v8369, %v8317
        %v8402 = vadd.f32 %v8370, %v8322
        %v8403 = vadd.f32 %v8371, %v8325
        %v8404 = vadd.f32 %v8372, %v8330
        %v8405 = vadd.f32 %v8373, %v8333
        %v8406 = vadd.f32 %v8374, %v8338
        %v8407 = vadd.f32 %v8375, %v8341
        %8408 = vst [vmem:[#allocation4] sm:$0xff] %v8376
        %8409 = vst [vmem:[#allocation4 + $0x8] sm:$0xff] %v8377
        %8410 = vst [vmem:[#allocation4 + $0x10] sm:$0xff] %v8378
        %8411 = vst [vmem:[#allocation4 + $0x18] sm:$0xff] %v8379
        %8412 = vst [vmem:[#allocation4 + $0x20] sm:$0xff] %v8380
        %8413 = vst [vmem:[#allocation4 + $0x28] sm:$0xff] %v8381
        %8414 = vst [vmem:[#allocation4 + $0x30] sm:$0xff] %v8382
        %8415 = vst [vmem:[#allocation4 + $0x38] sm:$0xff] %v8383
        %8416 = vst [vmem:[#allocation4 + $0x40] sm:$0xff] %v8384
        %8417 = vst [vmem:[#allocation4 + $0x48] sm:$0xff] %v8385
        %8418 = vst [vmem:[#allocation4 + $0x50] sm:$0xff] %v8386
        %8419 = vst [vmem:[#allocation4 + $0x58] sm:$0xff] %v8387
        %8420 = vst [vmem:[#allocation4 + $0x60] sm:$0xff] %v8388
        %8421 = vst [vmem:[#allocation4 + $0x68] sm:$0xff] %v8389
        %8422 = vst [vmem:[#allocation4 + $0x70] sm:$0xff] %v8390
        %8423 = vst [vmem:[#allocation4 + $0x78] sm:$0xff] %v8391
        %8424 = vst [vmem:[#allocation4 + $0x80] sm:$0xff] %v8392
        %8425 = vst [vmem:[#allocation4 + $0x88] sm:$0xff] %v8393
        %8426 = vst [vmem:[#allocation4 + $0x90] sm:$0xff] %v8394
        %8427 = vst [vmem:[#allocation4 + $0x98] sm:$0xff] %v8395
        %8428 = vst [vmem:[#allocation4 + $0xa0] sm:$0xff] %v8396
        %8429 = vst [vmem:[#allocation4 + $0xa8] sm:$0xff] %v8397
        %8430 = vst [vmem:[#allocation4 + $0xb0] sm:$0xff] %v8398
        %8431 = vst [vmem:[#allocation4 + $0xb8] sm:$0xff] %v8399
        %8432 = vst [vmem:[#allocation4 + $0xc0] sm:$0xff] %v8400
        %8433 = vst [vmem:[#allocation4 + $0xc8] sm:$0xff] %v8401
        %8434 = vst [vmem:[#allocation4 + $0xd0] sm:$0xff] %v8402
        %8435 = vst [vmem:[#allocation4 + $0xd8] sm:$0xff] %v8403
        %8436 = vst [vmem:[#allocation4 + $0xe0] sm:$0xff] %v8404
        %8437 = vst [vmem:[#allocation4 + $0xe8] sm:$0xff] %v8405
        %8438 = vst [vmem:[#allocation4 + $0xf0] sm:$0xff] %v8406
        %8439 = vst [vmem:[#allocation4 + $0xf8] sm:$0xff] %v8407
        %v8440 = vld [vmem:[%s7171] sm:$0xe]
        %v8441 = vld [vmem:[%s7171 + $0x4] sm:$0xf]
        %v8442 = vld [vmem:[%s7171 + $0x8] sm:$0x1]
        %v8443 = vld [vmem:[%s7171 + $0xc] sm:$0xe]
        %v8444 = vld [vmem:[%s7171 + $0x10] sm:$0xf]
        %v8445 = vld [vmem:[%s7171 + $0x14] sm:$0x1]
        %v8446 = vld [vmem:[%s7171 + $0x18] sm:$0xe]
        %v8447 = vld [vmem:[%s7171 + $0x1c] sm:$0xf]
        %v8448 = vld [vmem:[%s7171 + $0x20] sm:$0x1]
        %v8449 = vld [vmem:[%s7171 + $0x24] sm:$0xe]
        %v8450 = vld [vmem:[%s7171 + $0x28] sm:$0xf]
        %v8451 = vld [vmem:[%s7171 + $0x2c] sm:$0x1]
        %v8452 = vld [vmem:[%s7171 + $0x30] sm:$0xe]
        %v8453 = vld [vmem:[%s7171 + $0x34] sm:$0xf]
        %v8454 = vld [vmem:[%s7171 + $0x38] sm:$0x1]
        %v8455 = vld [vmem:[%s7171 + $0x3c] sm:$0xe]
        %v8456 = vld [vmem:[%s7171 + $0x40] sm:$0xf]
        %v8457 = vld [vmem:[%s7171 + $0x44] sm:$0x1]
        %v8458 = vld [vmem:[%s7171 + $0x48] sm:$0xe]
        %v8459 = vld [vmem:[%s7171 + $0x4c] sm:$0xf]
        %v8460 = vld [vmem:[%s7171 + $0x50] sm:$0x1]
        %v8461 = vld [vmem:[%s7171 + $0x54] sm:$0xe]
        %v8462 = vld [vmem:[%s7171 + $0x58] sm:$0xf]
        %v8463 = vld [vmem:[%s7171 + $0x5c] sm:$0x1]
        %v8464 = vld [vmem:[%s7171 + $0x60] sm:$0xe]
        %v8465 = vld [vmem:[%s7171 + $0x64] sm:$0xf]
        %v8466 = vld [vmem:[%s7171 + $0x68] sm:$0x1]
        %v8467 = vld [vmem:[%s7171 + $0x6c] sm:$0xe]
        %v8468 = vld [vmem:[%s7171 + $0x70] sm:$0xf]
        %v8469 = vld [vmem:[%s7171 + $0x74] sm:$0x1]
        %v8470 = vld [vmem:[%s7171 + $0x78] sm:$0xe]
        %v8471 = vld [vmem:[%s7171 + $0x7c] sm:$0xf]
        %v8472 = vld [vmem:[%s7171 + $0x80] sm:$0x1]
        %v8473 = vld [vmem:[%s7171 + $0x84] sm:$0xe]
        %v8474 = vld [vmem:[%s7171 + $0x88] sm:$0xf]
        %v8475 = vld [vmem:[%s7171 + $0x8c] sm:$0x1]
        %v8476 = vld [vmem:[%s7171 + $0x90] sm:$0xe]
        %v8477 = vld [vmem:[%s7171 + $0x94] sm:$0xf]
        %v8478 = vld [vmem:[%s7171 + $0x98] sm:$0x1]
        %v8479 = vld [vmem:[%s7171 + $0x9c] sm:$0xe]
        %v8480 = vld [vmem:[%s7171 + $0xa0] sm:$0xf]
        %v8481 = vld [vmem:[%s7171 + $0xa4] sm:$0x1]
        %v8482 = vld [vmem:[%s7171 + $0xa8] sm:$0xe]
        %v8483 = vld [vmem:[%s7171 + $0xac] sm:$0xf]
        %v8484 = vld [vmem:[%s7171 + $0xb0] sm:$0x1]
        %v8485 = vld [vmem:[%s7171 + $0xb4] sm:$0xe]
        %v8486 = vld [vmem:[%s7171 + $0xb8] sm:$0xf]
        %v8487 = vld [vmem:[%s7171 + $0xbc] sm:$0x1]
        %v8536 = vrot.slane %v8440, 5
        %v8537 = vrot.slane %v8536, 4
        %v8538 = vrot.slane %v8441, 5
        %v8539 = vsel %vm4810, %v8537, %v8538
        %v8540 = vrot.slane %v8538, 4
        %v8541 = vrot.slane %v8442, 5
        %v8542 = vsel %vm4810, %v8540, %v8541
        %v8543 = vrot.slane %v8443, 5
        %v8544 = vrot.slane %v8543, 4
        %v8545 = vrot.slane %v8444, 5
        %v8546 = vsel %vm4810, %v8544, %v8545
        %v8547 = vrot.slane %v8545, 4
        %v8548 = vrot.slane %v8445, 5
        %v8549 = vsel %vm4810, %v8547, %v8548
        %v8550 = vrot.slane %v8446, 5
        %v8551 = vrot.slane %v8550, 4
        %v8552 = vrot.slane %v8447, 5
        %v8553 = vsel %vm4810, %v8551, %v8552
        %v8554 = vrot.slane %v8552, 4
        %v8555 = vrot.slane %v8448, 5
        %v8556 = vsel %vm4810, %v8554, %v8555
        %v8557 = vrot.slane %v8449, 5
        %v8558 = vrot.slane %v8557, 4
        %v8559 = vrot.slane %v8450, 5
        %v8560 = vsel %vm4810, %v8558, %v8559
        %v8561 = vrot.slane %v8559, 4
        %v8562 = vrot.slane %v8451, 5
        %v8563 = vsel %vm4810, %v8561, %v8562
        %v8564 = vrot.slane %v8452, 5
        %v8565 = vrot.slane %v8564, 4
        %v8566 = vrot.slane %v8453, 5
        %v8567 = vsel %vm4810, %v8565, %v8566
        %v8568 = vrot.slane %v8566, 4
        %v8569 = vrot.slane %v8454, 5
        %v8570 = vsel %vm4810, %v8568, %v8569
        %v8571 = vrot.slane %v8455, 5
        %v8572 = vrot.slane %v8571, 4
        %v8573 = vrot.slane %v8456, 5
        %v8574 = vsel %vm4810, %v8572, %v8573
        %v8575 = vrot.slane %v8573, 4
        %v8576 = vrot.slane %v8457, 5
        %v8577 = vsel %vm4810, %v8575, %v8576
        %v8578 = vrot.slane %v8458, 5
        %v8579 = vrot.slane %v8578, 4
        %v8580 = vrot.slane %v8459, 5
        %v8581 = vsel %vm4810, %v8579, %v8580
        %v8582 = vrot.slane %v8580, 4
        %v8583 = vrot.slane %v8460, 5
        %v8584 = vsel %vm4810, %v8582, %v8583
        %v8585 = vrot.slane %v8461, 5
        %v8586 = vrot.slane %v8585, 4
        %v8587 = vrot.slane %v8462, 5
        %v8588 = vsel %vm4810, %v8586, %v8587
        %v8589 = vrot.slane %v8587, 4
        %v8590 = vrot.slane %v8463, 5
        %v8591 = vsel %vm4810, %v8589, %v8590
        %v8592 = vrot.slane %v8464, 5
        %v8593 = vrot.slane %v8592, 4
        %v8594 = vrot.slane %v8465, 5
        %v8595 = vsel %vm4810, %v8593, %v8594
        %v8596 = vrot.slane %v8594, 4
        %v8597 = vrot.slane %v8466, 5
        %v8598 = vsel %vm4810, %v8596, %v8597
        %v8599 = vrot.slane %v8467, 5
        %v8600 = vrot.slane %v8599, 4
        %v8601 = vrot.slane %v8468, 5
        %v8602 = vsel %vm4810, %v8600, %v8601
        %v8603 = vrot.slane %v8601, 4
        %v8604 = vrot.slane %v8469, 5
        %v8605 = vsel %vm4810, %v8603, %v8604
        %v8606 = vrot.slane %v8470, 5
        %v8607 = vrot.slane %v8606, 4
        %v8608 = vrot.slane %v8471, 5
        %v8609 = vsel %vm4810, %v8607, %v8608
        %v8610 = vrot.slane %v8608, 4
        %v8611 = vrot.slane %v8472, 5
        %v8612 = vsel %vm4810, %v8610, %v8611
        %v8613 = vrot.slane %v8473, 5
        %v8614 = vrot.slane %v8613, 4
        %v8615 = vrot.slane %v8474, 5
        %v8616 = vsel %vm4810, %v8614, %v8615
        %v8617 = vrot.slane %v8615, 4
        %v8618 = vrot.slane %v8475, 5
        %v8619 = vsel %vm4810, %v8617, %v8618
        %v8620 = vrot.slane %v8476, 5
        %v8621 = vrot.slane %v8620, 4
        %v8622 = vrot.slane %v8477, 5
        %v8623 = vsel %vm4810, %v8621, %v8622
        %v8624 = vrot.slane %v8622, 4
        %v8625 = vrot.slane %v8478, 5
        %v8626 = vsel %vm4810, %v8624, %v8625
        %v8627 = vrot.slane %v8479, 5
        %v8628 = vrot.slane %v8627, 4
        %v8629 = vrot.slane %v8480, 5
        %v8630 = vsel %vm4810, %v8628, %v8629
        %v8631 = vrot.slane %v8629, 4
        %v8632 = vrot.slane %v8481, 5
        %v8633 = vsel %vm4810, %v8631, %v8632
        %v8634 = vrot.slane %v8482, 5
        %v8635 = vrot.slane %v8634, 4
        %v8636 = vrot.slane %v8483, 5
        %v8637 = vsel %vm4810, %v8635, %v8636
        %v8638 = vrot.slane %v8636, 4
        %v8639 = vrot.slane %v8484, 5
        %v8640 = vsel %vm4810, %v8638, %v8639
        %v8641 = vrot.slane %v8485, 5
        %v8642 = vrot.slane %v8641, 4
        %v8643 = vrot.slane %v8486, 5
        %v8644 = vsel %vm4810, %v8642, %v8643
        %v8645 = vrot.slane %v8643, 4
        %v8646 = vrot.slane %v8487, 5
        %v8647 = vsel %vm4810, %v8645, %v8646
        %s8648 = scalar_lea.vmem %s4, 256
        %v8649 = vld [vmem:[%s8648] sm:$0xf]
        %v8650 = vld [vmem:[%s8648 + $0x4] sm:$0xf]
        %v8651 = vld [vmem:[%s8648 + $0x8] sm:$0xf]
        %v8652 = vld [vmem:[%s8648 + $0xc] sm:$0xf]
        %v8653 = vld [vmem:[%s8648 + $0x10] sm:$0xf]
        %v8654 = vld [vmem:[%s8648 + $0x14] sm:$0xf]
        %v8655 = vld [vmem:[%s8648 + $0x18] sm:$0xf]
        %v8656 = vld [vmem:[%s8648 + $0x1c] sm:$0xf]
        %v8657 = vunpack.c.l.b16 %v8539
        %v8658 = vunpack.c.l.b16 %v8542
        %v8659 = vunpack.c.l.b16 %v8546
        %v8660 = vunpack.c.l.b16 %v8549
        %v8661 = vunpack.c.l.b16 %v8553
        %v8662 = vunpack.c.l.b16 %v8556
        %v8663 = vunpack.c.l.b16 %v8560
        %v8664 = vunpack.c.l.b16 %v8563
        %v8665 = vunpack.c.l.b16 %v8567
        %v8666 = vunpack.c.l.b16 %v8570
        %v8667 = vunpack.c.l.b16 %v8574
        %v8668 = vunpack.c.l.b16 %v8577
        %v8669 = vunpack.c.l.b16 %v8581
        %v8670 = vunpack.c.l.b16 %v8584
        %v8671 = vunpack.c.l.b16 %v8588
        %v8672 = vunpack.c.l.b16 %v8591
        %v8673 = vunpack.c.l.b16 %v8595
        %v8674 = vunpack.c.l.b16 %v8598
        %v8675 = vunpack.c.l.b16 %v8602
        %v8676 = vunpack.c.l.b16 %v8605
        %v8677 = vunpack.c.l.b16 %v8609
        %v8678 = vunpack.c.l.b16 %v8612
        %v8679 = vunpack.c.l.b16 %v8616
        %v8680 = vunpack.c.l.b16 %v8619
        %v8681 = vunpack.c.l.b16 %v8623
        %v8682 = vunpack.c.l.b16 %v8626
        %v8683 = vunpack.c.l.b16 %v8630
        %v8684 = vunpack.c.l.b16 %v8633
        %v8685 = vunpack.c.l.b16 %v8637
        %v8686 = vunpack.c.l.b16 %v8640
        %v8687 = vunpack.c.l.b16 %v8644
        %v8688 = vunpack.c.l.b16 %v8647
        %v8689 = vpack.c.b16 %v8658, %v8657
        %v8690 = vpack.c.b16 %v8660, %v8659
        %v8691 = vpack.c.b16 %v8662, %v8661
        %v8692 = vpack.c.b16 %v8664, %v8663
        %v8693 = vpack.c.b16 %v8666, %v8665
        %v8694 = vpack.c.b16 %v8668, %v8667
        %v8695 = vpack.c.b16 %v8670, %v8669
        %v8696 = vpack.c.b16 %v8672, %v8671
        %v8697 = vpack.c.b16 %v8674, %v8673
        %v8698 = vpack.c.b16 %v8676, %v8675
        %v8699 = vpack.c.b16 %v8678, %v8677
        %v8700 = vpack.c.b16 %v8680, %v8679
        %v8701 = vpack.c.b16 %v8682, %v8681
        %v8702 = vpack.c.b16 %v8684, %v8683
        %v8703 = vpack.c.b16 %v8686, %v8685
        %v8704 = vpack.c.b16 %v8688, %v8687
        %v8713 = vunpack.c.l.b16 %v8649
        %v8714 = vunpack.c.l.b16 %v8650
        %v8715 = vunpack.c.l.b16 %v8651
        %v8716 = vunpack.c.l.b16 %v8652
        %v8717 = vunpack.c.l.b16 %v8653
        %v8718 = vunpack.c.l.b16 %v8654
        %v8719 = vunpack.c.l.b16 %v8655
        %v8720 = vunpack.c.l.b16 %v8656
        %v8721 = vpack.c.b16 %v8714, %v8713
        %v8722 = vpack.c.b16 %v8716, %v8715
        %v8723 = vpack.c.b16 %v8718, %v8717
        %v8724 = vpack.c.b16 %v8720, %v8719
        %v8730 = vsel %vm3649, %v8689, 0
        %v8733 = vsel %vm3649, %v8690, 0
        %v8736 = vsel %vm3649, %v8691, 0
        %v8739 = vsel %vm3649, %v8692, 0
        %v8742 = vsel %vm3649, %v8693, 0
        %v8745 = vsel %vm3649, %v8694, 0
        %v8748 = vsel %vm3649, %v8695, 0
        %v8751 = vsel %vm3649, %v8696, 0
        %v8754 = vsel %vm3649, %v8697, 0
        %v8757 = vsel %vm3649, %v8698, 0
        %v8760 = vsel %vm3649, %v8699, 0
        %v8763 = vsel %vm3649, %v8700, 0
        %v8766 = vsel %vm3649, %v8701, 0
        %v8769 = vsel %vm3649, %v8702, 0
        %v8772 = vsel %vm3649, %v8703, 0
        %v8775 = vsel %vm3649, %v8704, 0
        %8777 = vmatprep.subr.bf16.mxu0 0
        %8778 = vmatpush1.bf16.msra.mxu0 0
        %8779 = vmatprep.subr.bf16.mxu0 0
        %8780 = vmatpush1.bf16.msra.mxu0 0
        %8781 = vmatprep.subr.bf16.mxu0 0
        %8782 = vmatpush1.bf16.msra.mxu0 0
        %8783 = vmatprep.subr.bf16.mxu0 0
        %8784 = vmatpush1.bf16.msra.mxu0 0
        %8785 = vmatprep.subr.bf16.mxu0 0
        %8786 = vmatpush1.bf16.msra.mxu0 %v8724
        %8787 = vmatprep.subr.bf16.mxu0 0
        %8788 = vmatpush1.bf16.msra.mxu0 %v8723
        %8789 = vmatprep.subr.bf16.mxu0 0
        %8790 = vmatpush1.bf16.msra.mxu0 %v8722
        %8791 = vmatprep.subr.bf16.mxu0 0
        %8792 = vmatpush1.bf16.msra.mxu0 %v8721
        %8793 = vmatprep.subr.bf16.mxu0 0
        %8794 = vmatpush2.bf16.msra.mxu0 0
        %8795 = vmatprep.subr.bf16.mxu0 0
        %8796 = vmatpush2.bf16.msra.mxu0 0
        %8797 = vmatprep.subr.bf16.mxu0 0
        %8798 = vmatpush2.bf16.msra.mxu0 0
        %8799 = vmatprep.subr.bf16.mxu0 0
        %8800 = vmatpush2.bf16.msra.mxu0 0
        %8801 = vmatprep.subr.bf16.mxu0 0
        %8802 = vmatpush2.bf16.msra.mxu0 0
        %8803 = vmatprep.subr.bf16.mxu0 0
        %8804 = vmatpush2.bf16.msra.mxu0 0
        %8805 = vmatprep.subr.bf16.mxu0 0
        %8806 = vmatpush2.bf16.msra.mxu0 0
        %8807 = vmatprep.subr.bf16.mxu0 0
        %8808 = vmatpush2.bf16.msra.mxu0 0
        %8809 = vmatprep.mubr.bf16.mxu0 0
        %8810 = vmatmul.mubr.bf16.gmra.mxu0 %v8730
        %v8811 = vpop.f32.mrf.mxu0
        %v8812 = vadd.f32 0.0, %v8811
        %v8813 = vpop.f32.mrf.mxu0
        %v8814 = vpop.f32.mrf.mxu0
        %v8815 = vadd.f32 0.0, %v8814
        %v8816 = vpop.f32.mrf.mxu0
        %8817 = vmatprep.mubr.bf16.mxu0 0
        %8818 = vmatmul.mubr.bf16.gmra.mxu0 %v8733
        %v8819 = vpop.f32.mrf.mxu0
        %v8820 = vadd.f32 0.0, %v8819
        %v8821 = vpop.f32.mrf.mxu0
        %v8822 = vpop.f32.mrf.mxu0
        %v8823 = vadd.f32 0.0, %v8822
        %v8824 = vpop.f32.mrf.mxu0
        %8825 = vmatprep.mubr.bf16.mxu0 0
        %8826 = vmatmul.mubr.bf16.gmra.mxu0 %v8736
        %v8827 = vpop.f32.mrf.mxu0
        %v8828 = vadd.f32 0.0, %v8827
        %v8829 = vpop.f32.mrf.mxu0
        %v8830 = vpop.f32.mrf.mxu0
        %v8831 = vadd.f32 0.0, %v8830
        %v8832 = vpop.f32.mrf.mxu0
        %8833 = vmatprep.mubr.bf16.mxu0 0
        %8834 = vmatmul.mubr.bf16.gmra.mxu0 %v8739
        %v8835 = vpop.f32.mrf.mxu0
        %v8836 = vadd.f32 0.0, %v8835
        %v8837 = vpop.f32.mrf.mxu0
        %v8838 = vpop.f32.mrf.mxu0
        %v8839 = vadd.f32 0.0, %v8838
        %v8840 = vpop.f32.mrf.mxu0
        %8841 = vmatprep.mubr.bf16.mxu0 0
        %8842 = vmatmul.mubr.bf16.gmra.mxu0 %v8742
        %v8843 = vpop.f32.mrf.mxu0
        %v8844 = vadd.f32 0.0, %v8843
        %v8845 = vpop.f32.mrf.mxu0
        %v8846 = vpop.f32.mrf.mxu0
        %v8847 = vadd.f32 0.0, %v8846
        %v8848 = vpop.f32.mrf.mxu0
        %8849 = vmatprep.mubr.bf16.mxu0 0
        %8850 = vmatmul.mubr.bf16.gmra.mxu0 %v8745
        %v8851 = vpop.f32.mrf.mxu0
        %v8852 = vadd.f32 0.0, %v8851
        %v8853 = vpop.f32.mrf.mxu0
        %v8854 = vpop.f32.mrf.mxu0
        %v8855 = vadd.f32 0.0, %v8854
        %v8856 = vpop.f32.mrf.mxu0
        %8857 = vmatprep.mubr.bf16.mxu0 0
        %8858 = vmatmul.mubr.bf16.gmra.mxu0 %v8748
        %v8859 = vpop.f32.mrf.mxu0
        %v8860 = vadd.f32 0.0, %v8859
        %v8861 = vpop.f32.mrf.mxu0
        %v8862 = vpop.f32.mrf.mxu0
        %v8863 = vadd.f32 0.0, %v8862
        %v8864 = vpop.f32.mrf.mxu0
        %8865 = vmatprep.mubr.bf16.mxu0 0
        %8866 = vmatmul.mubr.bf16.gmra.mxu0 %v8751
        %v8867 = vpop.f32.mrf.mxu0
        %v8868 = vadd.f32 0.0, %v8867
        %v8869 = vpop.f32.mrf.mxu0
        %v8870 = vpop.f32.mrf.mxu0
        %v8871 = vadd.f32 0.0, %v8870
        %v8872 = vpop.f32.mrf.mxu0
        %8873 = vmatprep.mubr.bf16.mxu0 0
        %8874 = vmatmul.mubr.bf16.gmra.mxu0 %v8754
        %v8875 = vpop.f32.mrf.mxu0
        %v8876 = vadd.f32 0.0, %v8875
        %v8877 = vpop.f32.mrf.mxu0
        %v8878 = vpop.f32.mrf.mxu0
        %v8879 = vadd.f32 0.0, %v8878
        %v8880 = vpop.f32.mrf.mxu0
        %8881 = vmatprep.mubr.bf16.mxu0 0
        %8882 = vmatmul.mubr.bf16.gmra.mxu0 %v8757
        %v8883 = vpop.f32.mrf.mxu0
        %v8884 = vadd.f32 0.0, %v8883
        %v8885 = vpop.f32.mrf.mxu0
        %v8886 = vpop.f32.mrf.mxu0
        %v8887 = vadd.f32 0.0, %v8886
        %v8888 = vpop.f32.mrf.mxu0
        %8889 = vmatprep.mubr.bf16.mxu0 0
        %8890 = vmatmul.mubr.bf16.gmra.mxu0 %v8760
        %v8891 = vpop.f32.mrf.mxu0
        %v8892 = vadd.f32 0.0, %v8891
        %v8893 = vpop.f32.mrf.mxu0
        %v8894 = vpop.f32.mrf.mxu0
        %v8895 = vadd.f32 0.0, %v8894
        %v8896 = vpop.f32.mrf.mxu0
        %8897 = vmatprep.mubr.bf16.mxu0 0
        %8898 = vmatmul.mubr.bf16.gmra.mxu0 %v8763
        %v8899 = vpop.f32.mrf.mxu0
        %v8900 = vadd.f32 0.0, %v8899
        %v8901 = vpop.f32.mrf.mxu0
        %v8902 = vpop.f32.mrf.mxu0
        %v8903 = vadd.f32 0.0, %v8902
        %v8904 = vpop.f32.mrf.mxu0
        %8905 = vmatprep.mubr.bf16.mxu0 0
        %8906 = vmatmul.mubr.bf16.gmra.mxu0 %v8766
        %v8907 = vpop.f32.mrf.mxu0
        %v8908 = vadd.f32 0.0, %v8907
        %v8909 = vpop.f32.mrf.mxu0
        %v8910 = vpop.f32.mrf.mxu0
        %v8911 = vadd.f32 0.0, %v8910
        %v8912 = vpop.f32.mrf.mxu0
        %8913 = vmatprep.mubr.bf16.mxu0 0
        %8914 = vmatmul.mubr.bf16.gmra.mxu0 %v8769
        %v8915 = vpop.f32.mrf.mxu0
        %v8916 = vadd.f32 0.0, %v8915
        %v8917 = vpop.f32.mrf.mxu0
        %v8918 = vpop.f32.mrf.mxu0
        %v8919 = vadd.f32 0.0, %v8918
        %v8920 = vpop.f32.mrf.mxu0
        %8921 = vmatprep.mubr.bf16.mxu0 0
        %8922 = vmatmul.mubr.bf16.gmra.mxu0 %v8772
        %v8923 = vpop.f32.mrf.mxu0
        %v8924 = vadd.f32 0.0, %v8923
        %v8925 = vpop.f32.mrf.mxu0
        %v8926 = vpop.f32.mrf.mxu0
        %v8927 = vadd.f32 0.0, %v8926
        %v8928 = vpop.f32.mrf.mxu0
        %8929 = vmatprep.mubr.bf16.mxu0 0
        %8930 = vmatmul.mubr.bf16.gmra.mxu0 %v8775
        %v8931 = vpop.f32.mrf.mxu0
        %v8932 = vadd.f32 0.0, %v8931
        %v8933 = vpop.f32.mrf.mxu0
        %v8934 = vpop.f32.mrf.mxu0
        %v8935 = vadd.f32 0.0, %v8934
        %v8936 = vpop.f32.mrf.mxu0
        %8937 = vdwg.mxu0
        %v8938 = vld [vmem:[#allocation4] sm:$0xff]
        %v8939 = vld [vmem:[#allocation4 + $0x8] sm:$0xff]
        %v8940 = vld [vmem:[#allocation4 + $0x10] sm:$0xff]
        %v8941 = vld [vmem:[#allocation4 + $0x18] sm:$0xff]
        %v8942 = vld [vmem:[#allocation4 + $0x20] sm:$0xff]
        %v8943 = vld [vmem:[#allocation4 + $0x28] sm:$0xff]
        %v8944 = vld [vmem:[#allocation4 + $0x30] sm:$0xff]
        %v8945 = vld [vmem:[#allocation4 + $0x38] sm:$0xff]
        %v8946 = vld [vmem:[#allocation4 + $0x40] sm:$0xff]
        %v8947 = vld [vmem:[#allocation4 + $0x48] sm:$0xff]
        %v8948 = vld [vmem:[#allocation4 + $0x50] sm:$0xff]
        %v8949 = vld [vmem:[#allocation4 + $0x58] sm:$0xff]
        %v8950 = vld [vmem:[#allocation4 + $0x60] sm:$0xff]
        %v8951 = vld [vmem:[#allocation4 + $0x68] sm:$0xff]
        %v8952 = vld [vmem:[#allocation4 + $0x70] sm:$0xff]
        %v8953 = vld [vmem:[#allocation4 + $0x78] sm:$0xff]
        %v8954 = vld [vmem:[#allocation4 + $0x80] sm:$0xff]
        %v8955 = vld [vmem:[#allocation4 + $0x88] sm:$0xff]
        %v8956 = vld [vmem:[#allocation4 + $0x90] sm:$0xff]
        %v8957 = vld [vmem:[#allocation4 + $0x98] sm:$0xff]
        %v8958 = vld [vmem:[#allocation4 + $0xa0] sm:$0xff]
        %v8959 = vld [vmem:[#allocation4 + $0xa8] sm:$0xff]
        %v8960 = vld [vmem:[#allocation4 + $0xb0] sm:$0xff]
        %v8961 = vld [vmem:[#allocation4 + $0xb8] sm:$0xff]
        %v8962 = vld [vmem:[#allocation4 + $0xc0] sm:$0xff]
        %v8963 = vld [vmem:[#allocation4 + $0xc8] sm:$0xff]
        %v8964 = vld [vmem:[#allocation4 + $0xd0] sm:$0xff]
        %v8965 = vld [vmem:[#allocation4 + $0xd8] sm:$0xff]
        %v8966 = vld [vmem:[#allocation4 + $0xe0] sm:$0xff]
        %v8967 = vld [vmem:[#allocation4 + $0xe8] sm:$0xff]
        %v8968 = vld [vmem:[#allocation4 + $0xf0] sm:$0xff]
        %v8969 = vld [vmem:[#allocation4 + $0xf8] sm:$0xff]
        %v8970 = vadd.f32 %v8938, %v8812
        %v8971 = vadd.f32 %v8939, %v8815
        %v8972 = vadd.f32 %v8940, %v8820
        %v8973 = vadd.f32 %v8941, %v8823
        %v8974 = vadd.f32 %v8942, %v8828
        %v8975 = vadd.f32 %v8943, %v8831
        %v8976 = vadd.f32 %v8944, %v8836
        %v8977 = vadd.f32 %v8945, %v8839
        %v8978 = vadd.f32 %v8946, %v8844
        %v8979 = vadd.f32 %v8947, %v8847
        %v8980 = vadd.f32 %v8948, %v8852
        %v8981 = vadd.f32 %v8949, %v8855
        %v8982 = vadd.f32 %v8950, %v8860
        %v8983 = vadd.f32 %v8951, %v8863
        %v8984 = vadd.f32 %v8952, %v8868
        %v8985 = vadd.f32 %v8953, %v8871
        %v8986 = vadd.f32 %v8954, %v8876
        %v8987 = vadd.f32 %v8955, %v8879
        %v8988 = vadd.f32 %v8956, %v8884
        %v8989 = vadd.f32 %v8957, %v8887
        %v8990 = vadd.f32 %v8958, %v8892
        %v8991 = vadd.f32 %v8959, %v8895
        %v8992 = vadd.f32 %v8960, %v8900
        %v8993 = vadd.f32 %v8961, %v8903
        %v8994 = vadd.f32 %v8962, %v8908
        %v8995 = vadd.f32 %v8963, %v8911
        %v8996 = vadd.f32 %v8964, %v8916
        %v8997 = vadd.f32 %v8965, %v8919
        %v8998 = vadd.f32 %v8966, %v8924
        %v8999 = vadd.f32 %v8967, %v8927
        %v9000 = vadd.f32 %v8968, %v8932
        %v9001 = vadd.f32 %v8969, %v8935
        %9002 = vst [vmem:[#allocation4] sm:$0xff] %v8970
        %9003 = vst [vmem:[#allocation4 + $0x8] sm:$0xff] %v8971
        %9004 = vst [vmem:[#allocation4 + $0x10] sm:$0xff] %v8972
        %9005 = vst [vmem:[#allocation4 + $0x18] sm:$0xff] %v8973
        %9006 = vst [vmem:[#allocation4 + $0x20] sm:$0xff] %v8974
        %9007 = vst [vmem:[#allocation4 + $0x28] sm:$0xff] %v8975
        %9008 = vst [vmem:[#allocation4 + $0x30] sm:$0xff] %v8976
        %9009 = vst [vmem:[#allocation4 + $0x38] sm:$0xff] %v8977
        %9010 = vst [vmem:[#allocation4 + $0x40] sm:$0xff] %v8978
        %9011 = vst [vmem:[#allocation4 + $0x48] sm:$0xff] %v8979
        %9012 = vst [vmem:[#allocation4 + $0x50] sm:$0xff] %v8980
        %9013 = vst [vmem:[#allocation4 + $0x58] sm:$0xff] %v8981
        %9014 = vst [vmem:[#allocation4 + $0x60] sm:$0xff] %v8982
        %9015 = vst [vmem:[#allocation4 + $0x68] sm:$0xff] %v8983
        %9016 = vst [vmem:[#allocation4 + $0x70] sm:$0xff] %v8984
        %9017 = vst [vmem:[#allocation4 + $0x78] sm:$0xff] %v8985
        %9018 = vst [vmem:[#allocation4 + $0x80] sm:$0xff] %v8986
        %9019 = vst [vmem:[#allocation4 + $0x88] sm:$0xff] %v8987
        %9020 = vst [vmem:[#allocation4 + $0x90] sm:$0xff] %v8988
        %9021 = vst [vmem:[#allocation4 + $0x98] sm:$0xff] %v8989
        %9022 = vst [vmem:[#allocation4 + $0xa0] sm:$0xff] %v8990
        %9023 = vst [vmem:[#allocation4 + $0xa8] sm:$0xff] %v8991
        %9024 = vst [vmem:[#allocation4 + $0xb0] sm:$0xff] %v8992
        %9025 = vst [vmem:[#allocation4 + $0xb8] sm:$0xff] %v8993
        %9026 = vst [vmem:[#allocation4 + $0xc0] sm:$0xff] %v8994
        %9027 = vst [vmem:[#allocation4 + $0xc8] sm:$0xff] %v8995
        %9028 = vst [vmem:[#allocation4 + $0xd0] sm:$0xff] %v8996
        %9029 = vst [vmem:[#allocation4 + $0xd8] sm:$0xff] %v8997
        %9030 = vst [vmem:[#allocation4 + $0xe0] sm:$0xff] %v8998
        %9031 = vst [vmem:[#allocation4 + $0xe8] sm:$0xff] %v8999
        %9032 = vst [vmem:[#allocation4 + $0xf0] sm:$0xff] %v9000
        %9033 = vst [vmem:[#allocation4 + $0xf8] sm:$0xff] %v9001
        %v9034 = vld [vmem:[#allocation4] sm:$0xff]
        %v9035 = vld [vmem:[#allocation4 + $0x8] sm:$0xff]
        %v9036 = vld [vmem:[#allocation4 + $0x10] sm:$0xff]
        %v9037 = vld [vmem:[#allocation4 + $0x18] sm:$0xff]
        %v9038 = vld [vmem:[#allocation4 + $0x20] sm:$0xff]
        %v9039 = vld [vmem:[#allocation4 + $0x28] sm:$0xff]
        %v9040 = vld [vmem:[#allocation4 + $0x30] sm:$0xff]
        %v9041 = vld [vmem:[#allocation4 + $0x38] sm:$0xff]
        %v9042 = vld [vmem:[#allocation4 + $0x40] sm:$0xff]
        %v9043 = vld [vmem:[#allocation4 + $0x48] sm:$0xff]
        %v9044 = vld [vmem:[#allocation4 + $0x50] sm:$0xff]
        %v9045 = vld [vmem:[#allocation4 + $0x58] sm:$0xff]
        %v9046 = vld [vmem:[#allocation4 + $0x60] sm:$0xff]
        %v9047 = vld [vmem:[#allocation4 + $0x68] sm:$0xff]
        %v9048 = vld [vmem:[#allocation4 + $0x70] sm:$0xff]
        %v9049 = vld [vmem:[#allocation4 + $0x78] sm:$0xff]
        %v9050 = vld [vmem:[#allocation4 + $0x80] sm:$0xff]
        %v9051 = vld [vmem:[#allocation4 + $0x88] sm:$0xff]
        %v9052 = vld [vmem:[#allocation4 + $0x90] sm:$0xff]
        %v9053 = vld [vmem:[#allocation4 + $0x98] sm:$0xff]
        %v9054 = vld [vmem:[#allocation4 + $0xa0] sm:$0xff]
        %v9055 = vld [vmem:[#allocation4 + $0xa8] sm:$0xff]
        %v9056 = vld [vmem:[#allocation4 + $0xb0] sm:$0xff]
        %v9057 = vld [vmem:[#allocation4 + $0xb8] sm:$0xff]
        %v9058 = vld [vmem:[#allocation4 + $0xc0] sm:$0xff]
        %v9059 = vld [vmem:[#allocation4 + $0xc8] sm:$0xff]
        %v9060 = vld [vmem:[#allocation4 + $0xd0] sm:$0xff]
        %v9061 = vld [vmem:[#allocation4 + $0xd8] sm:$0xff]
        %v9062 = vld [vmem:[#allocation4 + $0xe0] sm:$0xff]
        %v9063 = vld [vmem:[#allocation4 + $0xe8] sm:$0xff]
        %v9064 = vld [vmem:[#allocation4 + $0xf0] sm:$0xff]
        %v9065 = vld [vmem:[#allocation4 + $0xf8] sm:$0xff]
        %v9066 = vld [vmem:[%s5] sm:$0x1]
        %v9068 = vlaneseq
        %v9069 = vshrl.u32 %v9068, 7
        %v9070 = vsub.s32 0, %v9069
        %v9071 = vrot.slane %v9066, %v9070
        %v9073 = vmul.f32 %v9034, %v9071
        %v9074 = vmul.f32 %v9035, %v9071
        %v9075 = vmul.f32 %v9036, %v9071
        %v9076 = vmul.f32 %v9037, %v9071
        %v9077 = vmul.f32 %v9038, %v9071
        %v9078 = vmul.f32 %v9039, %v9071
        %v9079 = vmul.f32 %v9040, %v9071
        %v9080 = vmul.f32 %v9041, %v9071
        %v9081 = vmul.f32 %v9042, %v9071
        %v9082 = vmul.f32 %v9043, %v9071
        %v9083 = vmul.f32 %v9044, %v9071
        %v9084 = vmul.f32 %v9045, %v9071
        %v9085 = vmul.f32 %v9046, %v9071
        %v9086 = vmul.f32 %v9047, %v9071
        %v9087 = vmul.f32 %v9048, %v9071
        %v9088 = vmul.f32 %v9049, %v9071
        %v9089 = vmul.f32 %v9050, %v9071
        %v9090 = vmul.f32 %v9051, %v9071
        %v9091 = vmul.f32 %v9052, %v9071
        %v9092 = vmul.f32 %v9053, %v9071
        %v9093 = vmul.f32 %v9054, %v9071
        %v9094 = vmul.f32 %v9055, %v9071
        %v9095 = vmul.f32 %v9056, %v9071
        %v9096 = vmul.f32 %v9057, %v9071
        %v9097 = vmul.f32 %v9058, %v9071
        %v9098 = vmul.f32 %v9059, %v9071
        %v9099 = vmul.f32 %v9060, %v9071
        %v9100 = vmul.f32 %v9061, %v9071
        %v9101 = vmul.f32 %v9062, %v9071
        %v9102 = vmul.f32 %v9063, %v9071
        %v9103 = vmul.f32 %v9064, %v9071
        %v9104 = vmul.f32 %v9065, %v9071
        %v9105 = vld [vmem:[%s6] sm:$0x1]
        %v9107 = vlaneseq
        %v9108 = vshrl.u32 %v9107, 7
        %v9109 = vsub.s32 0, %v9108
        %v9110 = vrot.slane %v9105, %v9109
        %v9112 = vadd.f32 %v9073, %v9110
        %v9113 = vadd.f32 %v9074, %v9110
        %v9114 = vadd.f32 %v9075, %v9110
        %v9115 = vadd.f32 %v9076, %v9110
        %v9116 = vadd.f32 %v9077, %v9110
        %v9117 = vadd.f32 %v9078, %v9110
        %v9118 = vadd.f32 %v9079, %v9110
        %v9119 = vadd.f32 %v9080, %v9110
        %v9120 = vadd.f32 %v9081, %v9110
        %v9121 = vadd.f32 %v9082, %v9110
        %v9122 = vadd.f32 %v9083, %v9110
        %v9123 = vadd.f32 %v9084, %v9110
        %v9124 = vadd.f32 %v9085, %v9110
        %v9125 = vadd.f32 %v9086, %v9110
        %v9126 = vadd.f32 %v9087, %v9110
        %v9127 = vadd.f32 %v9088, %v9110
        %v9128 = vadd.f32 %v9089, %v9110
        %v9129 = vadd.f32 %v9090, %v9110
        %v9130 = vadd.f32 %v9091, %v9110
        %v9131 = vadd.f32 %v9092, %v9110
        %v9132 = vadd.f32 %v9093, %v9110
        %v9133 = vadd.f32 %v9094, %v9110
        %v9134 = vadd.f32 %v9095, %v9110
        %v9135 = vadd.f32 %v9096, %v9110
        %v9136 = vadd.f32 %v9097, %v9110
        %v9137 = vadd.f32 %v9098, %v9110
        %v9138 = vadd.f32 %v9099, %v9110
        %v9139 = vadd.f32 %v9100, %v9110
        %v9140 = vadd.f32 %v9101, %v9110
        %v9141 = vadd.f32 %v9102, %v9110
        %v9142 = vadd.f32 %v9103, %v9110
        %v9143 = vadd.f32 %v9104, %v9110
        %v9144 = vmax.f32 %v9112, 0.0
        %v9145 = vmax.f32 %v9113, 0.0
        %v9146 = vmax.f32 %v9114, 0.0
        %v9147 = vmax.f32 %v9115, 0.0
        %v9148 = vmax.f32 %v9116, 0.0
        %v9149 = vmax.f32 %v9117, 0.0
        %v9150 = vmax.f32 %v9118, 0.0
        %v9151 = vmax.f32 %v9119, 0.0
        %v9152 = vmax.f32 %v9120, 0.0
        %v9153 = vmax.f32 %v9121, 0.0
        %v9154 = vmax.f32 %v9122, 0.0
        %v9155 = vmax.f32 %v9123, 0.0
        %v9156 = vmax.f32 %v9124, 0.0
        %v9157 = vmax.f32 %v9125, 0.0
        %v9158 = vmax.f32 %v9126, 0.0
        %v9159 = vmax.f32 %v9127, 0.0
        %v9160 = vmax.f32 %v9128, 0.0
        %v9161 = vmax.f32 %v9129, 0.0
        %v9162 = vmax.f32 %v9130, 0.0
        %v9163 = vmax.f32 %v9131, 0.0
        %v9164 = vmax.f32 %v9132, 0.0
        %v9165 = vmax.f32 %v9133, 0.0
        %v9166 = vmax.f32 %v9134, 0.0
        %v9167 = vmax.f32 %v9135, 0.0
        %v9168 = vmax.f32 %v9136, 0.0
        %v9169 = vmax.f32 %v9137, 0.0
        %v9170 = vmax.f32 %v9138, 0.0
        %v9171 = vmax.f32 %v9139, 0.0
        %v9172 = vmax.f32 %v9140, 0.0
        %v9173 = vmax.f32 %v9141, 0.0
        %v9174 = vmax.f32 %v9142, 0.0
        %v9175 = vmax.f32 %v9143, 0.0
        %v9176 = vmax.f32 %v9144, %v9148
        %v9177 = vmax.f32 %v9145, %v9149
        %v9178 = vmax.f32 %v9146, %v9150
        %v9179 = vmax.f32 %v9147, %v9151
        %v9180 = vmax.f32 %v9176, %v9152
        %v9181 = vmax.f32 %v9177, %v9153
        %v9182 = vmax.f32 %v9178, %v9154
        %v9183 = vmax.f32 %v9179, %v9155
        %v9184 = vmax.f32 %v9180, %v9156
        %v9185 = vmax.f32 %v9181, %v9157
        %v9186 = vmax.f32 %v9182, %v9158
        %v9187 = vmax.f32 %v9183, %v9159
        %v9188 = vmax.f32 %v9184, %v9160
        %v9189 = vmax.f32 %v9185, %v9161
        %v9190 = vmax.f32 %v9186, %v9162
        %v9191 = vmax.f32 %v9187, %v9163
        %v9192 = vmax.f32 %v9188, %v9164
        %v9193 = vmax.f32 %v9189, %v9165
        %v9194 = vmax.f32 %v9190, %v9166
        %v9195 = vmax.f32 %v9191, %v9167
        %v9196 = vmax.f32 %v9192, %v9168
        %v9197 = vmax.f32 %v9193, %v9169
        %v9198 = vmax.f32 %v9194, %v9170
        %v9199 = vmax.f32 %v9195, %v9171
        %v9200 = vmax.f32 %v9196, %v9172
        %v9201 = vmax.f32 %v9197, %v9173
        %v9202 = vmax.f32 %v9198, %v9174
        %v9203 = vmax.f32 %v9199, %v9175
        %v9204 = vmax.f32 %v9200, %v9201
        %v9205 = vmax.f32 %v9202, %v9203
        %v9206 = vmax.f32 %v9204, %v9205
        %v9207 = vrot.slane %v9206, 4
        %v9208 = vmax.f32 %v9206, %v9207
        %v9209 = vrot.slane %v9208, 2
        %v9210 = vmax.f32 %v9208, %v9209
        %v9211 = vrot.slane %v9210, 1
        %v9212 = vmax.f32 %v9210, %v9211
        %v9213 = vld [vmem:[%s7] sm:$0xff]
        %v9214 = vld [vmem:[%s7 + $0x8] sm:$0xff]
        %v9215 = vld [vmem:[%s7 + $0x10] sm:$0xff]
        %v9216 = vld [vmem:[%s7 + $0x18] sm:$0xff]
        %v9217 = vld [vmem:[%s7 + $0x20] sm:$0xff]
        %v9218 = vld [vmem:[%s7 + $0x28] sm:$0xff]
        %v9219 = vld [vmem:[%s7 + $0x30] sm:$0xff]
        %v9220 = vld [vmem:[%s7 + $0x38] sm:$0xff]
        %v9221 = vld [vmem:[%s7 + $0x40] sm:$0xff]
        %v9222 = vld [vmem:[%s7 + $0x48] sm:$0xff]
        %v9223 = vld [vmem:[%s7 + $0x50] sm:$0xff]
        %v9224 = vld [vmem:[%s7 + $0x58] sm:$0xff]
        %v9225 = vld [vmem:[%s7 + $0x60] sm:$0xff]
        %v9226 = vld [vmem:[%s7 + $0x68] sm:$0xff]
        %v9227 = vld [vmem:[%s7 + $0x70] sm:$0xff]
        %v9228 = vld [vmem:[%s7 + $0x78] sm:$0xff]
        %v9229 = vld [vmem:[%s8] sm:$0x1]
        %9230 = vmatprep.subr.mxu0 0.0
        %9231 = vmatpush1.msra.mxu0 %v9228
        %9232 = vmatprep.subr.mxu0 0.0
        %9233 = vmatpush1.msra.mxu0 %v9227
        %9234 = vmatprep.subr.mxu0 0.0
        %9235 = vmatpush1.msra.mxu0 %v9226
        %9236 = vmatprep.subr.mxu0 0.0
        %9237 = vmatpush1.msra.mxu0 %v9225
        %9238 = vmatprep.subr.mxu0 0.0
        %9239 = vmatpush1.msra.mxu0 %v9224
        %9240 = vmatprep.subr.mxu0 0.0
        %9241 = vmatpush1.msra.mxu0 %v9223
        %9242 = vmatprep.subr.mxu0 0.0
        %9243 = vmatpush1.msra.mxu0 %v9222
        %9244 = vmatprep.subr.mxu0 0.0
        %9245 = vmatpush1.msra.mxu0 %v9221
        %9246 = vmatprep.subr.mxu0 0.0
        %9247 = vmatpush1.msra.mxu0 %v9220
        %9248 = vmatprep.subr.mxu0 0.0
        %9249 = vmatpush1.msra.mxu0 %v9219
        %9250 = vmatprep.subr.mxu0 0.0
        %9251 = vmatpush1.msra.mxu0 %v9218
        %9252 = vmatprep.subr.mxu0 0.0
        %9253 = vmatpush1.msra.mxu0 %v9217
        %9254 = vmatprep.subr.mxu0 0.0
        %9255 = vmatpush1.msra.mxu0 %v9216
        %9256 = vmatprep.subr.mxu0 0.0
        %9257 = vmatpush1.msra.mxu0 %v9215
        %9258 = vmatprep.subr.mxu0 0.0
        %9259 = vmatpush1.msra.mxu0 %v9214
        %9260 = vmatprep.subr.mxu0 0.0
        %9261 = vmatpush1.msra.mxu0 %v9213
        %9262 = vmatprep.subr.mxu0 0.0
        %9263 = vmatpush2.msra.mxu0 0.0
        %9264 = vmatprep.subr.mxu0 0.0
        %9265 = vmatpush2.msra.mxu0 0.0
        %9266 = vmatprep.subr.mxu0 0.0
        %9267 = vmatpush2.msra.mxu0 0.0
        %9268 = vmatprep.subr.mxu0 0.0
        %9269 = vmatpush2.msra.mxu0 0.0
        %9270 = vmatprep.subr.mxu0 0.0
        %9271 = vmatpush2.msra.mxu0 0.0
        %9272 = vmatprep.subr.mxu0 0.0
        %9273 = vmatpush2.msra.mxu0 0.0
        %9274 = vmatprep.subr.mxu0 0.0
        %9275 = vmatpush2.msra.mxu0 0.0
        %9276 = vmatprep.subr.mxu0 0.0
        %9277 = vmatpush2.msra.mxu0 0.0
        %9278 = vmatprep.subr.mxu0 0.0
        %9279 = vmatpush2.msra.mxu0 0.0
        %9280 = vmatprep.subr.mxu0 0.0
        %9281 = vmatpush2.msra.mxu0 0.0
        %9282 = vmatprep.subr.mxu0 0.0
        %9283 = vmatpush2.msra.mxu0 0.0
        %9284 = vmatprep.subr.mxu0 0.0
        %9285 = vmatpush2.msra.mxu0 0.0
        %9286 = vmatprep.subr.mxu0 0.0
        %9287 = vmatpush2.msra.mxu0 0.0
        %9288 = vmatprep.subr.mxu0 0.0
        %9289 = vmatpush2.msra.mxu0 0.0
        %9290 = vmatprep.subr.mxu0 0.0
        %9291 = vmatpush2.msra.mxu0 0.0
        %9292 = vmatprep.subr.mxu0 0.0
        %9293 = vmatpush2.msra.mxu0 0.0
        %9294 = vmatprep.mubr.f32.mxu0 0.0
        %9295 = vmatmul.mubr.f32.gmra.mxu0 %v9212
        %v9296 = vpop.f32.mrf.mxu0
        %v9297 = vadd.f32 %v9229, %v9296
        %v9298 = vpop.f32.mrf.mxu0
        %9299 = vdwg.mxu0
        %vm9300 = vcmask 1040384
        %v9301 = vsel %vm9300, %v9297, -inf
        %9302 = vmax.xlane.f32.xlu0 %v9301
        %v9303 = vpop.xlane.xlu0 %9302
        %v9304 = vsub.f32 %v9297, %v9303
        %v9305 = vmul.f32 %v9304, 1.442695
        %v9306 = vpow.pop %v9305
        %v9307 = vsel %vm9300, %v9306, 0.0
        %9308 = vadd.xlane.f32.xlu0 %v9307
        %v9309 = vpop.xlane.xlu0 %9308
        %v9310 = vlog2.pop %v9309
        %v9311 = vmul.f32 %v9310, 0.6931472
        %v9312 = vadd.f32 %v9303, %v9311
        %v9313 = vsub.f32 %v9297, %v9312
        %9314 = vst [vmem:[%s324] sm:$0x1] %v9313
        %s9315 = sand.u32 %s225, 1
        %s9316 = scalar_lea.sflag [#allocation6], %s9315
        %s9317 = sand.u32 %s225, 1
        %s9318 = scalar_lea.vmem [#allocation5], %s9317
        // Predicated region
        $region57: #{cnn_forward.1} parent=55 // pred_check
          %p9319 = pneg %p235
        $region58: #{cnn_forward.1} parent=55 // pred_check_branch
          %9321 = sbr.rel (%p9319) target = $region60
        $region59: #{cnn_forward.1} parent=55 // pred_region
          %s9323 = ssub.s32 16, 16
          %9324 = vsyncadd %s9316, %s9323
          %s9325 = smul.addr %s23, 16
          %s9326 = scalar_lea.hbm %s9, %s9325
          %s9328 = sshll.u32 %s9318, 4
          %s9329 = int_to_ptr.vmem [resolvable:$true] %s9328
          %9331 = dma.vmem_to_hbm [thread:$0]  %s9329, 16, %s9326, %s9316
        $region60: #{cnn_forward.1} parent=55 // pred_fallthru
          _
      $region56: #{cnn_forward.1} parent=5 // pred_fallthru
        _
      %p9332 = scmp.le.s32.totalorder 2, %s18
      // Predicated region
      $region61: #{cnn_forward.1} parent=5 // pred_check
        %p9333 = pneg %p9332
      $region62: #{cnn_forward.1} parent=5 // pred_check_branch
        %9335 = sbr.rel (%p9333) target = $region64
      $region63: #{cnn_forward.1} parent=5 // pred_region
        %s9336 = ssub.s32 %s18, 2
        // Predicated region
        $region65: #{cnn_forward.1} parent=63 // pred_check
          %p9337 = pneg %p241
        $region66: #{cnn_forward.1} parent=63 // pred_check_branch
          %9339 = sbr.rel (%p9337) target = $region68
        $region67: #{cnn_forward.1} parent=63 // pred_region
          %s9340 = sand.u32 %s226, 1
          %s9341 = scalar_lea.sflag [#allocation6], %s9340
          %s9342 = sand.u32 %s226, 1
          %s9343 = scalar_lea.vmem [#allocation5], %s9342
          %9344 = dma.done %s9341, 16
        $region68: #{cnn_forward.1} parent=63 // pred_fallthru
          _
      $region64: #{cnn_forward.1} parent=5 // pred_fallthru
        _
    $region6: #{cnn_forward.1} parent=1 // loop_footer
      %s22 = sadd.s32 1, %s18
    $region7: #{cnn_forward.1} parent=1 // loop_footer_branch
      %17 = sbr.rel target = $region3
    $region8: #{cnn_forward.1} parent=1 // loop_exit
      _
    %9345 = vsyncpa [#allocation6], 1
    %s9346 = scalar_lea.sflag [#allocation6], 1
    %9347 = vsyncpa %s9346, 1

</llo_original>
